<compile_context>
chip_gen: v7x
topology: tpu7x:2x2x1
jax: 0.10.0
libtpu: 0.0.40
codegen_flags: <defaults>
</compile_context>

<pallas_src>
import math

import jax
import jax.numpy as jnp
from jax.experimental import pallas as pl
from jax.experimental.pallas import tpu as pltpu

# ----- small, shape-consistent configuration (scaled-down from the module) -----
B = 2          # batch
S_DEC = 8      # decoder (target) sequence length
S_ENC = 10     # encoder (source) sequence length
D_MODEL = 32   # model width
N_HEADS = 4    # heads
D_HEAD = D_MODEL // N_HEADS
D_FF = 64      # feed-forward width
N_LAYERS = 2   # decoder layers
VOCAB = 50     # vocabulary size
VOCAB_PAD = 128            # lane-dense padded vocab width for the output projection
MAX_LEN = 16   # positional-embedding table size
EPS = 1e-5     # LayerNorm eps (PyTorch default)
SCALE = math.sqrt(D_MODEL / N_HEADS)
MASK_VAL = -1e10           # python float literal


# --------------------------------------------------------------------------
# Fused whole-decoder Pallas kernel (single invocation, whole batch)
# --------------------------------------------------------------------------
def decoder_kernel(
    x_ref, enc_ref, self_bias_ref, cross_bias_ref,
    wqkv_s_ref, bqkv_s_ref, wo_s_ref, bo_s_ref, g1_ref, be1_ref,
    wq_c_ref, bq_c_ref, wkv_c_ref, bkv_c_ref, wo_c_ref, bo_c_ref, g2_ref, be2_ref,
    w1_ref, b1_ref, w2_ref, b2_ref, g3_ref, be3_ref,
    wout_ref, bout_ref,
    out_ref,
):
    n_q = x_ref.shape[0]      # B * S_DEC rows
    n_k = enc_ref.shape[0]    # B * S_ENC rows

    def layernorm(x, g, b):
        mean = jnp.mean(x, axis=-1, keepdims=True)
        xc = x - mean
        var = jnp.mean(xc * xc, axis=-1, keepdims=True)
        return xc * jax.lax.rsqrt(var + EPS) * g + b

    def softmax_lastdim(s):
        s = s - jnp.max(s, axis=-1, keepdims=True)
        p = jnp.exp(s)
        # EUP approximate reciprocal instead of a VALU divide
        return p * pl.reciprocal(jnp.sum(p, axis=-1, keepdims=True), approx=True)

    def split_heads(t, rows):
        # (rows, H*dh) -> (H*rows, dh): head-major row blocks (h, b, s)
        return (t.reshape(rows, N_HEADS, D_HEAD)
                 .transpose(1, 0, 2)
                 .reshape(N_HEADS * rows, D_HEAD))

    def merge_heads(t, rows):
        # (H*rows, dh) -> (rows, H*dh): concat heads back onto the feature dim
        return (t.reshape(N_HEADS, rows, D_HEAD)
                 .transpose(1, 0, 2)
                 .reshape(rows, D_MODEL))

    def attention(q, k, v, bias, wo, bo, rows_q, rows_k):
        # q already carries the 1/sqrt(d_head) scale (folded into Wq/bq).
        qh = split_heads(q, rows_q)                 # (H*rows_q, dh)
        kh = split_heads(k, rows_k)                 # (H*rows_k, dh)
        vh = split_heads(v, rows_k)                 # (H*rows_k, dh)
        # Block-diagonal 2-D score matmul: s[r, c] = qh[r] . kh[c]
        s = jax.lax.dot_general(qh, kh, (((1,), (1,)), ((), ())),
                                preferred_element_type=jnp.float32)
        # bias carries batch-block, head-block, causal / padding masks (additive)
        p = softmax_lastdim(s + bias)
        o = jnp.dot(p, vh, preferred_element_type=jnp.float32)   # (H*rows_q, dh)
        o = merge_heads(o, rows_q)                                # (rows_q, D)
        return jnp.dot(o.astype(jnp.bfloat16), wo,
                       preferred_element_type=jnp.float32) + bo

    x = x_ref[...].astype(jnp.float32)                  # (B*S_dec, D), residual stream f32
    enc_b = enc_ref[...].astype(jnp.bfloat16)            # (B*S_enc, D), only feeds matmuls
    self_bias = self_bias_ref[...]                        # (H*B*S_dec, H*B*S_dec)
    cross_bias = cross_bias_ref[...]                       # (H*B*S_dec, H*B*S_enc)

    for l in range(N_LAYERS):   # static unroll (tiny depth); weights stay VMEM-resident
        # ---- masked self-attention (fused QKV, bf16 weights) + residual + LayerNorm ----
        xb = x.astype(jnp.bfloat16)
        qkv = jnp.dot(xb, wqkv_s_ref[l],
                      preferred_element_type=jnp.float32) + bqkv_s_ref[l]
        a = attention(qkv[:, :D_MODEL], qkv[:, D_MODEL:2 * D_MODEL],
                      qkv[:, 2 * D_MODEL:],
                      self_bias, wo_s_ref[l], bo_s_ref[l], n_q, n_q)
        x = layernorm(x + a, g1_ref[l], be1_ref[l])

        # ---- encoder-decoder cross-attention (fused KV) + residual + LayerNorm ----
        xb = x.astype(jnp.bfloat16)
        q = jnp.dot(xb, wq_c_ref[l],
                    preferred_element_type=jnp.float32) + bq_c_ref[l]
        kv = jnp.dot(enc_b, wkv_c_ref[l],
                     preferred_element_type=jnp.float32) + bkv_c_ref[l]
        a = attention(q, kv[:, :D_MODEL], kv[:, D_MODEL:],
                      cross_bias, wo_c_ref[l], bo_c_ref[l], n_q, n_k)
        x = layernorm(x + a, g2_ref[l], be2_ref[l])

        # ---- feed-forward (Linear -> ReLU -> Linear) + residual + LayerNorm ----
        xb = x.astype(jnp.bfloat16)
        h = jnp.maximum(
            jnp.dot(xb, w1_ref[l], preferred_element_type=jnp.float32) + b1_ref[l],
            0.0)
        f = jnp.dot(h.astype(jnp.bfloat16), w2_ref[l],
                    preferred_element_type=jnp.float32) + b2_ref[l]
        x = layernorm(x + f, g3_ref[l], be3_ref[l])

    # ---- final vocabulary projection (lane-dense, zero-padded to VOCAB_PAD=128) ----
    logits = jnp.dot(x.astype(jnp.bfloat16), wout_ref[...],
                     preferred_element_type=jnp.float32) + bout_ref[...]
    out_ref[...] = logits.astype(out_ref.dtype)


# --------------------------------------------------------------------------
# Parameter fusion / stacking (f32 fuse & scale-fold, then bf16 for matmul weights)
# --------------------------------------------------------------------------
_WEIGHT_NAMES = (
    'wqkv_s', 'bqkv_s', 'wo_s', 'bo_s', 'g1', 'be1',
    'wq_c', 'bq_c', 'wkv_c', 'bkv_c', 'wo_c', 'bo_c', 'g2', 'be2',
    'w1', 'b1', 'w2', 'b2', 'g3', 'be3',
    'wout', 'bout',
)


def fuse_params(params):
    """Pre-fuse/stack per-layer weights; fold 1/scale into Wq (f32) then cast to bf16."""
    inv_scale = 1.0 / SCALE
    layers = params['layers']
    bf = jnp.bfloat16

    def stack(fn, dtype=jnp.float32):
        return jnp.stack([fn(l) for l in layers]).astype(dtype)

    fused = {
        'wqkv_s': stack(lambda l: jnp.concatenate(
            [l['self']['wq'] * inv_scale, l['self']['wk'], l['self']['wv']], axis=1), bf),
        'bqkv_s': stack(lambda l: jnp.concatenate(
            [l['self']['bq'] * inv_scale, l['self']['bk'], l['self']['bv']], axis=1)),
        'wo_s': stack(lambda l: l['self']['wo'], bf),
        'bo_s': stack(lambda l: l['self']['bo']),
        'g1': stack(lambda l: l['ln1_g']),
        'be1': stack(lambda l: l['ln1_b']),
        'wq_c': stack(lambda l: l['cross']['wq'] * inv_scale, bf),
        'bq_c': stack(lambda l: l['cross']['bq'] * inv_scale),
        'wkv_c': stack(lambda l: jnp.concatenate(
            [l['cross']['wk'], l['cross']['wv']], axis=1), bf),
        'bkv_c': stack(lambda l: jnp.concatenate(
            [l['cross']['bk'], l['cross']['bv']], axis=1)),
        'wo_c': stack(lambda l: l['cross']['wo'], bf),
        'bo_c': stack(lambda l: l['cross']['bo']),
        'g2': stack(lambda l: l['ln2_g']),
        'be2': stack(lambda l: l['ln2_b']),
        'w1': stack(lambda l: l['ff']['w1'], bf),
        'b1': stack(lambda l: l['ff']['b1']),
        'w2': stack(lambda l: l['ff']['w2'], bf),
        'b2': stack(lambda l: l['ff']['b2']),
        'g3': stack(lambda l: l['ln3_g']),
        'be3': stack(lambda l: l['ln3_b']),
        # Padded columns stay exactly zero so the slice-back to VOCAB is exact.
        'wout': jnp.zeros((D_MODEL, VOCAB_PAD), jnp.float32)
                   .at[:, :VOCAB].set(params['w_out']).astype(bf),
        'bout': jnp.zeros((1, VOCAB_PAD), jnp.float32)
                   .at[:, :VOCAB].set(params['b_out']),
    }
    return fused


# --------------------------------------------------------------------------
# Combined (batch, head)-block-diagonal additive attention bias
# --------------------------------------------------------------------------
def make_block_bias(mask_bqk):
    """mask_bqk: bool (B, Sq, Sk), True = masked.
    Returns f32 (H*B*Sq, H*B*Sk) additive bias for the head-flattened score matrix:
    row r = h*(B*Sq) + b*Sq + i ; col c = h'*(B*Sk) + b'*Sk + j.
    Entry = MASK_VAL unless (h==h' and b==b' and not mask[b,i,j])."""
    bsz, sq, sk = mask_bqk.shape
    nq = N_HEADS * bsz * sq
    nk = N_HEADS * bsz * sk
    r = jnp.arange(nq)
    c = jnp.arange(nk)
    rh, rb, ri = r // (bsz * sq), (r // sq) % bsz, r % sq
    ch, cb, cj = c // (bsz * sk), (c // sk) % bsz, c % sk
    same_block = (rh[:, None] == ch[None, :]) & (rb[:, None] == cb[None, :])
    inner = mask_bqk[rb[:, None], ri[:, None], cj[None, :]]
    masked = jnp.logical_or(jnp.logical_not(same_block), inner)
    return jnp.where(masked, MASK_VAL, 0.0).astype(jnp.float32)


# --------------------------------------------------------------------------
# Static cost estimate (scheduling hint for XLA)
# --------------------------------------------------------------------------
def _static_cost(bsz, s, s_enc):
    n_q, n_kv = bsz * s, bsz * s_enc
    r_q, r_ks, r_kc = N_HEADS * n_q, N_HEADS * n_q, N_HEADS * n_kv
    per_layer = (
        2 * n_q * D_MODEL * 3 * D_MODEL                       # fused QKV
        + 2 * r_q * D_HEAD * r_ks + 2 * r_q * r_ks * D_HEAD   # self scores + PV
        + 2 * n_q * D_MODEL * D_MODEL                          # self out proj
        + 2 * n_q * D_MODEL * D_MODEL                          # cross Q
        + 2 * n_kv * D_MODEL * 2 * D_MODEL                     # cross fused KV
        + 2 * r_q * D_HEAD * r_kc + 2 * r_q * r_kc * D_HEAD   # cross scores + PV
        + 2 * n_q * D_MODEL * D_MODEL                          # cross out proj
        + 2 * n_q * D_MODEL * D_FF + 2 * n_q * D_FF * D_MODEL  # FFN
    )
    flops = N_LAYERS * per_layer + 2 * n_q * D_MODEL * VOCAB_PAD
    transcendentals = N_LAYERS * (r_q * r_ks + r_q * r_kc + 8 * n_q)
    return int(flops), int(transcendentals)


# --------------------------------------------------------------------------
# Decoder forward (single fused, grid-less Pallas call)
# --------------------------------------------------------------------------
@jax.jit
def decoder_forward(params, fused, trg, enc_out, dec_mask, enc_dec_mask):
    bsz, s = trg.shape
    s_enc = enc_out.shape[1]

    pos = jnp.arange(s)
    x = params['tok_emb'][trg] + params['pos_emb'][pos][None, :, :]   # (B, S, D)
    x = x.reshape(bsz * s, D_MODEL).astype(jnp.float32)               # (B*S, D)
    enc = enc_out.reshape(bsz * s_enc, D_MODEL).astype(jnp.float32)   # (B*S_enc, D)
    # dropout -> identity (inference)

    # Combined additive biases: batch-block + head-block + causal / padding masks.
    self_bias = make_block_bias(dec_mask)        # (H*B*S, H*B*S)
    cross_bias = make_block_bias(enc_dec_mask)   # (H*B*S, H*B*S_enc)

    operands = [x, enc, self_bias, cross_bias] + [fused[n] for n in _WEIGHT_NAMES]

    vmem_spec = pl.BlockSpec(memory_space=pltpu.MemorySpace.VMEM)
    flops, transcendentals = _static_cost(bsz, s, s_enc)
    bytes_accessed = int(sum(int(a.size) * int(a.dtype.itemsize) for a in operands)
                         + bsz * s * VOCAB_PAD * 4)

    logits_pad = pl.pallas_call(
        decoder_kernel,
        out_shape=jax.ShapeDtypeStruct((bsz * s, VOCAB_PAD), jnp.float32),
        in_specs=[vmem_spec] * len(operands),
        out_specs=vmem_spec,
        cost_estimate=pl.CostEstimate(flops=flops,
                                      transcendentals=transcendentals,
                                      bytes_accessed=bytes_accessed),
    )(*operands)

    logits = logits_pad.reshape(bsz, s, VOCAB_PAD)[..., :VOCAB]
    # atten_map_save=False -> empty attention stacks, matching the reference.
    empty = jnp.zeros((0,), jnp.float32)
    return logits, empty, empty


# --------------------------------------------------------------------------
# Pure-JAX f32 reference (numerical sanity check)
# --------------------------------------------------------------------------
def _ref_mha(xq, xkv, mask, w):
    bsz, sq, d = xq.shape
    sk = xkv.shape[1]
    dh = d // N_HEADS
    q = xq @ w['wq'] + w['bq'][0]
    k = xkv @ w['wk'] + w['bk'][0]
    v = xkv @ w['wv'] + w['bv'][0]
    q = q.reshape(bsz, sq, N_HEADS, dh).transpose(0, 2, 1, 3)
    k = k.reshape(bsz, sk, N_HEADS, dh).transpose(0, 2, 1, 3)
    v = v.reshape(bsz, sk, N_HEADS, dh).transpose(0, 2, 1, 3)
    s = q @ k.transpose(0, 1, 3, 2) / SCALE
    s = jnp.where(mask[:, None, :, :], -1e10, s)
    p = jax.nn.softmax(s, axis=-1)
    a = (p @ v).transpose(0, 2, 1, 3).reshape(bsz, sq, d)
    return a @ w['wo'] + w['bo'][0]


def _ref_ln(x, g, b):
    mean = jnp.mean(x, axis=-1, keepdims=True)
    var = jnp.mean((x - mean) ** 2, axis=-1, keepdims=True)
    return (x - mean) / jnp.sqrt(var + EPS) * g[0] + b[0]


def ref_forward(params, trg, enc_out, dec_mask, enc_dec_mask):
    bsz, s = trg.shape
    x = params['tok_emb'][trg] + params['pos_emb'][jnp.arange(s)][None]
    for lyr in params['layers']:
        x = _ref_ln(x + _ref_mha(x, x, dec_mask, lyr['self']),
                    lyr['ln1_g'], lyr['ln1_b'])
        x = _ref_ln(x + _ref_mha(x, enc_out, enc_dec_mask, lyr['cross']),
                    lyr['ln2_g'], lyr['ln2_b'])
        h = jnp.maximum(x @ lyr['ff']['w1'] + lyr['ff']['b1'][0], 0.0)
        f = h @ lyr['ff']['w2'] + lyr['ff']['b2'][0]
        x = _ref_ln(x + f, lyr['ln3_g'], lyr['ln3_b'])
    return x @ params['w_out'] + params['b_out'][0]


# --------------------------------------------------------------------------
# Deterministic parameter initialization (PyTorch-style layout)
# --------------------------------------------------------------------------
def init_params(key):
    keys = iter(jax.random.split(key, 128))

    def dense(din, dout):
        w = jax.random.normal(next(keys), (din, dout), jnp.float32) * 0.05
        b = jax.random.normal(next(keys), (1, dout), jnp.float32) * 0.05
        return w, b

    def mha_params():
        wq, bq = dense(D_MODEL, D_MODEL)
        wk, bk = dense(D_MODEL, D_MODEL)
        wv, bv = dense(D_MODEL, D_MODEL)
        wo, bo = dense(D_MODEL, D_MODEL)
        return dict(wq=wq, bq=bq, wk=wk, bk=bk, wv=wv, bv=bv, wo=wo, bo=bo)

    layers = []
    for _ in range(N_LAYERS):
        w1, b1 = dense(D_MODEL, D_FF)
        w2, b2 = dense(D_FF, D_MODEL)
        layers.append(dict(
            self=mha_params(),
            ln1_g=jnp.ones((1, D_MODEL), jnp.float32),
            ln1_b=jnp.zeros((1, D_MODEL), jnp.float32),
            cross=mha_params(),
            ln2_g=jnp.ones((1, D_MODEL), jnp.float32),
            ln2_b=jnp.zeros((1, D_MODEL), jnp.float32),
            ff=dict(w1=w1, b1=b1, w2=w2, b2=b2),
            ln3_g=jnp.ones((1, D_MODEL), jnp.float32),
            ln3_b=jnp.zeros((1, D_MODEL), jnp.float32),
        ))

    w_out, b_out = dense(D_MODEL, VOCAB)
    return dict(
        tok_emb=jax.random.normal(next(keys), (VOCAB, D_MODEL), jnp.float32) * 0.1,
        pos_emb=jax.random.normal(next(keys), (MAX_LEN, D_MODEL), jnp.float32) * 0.1,
        layers=layers,
        w_out=w_out,
        b_out=b_out,
    )


# --------------------------------------------------------------------------
if __name__ == "__main__":
    root = jax.random.PRNGKey(0)
    k_par, k_trg, k_enc = jax.random.split(root, 3)

    params = init_params(k_par)
    fused = fuse_params(params)

    trg = jax.random.randint(k_trg, (B, S_DEC), 0, VOCAB, dtype=jnp.int32)
    enc_out = jax.random.normal(k_enc, (B, S_ENC, D_MODEL), jnp.float32)

    # causal decoder mask (True = masked)
    dec_mask = jnp.broadcast_to(
        jnp.triu(jnp.ones((S_DEC, S_DEC), jnp.bool_), k=1), (B, S_DEC, S_DEC))
    # encoder-decoder padding mask: batch 1 has its last 3 encoder positions padded
    enc_valid_len = jnp.array([S_ENC, S_ENC - 3])
    enc_dec_mask = jnp.arange(S_ENC)[None, None, :] >= enc_valid_len[:, None, None]
    enc_dec_mask = jnp.broadcast_to(enc_dec_mask, (B, S_DEC, S_ENC))

    logits, atten_decs, atten_enc_decs = decoder_forward(
        params, fused, trg, enc_out, dec_mask, enc_dec_mask)
    logits = jax.block_until_ready(logits)

    # numerical sanity check against a pure-JAX f32 reference
    # (kernel uses bf16 weights/matmul inputs + approx softmax reciprocal, so the
    #  tolerance is looser than a pure-f32 comparison)
    ref_logits = ref_forward(params, trg, enc_out, dec_mask, enc_dec_mask)
    assert logits.shape == (B, S_DEC, VOCAB)
    max_err = float(jnp.max(jnp.abs(logits - ref_logits)))
    assert jnp.allclose(logits, ref_logits, atol=2e-2, rtol=2e-2), max_err

    print("KERNEL_OK")
</pallas_src>

<mosaic_0001>
module attributes {stable_mosaic.version = 11 : i64} {
  func.func @decoder_kernel(%arg0: memref<16x32xf32, #tpu.memory_space<vmem>>, %arg1: memref<20x32xf32, #tpu.memory_space<vmem>>, %arg2: memref<64x64xf32, #tpu.memory_space<vmem>>, %arg3: memref<64x80xf32, #tpu.memory_space<vmem>>, %arg4: memref<2x32x96xbf16, #tpu.memory_space<vmem>>, %arg5: memref<2x1x96xf32, #tpu.memory_space<vmem>>, %arg6: memref<2x32x32xbf16, #tpu.memory_space<vmem>>, %arg7: memref<2x1x32xf32, #tpu.memory_space<vmem>>, %arg8: memref<2x1x32xf32, #tpu.memory_space<vmem>>, %arg9: memref<2x1x32xf32, #tpu.memory_space<vmem>>, %arg10: memref<2x32x32xbf16, #tpu.memory_space<vmem>>, %arg11: memref<2x1x32xf32, #tpu.memory_space<vmem>>, %arg12: memref<2x32x64xbf16, #tpu.memory_space<vmem>>, %arg13: memref<2x1x64xf32, #tpu.memory_space<vmem>>, %arg14: memref<2x32x32xbf16, #tpu.memory_space<vmem>>, %arg15: memref<2x1x32xf32, #tpu.memory_space<vmem>>, %arg16: memref<2x1x32xf32, #tpu.memory_space<vmem>>, %arg17: memref<2x1x32xf32, #tpu.memory_space<vmem>>, %arg18: memref<2x32x64xbf16, #tpu.memory_space<vmem>>, %arg19: memref<2x1x64xf32, #tpu.memory_space<vmem>>, %arg20: memref<2x64x32xbf16, #tpu.memory_space<vmem>>, %arg21: memref<2x1x32xf32, #tpu.memory_space<vmem>>, %arg22: memref<2x1x32xf32, #tpu.memory_space<vmem>>, %arg23: memref<2x1x32xf32, #tpu.memory_space<vmem>>, %arg24: memref<32x128xbf16, #tpu.memory_space<vmem>>, %arg25: memref<1x128xf32, #tpu.memory_space<vmem>>, %arg26: memref<16x128xf32, #tpu.memory_space<vmem>>) attributes {dimension_semantics = [], scalar_prefetch = 0 : i64, scratch_operands = 0 : i64, tpu.core_type = #tpu.core_type<tc>} {
    %c0 = arith.constant 0 : index
    %c0_0 = arith.constant 0 : index
    %0 = vector.load %arg0[%c0, %c0_0] : memref<16x32xf32, #tpu.memory_space<vmem>>, vector<16x32xf32>
    %c0_1 = arith.constant 0 : index
    %c0_2 = arith.constant 0 : index
    %1 = vector.load %arg1[%c0_1, %c0_2] : memref<20x32xf32, #tpu.memory_space<vmem>>, vector<20x32xf32>
    %2 = arith.truncf %1 : vector<20x32xf32> to vector<20x32xbf16>
    %c0_3 = arith.constant 0 : index
    %c0_4 = arith.constant 0 : index
    %3 = vector.load %arg2[%c0_3, %c0_4] : memref<64x64xf32, #tpu.memory_space<vmem>>, vector<64x64xf32>
    %c0_5 = arith.constant 0 : index
    %c0_6 = arith.constant 0 : index
    %4 = vector.load %arg3[%c0_5, %c0_6] : memref<64x80xf32, #tpu.memory_space<vmem>>, vector<64x80xf32>
    %5 = arith.truncf %0 : vector<16x32xf32> to vector<16x32xbf16>
    %c0_7 = arith.constant 0 : index
    %c0_8 = arith.constant 0 : index
    %c0_9 = arith.constant 0 : index
    %6 = vector.load %arg4[%c0_7, %c0_8, %c0_9] : memref<2x32x96xbf16, #tpu.memory_space<vmem>>, vector<1x32x96xbf16>
    %7 = vector.shape_cast %6 : vector<1x32x96xbf16> to vector<32x96xbf16>
    %cst = arith.constant dense<0.000000e+00> : vector<16x96xf32>
    %8 = tpu.matmul %5, %7, %cst {dimension_numbers = #tpu.dot_dimension_numbers<[1], [0], [0], [1], [0, 0, 1, 1], [], []>} : vector<16x32xbf16>, vector<32x96xbf16>, vector<16x96xf32> -> vector<16x96xf32>
    %c0_10 = arith.constant 0 : index
    %c0_11 = arith.constant 0 : index
    %c0_12 = arith.constant 0 : index
    %9 = vector.load %arg5[%c0_10, %c0_11, %c0_12] : memref<2x1x96xf32, #tpu.memory_space<vmem>>, vector<1x1x96xf32>
    %10 = vector.shape_cast %9 : vector<1x1x96xf32> to vector<1x96xf32>
    %11 = vector.broadcast %10 : vector<1x96xf32> to vector<16x96xf32>
    %12 = arith.addf %8, %11 : vector<16x96xf32>
    %13 = vector.extract_strided_slice %12 {offsets = [0, 0], sizes = [16, 32], strides = [1, 1]} : vector<16x96xf32> to vector<16x32xf32>
    %14 = vector.extract_strided_slice %12 {offsets = [0, 32], sizes = [16, 32], strides = [1, 1]} : vector<16x96xf32> to vector<16x32xf32>
    %15 = vector.extract_strided_slice %12 {offsets = [0, 64], sizes = [16, 32], strides = [1, 1]} : vector<16x96xf32> to vector<16x32xf32>
    %c0_13 = arith.constant 0 : index
    %c0_14 = arith.constant 0 : index
    %c0_15 = arith.constant 0 : index
    %16 = vector.load %arg6[%c0_13, %c0_14, %c0_15] : memref<2x32x32xbf16, #tpu.memory_space<vmem>>, vector<1x32x32xbf16>
    %17 = vector.shape_cast %16 : vector<1x32x32xbf16> to vector<32x32xbf16>
    %c0_16 = arith.constant 0 : index
    %c0_17 = arith.constant 0 : index
    %c0_18 = arith.constant 0 : index
    %18 = vector.load %arg7[%c0_16, %c0_17, %c0_18] : memref<2x1x32xf32, #tpu.memory_space<vmem>>, vector<1x1x32xf32>
    %19 = vector.shape_cast %18 : vector<1x1x32xf32> to vector<1x32xf32>
    %20 = vector.shape_cast %13 : vector<16x32xf32> to vector<16x4x8xf32>
    %21 = tpu.transpose %20, [1, 0, 2] : vector<16x4x8xf32> -> vector<4x16x8xf32>
    %22 = vector.shape_cast %21 : vector<4x16x8xf32> to vector<64x8xf32>
    %23 = vector.shape_cast %14 : vector<16x32xf32> to vector<16x4x8xf32>
    %24 = tpu.transpose %23, [1, 0, 2] : vector<16x4x8xf32> -> vector<4x16x8xf32>
    %25 = vector.shape_cast %24 : vector<4x16x8xf32> to vector<64x8xf32>
    %26 = vector.shape_cast %15 : vector<16x32xf32> to vector<16x4x8xf32>
    %27 = tpu.transpose %26, [1, 0, 2] : vector<16x4x8xf32> -> vector<4x16x8xf32>
    %28 = vector.shape_cast %27 : vector<4x16x8xf32> to vector<64x8xf32>
    %cst_19 = arith.constant dense<0.000000e+00> : vector<64x64xf32>
    %29 = tpu.matmul %22, %25, %cst_19 {dimension_numbers = #tpu.dot_dimension_numbers<[1], [1], [0], [0], [0, 0, 1, 0], [], []>} : vector<64x8xf32>, vector<64x8xf32>, vector<64x64xf32> -> vector<64x64xf32>
    %30 = arith.addf %29, %3 : vector<64x64xf32>
    %cst_20 = arith.constant dense<0xFF800000> : vector<64xf32>
    %31 = vector.multi_reduction <maximumf>, %30, %cst_20 [1] : vector<64x64xf32> to vector<64xf32>
    %32 = vector.shape_cast %31 : vector<64xf32> to vector<64x1xf32>
    %33 = vector.broadcast %32 : vector<64x1xf32> to vector<64x64xf32>
    %34 = arith.subf %30, %33 : vector<64x64xf32>
    %35 = math.exp %34 : vector<64x64xf32>
    %cst_21 = arith.constant dense<0.000000e+00> : vector<64xf32>
    %36 = vector.multi_reduction <add>, %35, %cst_21 [1] : vector<64x64xf32> to vector<64xf32>
    %37 = vector.shape_cast %36 : vector<64xf32> to vector<64x1xf32>
    %38 = tpu.reciprocal %37 {approx = true} : vector<64x1xf32> -> vector<64x1xf32>
    %39 = vector.broadcast %38 : vector<64x1xf32> to vector<64x64xf32>
    %40 = arith.mulf %35, %39 : vector<64x64xf32>
    %cst_22 = arith.constant dense<0.000000e+00> : vector<64x8xf32>
    %41 = tpu.matmul %40, %28, %cst_22 {dimension_numbers = #tpu.dot_dimension_numbers<[1], [0], [0], [1], [0, 0, 1, 1], [], []>} : vector<64x64xf32>, vector<64x8xf32>, vector<64x8xf32> -> vector<64x8xf32>
    %42 = vector.shape_cast %41 : vector<64x8xf32> to vector<4x16x8xf32>
    %43 = tpu.transpose %42, [1, 0, 2] : vector<4x16x8xf32> -> vector<16x4x8xf32>
    %44 = vector.shape_cast %43 : vector<16x4x8xf32> to vector<16x32xf32>
    %45 = arith.truncf %44 : vector<16x32xf32> to vector<16x32xbf16>
    %cst_23 = arith.constant dense<0.000000e+00> : vector<16x32xf32>
    %46 = tpu.matmul %45, %17, %cst_23 {dimension_numbers = #tpu.dot_dimension_numbers<[1], [0], [0], [1], [0, 0, 1, 1], [], []>} : vector<16x32xbf16>, vector<32x32xbf16>, vector<16x32xf32> -> vector<16x32xf32>
    %47 = vector.broadcast %19 : vector<1x32xf32> to vector<16x32xf32>
    %48 = arith.addf %46, %47 : vector<16x32xf32>
    %49 = arith.addf %0, %48 : vector<16x32xf32>
    %c0_24 = arith.constant 0 : index
    %c0_25 = arith.constant 0 : index
    %c0_26 = arith.constant 0 : index
    %50 = vector.load %arg8[%c0_24, %c0_25, %c0_26] : memref<2x1x32xf32, #tpu.memory_space<vmem>>, vector<1x1x32xf32>
    %51 = vector.shape_cast %50 : vector<1x1x32xf32> to vector<1x32xf32>
    %c0_27 = arith.constant 0 : index
    %c0_28 = arith.constant 0 : index
    %c0_29 = arith.constant 0 : index
    %52 = vector.load %arg9[%c0_27, %c0_28, %c0_29] : memref<2x1x32xf32, #tpu.memory_space<vmem>>, vector<1x1x32xf32>
    %53 = vector.shape_cast %52 : vector<1x1x32xf32> to vector<1x32xf32>
    %cst_30 = arith.constant dense<0.000000e+00> : vector<16xf32>
    %54 = vector.multi_reduction <add>, %49, %cst_30 [1] : vector<16x32xf32> to vector<16xf32>
    %55 = vector.shape_cast %54 : vector<16xf32> to vector<16x1xf32>
    %cst_31 = arith.constant 3.200000e+01 : f32
    %56 = vector.broadcast %cst_31 : f32 to vector<16x1xf32>
    %57 = arith.divf %55, %56 : vector<16x1xf32>
    %58 = vector.broadcast %57 : vector<16x1xf32> to vector<16x32xf32>
    %59 = arith.subf %49, %58 : vector<16x32xf32>
    %60 = arith.mulf %59, %59 : vector<16x32xf32>
    %cst_32 = arith.constant dense<0.000000e+00> : vector<16xf32>
    %61 = vector.multi_reduction <add>, %60, %cst_32 [1] : vector<16x32xf32> to vector<16xf32>
    %62 = vector.shape_cast %61 : vector<16xf32> to vector<16x1xf32>
    %cst_33 = arith.constant 3.200000e+01 : f32
    %63 = vector.broadcast %cst_33 : f32 to vector<16x1xf32>
    %64 = arith.divf %62, %63 : vector<16x1xf32>
    %cst_34 = arith.constant 9.99999974E-6 : f32
    %65 = vector.broadcast %cst_34 : f32 to vector<16x1xf32>
    %66 = arith.addf %64, %65 : vector<16x1xf32>
    %67 = math.rsqrt %66 : vector<16x1xf32>
    %68 = vector.broadcast %67 : vector<16x1xf32> to vector<16x32xf32>
    %69 = arith.mulf %59, %68 : vector<16x32xf32>
    %70 = vector.broadcast %51 : vector<1x32xf32> to vector<16x32xf32>
    %71 = arith.mulf %69, %70 : vector<16x32xf32>
    %72 = vector.broadcast %53 : vector<1x32xf32> to vector<16x32xf32>
    %73 = arith.addf %71, %72 : vector<16x32xf32>
    %74 = arith.truncf %73 : vector<16x32xf32> to vector<16x32xbf16>
    %c0_35 = arith.constant 0 : index
    %c0_36 = arith.constant 0 : index
    %c0_37 = arith.constant 0 : index
    %75 = vector.load %arg10[%c0_35, %c0_36, %c0_37] : memref<2x32x32xbf16, #tpu.memory_space<vmem>>, vector<1x32x32xbf16>
    %76 = vector.shape_cast %75 : vector<1x32x32xbf16> to vector<32x32xbf16>
    %cst_38 = arith.constant dense<0.000000e+00> : vector<16x32xf32>
    %77 = tpu.matmul %74, %76, %cst_38 {dimension_numbers = #tpu.dot_dimension_numbers<[1], [0], [0], [1], [0, 0, 1, 1], [], []>} : vector<16x32xbf16>, vector<32x32xbf16>, vector<16x32xf32> -> vector<16x32xf32>
    %c0_39 = arith.constant 0 : index
    %c0_40 = arith.constant 0 : index
    %c0_41 = arith.constant 0 : index
    %78 = vector.load %arg11[%c0_39, %c0_40, %c0_41] : memref<2x1x32xf32, #tpu.memory_space<vmem>>, vector<1x1x32xf32>
    %79 = vector.shape_cast %78 : vector<1x1x32xf32> to vector<1x32xf32>
    %80 = vector.broadcast %79 : vector<1x32xf32> to vector<16x32xf32>
    %81 = arith.addf %77, %80 : vector<16x32xf32>
    %c0_42 = arith.constant 0 : index
    %c0_43 = arith.constant 0 : index
    %c0_44 = arith.constant 0 : index
    %82 = vector.load %arg12[%c0_42, %c0_43, %c0_44] : memref<2x32x64xbf16, #tpu.memory_space<vmem>>, vector<1x32x64xbf16>
    %83 = vector.shape_cast %82 : vector<1x32x64xbf16> to vector<32x64xbf16>
    %cst_45 = arith.constant dense<0.000000e+00> : vector<20x64xf32>
    %84 = tpu.matmul %2, %83, %cst_45 {dimension_numbers = #tpu.dot_dimension_numbers<[1], [0], [0], [1], [0, 0, 1, 1], [], []>} : vector<20x32xbf16>, vector<32x64xbf16>, vector<20x64xf32> -> vector<20x64xf32>
    %c0_46 = arith.constant 0 : index
    %c0_47 = arith.constant 0 : index
    %c0_48 = arith.constant 0 : index
    %85 = vector.load %arg13[%c0_46, %c0_47, %c0_48] : memref<2x1x64xf32, #tpu.memory_space<vmem>>, vector<1x1x64xf32>
    %86 = vector.shape_cast %85 : vector<1x1x64xf32> to vector<1x64xf32>
    %87 = vector.broadcast %86 : vector<1x64xf32> to vector<20x64xf32>
    %88 = arith.addf %84, %87 : vector<20x64xf32>
    %89 = vector.extract_strided_slice %88 {offsets = [0, 0], sizes = [20, 32], strides = [1, 1]} : vector<20x64xf32> to vector<20x32xf32>
    %90 = vector.extract_strided_slice %88 {offsets = [0, 32], sizes = [20, 32], strides = [1, 1]} : vector<20x64xf32> to vector<20x32xf32>
    %c0_49 = arith.constant 0 : index
    %c0_50 = arith.constant 0 : index
    %c0_51 = arith.constant 0 : index
    %91 = vector.load %arg14[%c0_49, %c0_50, %c0_51] : memref<2x32x32xbf16, #tpu.memory_space<vmem>>, vector<1x32x32xbf16>
    %92 = vector.shape_cast %91 : vector<1x32x32xbf16> to vector<32x32xbf16>
    %c0_52 = arith.constant 0 : index
    %c0_53 = arith.constant 0 : index
    %c0_54 = arith.constant 0 : index
    %93 = vector.load %arg15[%c0_52, %c0_53, %c0_54] : memref<2x1x32xf32, #tpu.memory_space<vmem>>, vector<1x1x32xf32>
    %94 = vector.shape_cast %93 : vector<1x1x32xf32> to vector<1x32xf32>
    %95 = vector.shape_cast %81 : vector<16x32xf32> to vector<16x4x8xf32>
    %96 = tpu.transpose %95, [1, 0, 2] : vector<16x4x8xf32> -> vector<4x16x8xf32>
    %97 = vector.shape_cast %96 : vector<4x16x8xf32> to vector<64x8xf32>
    %98 = vector.shape_cast %89 : vector<20x32xf32> to vector<20x4x8xf32>
    %99 = tpu.transpose %98, [1, 0, 2] : vector<20x4x8xf32> -> vector<4x20x8xf32>
    %100 = vector.shape_cast %99 : vector<4x20x8xf32> to vector<80x8xf32>
    %101 = vector.shape_cast %90 : vector<20x32xf32> to vector<20x4x8xf32>
    %102 = tpu.transpose %101, [1, 0, 2] : vector<20x4x8xf32> -> vector<4x20x8xf32>
    %103 = vector.shape_cast %102 : vector<4x20x8xf32> to vector<80x8xf32>
    %cst_55 = arith.constant dense<0.000000e+00> : vector<64x80xf32>
    %104 = tpu.matmul %97, %100, %cst_55 {dimension_numbers = #tpu.dot_dimension_numbers<[1], [1], [0], [0], [0, 0, 1, 0], [], []>} : vector<64x8xf32>, vector<80x8xf32>, vector<64x80xf32> -> vector<64x80xf32>
    %105 = arith.addf %104, %4 : vector<64x80xf32>
    %cst_56 = arith.constant dense<0xFF800000> : vector<64xf32>
    %106 = vector.multi_reduction <maximumf>, %105, %cst_56 [1] : vector<64x80xf32> to vector<64xf32>
    %107 = vector.shape_cast %106 : vector<64xf32> to vector<64x1xf32>
    %108 = vector.broadcast %107 : vector<64x1xf32> to vector<64x80xf32>
    %109 = arith.subf %105, %108 : vector<64x80xf32>
    %110 = math.exp %109 : vector<64x80xf32>
    %cst_57 = arith.constant dense<0.000000e+00> : vector<64xf32>
    %111 = vector.multi_reduction <add>, %110, %cst_57 [1] : vector<64x80xf32> to vector<64xf32>
    %112 = vector.shape_cast %111 : vector<64xf32> to vector<64x1xf32>
    %113 = tpu.reciprocal %112 {approx = true} : vector<64x1xf32> -> vector<64x1xf32>
    %114 = vector.broadcast %113 : vector<64x1xf32> to vector<64x80xf32>
    %115 = arith.mulf %110, %114 : vector<64x80xf32>
    %cst_58 = arith.constant dense<0.000000e+00> : vector<64x8xf32>
    %116 = tpu.matmul %115, %103, %cst_58 {dimension_numbers = #tpu.dot_dimension_numbers<[1], [0], [0], [1], [0, 0, 1, 1], [], []>} : vector<64x80xf32>, vector<80x8xf32>, vector<64x8xf32> -> vector<64x8xf32>
    %117 = vector.shape_cast %116 : vector<64x8xf32> to vector<4x16x8xf32>
    %118 = tpu.transpose %117, [1, 0, 2] : vector<4x16x8xf32> -> vector<16x4x8xf32>
    %119 = vector.shape_cast %118 : vector<16x4x8xf32> to vector<16x32xf32>
    %120 = arith.truncf %119 : vector<16x32xf32> to vector<16x32xbf16>
    %cst_59 = arith.constant dense<0.000000e+00> : vector<16x32xf32>
    %121 = tpu.matmul %120, %92, %cst_59 {dimension_numbers = #tpu.dot_dimension_numbers<[1], [0], [0], [1], [0, 0, 1, 1], [], []>} : vector<16x32xbf16>, vector<32x32xbf16>, vector<16x32xf32> -> vector<16x32xf32>
    %122 = vector.broadcast %94 : vector<1x32xf32> to vector<16x32xf32>
    %123 = arith.addf %121, %122 : vector<16x32xf32>
    %124 = arith.addf %73, %123 : vector<16x32xf32>
    %c0_60 = arith.constant 0 : index
    %c0_61 = arith.constant 0 : index
    %c0_62 = arith.constant 0 : index
    %125 = vector.load %arg16[%c0_60, %c0_61, %c0_62] : memref<2x1x32xf32, #tpu.memory_space<vmem>>, vector<1x1x32xf32>
    %126 = vector.shape_cast %125 : vector<1x1x32xf32> to vector<1x32xf32>
    %c0_63 = arith.constant 0 : index
    %c0_64 = arith.constant 0 : index
    %c0_65 = arith.constant 0 : index
    %127 = vector.load %arg17[%c0_63, %c0_64, %c0_65] : memref<2x1x32xf32, #tpu.memory_space<vmem>>, vector<1x1x32xf32>
    %128 = vector.shape_cast %127 : vector<1x1x32xf32> to vector<1x32xf32>
    %cst_66 = arith.constant dense<0.000000e+00> : vector<16xf32>
    %129 = vector.multi_reduction <add>, %124, %cst_66 [1] : vector<16x32xf32> to vector<16xf32>
    %130 = vector.shape_cast %129 : vector<16xf32> to vector<16x1xf32>
    %cst_67 = arith.constant 3.200000e+01 : f32
    %131 = vector.broadcast %cst_67 : f32 to vector<16x1xf32>
    %132 = arith.divf %130, %131 : vector<16x1xf32>
    %133 = vector.broadcast %132 : vector<16x1xf32> to vector<16x32xf32>
    %134 = arith.subf %124, %133 : vector<16x32xf32>
    %135 = arith.mulf %134, %134 : vector<16x32xf32>
    %cst_68 = arith.constant dense<0.000000e+00> : vector<16xf32>
    %136 = vector.multi_reduction <add>, %135, %cst_68 [1] : vector<16x32xf32> to vector<16xf32>
    %137 = vector.shape_cast %136 : vector<16xf32> to vector<16x1xf32>
    %cst_69 = arith.constant 3.200000e+01 : f32
    %138 = vector.broadcast %cst_69 : f32 to vector<16x1xf32>
    %139 = arith.divf %137, %138 : vector<16x1xf32>
    %cst_70 = arith.constant 9.99999974E-6 : f32
    %140 = vector.broadcast %cst_70 : f32 to vector<16x1xf32>
    %141 = arith.addf %139, %140 : vector<16x1xf32>
    %142 = math.rsqrt %141 : vector<16x1xf32>
    %143 = vector.broadcast %142 : vector<16x1xf32> to vector<16x32xf32>
    %144 = arith.mulf %134, %143 : vector<16x32xf32>
    %145 = vector.broadcast %126 : vector<1x32xf32> to vector<16x32xf32>
    %146 = arith.mulf %144, %145 : vector<16x32xf32>
    %147 = vector.broadcast %128 : vector<1x32xf32> to vector<16x32xf32>
    %148 = arith.addf %146, %147 : vector<16x32xf32>
    %149 = arith.truncf %148 : vector<16x32xf32> to vector<16x32xbf16>
    %c0_71 = arith.constant 0 : index
    %c0_72 = arith.constant 0 : index
    %c0_73 = arith.constant 0 : index
    %150 = vector.load %arg18[%c0_71, %c0_72, %c0_73] : memref<2x32x64xbf16, #tpu.memory_space<vmem>>, vector<1x32x64xbf16>
    %151 = vector.shape_cast %150 : vector<1x32x64xbf16> to vector<32x64xbf16>
    %cst_74 = arith.constant dense<0.000000e+00> : vector<16x64xf32>
    %152 = tpu.matmul %149, %151, %cst_74 {dimension_numbers = #tpu.dot_dimension_numbers<[1], [0], [0], [1], [0, 0, 1, 1], [], []>} : vector<16x32xbf16>, vector<32x64xbf16>, vector<16x64xf32> -> vector<16x64xf32>
    %c0_75 = arith.constant 0 : index
    %c0_76 = arith.constant 0 : index
    %c0_77 = arith.constant 0 : index
    %153 = vector.load %arg19[%c0_75, %c0_76, %c0_77] : memref<2x1x64xf32, #tpu.memory_space<vmem>>, vector<1x1x64xf32>
    %154 = vector.shape_cast %153 : vector<1x1x64xf32> to vector<1x64xf32>
    %155 = vector.broadcast %154 : vector<1x64xf32> to vector<16x64xf32>
    %156 = arith.addf %152, %155 : vector<16x64xf32>
    %cst_78 = arith.constant 0.000000e+00 : f32
    %157 = vector.broadcast %cst_78 : f32 to vector<16x64xf32>
    %158 = arith.maximumf %156, %157 : vector<16x64xf32>
    %159 = arith.truncf %158 : vector<16x64xf32> to vector<16x64xbf16>
    %c0_79 = arith.constant 0 : index
    %c0_80 = arith.constant 0 : index
    %c0_81 = arith.constant 0 : index
    %160 = vector.load %arg20[%c0_79, %c0_80, %c0_81] : memref<2x64x32xbf16, #tpu.memory_space<vmem>>, vector<1x64x32xbf16>
    %161 = vector.shape_cast %160 : vector<1x64x32xbf16> to vector<64x32xbf16>
    %cst_82 = arith.constant dense<0.000000e+00> : vector<16x32xf32>
    %162 = tpu.matmul %159, %161, %cst_82 {dimension_numbers = #tpu.dot_dimension_numbers<[1], [0], [0], [1], [0, 0, 1, 1], [], []>} : vector<16x64xbf16>, vector<64x32xbf16>, vector<16x32xf32> -> vector<16x32xf32>
    %c0_83 = arith.constant 0 : index
    %c0_84 = arith.constant 0 : index
    %c0_85 = arith.constant 0 : index
    %163 = vector.load %arg21[%c0_83, %c0_84, %c0_85] : memref<2x1x32xf32, #tpu.memory_space<vmem>>, vector<1x1x32xf32>
    %164 = vector.shape_cast %163 : vector<1x1x32xf32> to vector<1x32xf32>
    %165 = vector.broadcast %164 : vector<1x32xf32> to vector<16x32xf32>
    %166 = arith.addf %162, %165 : vector<16x32xf32>
    %167 = arith.addf %148, %166 : vector<16x32xf32>
    %c0_86 = arith.constant 0 : index
    %c0_87 = arith.constant 0 : index
    %c0_88 = arith.constant 0 : index
    %168 = vector.load %arg22[%c0_86, %c0_87, %c0_88] : memref<2x1x32xf32, #tpu.memory_space<vmem>>, vector<1x1x32xf32>
    %169 = vector.shape_cast %168 : vector<1x1x32xf32> to vector<1x32xf32>
    %c0_89 = arith.constant 0 : index
    %c0_90 = arith.constant 0 : index
    %c0_91 = arith.constant 0 : index
    %170 = vector.load %arg23[%c0_89, %c0_90, %c0_91] : memref<2x1x32xf32, #tpu.memory_space<vmem>>, vector<1x1x32xf32>
    %171 = vector.shape_cast %170 : vector<1x1x32xf32> to vector<1x32xf32>
    %cst_92 = arith.constant dense<0.000000e+00> : vector<16xf32>
    %172 = vector.multi_reduction <add>, %167, %cst_92 [1] : vector<16x32xf32> to vector<16xf32>
    %173 = vector.shape_cast %172 : vector<16xf32> to vector<16x1xf32>
    %cst_93 = arith.constant 3.200000e+01 : f32
    %174 = vector.broadcast %cst_93 : f32 to vector<16x1xf32>
    %175 = arith.divf %173, %174 : vector<16x1xf32>
    %176 = vector.broadcast %175 : vector<16x1xf32> to vector<16x32xf32>
    %177 = arith.subf %167, %176 : vector<16x32xf32>
    %178 = arith.mulf %177, %177 : vector<16x32xf32>
    %cst_94 = arith.constant dense<0.000000e+00> : vector<16xf32>
    %179 = vector.multi_reduction <add>, %178, %cst_94 [1] : vector<16x32xf32> to vector<16xf32>
    %180 = vector.shape_cast %179 : vector<16xf32> to vector<16x1xf32>
    %cst_95 = arith.constant 3.200000e+01 : f32
    %181 = vector.broadcast %cst_95 : f32 to vector<16x1xf32>
    %182 = arith.divf %180, %181 : vector<16x1xf32>
    %cst_96 = arith.constant 9.99999974E-6 : f32
    %183 = vector.broadcast %cst_96 : f32 to vector<16x1xf32>
    %184 = arith.addf %182, %183 : vector<16x1xf32>
    %185 = math.rsqrt %184 : vector<16x1xf32>
    %186 = vector.broadcast %185 : vector<16x1xf32> to vector<16x32xf32>
    %187 = arith.mulf %177, %186 : vector<16x32xf32>
    %188 = vector.broadcast %169 : vector<1x32xf32> to vector<16x32xf32>
    %189 = arith.mulf %187, %188 : vector<16x32xf32>
    %190 = vector.broadcast %171 : vector<1x32xf32> to vector<16x32xf32>
    %191 = arith.addf %189, %190 : vector<16x32xf32>
    %192 = arith.truncf %191 : vector<16x32xf32> to vector<16x32xbf16>
    %c1 = arith.constant 1 : index
    %c0_97 = arith.constant 0 : index
    %c0_98 = arith.constant 0 : index
    %193 = vector.load %arg4[%c1, %c0_97, %c0_98] : memref<2x32x96xbf16, #tpu.memory_space<vmem>>, vector<1x32x96xbf16>
    %194 = vector.shape_cast %193 : vector<1x32x96xbf16> to vector<32x96xbf16>
    %cst_99 = arith.constant dense<0.000000e+00> : vector<16x96xf32>
    %195 = tpu.matmul %192, %194, %cst_99 {dimension_numbers = #tpu.dot_dimension_numbers<[1], [0], [0], [1], [0, 0, 1, 1], [], []>} : vector<16x32xbf16>, vector<32x96xbf16>, vector<16x96xf32> -> vector<16x96xf32>
    %c1_100 = arith.constant 1 : index
    %c0_101 = arith.constant 0 : index
    %c0_102 = arith.constant 0 : index
    %196 = vector.load %arg5[%c1_100, %c0_101, %c0_102] : memref<2x1x96xf32, #tpu.memory_space<vmem>>, vector<1x1x96xf32>
    %197 = vector.shape_cast %196 : vector<1x1x96xf32> to vector<1x96xf32>
    %198 = vector.broadcast %197 : vector<1x96xf32> to vector<16x96xf32>
    %199 = arith.addf %195, %198 : vector<16x96xf32>
    %200 = vector.extract_strided_slice %199 {offsets = [0, 0], sizes = [16, 32], strides = [1, 1]} : vector<16x96xf32> to vector<16x32xf32>
    %201 = vector.extract_strided_slice %199 {offsets = [0, 32], sizes = [16, 32], strides = [1, 1]} : vector<16x96xf32> to vector<16x32xf32>
    %202 = vector.extract_strided_slice %199 {offsets = [0, 64], sizes = [16, 32], strides = [1, 1]} : vector<16x96xf32> to vector<16x32xf32>
    %c1_103 = arith.constant 1 : index
    %c0_104 = arith.constant 0 : index
    %c0_105 = arith.constant 0 : index
    %203 = vector.load %arg6[%c1_103, %c0_104, %c0_105] : memref<2x32x32xbf16, #tpu.memory_space<vmem>>, vector<1x32x32xbf16>
    %204 = vector.shape_cast %203 : vector<1x32x32xbf16> to vector<32x32xbf16>
    %c1_106 = arith.constant 1 : index
    %c0_107 = arith.constant 0 : index
    %c0_108 = arith.constant 0 : index
    %205 = vector.load %arg7[%c1_106, %c0_107, %c0_108] : memref<2x1x32xf32, #tpu.memory_space<vmem>>, vector<1x1x32xf32>
    %206 = vector.shape_cast %205 : vector<1x1x32xf32> to vector<1x32xf32>
    %207 = vector.shape_cast %200 : vector<16x32xf32> to vector<16x4x8xf32>
    %208 = tpu.transpose %207, [1, 0, 2] : vector<16x4x8xf32> -> vector<4x16x8xf32>
    %209 = vector.shape_cast %208 : vector<4x16x8xf32> to vector<64x8xf32>
    %210 = vector.shape_cast %201 : vector<16x32xf32> to vector<16x4x8xf32>
    %211 = tpu.transpose %210, [1, 0, 2] : vector<16x4x8xf32> -> vector<4x16x8xf32>
    %212 = vector.shape_cast %211 : vector<4x16x8xf32> to vector<64x8xf32>
    %213 = vector.shape_cast %202 : vector<16x32xf32> to vector<16x4x8xf32>
    %214 = tpu.transpose %213, [1, 0, 2] : vector<16x4x8xf32> -> vector<4x16x8xf32>
    %215 = vector.shape_cast %214 : vector<4x16x8xf32> to vector<64x8xf32>
    %cst_109 = arith.constant dense<0.000000e+00> : vector<64x64xf32>
    %216 = tpu.matmul %209, %212, %cst_109 {dimension_numbers = #tpu.dot_dimension_numbers<[1], [1], [0], [0], [0, 0, 1, 0], [], []>} : vector<64x8xf32>, vector<64x8xf32>, vector<64x64xf32> -> vector<64x64xf32>
    %217 = arith.addf %216, %3 : vector<64x64xf32>
    %cst_110 = arith.constant dense<0xFF800000> : vector<64xf32>
    %218 = vector.multi_reduction <maximumf>, %217, %cst_110 [1] : vector<64x64xf32> to vector<64xf32>
    %219 = vector.shape_cast %218 : vector<64xf32> to vector<64x1xf32>
    %220 = vector.broadcast %219 : vector<64x1xf32> to vector<64x64xf32>
    %221 = arith.subf %217, %220 : vector<64x64xf32>
    %222 = math.exp %221 : vector<64x64xf32>
    %cst_111 = arith.constant dense<0.000000e+00> : vector<64xf32>
    %223 = vector.multi_reduction <add>, %222, %cst_111 [1] : vector<64x64xf32> to vector<64xf32>
    %224 = vector.shape_cast %223 : vector<64xf32> to vector<64x1xf32>
    %225 = tpu.reciprocal %224 {approx = true} : vector<64x1xf32> -> vector<64x1xf32>
    %226 = vector.broadcast %225 : vector<64x1xf32> to vector<64x64xf32>
    %227 = arith.mulf %222, %226 : vector<64x64xf32>
    %cst_112 = arith.constant dense<0.000000e+00> : vector<64x8xf32>
    %228 = tpu.matmul %227, %215, %cst_112 {dimension_numbers = #tpu.dot_dimension_numbers<[1], [0], [0], [1], [0, 0, 1, 1], [], []>} : vector<64x64xf32>, vector<64x8xf32>, vector<64x8xf32> -> vector<64x8xf32>
    %229 = vector.shape_cast %228 : vector<64x8xf32> to vector<4x16x8xf32>
    %230 = tpu.transpose %229, [1, 0, 2] : vector<4x16x8xf32> -> vector<16x4x8xf32>
    %231 = vector.shape_cast %230 : vector<16x4x8xf32> to vector<16x32xf32>
    %232 = arith.truncf %231 : vector<16x32xf32> to vector<16x32xbf16>
    %cst_113 = arith.constant dense<0.000000e+00> : vector<16x32xf32>
    %233 = tpu.matmul %232, %204, %cst_113 {dimension_numbers = #tpu.dot_dimension_numbers<[1], [0], [0], [1], [0, 0, 1, 1], [], []>} : vector<16x32xbf16>, vector<32x32xbf16>, vector<16x32xf32> -> vector<16x32xf32>
    %234 = vector.broadcast %206 : vector<1x32xf32> to vector<16x32xf32>
    %235 = arith.addf %233, %234 : vector<16x32xf32>
    %236 = arith.addf %191, %235 : vector<16x32xf32>
    %c1_114 = arith.constant 1 : index
    %c0_115 = arith.constant 0 : index
    %c0_116 = arith.constant 0 : index
    %237 = vector.load %arg8[%c1_114, %c0_115, %c0_116] : memref<2x1x32xf32, #tpu.memory_space<vmem>>, vector<1x1x32xf32>
    %238 = vector.shape_cast %237 : vector<1x1x32xf32> to vector<1x32xf32>
    %c1_117 = arith.constant 1 : index
    %c0_118 = arith.constant 0 : index
    %c0_119 = arith.constant 0 : index
    %239 = vector.load %arg9[%c1_117, %c0_118, %c0_119] : memref<2x1x32xf32, #tpu.memory_space<vmem>>, vector<1x1x32xf32>
    %240 = vector.shape_cast %239 : vector<1x1x32xf32> to vector<1x32xf32>
    %cst_120 = arith.constant dense<0.000000e+00> : vector<16xf32>
    %241 = vector.multi_reduction <add>, %236, %cst_120 [1] : vector<16x32xf32> to vector<16xf32>
    %242 = vector.shape_cast %241 : vector<16xf32> to vector<16x1xf32>
    %cst_121 = arith.constant 3.200000e+01 : f32
    %243 = vector.broadcast %cst_121 : f32 to vector<16x1xf32>
    %244 = arith.divf %242, %243 : vector<16x1xf32>
    %245 = vector.broadcast %244 : vector<16x1xf32> to vector<16x32xf32>
    %246 = arith.subf %236, %245 : vector<16x32xf32>
    %247 = arith.mulf %246, %246 : vector<16x32xf32>
    %cst_122 = arith.constant dense<0.000000e+00> : vector<16xf32>
    %248 = vector.multi_reduction <add>, %247, %cst_122 [1] : vector<16x32xf32> to vector<16xf32>
    %249 = vector.shape_cast %248 : vector<16xf32> to vector<16x1xf32>
    %cst_123 = arith.constant 3.200000e+01 : f32
    %250 = vector.broadcast %cst_123 : f32 to vector<16x1xf32>
    %251 = arith.divf %249, %250 : vector<16x1xf32>
    %cst_124 = arith.constant 9.99999974E-6 : f32
    %252 = vector.broadcast %cst_124 : f32 to vector<16x1xf32>
    %253 = arith.addf %251, %252 : vector<16x1xf32>
    %254 = math.rsqrt %253 : vector<16x1xf32>
    %255 = vector.broadcast %254 : vector<16x1xf32> to vector<16x32xf32>
    %256 = arith.mulf %246, %255 : vector<16x32xf32>
    %257 = vector.broadcast %238 : vector<1x32xf32> to vector<16x32xf32>
    %258 = arith.mulf %256, %257 : vector<16x32xf32>
    %259 = vector.broadcast %240 : vector<1x32xf32> to vector<16x32xf32>
    %260 = arith.addf %258, %259 : vector<16x32xf32>
    %261 = arith.truncf %260 : vector<16x32xf32> to vector<16x32xbf16>
    %c1_125 = arith.constant 1 : index
    %c0_126 = arith.constant 0 : index
    %c0_127 = arith.constant 0 : index
    %262 = vector.load %arg10[%c1_125, %c0_126, %c0_127] : memref<2x32x32xbf16, #tpu.memory_space<vmem>>, vector<1x32x32xbf16>
    %263 = vector.shape_cast %262 : vector<1x32x32xbf16> to vector<32x32xbf16>
    %cst_128 = arith.constant dense<0.000000e+00> : vector<16x32xf32>
    %264 = tpu.matmul %261, %263, %cst_128 {dimension_numbers = #tpu.dot_dimension_numbers<[1], [0], [0], [1], [0, 0, 1, 1], [], []>} : vector<16x32xbf16>, vector<32x32xbf16>, vector<16x32xf32> -> vector<16x32xf32>
    %c1_129 = arith.constant 1 : index
    %c0_130 = arith.constant 0 : index
    %c0_131 = arith.constant 0 : index
    %265 = vector.load %arg11[%c1_129, %c0_130, %c0_131] : memref<2x1x32xf32, #tpu.memory_space<vmem>>, vector<1x1x32xf32>
    %266 = vector.shape_cast %265 : vector<1x1x32xf32> to vector<1x32xf32>
    %267 = vector.broadcast %266 : vector<1x32xf32> to vector<16x32xf32>
    %268 = arith.addf %264, %267 : vector<16x32xf32>
    %c1_132 = arith.constant 1 : index
    %c0_133 = arith.constant 0 : index
    %c0_134 = arith.constant 0 : index
    %269 = vector.load %arg12[%c1_132, %c0_133, %c0_134] : memref<2x32x64xbf16, #tpu.memory_space<vmem>>, vector<1x32x64xbf16>
    %270 = vector.shape_cast %269 : vector<1x32x64xbf16> to vector<32x64xbf16>
    %cst_135 = arith.constant dense<0.000000e+00> : vector<20x64xf32>
    %271 = tpu.matmul %2, %270, %cst_135 {dimension_numbers = #tpu.dot_dimension_numbers<[1], [0], [0], [1], [0, 0, 1, 1], [], []>} : vector<20x32xbf16>, vector<32x64xbf16>, vector<20x64xf32> -> vector<20x64xf32>
    %c1_136 = arith.constant 1 : index
    %c0_137 = arith.constant 0 : index
    %c0_138 = arith.constant 0 : index
    %272 = vector.load %arg13[%c1_136, %c0_137, %c0_138] : memref<2x1x64xf32, #tpu.memory_space<vmem>>, vector<1x1x64xf32>
    %273 = vector.shape_cast %272 : vector<1x1x64xf32> to vector<1x64xf32>
    %274 = vector.broadcast %273 : vector<1x64xf32> to vector<20x64xf32>
    %275 = arith.addf %271, %274 : vector<20x64xf32>
    %276 = vector.extract_strided_slice %275 {offsets = [0, 0], sizes = [20, 32], strides = [1, 1]} : vector<20x64xf32> to vector<20x32xf32>
    %277 = vector.extract_strided_slice %275 {offsets = [0, 32], sizes = [20, 32], strides = [1, 1]} : vector<20x64xf32> to vector<20x32xf32>
    %c1_139 = arith.constant 1 : index
    %c0_140 = arith.constant 0 : index
    %c0_141 = arith.constant 0 : index
    %278 = vector.load %arg14[%c1_139, %c0_140, %c0_141] : memref<2x32x32xbf16, #tpu.memory_space<vmem>>, vector<1x32x32xbf16>
    %279 = vector.shape_cast %278 : vector<1x32x32xbf16> to vector<32x32xbf16>
    %c1_142 = arith.constant 1 : index
    %c0_143 = arith.constant 0 : index
    %c0_144 = arith.constant 0 : index
    %280 = vector.load %arg15[%c1_142, %c0_143, %c0_144] : memref<2x1x32xf32, #tpu.memory_space<vmem>>, vector<1x1x32xf32>
    %281 = vector.shape_cast %280 : vector<1x1x32xf32> to vector<1x32xf32>
    %282 = vector.shape_cast %268 : vector<16x32xf32> to vector<16x4x8xf32>
    %283 = tpu.transpose %282, [1, 0, 2] : vector<16x4x8xf32> -> vector<4x16x8xf32>
    %284 = vector.shape_cast %283 : vector<4x16x8xf32> to vector<64x8xf32>
    %285 = vector.shape_cast %276 : vector<20x32xf32> to vector<20x4x8xf32>
    %286 = tpu.transpose %285, [1, 0, 2] : vector<20x4x8xf32> -> vector<4x20x8xf32>
    %287 = vector.shape_cast %286 : vector<4x20x8xf32> to vector<80x8xf32>
    %288 = vector.shape_cast %277 : vector<20x32xf32> to vector<20x4x8xf32>
    %289 = tpu.transpose %288, [1, 0, 2] : vector<20x4x8xf32> -> vector<4x20x8xf32>
    %290 = vector.shape_cast %289 : vector<4x20x8xf32> to vector<80x8xf32>
    %cst_145 = arith.constant dense<0.000000e+00> : vector<64x80xf32>
    %291 = tpu.matmul %284, %287, %cst_145 {dimension_numbers = #tpu.dot_dimension_numbers<[1], [1], [0], [0], [0, 0, 1, 0], [], []>} : vector<64x8xf32>, vector<80x8xf32>, vector<64x80xf32> -> vector<64x80xf32>
    %292 = arith.addf %291, %4 : vector<64x80xf32>
    %cst_146 = arith.constant dense<0xFF800000> : vector<64xf32>
    %293 = vector.multi_reduction <maximumf>, %292, %cst_146 [1] : vector<64x80xf32> to vector<64xf32>
    %294 = vector.shape_cast %293 : vector<64xf32> to vector<64x1xf32>
    %295 = vector.broadcast %294 : vector<64x1xf32> to vector<64x80xf32>
    %296 = arith.subf %292, %295 : vector<64x80xf32>
    %297 = math.exp %296 : vector<64x80xf32>
    %cst_147 = arith.constant dense<0.000000e+00> : vector<64xf32>
    %298 = vector.multi_reduction <add>, %297, %cst_147 [1] : vector<64x80xf32> to vector<64xf32>
    %299 = vector.shape_cast %298 : vector<64xf32> to vector<64x1xf32>
    %300 = tpu.reciprocal %299 {approx = true} : vector<64x1xf32> -> vector<64x1xf32>
    %301 = vector.broadcast %300 : vector<64x1xf32> to vector<64x80xf32>
    %302 = arith.mulf %297, %301 : vector<64x80xf32>
    %cst_148 = arith.constant dense<0.000000e+00> : vector<64x8xf32>
    %303 = tpu.matmul %302, %290, %cst_148 {dimension_numbers = #tpu.dot_dimension_numbers<[1], [0], [0], [1], [0, 0, 1, 1], [], []>} : vector<64x80xf32>, vector<80x8xf32>, vector<64x8xf32> -> vector<64x8xf32>
    %304 = vector.shape_cast %303 : vector<64x8xf32> to vector<4x16x8xf32>
    %305 = tpu.transpose %304, [1, 0, 2] : vector<4x16x8xf32> -> vector<16x4x8xf32>
    %306 = vector.shape_cast %305 : vector<16x4x8xf32> to vector<16x32xf32>
    %307 = arith.truncf %306 : vector<16x32xf32> to vector<16x32xbf16>
    %cst_149 = arith.constant dense<0.000000e+00> : vector<16x32xf32>
    %308 = tpu.matmul %307, %279, %cst_149 {dimension_numbers = #tpu.dot_dimension_numbers<[1], [0], [0], [1], [0, 0, 1, 1], [], []>} : vector<16x32xbf16>, vector<32x32xbf16>, vector<16x32xf32> -> vector<16x32xf32>
    %309 = vector.broadcast %281 : vector<1x32xf32> to vector<16x32xf32>
    %310 = arith.addf %308, %309 : vector<16x32xf32>
    %311 = arith.addf %260, %310 : vector<16x32xf32>
    %c1_150 = arith.constant 1 : index
    %c0_151 = arith.constant 0 : index
    %c0_152 = arith.constant 0 : index
    %312 = vector.load %arg16[%c1_150, %c0_151, %c0_152] : memref<2x1x32xf32, #tpu.memory_space<vmem>>, vector<1x1x32xf32>
    %313 = vector.shape_cast %312 : vector<1x1x32xf32> to vector<1x32xf32>
    %c1_153 = arith.constant 1 : index
    %c0_154 = arith.constant 0 : index
    %c0_155 = arith.constant 0 : index
    %314 = vector.load %arg17[%c1_153, %c0_154, %c0_155] : memref<2x1x32xf32, #tpu.memory_space<vmem>>, vector<1x1x32xf32>
    %315 = vector.shape_cast %314 : vector<1x1x32xf32> to vector<1x32xf32>
    %cst_156 = arith.constant dense<0.000000e+00> : vector<16xf32>
    %316 = vector.multi_reduction <add>, %311, %cst_156 [1] : vector<16x32xf32> to vector<16xf32>
    %317 = vector.shape_cast %316 : vector<16xf32> to vector<16x1xf32>
    %cst_157 = arith.constant 3.200000e+01 : f32
    %318 = vector.broadcast %cst_157 : f32 to vector<16x1xf32>
    %319 = arith.divf %317, %318 : vector<16x1xf32>
    %320 = vector.broadcast %319 : vector<16x1xf32> to vector<16x32xf32>
    %321 = arith.subf %311, %320 : vector<16x32xf32>
    %322 = arith.mulf %321, %321 : vector<16x32xf32>
    %cst_158 = arith.constant dense<0.000000e+00> : vector<16xf32>
    %323 = vector.multi_reduction <add>, %322, %cst_158 [1] : vector<16x32xf32> to vector<16xf32>
    %324 = vector.shape_cast %323 : vector<16xf32> to vector<16x1xf32>
    %cst_159 = arith.constant 3.200000e+01 : f32
    %325 = vector.broadcast %cst_159 : f32 to vector<16x1xf32>
    %326 = arith.divf %324, %325 : vector<16x1xf32>
    %cst_160 = arith.constant 9.99999974E-6 : f32
    %327 = vector.broadcast %cst_160 : f32 to vector<16x1xf32>
    %328 = arith.addf %326, %327 : vector<16x1xf32>
    %329 = math.rsqrt %328 : vector<16x1xf32>
    %330 = vector.broadcast %329 : vector<16x1xf32> to vector<16x32xf32>
    %331 = arith.mulf %321, %330 : vector<16x32xf32>
    %332 = vector.broadcast %313 : vector<1x32xf32> to vector<16x32xf32>
    %333 = arith.mulf %331, %332 : vector<16x32xf32>
    %334 = vector.broadcast %315 : vector<1x32xf32> to vector<16x32xf32>
    %335 = arith.addf %333, %334 : vector<16x32xf32>
    %336 = arith.truncf %335 : vector<16x32xf32> to vector<16x32xbf16>
    %c1_161 = arith.constant 1 : index
    %c0_162 = arith.constant 0 : index
    %c0_163 = arith.constant 0 : index
    %337 = vector.load %arg18[%c1_161, %c0_162, %c0_163] : memref<2x32x64xbf16, #tpu.memory_space<vmem>>, vector<1x32x64xbf16>
    %338 = vector.shape_cast %337 : vector<1x32x64xbf16> to vector<32x64xbf16>
    %cst_164 = arith.constant dense<0.000000e+00> : vector<16x64xf32>
    %339 = tpu.matmul %336, %338, %cst_164 {dimension_numbers = #tpu.dot_dimension_numbers<[1], [0], [0], [1], [0, 0, 1, 1], [], []>} : vector<16x32xbf16>, vector<32x64xbf16>, vector<16x64xf32> -> vector<16x64xf32>
    %c1_165 = arith.constant 1 : index
    %c0_166 = arith.constant 0 : index
    %c0_167 = arith.constant 0 : index
    %340 = vector.load %arg19[%c1_165, %c0_166, %c0_167] : memref<2x1x64xf32, #tpu.memory_space<vmem>>, vector<1x1x64xf32>
    %341 = vector.shape_cast %340 : vector<1x1x64xf32> to vector<1x64xf32>
    %342 = vector.broadcast %341 : vector<1x64xf32> to vector<16x64xf32>
    %343 = arith.addf %339, %342 : vector<16x64xf32>
    %cst_168 = arith.constant 0.000000e+00 : f32
    %344 = vector.broadcast %cst_168 : f32 to vector<16x64xf32>
    %345 = arith.maximumf %343, %344 : vector<16x64xf32>
    %346 = arith.truncf %345 : vector<16x64xf32> to vector<16x64xbf16>
    %c1_169 = arith.constant 1 : index
    %c0_170 = arith.constant 0 : index
    %c0_171 = arith.constant 0 : index
    %347 = vector.load %arg20[%c1_169, %c0_170, %c0_171] : memref<2x64x32xbf16, #tpu.memory_space<vmem>>, vector<1x64x32xbf16>
    %348 = vector.shape_cast %347 : vector<1x64x32xbf16> to vector<64x32xbf16>
    %cst_172 = arith.constant dense<0.000000e+00> : vector<16x32xf32>
    %349 = tpu.matmul %346, %348, %cst_172 {dimension_numbers = #tpu.dot_dimension_numbers<[1], [0], [0], [1], [0, 0, 1, 1], [], []>} : vector<16x64xbf16>, vector<64x32xbf16>, vector<16x32xf32> -> vector<16x32xf32>
    %c1_173 = arith.constant 1 : index
    %c0_174 = arith.constant 0 : index
    %c0_175 = arith.constant 0 : index
    %350 = vector.load %arg21[%c1_173, %c0_174, %c0_175] : memref<2x1x32xf32, #tpu.memory_space<vmem>>, vector<1x1x32xf32>
    %351 = vector.shape_cast %350 : vector<1x1x32xf32> to vector<1x32xf32>
    %352 = vector.broadcast %351 : vector<1x32xf32> to vector<16x32xf32>
    %353 = arith.addf %349, %352 : vector<16x32xf32>
    %354 = arith.addf %335, %353 : vector<16x32xf32>
    %c1_176 = arith.constant 1 : index
    %c0_177 = arith.constant 0 : index
    %c0_178 = arith.constant 0 : index
    %355 = vector.load %arg22[%c1_176, %c0_177, %c0_178] : memref<2x1x32xf32, #tpu.memory_space<vmem>>, vector<1x1x32xf32>
    %356 = vector.shape_cast %355 : vector<1x1x32xf32> to vector<1x32xf32>
    %c1_179 = arith.constant 1 : index
    %c0_180 = arith.constant 0 : index
    %c0_181 = arith.constant 0 : index
    %357 = vector.load %arg23[%c1_179, %c0_180, %c0_181] : memref<2x1x32xf32, #tpu.memory_space<vmem>>, vector<1x1x32xf32>
    %358 = vector.shape_cast %357 : vector<1x1x32xf32> to vector<1x32xf32>
    %cst_182 = arith.constant dense<0.000000e+00> : vector<16xf32>
    %359 = vector.multi_reduction <add>, %354, %cst_182 [1] : vector<16x32xf32> to vector<16xf32>
    %360 = vector.shape_cast %359 : vector<16xf32> to vector<16x1xf32>
    %cst_183 = arith.constant 3.200000e+01 : f32
    %361 = vector.broadcast %cst_183 : f32 to vector<16x1xf32>
    %362 = arith.divf %360, %361 : vector<16x1xf32>
    %363 = vector.broadcast %362 : vector<16x1xf32> to vector<16x32xf32>
    %364 = arith.subf %354, %363 : vector<16x32xf32>
    %365 = arith.mulf %364, %364 : vector<16x32xf32>
    %cst_184 = arith.constant dense<0.000000e+00> : vector<16xf32>
    %366 = vector.multi_reduction <add>, %365, %cst_184 [1] : vector<16x32xf32> to vector<16xf32>
    %367 = vector.shape_cast %366 : vector<16xf32> to vector<16x1xf32>
    %cst_185 = arith.constant 3.200000e+01 : f32
    %368 = vector.broadcast %cst_185 : f32 to vector<16x1xf32>
    %369 = arith.divf %367, %368 : vector<16x1xf32>
    %cst_186 = arith.constant 9.99999974E-6 : f32
    %370 = vector.broadcast %cst_186 : f32 to vector<16x1xf32>
    %371 = arith.addf %369, %370 : vector<16x1xf32>
    %372 = math.rsqrt %371 : vector<16x1xf32>
    %373 = vector.broadcast %372 : vector<16x1xf32> to vector<16x32xf32>
    %374 = arith.mulf %364, %373 : vector<16x32xf32>
    %375 = vector.broadcast %356 : vector<1x32xf32> to vector<16x32xf32>
    %376 = arith.mulf %374, %375 : vector<16x32xf32>
    %377 = vector.broadcast %358 : vector<1x32xf32> to vector<16x32xf32>
    %378 = arith.addf %376, %377 : vector<16x32xf32>
    %379 = arith.truncf %378 : vector<16x32xf32> to vector<16x32xbf16>
    %c0_187 = arith.constant 0 : index
    %c0_188 = arith.constant 0 : index
    %380 = vector.load %arg24[%c0_187, %c0_188] : memref<32x128xbf16, #tpu.memory_space<vmem>>, vector<32x128xbf16>
    %cst_189 = arith.constant dense<0.000000e+00> : vector<16x128xf32>
    %381 = tpu.matmul %379, %380, %cst_189 {dimension_numbers = #tpu.dot_dimension_numbers<[1], [0], [0], [1], [0, 0, 1, 1], [], []>} : vector<16x32xbf16>, vector<32x128xbf16>, vector<16x128xf32> -> vector<16x128xf32>
    %c0_190 = arith.constant 0 : index
    %c0_191 = arith.constant 0 : index
    %382 = vector.load %arg25[%c0_190, %c0_191] : memref<1x128xf32, #tpu.memory_space<vmem>>, vector<1x128xf32>
    %383 = vector.broadcast %382 : vector<1x128xf32> to vector<16x128xf32>
    %384 = arith.addf %381, %383 : vector<16x128xf32>
    %c0_192 = arith.constant 0 : index
    %c0_193 = arith.constant 0 : index
    %385 = vector.load %arg26[%c0_192, %c0_193] : memref<16x128xf32, #tpu.memory_space<vmem>>, vector<16x128xf32>
    tpu.vector_store %arg26[%c0_192, %c0_193], %384 {strides = array<i32>} : memref<16x128xf32, #tpu.memory_space<vmem>>, vector<16x128xf32>,
    return
  }
}

</mosaic_0001>

<llo_original>
// kernel: decoder_forward.1
$region0: #{decoder_forward.1}
  #allocation0 [shape = 'u32[]', space=smem, size = 0x4, offset = 0x4, fixed_abs, tag = 'smem constant byte address 0x4 - core index']
  #allocation1 [shape = 'u32[144,128]{1,0:T(1,128)}', space=vmem, size = 0x12000, scoped, tag = 'internal scratch']
  %s0 = inlined_call_operand.vmem [shape: f32[16,32], index: 0, kind: input, shape index: {}]
  %s1 = inlined_call_operand.vmem [shape: f32[20,32], index: 1, kind: input, shape index: {}]
  %s2 = inlined_call_operand.vmem [shape: f32[64,64], index: 2, kind: input, shape index: {}]
  %s3 = inlined_call_operand.vmem [shape: f32[64,80], index: 3, kind: input, shape index: {}]
  %s4 = inlined_call_operand.vmem [shape: bf16[2,32,96], index: 4, kind: input, shape index: {}]
  %s5 = inlined_call_operand.vmem [shape: f32[2,1,96], index: 5, kind: input, shape index: {}]
  %s6 = inlined_call_operand.vmem [shape: bf16[2,32,32], index: 6, kind: input, shape index: {}]
  %s7 = inlined_call_operand.vmem [shape: f32[2,1,32], index: 7, kind: input, shape index: {}]
  %s8 = inlined_call_operand.vmem [shape: f32[2,1,32], index: 8, kind: input, shape index: {}]
  %s9 = inlined_call_operand.vmem [shape: f32[2,1,32], index: 9, kind: input, shape index: {}]
  %s10 = inlined_call_operand.vmem [shape: bf16[2,32,32], index: 10, kind: input, shape index: {}]
  %s11 = inlined_call_operand.vmem [shape: f32[2,1,32], index: 11, kind: input, shape index: {}]
  %s12 = inlined_call_operand.vmem [shape: bf16[2,32,64], index: 12, kind: input, shape index: {}]
  %s13 = inlined_call_operand.vmem [shape: f32[2,1,64], index: 13, kind: input, shape index: {}]
  %s14 = inlined_call_operand.vmem [shape: bf16[2,32,32], index: 14, kind: input, shape index: {}]
  %s15 = inlined_call_operand.vmem [shape: f32[2,1,32], index: 15, kind: input, shape index: {}]
  %s16 = inlined_call_operand.vmem [shape: f32[2,1,32], index: 16, kind: input, shape index: {}]
  %s17 = inlined_call_operand.vmem [shape: f32[2,1,32], index: 17, kind: input, shape index: {}]
  %s18 = inlined_call_operand.vmem [shape: bf16[2,32,64], index: 18, kind: input, shape index: {}]
  %s19 = inlined_call_operand.vmem [shape: f32[2,1,64], index: 19, kind: input, shape index: {}]
  %s20 = inlined_call_operand.vmem [shape: bf16[2,64,32], index: 20, kind: input, shape index: {}]
  %s21 = inlined_call_operand.vmem [shape: f32[2,1,32], index: 21, kind: input, shape index: {}]
  %s22 = inlined_call_operand.vmem [shape: f32[2,1,32], index: 22, kind: input, shape index: {}]
  %s23 = inlined_call_operand.vmem [shape: f32[2,1,32], index: 23, kind: input, shape index: {}]
  %s24 = inlined_call_operand.vmem [shape: bf16[32,128], index: 24, kind: input, shape index: {}]
  %s25 = inlined_call_operand.vmem [shape: f32[1,128], index: 25, kind: input, shape index: {}]
  %s26 = inlined_call_operand.hbm [shape: f32[16,128], index: 26, kind: output, shape index: {}]
  %s27 = sld [smem:[#allocation0]]
  $region114: #{decoder_forward.1} parent=0
    _
  %s29 = ssub.s32 1, %s27
  %s30 = scalar_select 0, %s29, %s27
  $region1: #{decoder_forward.1} parent=0
    #allocation2 [shape = 'u8[8192]{0}', space=vmem, size = 0x2000, scoped, tag = 'output window, operand 0, single buffered']
    #allocation3 [shape = 's32[1]{0}', space=sflag, size = 0x4, scoped, tag = 'scoped memory for decoder_forward.1']
    %31 = vsyncpa [#allocation3], 0
    // Predicated region
    $region2: #{decoder_forward.1} parent=1 // pred_check
      _
    $region3: #{decoder_forward.1} parent=1 // pred_check_branch
      %33 = sbr.rel (0) target = $region5
    $region4: #{decoder_forward.1} parent=1 // pred_region
      _
    $region5: #{decoder_forward.1} parent=1 // pred_fallthru
      _
    // Predicated region
    $region6: #{decoder_forward.1} parent=1 // pred_check
      _
    $region7: #{decoder_forward.1} parent=1 // pred_check_branch
      %35 = sbr.rel (0) target = $region9
    $region8: #{decoder_forward.1} parent=1 // pred_region
      _
    $region9: #{decoder_forward.1} parent=1 // pred_fallthru
      _
    // Predicated region
    $region10: #{decoder_forward.1} parent=1 // pred_check
      _
    $region11: #{decoder_forward.1} parent=1 // pred_check_branch
      %37 = sbr.rel (0) target = $region13
    $region12: #{decoder_forward.1} parent=1 // pred_region
      _
    $region13: #{decoder_forward.1} parent=1 // pred_fallthru
      _
    // Predicated region
    $region14: #{decoder_forward.1} parent=1 // pred_check
      _
    $region15: #{decoder_forward.1} parent=1 // pred_check_branch
      %39 = sbr.rel (0) target = $region17
    $region16: #{decoder_forward.1} parent=1 // pred_region
      _
    $region17: #{decoder_forward.1} parent=1 // pred_fallthru
      _
    // Predicated region
    $region18: #{decoder_forward.1} parent=1 // pred_check
      _
    $region19: #{decoder_forward.1} parent=1 // pred_check_branch
      %41 = sbr.rel (0) target = $region21
    $region20: #{decoder_forward.1} parent=1 // pred_region
      _
    $region21: #{decoder_forward.1} parent=1 // pred_fallthru
      _
    // Predicated region
    $region22: #{decoder_forward.1} parent=1 // pred_check
      _
    $region23: #{decoder_forward.1} parent=1 // pred_check_branch
      %43 = sbr.rel (0) target = $region25
    $region24: #{decoder_forward.1} parent=1 // pred_region
      _
    $region25: #{decoder_forward.1} parent=1 // pred_fallthru
      _
    // Predicated region
    $region26: #{decoder_forward.1} parent=1 // pred_check
      _
    $region27: #{decoder_forward.1} parent=1 // pred_check_branch
      %45 = sbr.rel (0) target = $region29
    $region28: #{decoder_forward.1} parent=1 // pred_region
      _
    $region29: #{decoder_forward.1} parent=1 // pred_fallthru
      _
    // Predicated region
    $region30: #{decoder_forward.1} parent=1 // pred_check
      _
    $region31: #{decoder_forward.1} parent=1 // pred_check_branch
      %47 = sbr.rel (0) target = $region33
    $region32: #{decoder_forward.1} parent=1 // pred_region
      _
    $region33: #{decoder_forward.1} parent=1 // pred_fallthru
      _
    // Predicated region
    $region34: #{decoder_forward.1} parent=1 // pred_check
      _
    $region35: #{decoder_forward.1} parent=1 // pred_check_branch
      %49 = sbr.rel (0) target = $region37
    $region36: #{decoder_forward.1} parent=1 // pred_region
      _
    $region37: #{decoder_forward.1} parent=1 // pred_fallthru
      _
    // Predicated region
    $region38: #{decoder_forward.1} parent=1 // pred_check
      _
    $region39: #{decoder_forward.1} parent=1 // pred_check_branch
      %51 = sbr.rel (0) target = $region41
    $region40: #{decoder_forward.1} parent=1 // pred_region
      _
    $region41: #{decoder_forward.1} parent=1 // pred_fallthru
      _
    // Predicated region
    $region42: #{decoder_forward.1} parent=1 // pred_check
      _
    $region43: #{decoder_forward.1} parent=1 // pred_check_branch
      %53 = sbr.rel (0) target = $region45
    $region44: #{decoder_forward.1} parent=1 // pred_region
      _
    $region45: #{decoder_forward.1} parent=1 // pred_fallthru
      _
    // Predicated region
    $region46: #{decoder_forward.1} parent=1 // pred_check
      _
    $region47: #{decoder_forward.1} parent=1 // pred_check_branch
      %55 = sbr.rel (0) target = $region49
    $region48: #{decoder_forward.1} parent=1 // pred_region
      _
    $region49: #{decoder_forward.1} parent=1 // pred_fallthru
      _
    // Predicated region
    $region50: #{decoder_forward.1} parent=1 // pred_check
      _
    $region51: #{decoder_forward.1} parent=1 // pred_check_branch
      %57 = sbr.rel (0) target = $region53
    $region52: #{decoder_forward.1} parent=1 // pred_region
      _
    $region53: #{decoder_forward.1} parent=1 // pred_fallthru
      _
    // Predicated region
    $region54: #{decoder_forward.1} parent=1 // pred_check
      _
    $region55: #{decoder_forward.1} parent=1 // pred_check_branch
      %59 = sbr.rel (0) target = $region57
    $region56: #{decoder_forward.1} parent=1 // pred_region
      _
    $region57: #{decoder_forward.1} parent=1 // pred_fallthru
      _
    // Predicated region
    $region58: #{decoder_forward.1} parent=1 // pred_check
      _
    $region59: #{decoder_forward.1} parent=1 // pred_check_branch
      %61 = sbr.rel (0) target = $region61
    $region60: #{decoder_forward.1} parent=1 // pred_region
      _
    $region61: #{decoder_forward.1} parent=1 // pred_fallthru
      _
    // Predicated region
    $region62: #{decoder_forward.1} parent=1 // pred_check
      _
    $region63: #{decoder_forward.1} parent=1 // pred_check_branch
      %63 = sbr.rel (0) target = $region65
    $region64: #{decoder_forward.1} parent=1 // pred_region
      _
    $region65: #{decoder_forward.1} parent=1 // pred_fallthru
      _
    // Predicated region
    $region66: #{decoder_forward.1} parent=1 // pred_check
      _
    $region67: #{decoder_forward.1} parent=1 // pred_check_branch
      %65 = sbr.rel (0) target = $region69
    $region68: #{decoder_forward.1} parent=1 // pred_region
      _
    $region69: #{decoder_forward.1} parent=1 // pred_fallthru
      _
    // Predicated region
    $region70: #{decoder_forward.1} parent=1 // pred_check
      _
    $region71: #{decoder_forward.1} parent=1 // pred_check_branch
      %67 = sbr.rel (0) target = $region73
    $region72: #{decoder_forward.1} parent=1 // pred_region
      _
    $region73: #{decoder_forward.1} parent=1 // pred_fallthru
      _
    // Predicated region
    $region74: #{decoder_forward.1} parent=1 // pred_check
      _
    $region75: #{decoder_forward.1} parent=1 // pred_check_branch
      %69 = sbr.rel (0) target = $region77
    $region76: #{decoder_forward.1} parent=1 // pred_region
      _
    $region77: #{decoder_forward.1} parent=1 // pred_fallthru
      _
    // Predicated region
    $region78: #{decoder_forward.1} parent=1 // pred_check
      _
    $region79: #{decoder_forward.1} parent=1 // pred_check_branch
      %71 = sbr.rel (0) target = $region81
    $region80: #{decoder_forward.1} parent=1 // pred_region
      _
    $region81: #{decoder_forward.1} parent=1 // pred_fallthru
      _
    // Predicated region
    $region82: #{decoder_forward.1} parent=1 // pred_check
      _
    $region83: #{decoder_forward.1} parent=1 // pred_check_branch
      %73 = sbr.rel (0) target = $region85
    $region84: #{decoder_forward.1} parent=1 // pred_region
      _
    $region85: #{decoder_forward.1} parent=1 // pred_fallthru
      _
    // Predicated region
    $region86: #{decoder_forward.1} parent=1 // pred_check
      _
    $region87: #{decoder_forward.1} parent=1 // pred_check_branch
      %75 = sbr.rel (0) target = $region89
    $region88: #{decoder_forward.1} parent=1 // pred_region
      _
    $region89: #{decoder_forward.1} parent=1 // pred_fallthru
      _
    // Predicated region
    $region90: #{decoder_forward.1} parent=1 // pred_check
      _
    $region91: #{decoder_forward.1} parent=1 // pred_check_branch
      %77 = sbr.rel (0) target = $region93
    $region92: #{decoder_forward.1} parent=1 // pred_region
      _
    $region93: #{decoder_forward.1} parent=1 // pred_fallthru
      _
    // Predicated region
    $region94: #{decoder_forward.1} parent=1 // pred_check
      _
    $region95: #{decoder_forward.1} parent=1 // pred_check_branch
      %79 = sbr.rel (0) target = $region97
    $region96: #{decoder_forward.1} parent=1 // pred_region
      _
    $region97: #{decoder_forward.1} parent=1 // pred_fallthru
      _
    // Predicated region
    $region98: #{decoder_forward.1} parent=1 // pred_check
      _
    $region99: #{decoder_forward.1} parent=1 // pred_check_branch
      %81 = sbr.rel (0) target = $region101
    $region100: #{decoder_forward.1} parent=1 // pred_region
      _
    $region101: #{decoder_forward.1} parent=1 // pred_fallthru
      _
    // Predicated region
    $region102: #{decoder_forward.1} parent=1 // pred_check
      _
    $region103: #{decoder_forward.1} parent=1 // pred_check_branch
      %83 = sbr.rel (0) target = $region105
    $region104: #{decoder_forward.1} parent=1 // pred_region
      _
    $region105: #{decoder_forward.1} parent=1 // pred_fallthru
      _
    %v85 = vld [vmem:[%s0] sm:$0xff]
    %v86 = vld [vmem:[%s0 + $0x8] sm:$0xff]
    %v87 = vld [vmem:[%s1] sm:$0xff]
    %v88 = vld [vmem:[%s1 + $0x8] sm:$0xff]
    %v89 = vld [vmem:[%s1 + $0x10] sm:$0xf]
    %v90 = vpack.c.bf16 %v88, %v87
    %v91 = vpack.c.bf16 %v89, %v89
    %v92 = vld [vmem:[%s2] sm:$0xff]
    %v93 = vld [vmem:[%s2 + $0x8] sm:$0xff]
    %v94 = vld [vmem:[%s2 + $0x10] sm:$0xff]
    %v95 = vld [vmem:[%s2 + $0x18] sm:$0xff]
    %v96 = vld [vmem:[%s2 + $0x20] sm:$0xff]
    %v97 = vld [vmem:[%s2 + $0x28] sm:$0xff]
    %v98 = vld [vmem:[%s2 + $0x30] sm:$0xff]
    %v99 = vld [vmem:[%s2 + $0x38] sm:$0xff]
    %v100 = vld [vmem:[%s3] sm:$0xff]
    %v101 = vld [vmem:[%s3 + $0x8] sm:$0xff]
    %v102 = vld [vmem:[%s3 + $0x10] sm:$0xff]
    %v103 = vld [vmem:[%s3 + $0x18] sm:$0xff]
    %v104 = vld [vmem:[%s3 + $0x20] sm:$0xff]
    %v105 = vld [vmem:[%s3 + $0x28] sm:$0xff]
    %v106 = vld [vmem:[%s3 + $0x30] sm:$0xff]
    %v107 = vld [vmem:[%s3 + $0x38] sm:$0xff]
    %v108 = vpack.c.bf16 %v86, %v85
    %v109 = vld [vmem:[%s4] sm:$0xf]
    %v110 = vld [vmem:[%s4 + $0x4] sm:$0xf]
    %v111 = vld [vmem:[%s4 + $0x8] sm:$0xf]
    %v112 = vld [vmem:[%s4 + $0xc] sm:$0xf]
    %v113 = vld [vmem:[%s5] sm:$0x1]
    %v115 = vlaneseq
    %v116 = vshrl.u32 %v115, 7
    %v117 = vsub.s32 0, %v116
    %v118 = vrot.slane %v113, %v117
    %v124 = vunpack.c.l.b16 %v109
    %v125 = vunpack.c.l.b16 %v110
    %v126 = vunpack.c.l.b16 %v111
    %v127 = vunpack.c.l.b16 %v112
    %v128 = vpack.c.b16 %v125, %v124
    %v129 = vpack.c.b16 %v127, %v126
    %vm132 = vcmask 261120
    %v134 = vsel %vm132, %v108, 0
    %136 = vmatprep.subr.bf16.mxu0 0
    %137 = vmatpush1.bf16.msra.mxu0 %v128
    %138 = vmatprep.subr.bf16.mxu0 0
    %139 = vmatpush1.bf16.msra.mxu0 %v129
    %140 = vmatprep.subr.bf16.mxu0 0
    %141 = vmatpush1.bf16.msra.mxu0 0
    %142 = vmatprep.subr.bf16.mxu0 0
    %143 = vmatpush1.bf16.msra.mxu0 0
    %144 = vmatprep.subr.bf16.mxu0 0
    %145 = vmatpush1.bf16.msra.mxu0 0
    %146 = vmatprep.subr.bf16.mxu0 0
    %147 = vmatpush1.bf16.msra.mxu0 0
    %148 = vmatprep.subr.bf16.mxu0 0
    %149 = vmatpush1.bf16.msra.mxu0 0
    %150 = vmatprep.subr.bf16.mxu0 0
    %151 = vmatpush1.bf16.msra.mxu0 0
    %152 = vmatprep.subr.bf16.mxu0 0
    %153 = vmatpush1.bf16.msra.mxu0 0
    %154 = vmatprep.subr.bf16.mxu0 0
    %155 = vmatpush1.bf16.msra.mxu0 0
    %156 = vmatprep.subr.bf16.mxu0 0
    %157 = vmatpush1.bf16.msra.mxu0 0
    %158 = vmatprep.subr.bf16.mxu0 0
    %159 = vmatpush1.bf16.msra.mxu0 0
    %160 = vmatprep.subr.bf16.mxu0 0
    %161 = vmatpush1.bf16.msra.mxu0 0
    %162 = vmatprep.subr.bf16.mxu0 0
    %163 = vmatpush1.bf16.msra.mxu0 0
    %164 = vmatprep.subr.bf16.mxu0 0
    %165 = vmatpush1.bf16.msra.mxu0 0
    %166 = vmatprep.subr.bf16.mxu0 0
    %167 = vmatpush1.bf16.msra.mxu0 0
    %168 = vmatprep.mubr.bf16.mxu0 0
    %169 = vmatmul.mubr.bf16.gmra.mrb[0].mxu0 %v134
    %v170 = vpop.f32.mrb[0].mxu0
    %v171 = vadd.f32 %v118, %v170
    %v172 = vpop.f32.mrb[0].mxu0
    %v173 = vpop.f32.mrb[0].mxu0
    %v174 = vadd.f32 %v118, %v173
    %v175 = vpop.f32.mrb[0].mxu0
    %176 = vdwg.mxu0
    %v177 = vld [vmem:[%s6] sm:$0xf]
    %v178 = vld [vmem:[%s6 + $0x4] sm:$0xf]
    %v179 = vld [vmem:[%s6 + $0x8] sm:$0xf]
    %v180 = vld [vmem:[%s6 + $0xc] sm:$0xf]
    %v181 = vld [vmem:[%s7] sm:$0x1]
    %184 = vrot.lane.b32.xlu0 %v171, 120
    %v185 = vpop.permute.xlu0 %184
    %186 = vrot.lane.b32.xlu0 %v174, 120
    %v187 = vpop.permute.xlu0 %186
    %190 = vrot.lane.b32.xlu0 %v171, 112
    %v191 = vpop.permute.xlu0 %190
    %192 = vrot.lane.b32.xlu0 %v174, 112
    %v193 = vpop.permute.xlu0 %192
    %196 = vrot.lane.b32.xlu0 %v171, 104
    %v197 = vpop.permute.xlu0 %196
    %198 = vrot.lane.b32.xlu0 %v174, 104
    %v199 = vpop.permute.xlu0 %198
    %v202 = vcombine.low %v171, %v191
    %v203 = vcombine.high %v171, %v191
    %v205 = vunpack.c.l.s4 1983009808
    %v206 = vunpack.c.0.s8 %v205
    %v207 = vlaneseq
    %v208 = vshrl.u32 %v207, 7
    %v209 = vsub.s32 %v206, %v208
    %v210 = vrot.slane %v202, %v209
    %v212 = vunpack.c.l.s4 1983009808
    %v213 = vunpack.c.0.s8 %v212
    %v214 = vlaneseq
    %v215 = vshrl.u32 %v214, 7
    %v216 = vsub.s32 %v213, %v215
    %v217 = vrot.slane %v203, %v216
    %v218 = vcombine.low %v185, %v197
    %v219 = vcombine.high %v185, %v197
    %v221 = vunpack.c.l.s4 1983009808
    %v222 = vunpack.c.0.s8 %v221
    %v223 = vlaneseq
    %v224 = vshrl.u32 %v223, 7
    %v225 = vsub.s32 %v222, %v224
    %v226 = vrot.slane %v218, %v225
    %v228 = vunpack.c.l.s4 1983009808
    %v229 = vunpack.c.0.s8 %v228
    %v230 = vlaneseq
    %v231 = vshrl.u32 %v230, 7
    %v232 = vsub.s32 %v229, %v231
    %v233 = vrot.slane %v219, %v232
    %v234 = vcombine.low %v210, %v226
    %v235 = vcombine.high %v210, %v226
    %v237 = vunpack.c.l.s4 1934713408
    %v238 = vunpack.c.0.s8 %v237
    %v239 = vlaneseq
    %v240 = vshrl.u32 %v239, 7
    %v241 = vsub.s32 %v238, %v240
    %v242 = vrot.slane %v234, %v241
    %v244 = vunpack.c.l.s4 1934713408
    %v245 = vunpack.c.0.s8 %v244
    %v246 = vlaneseq
    %v247 = vshrl.u32 %v246, 7
    %v248 = vsub.s32 %v245, %v247
    %v249 = vrot.slane %v235, %v248
    %v250 = vcombine.low %v217, %v233
    %v251 = vcombine.high %v217, %v233
    %v253 = vunpack.c.l.s4 1934713408
    %v254 = vunpack.c.0.s8 %v253
    %v255 = vlaneseq
    %v256 = vshrl.u32 %v255, 7
    %v257 = vsub.s32 %v254, %v256
    %v258 = vrot.slane %v250, %v257
    %v260 = vunpack.c.l.s4 1934713408
    %v261 = vunpack.c.0.s8 %v260
    %v262 = vlaneseq
    %v263 = vshrl.u32 %v262, 7
    %v264 = vsub.s32 %v261, %v263
    %v265 = vrot.slane %v251, %v264
    %v266 = vcombine.high %v242, 0.0
    %v267 = vcombine.high %v249, 0.0
    %v268 = vcombine.high %v258, 0.0
    %v269 = vcombine.high %v265, 0.0
    %v270 = vcombine.low %v174, %v193
    %v271 = vcombine.high %v174, %v193
    %v273 = vunpack.c.l.s4 1983009808
    %v274 = vunpack.c.0.s8 %v273
    %v275 = vlaneseq
    %v276 = vshrl.u32 %v275, 7
    %v277 = vsub.s32 %v274, %v276
    %v278 = vrot.slane %v270, %v277
    %v280 = vunpack.c.l.s4 1983009808
    %v281 = vunpack.c.0.s8 %v280
    %v282 = vlaneseq
    %v283 = vshrl.u32 %v282, 7
    %v284 = vsub.s32 %v281, %v283
    %v285 = vrot.slane %v271, %v284
    %v286 = vcombine.low %v187, %v199
    %v287 = vcombine.high %v187, %v199
    %v289 = vunpack.c.l.s4 1983009808
    %v290 = vunpack.c.0.s8 %v289
    %v291 = vlaneseq
    %v292 = vshrl.u32 %v291, 7
    %v293 = vsub.s32 %v290, %v292
    %v294 = vrot.slane %v286, %v293
    %v296 = vunpack.c.l.s4 1983009808
    %v297 = vunpack.c.0.s8 %v296
    %v298 = vlaneseq
    %v299 = vshrl.u32 %v298, 7
    %v300 = vsub.s32 %v297, %v299
    %v301 = vrot.slane %v287, %v300
    %v302 = vcombine.low %v278, %v294
    %v303 = vcombine.high %v278, %v294
    %v305 = vunpack.c.l.s4 1934713408
    %v306 = vunpack.c.0.s8 %v305
    %v307 = vlaneseq
    %v308 = vshrl.u32 %v307, 7
    %v309 = vsub.s32 %v306, %v308
    %v310 = vrot.slane %v302, %v309
    %v312 = vunpack.c.l.s4 1934713408
    %v313 = vunpack.c.0.s8 %v312
    %v314 = vlaneseq
    %v315 = vshrl.u32 %v314, 7
    %v316 = vsub.s32 %v313, %v315
    %v317 = vrot.slane %v303, %v316
    %v318 = vcombine.low %v285, %v301
    %v319 = vcombine.high %v285, %v301
    %v321 = vunpack.c.l.s4 1934713408
    %v322 = vunpack.c.0.s8 %v321
    %v323 = vlaneseq
    %v324 = vshrl.u32 %v323, 7
    %v325 = vsub.s32 %v322, %v324
    %v326 = vrot.slane %v318, %v325
    %v328 = vunpack.c.l.s4 1934713408
    %v329 = vunpack.c.0.s8 %v328
    %v330 = vlaneseq
    %v331 = vshrl.u32 %v330, 7
    %v332 = vsub.s32 %v329, %v331
    %v333 = vrot.slane %v319, %v332
    %v334 = vcombine.high %v310, 0.0
    %v335 = vcombine.high %v317, 0.0
    %v336 = vcombine.high %v326, 0.0
    %v337 = vcombine.high %v333, 0.0
    %v338 = vcombine.low %v242, %v249
    %v340 = vunpack.c.l.s4 1983009808
    %v341 = vunpack.c.0.s8 %v340
    %v342 = vlaneseq
    %v343 = vshrl.u32 %v342, 7
    %v344 = vsub.s32 %v341, %v343
    %v345 = vrot.slane %v338, %v344
    %v346 = vcombine.low %v266, %v267
    %v348 = vunpack.c.l.s4 1983009808
    %v349 = vunpack.c.0.s8 %v348
    %v350 = vlaneseq
    %v351 = vshrl.u32 %v350, 7
    %v352 = vsub.s32 %v349, %v351
    %v353 = vrot.slane %v346, %v352
    %v354 = vcombine.low %v258, %v265
    %v356 = vunpack.c.l.s4 1983009808
    %v357 = vunpack.c.0.s8 %v356
    %v358 = vlaneseq
    %v359 = vshrl.u32 %v358, 7
    %v360 = vsub.s32 %v357, %v359
    %v361 = vrot.slane %v354, %v360
    %v362 = vcombine.low %v268, %v269
    %v364 = vunpack.c.l.s4 1983009808
    %v365 = vunpack.c.0.s8 %v364
    %v366 = vlaneseq
    %v367 = vshrl.u32 %v366, 7
    %v368 = vsub.s32 %v365, %v367
    %v369 = vrot.slane %v362, %v368
    %v370 = vcombine.low %v345, %v353
    %v371 = vcombine.high %v345, %v353
    %v373 = vunpack.c.l.s4 1934713408
    %v374 = vunpack.c.0.s8 %v373
    %v375 = vlaneseq
    %v376 = vshrl.u32 %v375, 7
    %v377 = vsub.s32 %v374, %v376
    %v378 = vrot.slane %v370, %v377
    %v380 = vunpack.c.l.s4 1934713408
    %v381 = vunpack.c.0.s8 %v380
    %v382 = vlaneseq
    %v383 = vshrl.u32 %v382, 7
    %v384 = vsub.s32 %v381, %v383
    %v385 = vrot.slane %v371, %v384
    %v386 = vcombine.low %v361, %v369
    %v387 = vcombine.high %v361, %v369
    %v389 = vunpack.c.l.s4 1934713408
    %v390 = vunpack.c.0.s8 %v389
    %v391 = vlaneseq
    %v392 = vshrl.u32 %v391, 7
    %v393 = vsub.s32 %v390, %v392
    %v394 = vrot.slane %v386, %v393
    %v396 = vunpack.c.l.s4 1934713408
    %v397 = vunpack.c.0.s8 %v396
    %v398 = vlaneseq
    %v399 = vshrl.u32 %v398, 7
    %v400 = vsub.s32 %v397, %v399
    %v401 = vrot.slane %v387, %v400
    %v402 = vcombine.low %v378, %v394
    %v403 = vcombine.high %v378, %v394
    %v404 = vcombine.low %v385, %v401
    %v405 = vcombine.high %v385, %v401
    %v406 = vcombine.low %v310, %v317
    %v408 = vunpack.c.l.s4 1983009808
    %v409 = vunpack.c.0.s8 %v408
    %v410 = vlaneseq
    %v411 = vshrl.u32 %v410, 7
    %v412 = vsub.s32 %v409, %v411
    %v413 = vrot.slane %v406, %v412
    %v414 = vcombine.low %v334, %v335
    %v416 = vunpack.c.l.s4 1983009808
    %v417 = vunpack.c.0.s8 %v416
    %v418 = vlaneseq
    %v419 = vshrl.u32 %v418, 7
    %v420 = vsub.s32 %v417, %v419
    %v421 = vrot.slane %v414, %v420
    %v422 = vcombine.low %v326, %v333
    %v424 = vunpack.c.l.s4 1983009808
    %v425 = vunpack.c.0.s8 %v424
    %v426 = vlaneseq
    %v427 = vshrl.u32 %v426, 7
    %v428 = vsub.s32 %v425, %v427
    %v429 = vrot.slane %v422, %v428
    %v430 = vcombine.low %v336, %v337
    %v432 = vunpack.c.l.s4 1983009808
    %v433 = vunpack.c.0.s8 %v432
    %v434 = vlaneseq
    %v435 = vshrl.u32 %v434, 7
    %v436 = vsub.s32 %v433, %v435
    %v437 = vrot.slane %v430, %v436
    %v438 = vcombine.low %v413, %v421
    %v439 = vcombine.high %v413, %v421
    %v441 = vunpack.c.l.s4 1934713408
    %v442 = vunpack.c.0.s8 %v441
    %v443 = vlaneseq
    %v444 = vshrl.u32 %v443, 7
    %v445 = vsub.s32 %v442, %v444
    %v446 = vrot.slane %v438, %v445
    %v448 = vunpack.c.l.s4 1934713408
    %v449 = vunpack.c.0.s8 %v448
    %v450 = vlaneseq
    %v451 = vshrl.u32 %v450, 7
    %v452 = vsub.s32 %v449, %v451
    %v453 = vrot.slane %v439, %v452
    %v454 = vcombine.low %v429, %v437
    %v455 = vcombine.high %v429, %v437
    %v457 = vunpack.c.l.s4 1934713408
    %v458 = vunpack.c.0.s8 %v457
    %v459 = vlaneseq
    %v460 = vshrl.u32 %v459, 7
    %v461 = vsub.s32 %v458, %v460
    %v462 = vrot.slane %v454, %v461
    %v464 = vunpack.c.l.s4 1934713408
    %v465 = vunpack.c.0.s8 %v464
    %v466 = vlaneseq
    %v467 = vshrl.u32 %v466, 7
    %v468 = vsub.s32 %v465, %v467
    %v469 = vrot.slane %v455, %v468
    %v470 = vcombine.low %v446, %v462
    %v471 = vcombine.high %v446, %v462
    %v472 = vcombine.low %v453, %v469
    %v473 = vcombine.high %v453, %v469
    %474 = vrot.lane.b32.xlu0 %v171, 96
    %v475 = vpop.permute.xlu0 %474
    %476 = vrot.lane.b32.xlu0 %v174, 96
    %v477 = vpop.permute.xlu0 %476
    %478 = vrot.lane.b32.xlu0 %v185, 96
    %v479 = vpop.permute.xlu0 %478
    %480 = vrot.lane.b32.xlu0 %v187, 96
    %v481 = vpop.permute.xlu0 %480
    %482 = vrot.lane.b32.xlu0 %v191, 96
    %v483 = vpop.permute.xlu0 %482
    %484 = vrot.lane.b32.xlu0 %v193, 96
    %v485 = vpop.permute.xlu0 %484
    %486 = vrot.lane.b32.xlu0 %v197, 96
    %v487 = vpop.permute.xlu0 %486
    %488 = vrot.lane.b32.xlu0 %v199, 96
    %v489 = vpop.permute.xlu0 %488
    %v498 = vcombine.low %v475, %v483
    %v499 = vcombine.high %v475, %v483
    %v501 = vunpack.c.l.s4 1983009808
    %v502 = vunpack.c.0.s8 %v501
    %v503 = vlaneseq
    %v504 = vshrl.u32 %v503, 7
    %v505 = vsub.s32 %v502, %v504
    %v506 = vrot.slane %v498, %v505
    %v508 = vunpack.c.l.s4 1983009808
    %v509 = vunpack.c.0.s8 %v508
    %v510 = vlaneseq
    %v511 = vshrl.u32 %v510, 7
    %v512 = vsub.s32 %v509, %v511
    %v513 = vrot.slane %v499, %v512
    %v514 = vcombine.low %v479, %v487
    %v515 = vcombine.high %v479, %v487
    %v517 = vunpack.c.l.s4 1983009808
    %v518 = vunpack.c.0.s8 %v517
    %v519 = vlaneseq
    %v520 = vshrl.u32 %v519, 7
    %v521 = vsub.s32 %v518, %v520
    %v522 = vrot.slane %v514, %v521
    %v524 = vunpack.c.l.s4 1983009808
    %v525 = vunpack.c.0.s8 %v524
    %v526 = vlaneseq
    %v527 = vshrl.u32 %v526, 7
    %v528 = vsub.s32 %v525, %v527
    %v529 = vrot.slane %v515, %v528
    %v530 = vcombine.low %v506, %v522
    %v531 = vcombine.high %v506, %v522
    %v533 = vunpack.c.l.s4 1934713408
    %v534 = vunpack.c.0.s8 %v533
    %v535 = vlaneseq
    %v536 = vshrl.u32 %v535, 7
    %v537 = vsub.s32 %v534, %v536
    %v538 = vrot.slane %v530, %v537
    %v540 = vunpack.c.l.s4 1934713408
    %v541 = vunpack.c.0.s8 %v540
    %v542 = vlaneseq
    %v543 = vshrl.u32 %v542, 7
    %v544 = vsub.s32 %v541, %v543
    %v545 = vrot.slane %v531, %v544
    %v546 = vcombine.low %v513, %v529
    %v547 = vcombine.high %v513, %v529
    %v549 = vunpack.c.l.s4 1934713408
    %v550 = vunpack.c.0.s8 %v549
    %v551 = vlaneseq
    %v552 = vshrl.u32 %v551, 7
    %v553 = vsub.s32 %v550, %v552
    %v554 = vrot.slane %v546, %v553
    %v556 = vunpack.c.l.s4 1934713408
    %v557 = vunpack.c.0.s8 %v556
    %v558 = vlaneseq
    %v559 = vshrl.u32 %v558, 7
    %v560 = vsub.s32 %v557, %v559
    %v561 = vrot.slane %v547, %v560
    %v562 = vcombine.high %v538, 0.0
    %v563 = vcombine.high %v545, 0.0
    %v564 = vcombine.high %v554, 0.0
    %v565 = vcombine.high %v561, 0.0
    %v566 = vcombine.low %v477, %v485
    %v567 = vcombine.high %v477, %v485
    %v569 = vunpack.c.l.s4 1983009808
    %v570 = vunpack.c.0.s8 %v569
    %v571 = vlaneseq
    %v572 = vshrl.u32 %v571, 7
    %v573 = vsub.s32 %v570, %v572
    %v574 = vrot.slane %v566, %v573
    %v576 = vunpack.c.l.s4 1983009808
    %v577 = vunpack.c.0.s8 %v576
    %v578 = vlaneseq
    %v579 = vshrl.u32 %v578, 7
    %v580 = vsub.s32 %v577, %v579
    %v581 = vrot.slane %v567, %v580
    %v582 = vcombine.low %v481, %v489
    %v583 = vcombine.high %v481, %v489
    %v585 = vunpack.c.l.s4 1983009808
    %v586 = vunpack.c.0.s8 %v585
    %v587 = vlaneseq
    %v588 = vshrl.u32 %v587, 7
    %v589 = vsub.s32 %v586, %v588
    %v590 = vrot.slane %v582, %v589
    %v592 = vunpack.c.l.s4 1983009808
    %v593 = vunpack.c.0.s8 %v592
    %v594 = vlaneseq
    %v595 = vshrl.u32 %v594, 7
    %v596 = vsub.s32 %v593, %v595
    %v597 = vrot.slane %v583, %v596
    %v598 = vcombine.low %v574, %v590
    %v599 = vcombine.high %v574, %v590
    %v601 = vunpack.c.l.s4 1934713408
    %v602 = vunpack.c.0.s8 %v601
    %v603 = vlaneseq
    %v604 = vshrl.u32 %v603, 7
    %v605 = vsub.s32 %v602, %v604
    %v606 = vrot.slane %v598, %v605
    %v608 = vunpack.c.l.s4 1934713408
    %v609 = vunpack.c.0.s8 %v608
    %v610 = vlaneseq
    %v611 = vshrl.u32 %v610, 7
    %v612 = vsub.s32 %v609, %v611
    %v613 = vrot.slane %v599, %v612
    %v614 = vcombine.low %v581, %v597
    %v615 = vcombine.high %v581, %v597
    %v617 = vunpack.c.l.s4 1934713408
    %v618 = vunpack.c.0.s8 %v617
    %v619 = vlaneseq
    %v620 = vshrl.u32 %v619, 7
    %v621 = vsub.s32 %v618, %v620
    %v622 = vrot.slane %v614, %v621
    %v624 = vunpack.c.l.s4 1934713408
    %v625 = vunpack.c.0.s8 %v624
    %v626 = vlaneseq
    %v627 = vshrl.u32 %v626, 7
    %v628 = vsub.s32 %v625, %v627
    %v629 = vrot.slane %v615, %v628
    %v630 = vcombine.high %v606, 0.0
    %v631 = vcombine.high %v613, 0.0
    %v632 = vcombine.high %v622, 0.0
    %v633 = vcombine.high %v629, 0.0
    %v634 = vcombine.low %v538, %v545
    %v636 = vunpack.c.l.s4 1983009808
    %v637 = vunpack.c.0.s8 %v636
    %v638 = vlaneseq
    %v639 = vshrl.u32 %v638, 7
    %v640 = vsub.s32 %v637, %v639
    %v641 = vrot.slane %v634, %v640
    %v642 = vcombine.low %v562, %v563
    %v644 = vunpack.c.l.s4 1983009808
    %v645 = vunpack.c.0.s8 %v644
    %v646 = vlaneseq
    %v647 = vshrl.u32 %v646, 7
    %v648 = vsub.s32 %v645, %v647
    %v649 = vrot.slane %v642, %v648
    %v650 = vcombine.low %v554, %v561
    %v652 = vunpack.c.l.s4 1983009808
    %v653 = vunpack.c.0.s8 %v652
    %v654 = vlaneseq
    %v655 = vshrl.u32 %v654, 7
    %v656 = vsub.s32 %v653, %v655
    %v657 = vrot.slane %v650, %v656
    %v658 = vcombine.low %v564, %v565
    %v660 = vunpack.c.l.s4 1983009808
    %v661 = vunpack.c.0.s8 %v660
    %v662 = vlaneseq
    %v663 = vshrl.u32 %v662, 7
    %v664 = vsub.s32 %v661, %v663
    %v665 = vrot.slane %v658, %v664
    %v666 = vcombine.low %v641, %v649
    %v667 = vcombine.high %v641, %v649
    %v669 = vunpack.c.l.s4 1934713408
    %v670 = vunpack.c.0.s8 %v669
    %v671 = vlaneseq
    %v672 = vshrl.u32 %v671, 7
    %v673 = vsub.s32 %v670, %v672
    %v674 = vrot.slane %v666, %v673
    %v676 = vunpack.c.l.s4 1934713408
    %v677 = vunpack.c.0.s8 %v676
    %v678 = vlaneseq
    %v679 = vshrl.u32 %v678, 7
    %v680 = vsub.s32 %v677, %v679
    %v681 = vrot.slane %v667, %v680
    %v682 = vcombine.low %v657, %v665
    %v683 = vcombine.high %v657, %v665
    %v685 = vunpack.c.l.s4 1934713408
    %v686 = vunpack.c.0.s8 %v685
    %v687 = vlaneseq
    %v688 = vshrl.u32 %v687, 7
    %v689 = vsub.s32 %v686, %v688
    %v690 = vrot.slane %v682, %v689
    %v692 = vunpack.c.l.s4 1934713408
    %v693 = vunpack.c.0.s8 %v692
    %v694 = vlaneseq
    %v695 = vshrl.u32 %v694, 7
    %v696 = vsub.s32 %v693, %v695
    %v697 = vrot.slane %v683, %v696
    %v698 = vcombine.low %v674, %v690
    %v699 = vcombine.high %v674, %v690
    %v700 = vcombine.low %v681, %v697
    %v701 = vcombine.high %v681, %v697
    %v702 = vcombine.low %v606, %v613
    %v704 = vunpack.c.l.s4 1983009808
    %v705 = vunpack.c.0.s8 %v704
    %v706 = vlaneseq
    %v707 = vshrl.u32 %v706, 7
    %v708 = vsub.s32 %v705, %v707
    %v709 = vrot.slane %v702, %v708
    %v710 = vcombine.low %v630, %v631
    %v712 = vunpack.c.l.s4 1983009808
    %v713 = vunpack.c.0.s8 %v712
    %v714 = vlaneseq
    %v715 = vshrl.u32 %v714, 7
    %v716 = vsub.s32 %v713, %v715
    %v717 = vrot.slane %v710, %v716
    %v718 = vcombine.low %v622, %v629
    %v720 = vunpack.c.l.s4 1983009808
    %v721 = vunpack.c.0.s8 %v720
    %v722 = vlaneseq
    %v723 = vshrl.u32 %v722, 7
    %v724 = vsub.s32 %v721, %v723
    %v725 = vrot.slane %v718, %v724
    %v726 = vcombine.low %v632, %v633
    %v728 = vunpack.c.l.s4 1983009808
    %v729 = vunpack.c.0.s8 %v728
    %v730 = vlaneseq
    %v731 = vshrl.u32 %v730, 7
    %v732 = vsub.s32 %v729, %v731
    %v733 = vrot.slane %v726, %v732
    %v734 = vcombine.low %v709, %v717
    %v735 = vcombine.high %v709, %v717
    %v737 = vunpack.c.l.s4 1934713408
    %v738 = vunpack.c.0.s8 %v737
    %v739 = vlaneseq
    %v740 = vshrl.u32 %v739, 7
    %v741 = vsub.s32 %v738, %v740
    %v742 = vrot.slane %v734, %v741
    %v744 = vunpack.c.l.s4 1934713408
    %v745 = vunpack.c.0.s8 %v744
    %v746 = vlaneseq
    %v747 = vshrl.u32 %v746, 7
    %v748 = vsub.s32 %v745, %v747
    %v749 = vrot.slane %v735, %v748
    %v750 = vcombine.low %v725, %v733
    %v751 = vcombine.high %v725, %v733
    %v753 = vunpack.c.l.s4 1934713408
    %v754 = vunpack.c.0.s8 %v753
    %v755 = vlaneseq
    %v756 = vshrl.u32 %v755, 7
    %v757 = vsub.s32 %v754, %v756
    %v758 = vrot.slane %v750, %v757
    %v760 = vunpack.c.l.s4 1934713408
    %v761 = vunpack.c.0.s8 %v760
    %v762 = vlaneseq
    %v763 = vshrl.u32 %v762, 7
    %v764 = vsub.s32 %v761, %v763
    %v765 = vrot.slane %v751, %v764
    %v766 = vcombine.low %v742, %v758
    %v767 = vcombine.high %v742, %v758
    %v768 = vcombine.low %v749, %v765
    %v769 = vcombine.high %v749, %v765
    %770 = vrot.lane.b32.xlu0 %v171, 64
    %v771 = vpop.permute.xlu0 %770
    %772 = vrot.lane.b32.xlu0 %v174, 64
    %v773 = vpop.permute.xlu0 %772
    %774 = vrot.lane.b32.xlu0 %v185, 64
    %v775 = vpop.permute.xlu0 %774
    %776 = vrot.lane.b32.xlu0 %v187, 64
    %v777 = vpop.permute.xlu0 %776
    %778 = vrot.lane.b32.xlu0 %v191, 64
    %v779 = vpop.permute.xlu0 %778
    %780 = vrot.lane.b32.xlu0 %v193, 64
    %v781 = vpop.permute.xlu0 %780
    %782 = vrot.lane.b32.xlu0 %v197, 64
    %v783 = vpop.permute.xlu0 %782
    %784 = vrot.lane.b32.xlu0 %v199, 64
    %v785 = vpop.permute.xlu0 %784
    %v794 = vcombine.low %v771, %v779
    %v795 = vcombine.high %v771, %v779
    %v797 = vunpack.c.l.s4 1983009808
    %v798 = vunpack.c.0.s8 %v797
    %v799 = vlaneseq
    %v800 = vshrl.u32 %v799, 7
    %v801 = vsub.s32 %v798, %v800
    %v802 = vrot.slane %v794, %v801
    %v804 = vunpack.c.l.s4 1983009808
    %v805 = vunpack.c.0.s8 %v804
    %v806 = vlaneseq
    %v807 = vshrl.u32 %v806, 7
    %v808 = vsub.s32 %v805, %v807
    %v809 = vrot.slane %v795, %v808
    %v810 = vcombine.low %v775, %v783
    %v811 = vcombine.high %v775, %v783
    %v813 = vunpack.c.l.s4 1983009808
    %v814 = vunpack.c.0.s8 %v813
    %v815 = vlaneseq
    %v816 = vshrl.u32 %v815, 7
    %v817 = vsub.s32 %v814, %v816
    %v818 = vrot.slane %v810, %v817
    %v820 = vunpack.c.l.s4 1983009808
    %v821 = vunpack.c.0.s8 %v820
    %v822 = vlaneseq
    %v823 = vshrl.u32 %v822, 7
    %v824 = vsub.s32 %v821, %v823
    %v825 = vrot.slane %v811, %v824
    %v826 = vcombine.low %v802, %v818
    %v827 = vcombine.high %v802, %v818
    %v829 = vunpack.c.l.s4 1934713408
    %v830 = vunpack.c.0.s8 %v829
    %v831 = vlaneseq
    %v832 = vshrl.u32 %v831, 7
    %v833 = vsub.s32 %v830, %v832
    %v834 = vrot.slane %v826, %v833
    %v836 = vunpack.c.l.s4 1934713408
    %v837 = vunpack.c.0.s8 %v836
    %v838 = vlaneseq
    %v839 = vshrl.u32 %v838, 7
    %v840 = vsub.s32 %v837, %v839
    %v841 = vrot.slane %v827, %v840
    %v842 = vcombine.low %v809, %v825
    %v843 = vcombine.high %v809, %v825
    %v845 = vunpack.c.l.s4 1934713408
    %v846 = vunpack.c.0.s8 %v845
    %v847 = vlaneseq
    %v848 = vshrl.u32 %v847, 7
    %v849 = vsub.s32 %v846, %v848
    %v850 = vrot.slane %v842, %v849
    %v852 = vunpack.c.l.s4 1934713408
    %v853 = vunpack.c.0.s8 %v852
    %v854 = vlaneseq
    %v855 = vshrl.u32 %v854, 7
    %v856 = vsub.s32 %v853, %v855
    %v857 = vrot.slane %v843, %v856
    %v858 = vcombine.high %v834, 0.0
    %v859 = vcombine.high %v841, 0.0
    %v860 = vcombine.high %v850, 0.0
    %v861 = vcombine.high %v857, 0.0
    %v862 = vcombine.low %v773, %v781
    %v863 = vcombine.high %v773, %v781
    %v865 = vunpack.c.l.s4 1983009808
    %v866 = vunpack.c.0.s8 %v865
    %v867 = vlaneseq
    %v868 = vshrl.u32 %v867, 7
    %v869 = vsub.s32 %v866, %v868
    %v870 = vrot.slane %v862, %v869
    %v872 = vunpack.c.l.s4 1983009808
    %v873 = vunpack.c.0.s8 %v872
    %v874 = vlaneseq
    %v875 = vshrl.u32 %v874, 7
    %v876 = vsub.s32 %v873, %v875
    %v877 = vrot.slane %v863, %v876
    %v878 = vcombine.low %v777, %v785
    %v879 = vcombine.high %v777, %v785
    %v881 = vunpack.c.l.s4 1983009808
    %v882 = vunpack.c.0.s8 %v881
    %v883 = vlaneseq
    %v884 = vshrl.u32 %v883, 7
    %v885 = vsub.s32 %v882, %v884
    %v886 = vrot.slane %v878, %v885
    %v888 = vunpack.c.l.s4 1983009808
    %v889 = vunpack.c.0.s8 %v888
    %v890 = vlaneseq
    %v891 = vshrl.u32 %v890, 7
    %v892 = vsub.s32 %v889, %v891
    %v893 = vrot.slane %v879, %v892
    %v894 = vcombine.low %v870, %v886
    %v895 = vcombine.high %v870, %v886
    %v897 = vunpack.c.l.s4 1934713408
    %v898 = vunpack.c.0.s8 %v897
    %v899 = vlaneseq
    %v900 = vshrl.u32 %v899, 7
    %v901 = vsub.s32 %v898, %v900
    %v902 = vrot.slane %v894, %v901
    %v904 = vunpack.c.l.s4 1934713408
    %v905 = vunpack.c.0.s8 %v904
    %v906 = vlaneseq
    %v907 = vshrl.u32 %v906, 7
    %v908 = vsub.s32 %v905, %v907
    %v909 = vrot.slane %v895, %v908
    %v910 = vcombine.low %v877, %v893
    %v911 = vcombine.high %v877, %v893
    %v913 = vunpack.c.l.s4 1934713408
    %v914 = vunpack.c.0.s8 %v913
    %v915 = vlaneseq
    %v916 = vshrl.u32 %v915, 7
    %v917 = vsub.s32 %v914, %v916
    %v918 = vrot.slane %v910, %v917
    %v920 = vunpack.c.l.s4 1934713408
    %v921 = vunpack.c.0.s8 %v920
    %v922 = vlaneseq
    %v923 = vshrl.u32 %v922, 7
    %v924 = vsub.s32 %v921, %v923
    %v925 = vrot.slane %v911, %v924
    %v926 = vcombine.high %v902, 0.0
    %v927 = vcombine.high %v909, 0.0
    %v928 = vcombine.high %v918, 0.0
    %v929 = vcombine.high %v925, 0.0
    %v930 = vcombine.low %v834, %v841
    %v932 = vunpack.c.l.s4 1983009808
    %v933 = vunpack.c.0.s8 %v932
    %v934 = vlaneseq
    %v935 = vshrl.u32 %v934, 7
    %v936 = vsub.s32 %v933, %v935
    %v937 = vrot.slane %v930, %v936
    %v938 = vcombine.low %v858, %v859
    %v940 = vunpack.c.l.s4 1983009808
    %v941 = vunpack.c.0.s8 %v940
    %v942 = vlaneseq
    %v943 = vshrl.u32 %v942, 7
    %v944 = vsub.s32 %v941, %v943
    %v945 = vrot.slane %v938, %v944
    %v946 = vcombine.low %v850, %v857
    %v948 = vunpack.c.l.s4 1983009808
    %v949 = vunpack.c.0.s8 %v948
    %v950 = vlaneseq
    %v951 = vshrl.u32 %v950, 7
    %v952 = vsub.s32 %v949, %v951
    %v953 = vrot.slane %v946, %v952
    %v954 = vcombine.low %v860, %v861
    %v956 = vunpack.c.l.s4 1983009808
    %v957 = vunpack.c.0.s8 %v956
    %v958 = vlaneseq
    %v959 = vshrl.u32 %v958, 7
    %v960 = vsub.s32 %v957, %v959
    %v961 = vrot.slane %v954, %v960
    %v962 = vcombine.low %v937, %v945
    %v963 = vcombine.high %v937, %v945
    %v965 = vunpack.c.l.s4 1934713408
    %v966 = vunpack.c.0.s8 %v965
    %v967 = vlaneseq
    %v968 = vshrl.u32 %v967, 7
    %v969 = vsub.s32 %v966, %v968
    %v970 = vrot.slane %v962, %v969
    %v972 = vunpack.c.l.s4 1934713408
    %v973 = vunpack.c.0.s8 %v972
    %v974 = vlaneseq
    %v975 = vshrl.u32 %v974, 7
    %v976 = vsub.s32 %v973, %v975
    %v977 = vrot.slane %v963, %v976
    %v978 = vcombine.low %v953, %v961
    %v979 = vcombine.high %v953, %v961
    %v981 = vunpack.c.l.s4 1934713408
    %v982 = vunpack.c.0.s8 %v981
    %v983 = vlaneseq
    %v984 = vshrl.u32 %v983, 7
    %v985 = vsub.s32 %v982, %v984
    %v986 = vrot.slane %v978, %v985
    %v988 = vunpack.c.l.s4 1934713408
    %v989 = vunpack.c.0.s8 %v988
    %v990 = vlaneseq
    %v991 = vshrl.u32 %v990, 7
    %v992 = vsub.s32 %v989, %v991
    %v993 = vrot.slane %v979, %v992
    %v994 = vcombine.low %v970, %v986
    %v995 = vcombine.high %v970, %v986
    %v996 = vcombine.low %v977, %v993
    %v997 = vcombine.high %v977, %v993
    %v998 = vcombine.low %v902, %v909
    %v1000 = vunpack.c.l.s4 1983009808
    %v1001 = vunpack.c.0.s8 %v1000
    %v1002 = vlaneseq
    %v1003 = vshrl.u32 %v1002, 7
    %v1004 = vsub.s32 %v1001, %v1003
    %v1005 = vrot.slane %v998, %v1004
    %v1006 = vcombine.low %v926, %v927
    %v1008 = vunpack.c.l.s4 1983009808
    %v1009 = vunpack.c.0.s8 %v1008
    %v1010 = vlaneseq
    %v1011 = vshrl.u32 %v1010, 7
    %v1012 = vsub.s32 %v1009, %v1011
    %v1013 = vrot.slane %v1006, %v1012
    %v1014 = vcombine.low %v918, %v925
    %v1016 = vunpack.c.l.s4 1983009808
    %v1017 = vunpack.c.0.s8 %v1016
    %v1018 = vlaneseq
    %v1019 = vshrl.u32 %v1018, 7
    %v1020 = vsub.s32 %v1017, %v1019
    %v1021 = vrot.slane %v1014, %v1020
    %v1022 = vcombine.low %v928, %v929
    %v1024 = vunpack.c.l.s4 1983009808
    %v1025 = vunpack.c.0.s8 %v1024
    %v1026 = vlaneseq
    %v1027 = vshrl.u32 %v1026, 7
    %v1028 = vsub.s32 %v1025, %v1027
    %v1029 = vrot.slane %v1022, %v1028
    %v1030 = vcombine.low %v1005, %v1013
    %v1031 = vcombine.high %v1005, %v1013
    %v1033 = vunpack.c.l.s4 1934713408
    %v1034 = vunpack.c.0.s8 %v1033
    %v1035 = vlaneseq
    %v1036 = vshrl.u32 %v1035, 7
    %v1037 = vsub.s32 %v1034, %v1036
    %v1038 = vrot.slane %v1030, %v1037
    %v1040 = vunpack.c.l.s4 1934713408
    %v1041 = vunpack.c.0.s8 %v1040
    %v1042 = vlaneseq
    %v1043 = vshrl.u32 %v1042, 7
    %v1044 = vsub.s32 %v1041, %v1043
    %v1045 = vrot.slane %v1031, %v1044
    %v1046 = vcombine.low %v1021, %v1029
    %v1047 = vcombine.high %v1021, %v1029
    %v1049 = vunpack.c.l.s4 1934713408
    %v1050 = vunpack.c.0.s8 %v1049
    %v1051 = vlaneseq
    %v1052 = vshrl.u32 %v1051, 7
    %v1053 = vsub.s32 %v1050, %v1052
    %v1054 = vrot.slane %v1046, %v1053
    %v1056 = vunpack.c.l.s4 1934713408
    %v1057 = vunpack.c.0.s8 %v1056
    %v1058 = vlaneseq
    %v1059 = vshrl.u32 %v1058, 7
    %v1060 = vsub.s32 %v1057, %v1059
    %v1061 = vrot.slane %v1047, %v1060
    %v1062 = vcombine.low %v1038, %v1054
    %v1063 = vcombine.high %v1038, %v1054
    %v1064 = vcombine.low %v1045, %v1061
    %v1065 = vcombine.high %v1045, %v1061
    %vm1066 = vcmask 64512
    %v1068 = vsel %vm1066, %v402, 0
    %v1071 = vsel %vm1066, %v470, 0
    %v1074 = vsel %vm1066, %v403, 0
    %v1077 = vsel %vm1066, %v471, 0
    %v1080 = vsel %vm1066, %v404, 0
    %v1083 = vsel %vm1066, %v472, 0
    %v1086 = vsel %vm1066, %v405, 0
    %v1089 = vsel %vm1066, %v473, 0
    %v1092 = vsel %vm1066, %v698, 0
    %v1095 = vsel %vm1066, %v766, 0
    %v1098 = vsel %vm1066, %v699, 0
    %v1101 = vsel %vm1066, %v767, 0
    %v1104 = vsel %vm1066, %v700, 0
    %v1107 = vsel %vm1066, %v768, 0
    %v1110 = vsel %vm1066, %v701, 0
    %v1113 = vsel %vm1066, %v769, 0
    %1115 = vmatprep.subr.mxu0 0.0
    %1116 = vmatpush1.xpose.msra.mxu0 %v1092
    %1117 = vmatprep.subr.mxu0 0.0
    %1118 = vmatpush1.xpose.msra.mxu0 %v1095
    %1119 = vmatprep.subr.mxu0 0.0
    %1120 = vmatpush1.xpose.msra.mxu0 %v1098
    %1121 = vmatprep.subr.mxu0 0.0
    %1122 = vmatpush1.xpose.msra.mxu0 %v1101
    %1123 = vmatprep.subr.mxu0 0.0
    %1124 = vmatpush1.xpose.msra.mxu0 %v1104
    %1125 = vmatprep.subr.mxu0 0.0
    %1126 = vmatpush1.xpose.msra.mxu0 %v1107
    %1127 = vmatprep.subr.mxu0 0.0
    %1128 = vmatpush1.xpose.msra.mxu0 %v1110
    %1129 = vmatprep.subr.mxu0 0.0
    %1130 = vmatpush1.xpose.msra.mxu0 %v1113
    %1131 = vmatprep.subr.mxu0 0.0
    %1132 = vmatpush1.xpose.msra.mxu0 0.0
    %1133 = vmatprep.subr.mxu0 0.0
    %1134 = vmatpush1.xpose.msra.mxu0 0.0
    %1135 = vmatprep.subr.mxu0 0.0
    %1136 = vmatpush1.xpose.msra.mxu0 0.0
    %1137 = vmatprep.subr.mxu0 0.0
    %1138 = vmatpush1.xpose.msra.mxu0 0.0
    %1139 = vmatprep.subr.mxu0 0.0
    %1140 = vmatpush1.xpose.msra.mxu0 0.0
    %1141 = vmatprep.subr.mxu0 0.0
    %1142 = vmatpush1.xpose.msra.mxu0 0.0
    %1143 = vmatprep.subr.mxu0 0.0
    %1144 = vmatpush1.xpose.msra.mxu0 0.0
    %1145 = vmatprep.subr.mxu0 0.0
    %1146 = vmatpush1.xpose.msra.mxu0 0.0
    %1147 = vmatprep.subr.mxu0 0.0
    %1148 = vmatpush1.xpose.msra.mxu0 0.0
    %1149 = vmatprep.subr.mxu0 0.0
    %1150 = vmatpush1.xpose.msra.mxu0 0.0
    %1151 = vmatprep.subr.mxu0 0.0
    %1152 = vmatpush1.xpose.msra.mxu0 0.0
    %1153 = vmatprep.subr.mxu0 0.0
    %1154 = vmatpush1.xpose.msra.mxu0 0.0
    %1155 = vmatprep.subr.mxu0 0.0
    %1156 = vmatpush1.xpose.msra.mxu0 0.0
    %1157 = vmatprep.subr.mxu0 0.0
    %1158 = vmatpush1.xpose.msra.mxu0 0.0
    %1159 = vmatprep.subr.mxu0 0.0
    %1160 = vmatpush1.xpose.msra.mxu0 0.0
    %1161 = vmatprep.subr.mxu0 0.0
    %1162 = vmatpush1.xpose.msra.mxu0 0.0
    %1163 = vmatprep.subr.mxu0 0.0
    %1164 = vmatpush1.xpose.msra.mxu0 0.0
    %1165 = vmatprep.subr.mxu0 0.0
    %1166 = vmatpush1.xpose.msra.mxu0 0.0
    %1167 = vmatprep.subr.mxu0 0.0
    %1168 = vmatpush1.xpose.msra.mxu0 0.0
    %1169 = vmatprep.subr.mxu0 0.0
    %1170 = vmatpush1.xpose.msra.mxu0 0.0
    %1171 = vmatprep.subr.mxu0 0.0
    %1172 = vmatpush1.xpose.msra.mxu0 0.0
    %1173 = vmatprep.subr.mxu0 0.0
    %1174 = vmatpush1.xpose.msra.mxu0 0.0
    %1175 = vmatprep.subr.mxu0 0.0
    %1176 = vmatpush1.xpose.msra.mxu0 0.0
    %1177 = vmatprep.subr.mxu0 0.0
    %1178 = vmatpush1.xpose.msra.mxu0 0.0
    %1179 = vmatprep.mubr.f32.mxu0 0.0
    %1180 = vmatmul.mubr.f32.gmra.mrb[0].mxu0 %v1068
    %v1181 = vpop.f32.mrb[0].mxu0
    %v1182 = vadd.f32 %v92, %v1181
    %v1183 = vpop.f32.mrb[0].mxu0
    %1184 = vmatprep.mubr.f32.mxu0 0.0
    %1185 = vmatmul.mubr.f32.gmra.mrb[0].mxu0 %v1071
    %v1186 = vpop.f32.mrb[0].mxu0
    %v1187 = vadd.f32 %v93, %v1186
    %v1188 = vpop.f32.mrb[0].mxu0
    %1189 = vmatprep.mubr.f32.mxu0 0.0
    %1190 = vmatmul.mubr.f32.gmra.mrb[0].mxu0 %v1074
    %v1191 = vpop.f32.mrb[0].mxu0
    %v1192 = vadd.f32 %v94, %v1191
    %v1193 = vpop.f32.mrb[0].mxu0
    %1194 = vmatprep.mubr.f32.mxu0 0.0
    %1195 = vmatmul.mubr.f32.gmra.mrb[0].mxu0 %v1077
    %v1196 = vpop.f32.mrb[0].mxu0
    %v1197 = vadd.f32 %v95, %v1196
    %v1198 = vpop.f32.mrb[0].mxu0
    %1199 = vmatprep.mubr.f32.mxu0 0.0
    %1200 = vmatmul.mubr.f32.gmra.mrb[0].mxu0 %v1080
    %v1201 = vpop.f32.mrb[0].mxu0
    %v1202 = vadd.f32 %v96, %v1201
    %v1203 = vpop.f32.mrb[0].mxu0
    %1204 = vmatprep.mubr.f32.mxu0 0.0
    %1205 = vmatmul.mubr.f32.gmra.mrb[0].mxu0 %v1083
    %v1206 = vpop.f32.mrb[0].mxu0
    %v1207 = vadd.f32 %v97, %v1206
    %v1208 = vpop.f32.mrb[0].mxu0
    %1209 = vmatprep.mubr.f32.mxu0 0.0
    %1210 = vmatmul.mubr.f32.gmra.mrb[0].mxu0 %v1086
    %v1211 = vpop.f32.mrb[0].mxu0
    %v1212 = vadd.f32 %v98, %v1211
    %v1213 = vpop.f32.mrb[0].mxu0
    %1214 = vmatprep.mubr.f32.mxu0 0.0
    %1215 = vmatmul.mubr.f32.gmra.mrb[0].mxu0 %v1089
    %v1216 = vpop.f32.mrb[0].mxu0
    %v1217 = vadd.f32 %v99, %v1216
    %v1218 = vpop.f32.mrb[0].mxu0
    %1219 = vdwg.mxu0
    %vm1220 = vcmask 523264
    %v1221 = vsel %vm1220, %v1182, -inf
    %1222 = vmax.xlane.f32.xlu0 %v1221
    %v1223 = vpop.xlane.xlu0 %1222
    %v1224 = vsel %vm1220, %v1187, -inf
    %1225 = vmax.xlane.f32.xlu0 %v1224
    %v1226 = vpop.xlane.xlu0 %1225
    %v1227 = vsel %vm1220, %v1192, -inf
    %1228 = vmax.xlane.f32.xlu0 %v1227
    %v1229 = vpop.xlane.xlu0 %1228
    %v1230 = vsel %vm1220, %v1197, -inf
    %1231 = vmax.xlane.f32.xlu0 %v1230
    %v1232 = vpop.xlane.xlu0 %1231
    %v1233 = vsel %vm1220, %v1202, -inf
    %1234 = vmax.xlane.f32.xlu0 %v1233
    %v1235 = vpop.xlane.xlu0 %1234
    %v1236 = vsel %vm1220, %v1207, -inf
    %1237 = vmax.xlane.f32.xlu0 %v1236
    %v1238 = vpop.xlane.xlu0 %1237
    %v1239 = vsel %vm1220, %v1212, -inf
    %1240 = vmax.xlane.f32.xlu0 %v1239
    %v1241 = vpop.xlane.xlu0 %1240
    %v1242 = vsel %vm1220, %v1217, -inf
    %1243 = vmax.xlane.f32.xlu0 %v1242
    %v1244 = vpop.xlane.xlu0 %1243
    %v1245 = vsub.f32 %v1182, %v1223
    %v1246 = vsub.f32 %v1187, %v1226
    %v1247 = vsub.f32 %v1192, %v1229
    %v1248 = vsub.f32 %v1197, %v1232
    %v1249 = vsub.f32 %v1202, %v1235
    %v1250 = vsub.f32 %v1207, %v1238
    %v1251 = vsub.f32 %v1212, %v1241
    %v1252 = vsub.f32 %v1217, %v1244
    %v1253 = vmul.f32 %v1245, 1.442695
    %v1254 = vpow.pop %v1253
    %v1255 = vmul.f32 %v1246, 1.442695
    %v1256 = vpow.pop %v1255
    %v1257 = vmul.f32 %v1247, 1.442695
    %v1258 = vpow.pop %v1257
    %v1259 = vmul.f32 %v1248, 1.442695
    %v1260 = vpow.pop %v1259
    %v1261 = vmul.f32 %v1249, 1.442695
    %v1262 = vpow.pop %v1261
    %v1263 = vmul.f32 %v1250, 1.442695
    %v1264 = vpow.pop %v1263
    %v1265 = vmul.f32 %v1251, 1.442695
    %v1266 = vpow.pop %v1265
    %v1267 = vmul.f32 %v1252, 1.442695
    %v1268 = vpow.pop %v1267
    %v1269 = vsel %vm1220, %v1254, 0.0
    %1270 = vadd.xlane.f32.xlu0 %v1269
    %v1271 = vpop.xlane.xlu0 %1270
    %v1272 = vsel %vm1220, %v1256, 0.0
    %1273 = vadd.xlane.f32.xlu0 %v1272
    %v1274 = vpop.xlane.xlu0 %1273
    %v1275 = vsel %vm1220, %v1258, 0.0
    %1276 = vadd.xlane.f32.xlu0 %v1275
    %v1277 = vpop.xlane.xlu0 %1276
    %v1278 = vsel %vm1220, %v1260, 0.0
    %1279 = vadd.xlane.f32.xlu0 %v1278
    %v1280 = vpop.xlane.xlu0 %1279
    %v1281 = vsel %vm1220, %v1262, 0.0
    %1282 = vadd.xlane.f32.xlu0 %v1281
    %v1283 = vpop.xlane.xlu0 %1282
    %v1284 = vsel %vm1220, %v1264, 0.0
    %1285 = vadd.xlane.f32.xlu0 %v1284
    %v1286 = vpop.xlane.xlu0 %1285
    %v1287 = vsel %vm1220, %v1266, 0.0
    %1288 = vadd.xlane.f32.xlu0 %v1287
    %v1289 = vpop.xlane.xlu0 %1288
    %v1290 = vsel %vm1220, %v1268, 0.0
    %1291 = vadd.xlane.f32.xlu0 %v1290
    %v1292 = vpop.xlane.xlu0 %1291
    %v1293 = vrcp.pop %v1271
    %v1294 = vrcp.pop %v1274
    %v1295 = vrcp.pop %v1277
    %v1296 = vrcp.pop %v1280
    %v1297 = vrcp.pop %v1283
    %v1298 = vrcp.pop %v1286
    %v1299 = vrcp.pop %v1289
    %v1300 = vrcp.pop %v1292
    %v1301 = vmul.f32 %v1254, %v1293
    %v1302 = vmul.f32 %v1256, %v1294
    %v1303 = vmul.f32 %v1258, %v1295
    %v1304 = vmul.f32 %v1260, %v1296
    %v1305 = vmul.f32 %v1262, %v1297
    %v1306 = vmul.f32 %v1264, %v1298
    %v1307 = vmul.f32 %v1266, %v1299
    %v1308 = vmul.f32 %v1268, %v1300
    %v1310 = vsel %vm1220, %v1301, 0
    %v1313 = vsel %vm1220, %v1302, 0
    %v1316 = vsel %vm1220, %v1303, 0
    %v1319 = vsel %vm1220, %v1304, 0
    %v1322 = vsel %vm1220, %v1305, 0
    %v1325 = vsel %vm1220, %v1306, 0
    %v1328 = vsel %vm1220, %v1307, 0
    %v1331 = vsel %vm1220, %v1308, 0
    %1333 = vmatprep.subr.mxu0 0.0
    %1334 = vmatpush1.msra.mxu0 %v994
    %1335 = vmatprep.subr.mxu0 0.0
    %1336 = vmatpush1.msra.mxu0 %v1062
    %1337 = vmatprep.subr.mxu0 0.0
    %1338 = vmatpush1.msra.mxu0 %v995
    %1339 = vmatprep.subr.mxu0 0.0
    %1340 = vmatpush1.msra.mxu0 %v1063
    %1341 = vmatprep.subr.mxu0 0.0
    %1342 = vmatpush1.msra.mxu0 %v996
    %1343 = vmatprep.subr.mxu0 0.0
    %1344 = vmatpush1.msra.mxu0 %v1064
    %1345 = vmatprep.subr.mxu0 0.0
    %1346 = vmatpush1.msra.mxu0 %v997
    %1347 = vmatprep.subr.mxu0 0.0
    %1348 = vmatpush1.msra.mxu0 %v1065
    %1349 = vmatprep.subr.mxu0 0.0
    %1350 = vmatpush1.msra.mxu0 0.0
    %1351 = vmatprep.subr.mxu0 0.0
    %1352 = vmatpush1.msra.mxu0 0.0
    %1353 = vmatprep.subr.mxu0 0.0
    %1354 = vmatpush1.msra.mxu0 0.0
    %1355 = vmatprep.subr.mxu0 0.0
    %1356 = vmatpush1.msra.mxu0 0.0
    %1357 = vmatprep.subr.mxu0 0.0
    %1358 = vmatpush1.msra.mxu0 0.0
    %1359 = vmatprep.subr.mxu0 0.0
    %1360 = vmatpush1.msra.mxu0 0.0
    %1361 = vmatprep.subr.mxu0 0.0
    %1362 = vmatpush1.msra.mxu0 0.0
    %1363 = vmatprep.subr.mxu0 0.0
    %1364 = vmatpush1.msra.mxu0 0.0
    %1365 = vmatprep.subr.mxu0 0.0
    %1366 = vmatpush1.msra.mxu0 0.0
    %1367 = vmatprep.subr.mxu0 0.0
    %1368 = vmatpush1.msra.mxu0 0.0
    %1369 = vmatprep.subr.mxu0 0.0
    %1370 = vmatpush1.msra.mxu0 0.0
    %1371 = vmatprep.subr.mxu0 0.0
    %1372 = vmatpush1.msra.mxu0 0.0
    %1373 = vmatprep.subr.mxu0 0.0
    %1374 = vmatpush1.msra.mxu0 0.0
    %1375 = vmatprep.subr.mxu0 0.0
    %1376 = vmatpush1.msra.mxu0 0.0
    %1377 = vmatprep.subr.mxu0 0.0
    %1378 = vmatpush1.msra.mxu0 0.0
    %1379 = vmatprep.subr.mxu0 0.0
    %1380 = vmatpush1.msra.mxu0 0.0
    %1381 = vmatprep.subr.mxu0 0.0
    %1382 = vmatpush1.msra.mxu0 0.0
    %1383 = vmatprep.subr.mxu0 0.0
    %1384 = vmatpush1.msra.mxu0 0.0
    %1385 = vmatprep.subr.mxu0 0.0
    %1386 = vmatpush1.msra.mxu0 0.0
    %1387 = vmatprep.subr.mxu0 0.0
    %1388 = vmatpush1.msra.mxu0 0.0
    %1389 = vmatprep.subr.mxu0 0.0
    %1390 = vmatpush1.msra.mxu0 0.0
    %1391 = vmatprep.subr.mxu0 0.0
    %1392 = vmatpush1.msra.mxu0 0.0
    %1393 = vmatprep.subr.mxu0 0.0
    %1394 = vmatpush1.msra.mxu0 0.0
    %1395 = vmatprep.subr.mxu0 0.0
    %1396 = vmatpush1.msra.mxu0 0.0
    %1397 = vmatprep.mubr.f32.mxu0 0.0
    %1398 = vmatmul.mubr.f32.gmra.mrb[0].mxu0 %v1310
    %v1399 = vpop.f32.mrb[0].mxu0
    %v1400 = vadd.f32 0.0, %v1399
    %v1401 = vpop.f32.mrb[0].mxu0
    %1402 = vmatprep.mubr.f32.mxu0 0.0
    %1403 = vmatmul.mubr.f32.gmra.mrb[0].mxu0 %v1313
    %v1404 = vpop.f32.mrb[0].mxu0
    %v1405 = vadd.f32 0.0, %v1404
    %v1406 = vpop.f32.mrb[0].mxu0
    %1407 = vmatprep.mubr.f32.mxu0 0.0
    %1408 = vmatmul.mubr.f32.gmra.mrb[0].mxu0 %v1316
    %v1409 = vpop.f32.mrb[0].mxu0
    %v1410 = vadd.f32 0.0, %v1409
    %v1411 = vpop.f32.mrb[0].mxu0
    %1412 = vmatprep.mubr.f32.mxu0 0.0
    %1413 = vmatmul.mubr.f32.gmra.mrb[0].mxu0 %v1319
    %v1414 = vpop.f32.mrb[0].mxu0
    %v1415 = vadd.f32 0.0, %v1414
    %v1416 = vpop.f32.mrb[0].mxu0
    %1417 = vmatprep.mubr.f32.mxu0 0.0
    %1418 = vmatmul.mubr.f32.gmra.mrb[0].mxu0 %v1322
    %v1419 = vpop.f32.mrb[0].mxu0
    %v1420 = vadd.f32 0.0, %v1419
    %v1421 = vpop.f32.mrb[0].mxu0
    %1422 = vmatprep.mubr.f32.mxu0 0.0
    %1423 = vmatmul.mubr.f32.gmra.mrb[0].mxu0 %v1325
    %v1424 = vpop.f32.mrb[0].mxu0
    %v1425 = vadd.f32 0.0, %v1424
    %v1426 = vpop.f32.mrb[0].mxu0
    %1427 = vmatprep.mubr.f32.mxu0 0.0
    %1428 = vmatmul.mubr.f32.gmra.mrb[0].mxu0 %v1328
    %v1429 = vpop.f32.mrb[0].mxu0
    %v1430 = vadd.f32 0.0, %v1429
    %v1431 = vpop.f32.mrb[0].mxu0
    %1432 = vmatprep.mubr.f32.mxu0 0.0
    %1433 = vmatmul.mubr.f32.gmra.mrb[0].mxu0 %v1331
    %v1434 = vpop.f32.mrb[0].mxu0
    %v1435 = vadd.f32 0.0, %v1434
    %v1436 = vpop.f32.mrb[0].mxu0
    %1437 = vdwg.mxu0
    %v1438 = vcombine.low %v1400, %v1420
    %v1439 = vcombine.high %v1400, %v1420
    %v1441 = vunpack.c.l.s4 1983009808
    %v1442 = vunpack.c.0.s8 %v1441
    %v1443 = vlaneseq
    %v1444 = vshrl.u32 %v1443, 7
    %v1445 = vsub.s32 %v1442, %v1444
    %v1446 = vrot.slane %v1438, %v1445
    %v1448 = vunpack.c.l.s4 1983009808
    %v1449 = vunpack.c.0.s8 %v1448
    %v1450 = vlaneseq
    %v1451 = vshrl.u32 %v1450, 7
    %v1452 = vsub.s32 %v1449, %v1451
    %v1453 = vrot.slane %v1439, %v1452
    %v1454 = vcombine.low %v1410, %v1430
    %v1455 = vcombine.high %v1410, %v1430
    %v1457 = vunpack.c.l.s4 1983009808
    %v1458 = vunpack.c.0.s8 %v1457
    %v1459 = vlaneseq
    %v1460 = vshrl.u32 %v1459, 7
    %v1461 = vsub.s32 %v1458, %v1460
    %v1462 = vrot.slane %v1454, %v1461
    %v1464 = vunpack.c.l.s4 1983009808
    %v1465 = vunpack.c.0.s8 %v1464
    %v1466 = vlaneseq
    %v1467 = vshrl.u32 %v1466, 7
    %v1468 = vsub.s32 %v1465, %v1467
    %v1469 = vrot.slane %v1455, %v1468
    %v1470 = vcombine.low %v1446, %v1462
    %v1471 = vcombine.high %v1446, %v1462
    %v1473 = vunpack.c.l.s4 1934713408
    %v1474 = vunpack.c.0.s8 %v1473
    %v1475 = vlaneseq
    %v1476 = vshrl.u32 %v1475, 7
    %v1477 = vsub.s32 %v1474, %v1476
    %v1478 = vrot.slane %v1470, %v1477
    %v1480 = vunpack.c.l.s4 1934713408
    %v1481 = vunpack.c.0.s8 %v1480
    %v1482 = vlaneseq
    %v1483 = vshrl.u32 %v1482, 7
    %v1484 = vsub.s32 %v1481, %v1483
    %v1485 = vrot.slane %v1471, %v1484
    %v1486 = vcombine.low %v1453, %v1469
    %v1487 = vcombine.high %v1453, %v1469
    %v1489 = vunpack.c.l.s4 1934713408
    %v1490 = vunpack.c.0.s8 %v1489
    %v1491 = vlaneseq
    %v1492 = vshrl.u32 %v1491, 7
    %v1493 = vsub.s32 %v1490, %v1492
    %v1494 = vrot.slane %v1486, %v1493
    %v1496 = vunpack.c.l.s4 1934713408
    %v1497 = vunpack.c.0.s8 %v1496
    %v1498 = vlaneseq
    %v1499 = vshrl.u32 %v1498, 7
    %v1500 = vsub.s32 %v1497, %v1499
    %v1501 = vrot.slane %v1487, %v1500
    %v1502 = vcombine.high %v1478, 0.0
    %v1503 = vcombine.high %v1485, 0.0
    %v1504 = vcombine.high %v1494, 0.0
    %v1505 = vcombine.high %v1501, 0.0
    %v1506 = vcombine.low %v1405, %v1425
    %v1507 = vcombine.high %v1405, %v1425
    %v1509 = vunpack.c.l.s4 1983009808
    %v1510 = vunpack.c.0.s8 %v1509
    %v1511 = vlaneseq
    %v1512 = vshrl.u32 %v1511, 7
    %v1513 = vsub.s32 %v1510, %v1512
    %v1514 = vrot.slane %v1506, %v1513
    %v1516 = vunpack.c.l.s4 1983009808
    %v1517 = vunpack.c.0.s8 %v1516
    %v1518 = vlaneseq
    %v1519 = vshrl.u32 %v1518, 7
    %v1520 = vsub.s32 %v1517, %v1519
    %v1521 = vrot.slane %v1507, %v1520
    %v1522 = vcombine.low %v1415, %v1435
    %v1523 = vcombine.high %v1415, %v1435
    %v1525 = vunpack.c.l.s4 1983009808
    %v1526 = vunpack.c.0.s8 %v1525
    %v1527 = vlaneseq
    %v1528 = vshrl.u32 %v1527, 7
    %v1529 = vsub.s32 %v1526, %v1528
    %v1530 = vrot.slane %v1522, %v1529
    %v1532 = vunpack.c.l.s4 1983009808
    %v1533 = vunpack.c.0.s8 %v1532
    %v1534 = vlaneseq
    %v1535 = vshrl.u32 %v1534, 7
    %v1536 = vsub.s32 %v1533, %v1535
    %v1537 = vrot.slane %v1523, %v1536
    %v1538 = vcombine.low %v1514, %v1530
    %v1539 = vcombine.high %v1514, %v1530
    %v1541 = vunpack.c.l.s4 1934713408
    %v1542 = vunpack.c.0.s8 %v1541
    %v1543 = vlaneseq
    %v1544 = vshrl.u32 %v1543, 7
    %v1545 = vsub.s32 %v1542, %v1544
    %v1546 = vrot.slane %v1538, %v1545
    %v1548 = vunpack.c.l.s4 1934713408
    %v1549 = vunpack.c.0.s8 %v1548
    %v1550 = vlaneseq
    %v1551 = vshrl.u32 %v1550, 7
    %v1552 = vsub.s32 %v1549, %v1551
    %v1553 = vrot.slane %v1539, %v1552
    %v1554 = vcombine.low %v1521, %v1537
    %v1555 = vcombine.high %v1521, %v1537
    %v1557 = vunpack.c.l.s4 1934713408
    %v1558 = vunpack.c.0.s8 %v1557
    %v1559 = vlaneseq
    %v1560 = vshrl.u32 %v1559, 7
    %v1561 = vsub.s32 %v1558, %v1560
    %v1562 = vrot.slane %v1554, %v1561
    %v1564 = vunpack.c.l.s4 1934713408
    %v1565 = vunpack.c.0.s8 %v1564
    %v1566 = vlaneseq
    %v1567 = vshrl.u32 %v1566, 7
    %v1568 = vsub.s32 %v1565, %v1567
    %v1569 = vrot.slane %v1555, %v1568
    %v1570 = vcombine.high %v1546, 0.0
    %v1571 = vcombine.high %v1553, 0.0
    %v1572 = vcombine.high %v1562, 0.0
    %v1573 = vcombine.high %v1569, 0.0
    %v1574 = vcombine.low %v1478, %v1485
    %v1576 = vunpack.c.l.s4 1983009808
    %v1577 = vunpack.c.0.s8 %v1576
    %v1578 = vlaneseq
    %v1579 = vshrl.u32 %v1578, 7
    %v1580 = vsub.s32 %v1577, %v1579
    %v1581 = vrot.slane %v1574, %v1580
    %v1582 = vcombine.low %v1502, %v1503
    %v1584 = vunpack.c.l.s4 1983009808
    %v1585 = vunpack.c.0.s8 %v1584
    %v1586 = vlaneseq
    %v1587 = vshrl.u32 %v1586, 7
    %v1588 = vsub.s32 %v1585, %v1587
    %v1589 = vrot.slane %v1582, %v1588
    %v1590 = vcombine.low %v1494, %v1501
    %v1592 = vunpack.c.l.s4 1983009808
    %v1593 = vunpack.c.0.s8 %v1592
    %v1594 = vlaneseq
    %v1595 = vshrl.u32 %v1594, 7
    %v1596 = vsub.s32 %v1593, %v1595
    %v1597 = vrot.slane %v1590, %v1596
    %v1598 = vcombine.low %v1504, %v1505
    %v1600 = vunpack.c.l.s4 1983009808
    %v1601 = vunpack.c.0.s8 %v1600
    %v1602 = vlaneseq
    %v1603 = vshrl.u32 %v1602, 7
    %v1604 = vsub.s32 %v1601, %v1603
    %v1605 = vrot.slane %v1598, %v1604
    %v1606 = vcombine.low %v1581, %v1589
    %v1607 = vcombine.high %v1581, %v1589
    %v1609 = vunpack.c.l.s4 1934713408
    %v1610 = vunpack.c.0.s8 %v1609
    %v1611 = vlaneseq
    %v1612 = vshrl.u32 %v1611, 7
    %v1613 = vsub.s32 %v1610, %v1612
    %v1614 = vrot.slane %v1606, %v1613
    %v1616 = vunpack.c.l.s4 1934713408
    %v1617 = vunpack.c.0.s8 %v1616
    %v1618 = vlaneseq
    %v1619 = vshrl.u32 %v1618, 7
    %v1620 = vsub.s32 %v1617, %v1619
    %v1621 = vrot.slane %v1607, %v1620
    %v1622 = vcombine.low %v1597, %v1605
    %v1623 = vcombine.high %v1597, %v1605
    %v1625 = vunpack.c.l.s4 1934713408
    %v1626 = vunpack.c.0.s8 %v1625
    %v1627 = vlaneseq
    %v1628 = vshrl.u32 %v1627, 7
    %v1629 = vsub.s32 %v1626, %v1628
    %v1630 = vrot.slane %v1622, %v1629
    %v1632 = vunpack.c.l.s4 1934713408
    %v1633 = vunpack.c.0.s8 %v1632
    %v1634 = vlaneseq
    %v1635 = vshrl.u32 %v1634, 7
    %v1636 = vsub.s32 %v1633, %v1635
    %v1637 = vrot.slane %v1623, %v1636
    %v1638 = vcombine.low %v1614, %v1630
    %v1639 = vcombine.high %v1614, %v1630
    %v1640 = vcombine.low %v1621, %v1637
    %v1641 = vcombine.high %v1621, %v1637
    %v1642 = vcombine.low %v1546, %v1553
    %v1644 = vunpack.c.l.s4 1983009808
    %v1645 = vunpack.c.0.s8 %v1644
    %v1646 = vlaneseq
    %v1647 = vshrl.u32 %v1646, 7
    %v1648 = vsub.s32 %v1645, %v1647
    %v1649 = vrot.slane %v1642, %v1648
    %v1650 = vcombine.low %v1570, %v1571
    %v1652 = vunpack.c.l.s4 1983009808
    %v1653 = vunpack.c.0.s8 %v1652
    %v1654 = vlaneseq
    %v1655 = vshrl.u32 %v1654, 7
    %v1656 = vsub.s32 %v1653, %v1655
    %v1657 = vrot.slane %v1650, %v1656
    %v1658 = vcombine.low %v1562, %v1569
    %v1660 = vunpack.c.l.s4 1983009808
    %v1661 = vunpack.c.0.s8 %v1660
    %v1662 = vlaneseq
    %v1663 = vshrl.u32 %v1662, 7
    %v1664 = vsub.s32 %v1661, %v1663
    %v1665 = vrot.slane %v1658, %v1664
    %v1666 = vcombine.low %v1572, %v1573
    %v1668 = vunpack.c.l.s4 1983009808
    %v1669 = vunpack.c.0.s8 %v1668
    %v1670 = vlaneseq
    %v1671 = vshrl.u32 %v1670, 7
    %v1672 = vsub.s32 %v1669, %v1671
    %v1673 = vrot.slane %v1666, %v1672
    %v1674 = vcombine.low %v1649, %v1657
    %v1675 = vcombine.high %v1649, %v1657
    %v1677 = vunpack.c.l.s4 1934713408
    %v1678 = vunpack.c.0.s8 %v1677
    %v1679 = vlaneseq
    %v1680 = vshrl.u32 %v1679, 7
    %v1681 = vsub.s32 %v1678, %v1680
    %v1682 = vrot.slane %v1674, %v1681
    %v1684 = vunpack.c.l.s4 1934713408
    %v1685 = vunpack.c.0.s8 %v1684
    %v1686 = vlaneseq
    %v1687 = vshrl.u32 %v1686, 7
    %v1688 = vsub.s32 %v1685, %v1687
    %v1689 = vrot.slane %v1675, %v1688
    %v1690 = vcombine.low %v1665, %v1673
    %v1691 = vcombine.high %v1665, %v1673
    %v1693 = vunpack.c.l.s4 1934713408
    %v1694 = vunpack.c.0.s8 %v1693
    %v1695 = vlaneseq
    %v1696 = vshrl.u32 %v1695, 7
    %v1697 = vsub.s32 %v1694, %v1696
    %v1698 = vrot.slane %v1690, %v1697
    %v1700 = vunpack.c.l.s4 1934713408
    %v1701 = vunpack.c.0.s8 %v1700
    %v1702 = vlaneseq
    %v1703 = vshrl.u32 %v1702, 7
    %v1704 = vsub.s32 %v1701, %v1703
    %v1705 = vrot.slane %v1691, %v1704
    %v1706 = vcombine.low %v1682, %v1698
    %v1707 = vcombine.high %v1682, %v1698
    %v1708 = vcombine.low %v1689, %v1705
    %v1709 = vcombine.high %v1689, %v1705
    %1712 = vrot.lane.b32.xlu0 %v1639, 8
    %v1713 = vpop.permute.xlu0 %1712
    %1714 = vrot.lane.b32.xlu0 %v1707, 8
    %v1715 = vpop.permute.xlu0 %1714
    %1720 = vrot.lane.b32.xlu0 %v1640, 16
    %v1721 = vpop.permute.xlu0 %1720
    %1722 = vrot.lane.b32.xlu0 %v1708, 16
    %v1723 = vpop.permute.xlu0 %1722
    %1728 = vrot.lane.b32.xlu0 %v1641, 24
    %v1729 = vpop.permute.xlu0 %1728
    %1730 = vrot.lane.b32.xlu0 %v1709, 24
    %v1731 = vpop.permute.xlu0 %1730
    %v1734 = vsel %vm1066, %v1638, %v1713
    %v1735 = vsel %vm1066, %v1706, %v1715
    %vm1736 = vcmask 130048
    %v1737 = vsel %vm1736, %v1734, %v1721
    %v1738 = vsel %vm1736, %v1735, %v1723
    %vm1739 = vcmask 195584
    %v1740 = vsel %vm1739, %v1737, %v1729
    %v1741 = vsel %vm1739, %v1738, %v1731
    %v1742 = vpack.c.bf16 %v1741, %v1740
    %v1744 = vlaneseq
    %v1745 = vshrl.u32 %v1744, 7
    %v1746 = vsub.s32 0, %v1745
    %v1747 = vrot.slane %v181, %v1746
    %v1753 = vunpack.c.l.b16 %v177
    %v1754 = vunpack.c.l.b16 %v178
    %v1755 = vunpack.c.l.b16 %v179
    %v1756 = vunpack.c.l.b16 %v180
    %v1757 = vpack.c.b16 %v1754, %v1753
    %v1758 = vpack.c.b16 %v1756, %v1755
    %v1762 = vsel %vm132, %v1742, 0
    %1764 = vmatprep.subr.bf16.mxu0 0
    %1765 = vmatpush1.bf16.msra.mxu0 %v1757
    %1766 = vmatprep.subr.bf16.mxu0 0
    %1767 = vmatpush1.bf16.msra.mxu0 %v1758
    %1768 = vmatprep.subr.bf16.mxu0 0
    %1769 = vmatpush1.bf16.msra.mxu0 0
    %1770 = vmatprep.subr.bf16.mxu0 0
    %1771 = vmatpush1.bf16.msra.mxu0 0
    %1772 = vmatprep.subr.bf16.mxu0 0
    %1773 = vmatpush1.bf16.msra.mxu0 0
    %1774 = vmatprep.subr.bf16.mxu0 0
    %1775 = vmatpush1.bf16.msra.mxu0 0
    %1776 = vmatprep.subr.bf16.mxu0 0
    %1777 = vmatpush1.bf16.msra.mxu0 0
    %1778 = vmatprep.subr.bf16.mxu0 0
    %1779 = vmatpush1.bf16.msra.mxu0 0
    %1780 = vmatprep.subr.bf16.mxu0 0
    %1781 = vmatpush1.bf16.msra.mxu0 0
    %1782 = vmatprep.subr.bf16.mxu0 0
    %1783 = vmatpush1.bf16.msra.mxu0 0
    %1784 = vmatprep.subr.bf16.mxu0 0
    %1785 = vmatpush1.bf16.msra.mxu0 0
    %1786 = vmatprep.subr.bf16.mxu0 0
    %1787 = vmatpush1.bf16.msra.mxu0 0
    %1788 = vmatprep.subr.bf16.mxu0 0
    %1789 = vmatpush1.bf16.msra.mxu0 0
    %1790 = vmatprep.subr.bf16.mxu0 0
    %1791 = vmatpush1.bf16.msra.mxu0 0
    %1792 = vmatprep.subr.bf16.mxu0 0
    %1793 = vmatpush1.bf16.msra.mxu0 0
    %1794 = vmatprep.subr.bf16.mxu0 0
    %1795 = vmatpush1.bf16.msra.mxu0 0
    %1796 = vmatprep.mubr.bf16.mxu0 0
    %1797 = vmatmul.mubr.bf16.gmra.mrb[0].mxu0 %v1762
    %v1798 = vpop.f32.mrb[0].mxu0
    %v1799 = vadd.f32 %v1747, %v1798
    %v1800 = vpop.f32.mrb[0].mxu0
    %v1801 = vpop.f32.mrb[0].mxu0
    %v1802 = vadd.f32 %v1747, %v1801
    %v1803 = vpop.f32.mrb[0].mxu0
    %1804 = vdwg.mxu0
    %v1805 = vadd.f32 %v85, %v1799
    %v1806 = vadd.f32 %v86, %v1802
    %v1807 = vld [vmem:[%s8] sm:$0x1]
    %v1808 = vld [vmem:[%s9] sm:$0x1]
    %v1809 = vsel %vm132, %v1805, 0.0
    %1810 = vadd.xlane.f32.xlu0 %v1809
    %v1811 = vpop.xlane.xlu0 %1810
    %v1812 = vsel %vm132, %v1806, 0.0
    %1813 = vadd.xlane.f32.xlu0 %v1812
    %v1814 = vpop.xlane.xlu0 %1813
    %v1815 = vrcp.pop 32.0
    %v1816 = vmul.f32 %v1811, %v1815
    %v1817 = vmul.f32 %v1814, %v1815
    %v1818 = vsub.f32 %v1805, %v1816
    %v1819 = vsub.f32 %v1806, %v1817
    %v1820 = vmul.f32 %v1818, %v1818
    %v1821 = vmul.f32 %v1819, %v1819
    %v1822 = vsel %vm132, %v1820, 0.0
    %1823 = vadd.xlane.f32.xlu0 %v1822
    %v1824 = vpop.xlane.xlu0 %1823
    %v1825 = vsel %vm132, %v1821, 0.0
    %1826 = vadd.xlane.f32.xlu0 %v1825
    %v1827 = vpop.xlane.xlu0 %1826
    %v1828 = vmul.f32 %v1824, %v1815
    %v1829 = vmul.f32 %v1827, %v1815
    %v1830 = vadd.f32 %v1828, 1e-05
    %v1831 = vadd.f32 %v1829, 1e-05
    %v1832 = vrsqrt.pop %v1830
    %v1833 = vrsqrt.pop %v1831
    %v1834 = vmul.f32 %v1818, %v1832
    %v1835 = vmul.f32 %v1819, %v1833
    %v1837 = vlaneseq
    %v1838 = vshrl.u32 %v1837, 7
    %v1839 = vsub.s32 0, %v1838
    %v1840 = vrot.slane %v1807, %v1839
    %v1842 = vmul.f32 %v1834, %v1840
    %v1843 = vmul.f32 %v1835, %v1840
    %v1845 = vlaneseq
    %v1846 = vshrl.u32 %v1845, 7
    %v1847 = vsub.s32 0, %v1846
    %v1848 = vrot.slane %v1808, %v1847
    %v1850 = vadd.f32 %v1842, %v1848
    %v1851 = vadd.f32 %v1843, %v1848
    %v1852 = vpack.c.bf16 %v1851, %v1850
    %v1853 = vld [vmem:[%s10] sm:$0xf]
    %v1854 = vld [vmem:[%s10 + $0x4] sm:$0xf]
    %v1855 = vld [vmem:[%s10 + $0x8] sm:$0xf]
    %v1856 = vld [vmem:[%s10 + $0xc] sm:$0xf]
    %v1857 = vld [vmem:[%s11] sm:$0x1]
    %v1859 = vlaneseq
    %v1860 = vshrl.u32 %v1859, 7
    %v1861 = vsub.s32 0, %v1860
    %v1862 = vrot.slane %v1857, %v1861
    %v1868 = vunpack.c.l.b16 %v1853
    %v1869 = vunpack.c.l.b16 %v1854
    %v1870 = vunpack.c.l.b16 %v1855
    %v1871 = vunpack.c.l.b16 %v1856
    %v1872 = vpack.c.b16 %v1869, %v1868
    %v1873 = vpack.c.b16 %v1871, %v1870
    %v1877 = vsel %vm132, %v1852, 0
    %1879 = vmatprep.subr.bf16.mxu0 0
    %1880 = vmatpush1.bf16.msra.mxu0 %v1872
    %1881 = vmatprep.subr.bf16.mxu0 0
    %1882 = vmatpush1.bf16.msra.mxu0 %v1873
    %1883 = vmatprep.subr.bf16.mxu0 0
    %1884 = vmatpush1.bf16.msra.mxu0 0
    %1885 = vmatprep.subr.bf16.mxu0 0
    %1886 = vmatpush1.bf16.msra.mxu0 0
    %1887 = vmatprep.subr.bf16.mxu0 0
    %1888 = vmatpush1.bf16.msra.mxu0 0
    %1889 = vmatprep.subr.bf16.mxu0 0
    %1890 = vmatpush1.bf16.msra.mxu0 0
    %1891 = vmatprep.subr.bf16.mxu0 0
    %1892 = vmatpush1.bf16.msra.mxu0 0
    %1893 = vmatprep.subr.bf16.mxu0 0
    %1894 = vmatpush1.bf16.msra.mxu0 0
    %1895 = vmatprep.subr.bf16.mxu0 0
    %1896 = vmatpush1.bf16.msra.mxu0 0
    %1897 = vmatprep.subr.bf16.mxu0 0
    %1898 = vmatpush1.bf16.msra.mxu0 0
    %1899 = vmatprep.subr.bf16.mxu0 0
    %1900 = vmatpush1.bf16.msra.mxu0 0
    %1901 = vmatprep.subr.bf16.mxu0 0
    %1902 = vmatpush1.bf16.msra.mxu0 0
    %1903 = vmatprep.subr.bf16.mxu0 0
    %1904 = vmatpush1.bf16.msra.mxu0 0
    %1905 = vmatprep.subr.bf16.mxu0 0
    %1906 = vmatpush1.bf16.msra.mxu0 0
    %1907 = vmatprep.subr.bf16.mxu0 0
    %1908 = vmatpush1.bf16.msra.mxu0 0
    %1909 = vmatprep.subr.bf16.mxu0 0
    %1910 = vmatpush1.bf16.msra.mxu0 0
    %1911 = vmatprep.mubr.bf16.mxu0 0
    %1912 = vmatmul.mubr.bf16.gmra.mrb[0].mxu0 %v1877
    %v1913 = vpop.f32.mrb[0].mxu0
    %v1914 = vadd.f32 %v1862, %v1913
    %v1915 = vpop.f32.mrb[0].mxu0
    %v1916 = vpop.f32.mrb[0].mxu0
    %v1917 = vadd.f32 %v1862, %v1916
    %v1918 = vpop.f32.mrb[0].mxu0
    %1919 = vdwg.mxu0
    %v1920 = vld [vmem:[%s12] sm:$0xf]
    %v1921 = vld [vmem:[%s12 + $0x4] sm:$0xf]
    %v1922 = vld [vmem:[%s12 + $0x8] sm:$0xf]
    %v1923 = vld [vmem:[%s12 + $0xc] sm:$0xf]
    %v1924 = vld [vmem:[%s13] sm:$0x1]
    %v1926 = vlaneseq
    %v1927 = vshrl.u32 %v1926, 7
    %v1928 = vsub.s32 0, %v1927
    %v1929 = vrot.slane %v1924, %v1928
    %v1935 = vunpack.c.l.b16 %v1920
    %v1936 = vunpack.c.l.b16 %v1921
    %v1937 = vunpack.c.l.b16 %v1922
    %v1938 = vunpack.c.l.b16 %v1923
    %v1939 = vpack.c.b16 %v1936, %v1935
    %v1940 = vpack.c.b16 %v1938, %v1937
    %v1944 = vsel %vm132, %v90, 0
    %v1947 = vsel %vm132, %v91, 0
    %1949 = vmatprep.subr.bf16.mxu0 0
    %1950 = vmatpush1.bf16.msra.mxu0 %v1939
    %1951 = vmatprep.subr.bf16.mxu0 0
    %1952 = vmatpush1.bf16.msra.mxu0 %v1940
    %1953 = vmatprep.subr.bf16.mxu0 0
    %1954 = vmatpush1.bf16.msra.mxu0 0
    %1955 = vmatprep.subr.bf16.mxu0 0
    %1956 = vmatpush1.bf16.msra.mxu0 0
    %1957 = vmatprep.subr.bf16.mxu0 0
    %1958 = vmatpush1.bf16.msra.mxu0 0
    %1959 = vmatprep.subr.bf16.mxu0 0
    %1960 = vmatpush1.bf16.msra.mxu0 0
    %1961 = vmatprep.subr.bf16.mxu0 0
    %1962 = vmatpush1.bf16.msra.mxu0 0
    %1963 = vmatprep.subr.bf16.mxu0 0
    %1964 = vmatpush1.bf16.msra.mxu0 0
    %1965 = vmatprep.subr.bf16.mxu0 0
    %1966 = vmatpush1.bf16.msra.mxu0 0
    %1967 = vmatprep.subr.bf16.mxu0 0
    %1968 = vmatpush1.bf16.msra.mxu0 0
    %1969 = vmatprep.subr.bf16.mxu0 0
    %1970 = vmatpush1.bf16.msra.mxu0 0
    %1971 = vmatprep.subr.bf16.mxu0 0
    %1972 = vmatpush1.bf16.msra.mxu0 0
    %1973 = vmatprep.subr.bf16.mxu0 0
    %1974 = vmatpush1.bf16.msra.mxu0 0
    %1975 = vmatprep.subr.bf16.mxu0 0
    %1976 = vmatpush1.bf16.msra.mxu0 0
    %1977 = vmatprep.subr.bf16.mxu0 0
    %1978 = vmatpush1.bf16.msra.mxu0 0
    %1979 = vmatprep.subr.bf16.mxu0 0
    %1980 = vmatpush1.bf16.msra.mxu0 0
    %1981 = vmatprep.mubr.bf16.mxu0 0
    %1982 = vmatmul.mubr.bf16.gmra.mrb[0].mxu0 %v1944
    %v1983 = vpop.f32.mrb[0].mxu0
    %v1984 = vadd.f32 %v1929, %v1983
    %v1985 = vpop.f32.mrb[0].mxu0
    %v1986 = vpop.f32.mrb[0].mxu0
    %v1987 = vadd.f32 %v1929, %v1986
    %v1988 = vpop.f32.mrb[0].mxu0
    %1989 = vmatprep.mubr.bf16.mxu0 0
    %1990 = vmatmul.mubr.bf16.gmra.mrb[0].mxu0 %v1947
    %v1991 = vpop.f32.mrb[0].mxu0
    %v1992 = vadd.f32 %v1929, %v1991
    %v1993 = vpop.f32.mrb[0].mxu0
    %v1994 = vpop.f32.mrb[0].mxu0
    %v1995 = vpop.f32.mrb[0].mxu0
    %1996 = vdwg.mxu0
    %v1997 = vld [vmem:[%s14] sm:$0xf]
    %v1998 = vld [vmem:[%s14 + $0x4] sm:$0xf]
    %v1999 = vld [vmem:[%s14 + $0x8] sm:$0xf]
    %v2000 = vld [vmem:[%s14 + $0xc] sm:$0xf]
    %v2001 = vld [vmem:[%s15] sm:$0x1]
    %2004 = vrot.lane.b32.xlu0 %v1914, 120
    %v2005 = vpop.permute.xlu0 %2004
    %2006 = vrot.lane.b32.xlu0 %v1917, 120
    %v2007 = vpop.permute.xlu0 %2006
    %2010 = vrot.lane.b32.xlu0 %v1914, 112
    %v2011 = vpop.permute.xlu0 %2010
    %2012 = vrot.lane.b32.xlu0 %v1917, 112
    %v2013 = vpop.permute.xlu0 %2012
    %2016 = vrot.lane.b32.xlu0 %v1914, 104
    %v2017 = vpop.permute.xlu0 %2016
    %2018 = vrot.lane.b32.xlu0 %v1917, 104
    %v2019 = vpop.permute.xlu0 %2018
    %v2022 = vcombine.low %v1914, %v2011
    %v2023 = vcombine.high %v1914, %v2011
    %v2025 = vunpack.c.l.s4 1983009808
    %v2026 = vunpack.c.0.s8 %v2025
    %v2027 = vlaneseq
    %v2028 = vshrl.u32 %v2027, 7
    %v2029 = vsub.s32 %v2026, %v2028
    %v2030 = vrot.slane %v2022, %v2029
    %v2032 = vunpack.c.l.s4 1983009808
    %v2033 = vunpack.c.0.s8 %v2032
    %v2034 = vlaneseq
    %v2035 = vshrl.u32 %v2034, 7
    %v2036 = vsub.s32 %v2033, %v2035
    %v2037 = vrot.slane %v2023, %v2036
    %v2038 = vcombine.low %v2005, %v2017
    %v2039 = vcombine.high %v2005, %v2017
    %v2041 = vunpack.c.l.s4 1983009808
    %v2042 = vunpack.c.0.s8 %v2041
    %v2043 = vlaneseq
    %v2044 = vshrl.u32 %v2043, 7
    %v2045 = vsub.s32 %v2042, %v2044
    %v2046 = vrot.slane %v2038, %v2045
    %v2048 = vunpack.c.l.s4 1983009808
    %v2049 = vunpack.c.0.s8 %v2048
    %v2050 = vlaneseq
    %v2051 = vshrl.u32 %v2050, 7
    %v2052 = vsub.s32 %v2049, %v2051
    %v2053 = vrot.slane %v2039, %v2052
    %v2054 = vcombine.low %v2030, %v2046
    %v2055 = vcombine.high %v2030, %v2046
    %v2057 = vunpack.c.l.s4 1934713408
    %v2058 = vunpack.c.0.s8 %v2057
    %v2059 = vlaneseq
    %v2060 = vshrl.u32 %v2059, 7
    %v2061 = vsub.s32 %v2058, %v2060
    %v2062 = vrot.slane %v2054, %v2061
    %v2064 = vunpack.c.l.s4 1934713408
    %v2065 = vunpack.c.0.s8 %v2064
    %v2066 = vlaneseq
    %v2067 = vshrl.u32 %v2066, 7
    %v2068 = vsub.s32 %v2065, %v2067
    %v2069 = vrot.slane %v2055, %v2068
    %v2070 = vcombine.low %v2037, %v2053
    %v2071 = vcombine.high %v2037, %v2053
    %v2073 = vunpack.c.l.s4 1934713408
    %v2074 = vunpack.c.0.s8 %v2073
    %v2075 = vlaneseq
    %v2076 = vshrl.u32 %v2075, 7
    %v2077 = vsub.s32 %v2074, %v2076
    %v2078 = vrot.slane %v2070, %v2077
    %v2080 = vunpack.c.l.s4 1934713408
    %v2081 = vunpack.c.0.s8 %v2080
    %v2082 = vlaneseq
    %v2083 = vshrl.u32 %v2082, 7
    %v2084 = vsub.s32 %v2081, %v2083
    %v2085 = vrot.slane %v2071, %v2084
    %v2086 = vcombine.high %v2062, 0.0
    %v2087 = vcombine.high %v2069, 0.0
    %v2088 = vcombine.high %v2078, 0.0
    %v2089 = vcombine.high %v2085, 0.0
    %v2090 = vcombine.low %v1917, %v2013
    %v2091 = vcombine.high %v1917, %v2013
    %v2093 = vunpack.c.l.s4 1983009808
    %v2094 = vunpack.c.0.s8 %v2093
    %v2095 = vlaneseq
    %v2096 = vshrl.u32 %v2095, 7
    %v2097 = vsub.s32 %v2094, %v2096
    %v2098 = vrot.slane %v2090, %v2097
    %v2100 = vunpack.c.l.s4 1983009808
    %v2101 = vunpack.c.0.s8 %v2100
    %v2102 = vlaneseq
    %v2103 = vshrl.u32 %v2102, 7
    %v2104 = vsub.s32 %v2101, %v2103
    %v2105 = vrot.slane %v2091, %v2104
    %v2106 = vcombine.low %v2007, %v2019
    %v2107 = vcombine.high %v2007, %v2019
    %v2109 = vunpack.c.l.s4 1983009808
    %v2110 = vunpack.c.0.s8 %v2109
    %v2111 = vlaneseq
    %v2112 = vshrl.u32 %v2111, 7
    %v2113 = vsub.s32 %v2110, %v2112
    %v2114 = vrot.slane %v2106, %v2113
    %v2116 = vunpack.c.l.s4 1983009808
    %v2117 = vunpack.c.0.s8 %v2116
    %v2118 = vlaneseq
    %v2119 = vshrl.u32 %v2118, 7
    %v2120 = vsub.s32 %v2117, %v2119
    %v2121 = vrot.slane %v2107, %v2120
    %v2122 = vcombine.low %v2098, %v2114
    %v2123 = vcombine.high %v2098, %v2114
    %v2125 = vunpack.c.l.s4 1934713408
    %v2126 = vunpack.c.0.s8 %v2125
    %v2127 = vlaneseq
    %v2128 = vshrl.u32 %v2127, 7
    %v2129 = vsub.s32 %v2126, %v2128
    %v2130 = vrot.slane %v2122, %v2129
    %v2132 = vunpack.c.l.s4 1934713408
    %v2133 = vunpack.c.0.s8 %v2132
    %v2134 = vlaneseq
    %v2135 = vshrl.u32 %v2134, 7
    %v2136 = vsub.s32 %v2133, %v2135
    %v2137 = vrot.slane %v2123, %v2136
    %v2138 = vcombine.low %v2105, %v2121
    %v2139 = vcombine.high %v2105, %v2121
    %v2141 = vunpack.c.l.s4 1934713408
    %v2142 = vunpack.c.0.s8 %v2141
    %v2143 = vlaneseq
    %v2144 = vshrl.u32 %v2143, 7
    %v2145 = vsub.s32 %v2142, %v2144
    %v2146 = vrot.slane %v2138, %v2145
    %v2148 = vunpack.c.l.s4 1934713408
    %v2149 = vunpack.c.0.s8 %v2148
    %v2150 = vlaneseq
    %v2151 = vshrl.u32 %v2150, 7
    %v2152 = vsub.s32 %v2149, %v2151
    %v2153 = vrot.slane %v2139, %v2152
    %v2154 = vcombine.high %v2130, 0.0
    %v2155 = vcombine.high %v2137, 0.0
    %v2156 = vcombine.high %v2146, 0.0
    %v2157 = vcombine.high %v2153, 0.0
    %v2158 = vcombine.low %v2062, %v2069
    %v2160 = vunpack.c.l.s4 1983009808
    %v2161 = vunpack.c.0.s8 %v2160
    %v2162 = vlaneseq
    %v2163 = vshrl.u32 %v2162, 7
    %v2164 = vsub.s32 %v2161, %v2163
    %v2165 = vrot.slane %v2158, %v2164
    %v2166 = vcombine.low %v2086, %v2087
    %v2168 = vunpack.c.l.s4 1983009808
    %v2169 = vunpack.c.0.s8 %v2168
    %v2170 = vlaneseq
    %v2171 = vshrl.u32 %v2170, 7
    %v2172 = vsub.s32 %v2169, %v2171
    %v2173 = vrot.slane %v2166, %v2172
    %v2174 = vcombine.low %v2078, %v2085
    %v2176 = vunpack.c.l.s4 1983009808
    %v2177 = vunpack.c.0.s8 %v2176
    %v2178 = vlaneseq
    %v2179 = vshrl.u32 %v2178, 7
    %v2180 = vsub.s32 %v2177, %v2179
    %v2181 = vrot.slane %v2174, %v2180
    %v2182 = vcombine.low %v2088, %v2089
    %v2184 = vunpack.c.l.s4 1983009808
    %v2185 = vunpack.c.0.s8 %v2184
    %v2186 = vlaneseq
    %v2187 = vshrl.u32 %v2186, 7
    %v2188 = vsub.s32 %v2185, %v2187
    %v2189 = vrot.slane %v2182, %v2188
    %v2190 = vcombine.low %v2165, %v2173
    %v2191 = vcombine.high %v2165, %v2173
    %v2193 = vunpack.c.l.s4 1934713408
    %v2194 = vunpack.c.0.s8 %v2193
    %v2195 = vlaneseq
    %v2196 = vshrl.u32 %v2195, 7
    %v2197 = vsub.s32 %v2194, %v2196
    %v2198 = vrot.slane %v2190, %v2197
    %v2200 = vunpack.c.l.s4 1934713408
    %v2201 = vunpack.c.0.s8 %v2200
    %v2202 = vlaneseq
    %v2203 = vshrl.u32 %v2202, 7
    %v2204 = vsub.s32 %v2201, %v2203
    %v2205 = vrot.slane %v2191, %v2204
    %v2206 = vcombine.low %v2181, %v2189
    %v2207 = vcombine.high %v2181, %v2189
    %v2209 = vunpack.c.l.s4 1934713408
    %v2210 = vunpack.c.0.s8 %v2209
    %v2211 = vlaneseq
    %v2212 = vshrl.u32 %v2211, 7
    %v2213 = vsub.s32 %v2210, %v2212
    %v2214 = vrot.slane %v2206, %v2213
    %v2216 = vunpack.c.l.s4 1934713408
    %v2217 = vunpack.c.0.s8 %v2216
    %v2218 = vlaneseq
    %v2219 = vshrl.u32 %v2218, 7
    %v2220 = vsub.s32 %v2217, %v2219
    %v2221 = vrot.slane %v2207, %v2220
    %v2222 = vcombine.low %v2198, %v2214
    %v2223 = vcombine.high %v2198, %v2214
    %v2224 = vcombine.low %v2205, %v2221
    %v2225 = vcombine.high %v2205, %v2221
    %v2226 = vcombine.low %v2130, %v2137
    %v2228 = vunpack.c.l.s4 1983009808
    %v2229 = vunpack.c.0.s8 %v2228
    %v2230 = vlaneseq
    %v2231 = vshrl.u32 %v2230, 7
    %v2232 = vsub.s32 %v2229, %v2231
    %v2233 = vrot.slane %v2226, %v2232
    %v2234 = vcombine.low %v2154, %v2155
    %v2236 = vunpack.c.l.s4 1983009808
    %v2237 = vunpack.c.0.s8 %v2236
    %v2238 = vlaneseq
    %v2239 = vshrl.u32 %v2238, 7
    %v2240 = vsub.s32 %v2237, %v2239
    %v2241 = vrot.slane %v2234, %v2240
    %v2242 = vcombine.low %v2146, %v2153
    %v2244 = vunpack.c.l.s4 1983009808
    %v2245 = vunpack.c.0.s8 %v2244
    %v2246 = vlaneseq
    %v2247 = vshrl.u32 %v2246, 7
    %v2248 = vsub.s32 %v2245, %v2247
    %v2249 = vrot.slane %v2242, %v2248
    %v2250 = vcombine.low %v2156, %v2157
    %v2252 = vunpack.c.l.s4 1983009808
    %v2253 = vunpack.c.0.s8 %v2252
    %v2254 = vlaneseq
    %v2255 = vshrl.u32 %v2254, 7
    %v2256 = vsub.s32 %v2253, %v2255
    %v2257 = vrot.slane %v2250, %v2256
    %v2258 = vcombine.low %v2233, %v2241
    %v2259 = vcombine.high %v2233, %v2241
    %v2261 = vunpack.c.l.s4 1934713408
    %v2262 = vunpack.c.0.s8 %v2261
    %v2263 = vlaneseq
    %v2264 = vshrl.u32 %v2263, 7
    %v2265 = vsub.s32 %v2262, %v2264
    %v2266 = vrot.slane %v2258, %v2265
    %v2268 = vunpack.c.l.s4 1934713408
    %v2269 = vunpack.c.0.s8 %v2268
    %v2270 = vlaneseq
    %v2271 = vshrl.u32 %v2270, 7
    %v2272 = vsub.s32 %v2269, %v2271
    %v2273 = vrot.slane %v2259, %v2272
    %v2274 = vcombine.low %v2249, %v2257
    %v2275 = vcombine.high %v2249, %v2257
    %v2277 = vunpack.c.l.s4 1934713408
    %v2278 = vunpack.c.0.s8 %v2277
    %v2279 = vlaneseq
    %v2280 = vshrl.u32 %v2279, 7
    %v2281 = vsub.s32 %v2278, %v2280
    %v2282 = vrot.slane %v2274, %v2281
    %v2284 = vunpack.c.l.s4 1934713408
    %v2285 = vunpack.c.0.s8 %v2284
    %v2286 = vlaneseq
    %v2287 = vshrl.u32 %v2286, 7
    %v2288 = vsub.s32 %v2285, %v2287
    %v2289 = vrot.slane %v2275, %v2288
    %v2290 = vcombine.low %v2266, %v2282
    %v2291 = vcombine.high %v2266, %v2282
    %v2292 = vcombine.low %v2273, %v2289
    %v2293 = vcombine.high %v2273, %v2289
    %2297 = vrot.lane.b32.xlu0 %v1984, 120
    %v2298 = vpop.permute.xlu0 %2297
    %2299 = vrot.lane.b32.xlu0 %v1987, 120
    %v2300 = vpop.permute.xlu0 %2299
    %2301 = vrot.lane.b32.xlu0 %v1992, 120
    %v2302 = vpop.permute.xlu0 %2301
    %2306 = vrot.lane.b32.xlu0 %v1984, 112
    %v2307 = vpop.permute.xlu0 %2306
    %2308 = vrot.lane.b32.xlu0 %v1987, 112
    %v2309 = vpop.permute.xlu0 %2308
    %2310 = vrot.lane.b32.xlu0 %v1992, 112
    %v2311 = vpop.permute.xlu0 %2310
    %2315 = vrot.lane.b32.xlu0 %v1984, 104
    %v2316 = vpop.permute.xlu0 %2315
    %2317 = vrot.lane.b32.xlu0 %v1987, 104
    %v2318 = vpop.permute.xlu0 %2317
    %2319 = vrot.lane.b32.xlu0 %v1992, 104
    %v2320 = vpop.permute.xlu0 %2319
    %v2324 = vcombine.low %v1984, %v2307
    %v2325 = vcombine.high %v1984, %v2307
    %v2327 = vunpack.c.l.s4 1983009808
    %v2328 = vunpack.c.0.s8 %v2327
    %v2329 = vlaneseq
    %v2330 = vshrl.u32 %v2329, 7
    %v2331 = vsub.s32 %v2328, %v2330
    %v2332 = vrot.slane %v2324, %v2331
    %v2334 = vunpack.c.l.s4 1983009808
    %v2335 = vunpack.c.0.s8 %v2334
    %v2336 = vlaneseq
    %v2337 = vshrl.u32 %v2336, 7
    %v2338 = vsub.s32 %v2335, %v2337
    %v2339 = vrot.slane %v2325, %v2338
    %v2340 = vcombine.low %v2298, %v2316
    %v2341 = vcombine.high %v2298, %v2316
    %v2343 = vunpack.c.l.s4 1983009808
    %v2344 = vunpack.c.0.s8 %v2343
    %v2345 = vlaneseq
    %v2346 = vshrl.u32 %v2345, 7
    %v2347 = vsub.s32 %v2344, %v2346
    %v2348 = vrot.slane %v2340, %v2347
    %v2350 = vunpack.c.l.s4 1983009808
    %v2351 = vunpack.c.0.s8 %v2350
    %v2352 = vlaneseq
    %v2353 = vshrl.u32 %v2352, 7
    %v2354 = vsub.s32 %v2351, %v2353
    %v2355 = vrot.slane %v2341, %v2354
    %v2356 = vcombine.low %v2332, %v2348
    %v2357 = vcombine.high %v2332, %v2348
    %v2359 = vunpack.c.l.s4 1934713408
    %v2360 = vunpack.c.0.s8 %v2359
    %v2361 = vlaneseq
    %v2362 = vshrl.u32 %v2361, 7
    %v2363 = vsub.s32 %v2360, %v2362
    %v2364 = vrot.slane %v2356, %v2363
    %v2366 = vunpack.c.l.s4 1934713408
    %v2367 = vunpack.c.0.s8 %v2366
    %v2368 = vlaneseq
    %v2369 = vshrl.u32 %v2368, 7
    %v2370 = vsub.s32 %v2367, %v2369
    %v2371 = vrot.slane %v2357, %v2370
    %v2372 = vcombine.low %v2339, %v2355
    %v2373 = vcombine.high %v2339, %v2355
    %v2375 = vunpack.c.l.s4 1934713408
    %v2376 = vunpack.c.0.s8 %v2375
    %v2377 = vlaneseq
    %v2378 = vshrl.u32 %v2377, 7
    %v2379 = vsub.s32 %v2376, %v2378
    %v2380 = vrot.slane %v2372, %v2379
    %v2382 = vunpack.c.l.s4 1934713408
    %v2383 = vunpack.c.0.s8 %v2382
    %v2384 = vlaneseq
    %v2385 = vshrl.u32 %v2384, 7
    %v2386 = vsub.s32 %v2383, %v2385
    %v2387 = vrot.slane %v2373, %v2386
    %v2388 = vcombine.high %v2364, 0.0
    %v2389 = vcombine.high %v2371, 0.0
    %v2390 = vcombine.high %v2380, 0.0
    %v2391 = vcombine.high %v2387, 0.0
    %v2392 = vcombine.low %v1987, %v2309
    %v2393 = vcombine.high %v1987, %v2309
    %v2395 = vunpack.c.l.s4 1983009808
    %v2396 = vunpack.c.0.s8 %v2395
    %v2397 = vlaneseq
    %v2398 = vshrl.u32 %v2397, 7
    %v2399 = vsub.s32 %v2396, %v2398
    %v2400 = vrot.slane %v2392, %v2399
    %v2402 = vunpack.c.l.s4 1983009808
    %v2403 = vunpack.c.0.s8 %v2402
    %v2404 = vlaneseq
    %v2405 = vshrl.u32 %v2404, 7
    %v2406 = vsub.s32 %v2403, %v2405
    %v2407 = vrot.slane %v2393, %v2406
    %v2408 = vcombine.low %v2300, %v2318
    %v2409 = vcombine.high %v2300, %v2318
    %v2411 = vunpack.c.l.s4 1983009808
    %v2412 = vunpack.c.0.s8 %v2411
    %v2413 = vlaneseq
    %v2414 = vshrl.u32 %v2413, 7
    %v2415 = vsub.s32 %v2412, %v2414
    %v2416 = vrot.slane %v2408, %v2415
    %v2418 = vunpack.c.l.s4 1983009808
    %v2419 = vunpack.c.0.s8 %v2418
    %v2420 = vlaneseq
    %v2421 = vshrl.u32 %v2420, 7
    %v2422 = vsub.s32 %v2419, %v2421
    %v2423 = vrot.slane %v2409, %v2422
    %v2424 = vcombine.low %v2400, %v2416
    %v2425 = vcombine.high %v2400, %v2416
    %v2427 = vunpack.c.l.s4 1934713408
    %v2428 = vunpack.c.0.s8 %v2427
    %v2429 = vlaneseq
    %v2430 = vshrl.u32 %v2429, 7
    %v2431 = vsub.s32 %v2428, %v2430
    %v2432 = vrot.slane %v2424, %v2431
    %v2434 = vunpack.c.l.s4 1934713408
    %v2435 = vunpack.c.0.s8 %v2434
    %v2436 = vlaneseq
    %v2437 = vshrl.u32 %v2436, 7
    %v2438 = vsub.s32 %v2435, %v2437
    %v2439 = vrot.slane %v2425, %v2438
    %v2440 = vcombine.low %v2407, %v2423
    %v2441 = vcombine.high %v2407, %v2423
    %v2443 = vunpack.c.l.s4 1934713408
    %v2444 = vunpack.c.0.s8 %v2443
    %v2445 = vlaneseq
    %v2446 = vshrl.u32 %v2445, 7
    %v2447 = vsub.s32 %v2444, %v2446
    %v2448 = vrot.slane %v2440, %v2447
    %v2450 = vunpack.c.l.s4 1934713408
    %v2451 = vunpack.c.0.s8 %v2450
    %v2452 = vlaneseq
    %v2453 = vshrl.u32 %v2452, 7
    %v2454 = vsub.s32 %v2451, %v2453
    %v2455 = vrot.slane %v2441, %v2454
    %v2456 = vcombine.high %v2432, 0.0
    %v2457 = vcombine.high %v2439, 0.0
    %v2458 = vcombine.high %v2448, 0.0
    %v2459 = vcombine.high %v2455, 0.0
    %v2460 = vcombine.low %v1992, %v2311
    %v2462 = vunpack.c.l.s4 1983009808
    %v2463 = vunpack.c.0.s8 %v2462
    %v2464 = vlaneseq
    %v2465 = vshrl.u32 %v2464, 7
    %v2466 = vsub.s32 %v2463, %v2465
    %v2467 = vrot.slane %v2460, %v2466
    %v2468 = vcombine.low %v2302, %v2320
    %v2470 = vunpack.c.l.s4 1983009808
    %v2471 = vunpack.c.0.s8 %v2470
    %v2472 = vlaneseq
    %v2473 = vshrl.u32 %v2472, 7
    %v2474 = vsub.s32 %v2471, %v2473
    %v2475 = vrot.slane %v2468, %v2474
    %v2476 = vcombine.low %v2467, %v2475
    %v2477 = vcombine.high %v2467, %v2475
    %v2479 = vunpack.c.l.s4 1934713408
    %v2480 = vunpack.c.0.s8 %v2479
    %v2481 = vlaneseq
    %v2482 = vshrl.u32 %v2481, 7
    %v2483 = vsub.s32 %v2480, %v2482
    %v2484 = vrot.slane %v2476, %v2483
    %v2486 = vunpack.c.l.s4 1934713408
    %v2487 = vunpack.c.0.s8 %v2486
    %v2488 = vlaneseq
    %v2489 = vshrl.u32 %v2488, 7
    %v2490 = vsub.s32 %v2487, %v2489
    %v2491 = vrot.slane %v2477, %v2490
    %v2492 = vcombine.high %v2484, 0.0
    %v2493 = vcombine.high %v2491, 0.0
    %v2494 = vcombine.low %v2364, %v2371
    %v2496 = vunpack.c.l.s4 1983009808
    %v2497 = vunpack.c.0.s8 %v2496
    %v2498 = vlaneseq
    %v2499 = vshrl.u32 %v2498, 7
    %v2500 = vsub.s32 %v2497, %v2499
    %v2501 = vrot.slane %v2494, %v2500
    %v2502 = vcombine.low %v2388, %v2389
    %v2504 = vunpack.c.l.s4 1983009808
    %v2505 = vunpack.c.0.s8 %v2504
    %v2506 = vlaneseq
    %v2507 = vshrl.u32 %v2506, 7
    %v2508 = vsub.s32 %v2505, %v2507
    %v2509 = vrot.slane %v2502, %v2508
    %v2510 = vcombine.low %v2380, %v2387
    %v2512 = vunpack.c.l.s4 1983009808
    %v2513 = vunpack.c.0.s8 %v2512
    %v2514 = vlaneseq
    %v2515 = vshrl.u32 %v2514, 7
    %v2516 = vsub.s32 %v2513, %v2515
    %v2517 = vrot.slane %v2510, %v2516
    %v2518 = vcombine.low %v2390, %v2391
    %v2520 = vunpack.c.l.s4 1983009808
    %v2521 = vunpack.c.0.s8 %v2520
    %v2522 = vlaneseq
    %v2523 = vshrl.u32 %v2522, 7
    %v2524 = vsub.s32 %v2521, %v2523
    %v2525 = vrot.slane %v2518, %v2524
    %v2526 = vcombine.low %v2501, %v2509
    %v2527 = vcombine.high %v2501, %v2509
    %v2529 = vunpack.c.l.s4 1934713408
    %v2530 = vunpack.c.0.s8 %v2529
    %v2531 = vlaneseq
    %v2532 = vshrl.u32 %v2531, 7
    %v2533 = vsub.s32 %v2530, %v2532
    %v2534 = vrot.slane %v2526, %v2533
    %v2536 = vunpack.c.l.s4 1934713408
    %v2537 = vunpack.c.0.s8 %v2536
    %v2538 = vlaneseq
    %v2539 = vshrl.u32 %v2538, 7
    %v2540 = vsub.s32 %v2537, %v2539
    %v2541 = vrot.slane %v2527, %v2540
    %v2542 = vcombine.low %v2517, %v2525
    %v2543 = vcombine.high %v2517, %v2525
    %v2545 = vunpack.c.l.s4 1934713408
    %v2546 = vunpack.c.0.s8 %v2545
    %v2547 = vlaneseq
    %v2548 = vshrl.u32 %v2547, 7
    %v2549 = vsub.s32 %v2546, %v2548
    %v2550 = vrot.slane %v2542, %v2549
    %v2552 = vunpack.c.l.s4 1934713408
    %v2553 = vunpack.c.0.s8 %v2552
    %v2554 = vlaneseq
    %v2555 = vshrl.u32 %v2554, 7
    %v2556 = vsub.s32 %v2553, %v2555
    %v2557 = vrot.slane %v2543, %v2556
    %v2558 = vcombine.low %v2534, %v2550
    %v2559 = vcombine.high %v2534, %v2550
    %v2560 = vcombine.low %v2541, %v2557
    %v2561 = vcombine.high %v2541, %v2557
    %v2562 = vcombine.low %v2432, %v2439
    %v2564 = vunpack.c.l.s4 1983009808
    %v2565 = vunpack.c.0.s8 %v2564
    %v2566 = vlaneseq
    %v2567 = vshrl.u32 %v2566, 7
    %v2568 = vsub.s32 %v2565, %v2567
    %v2569 = vrot.slane %v2562, %v2568
    %v2570 = vcombine.low %v2456, %v2457
    %v2572 = vunpack.c.l.s4 1983009808
    %v2573 = vunpack.c.0.s8 %v2572
    %v2574 = vlaneseq
    %v2575 = vshrl.u32 %v2574, 7
    %v2576 = vsub.s32 %v2573, %v2575
    %v2577 = vrot.slane %v2570, %v2576
    %v2578 = vcombine.low %v2448, %v2455
    %v2580 = vunpack.c.l.s4 1983009808
    %v2581 = vunpack.c.0.s8 %v2580
    %v2582 = vlaneseq
    %v2583 = vshrl.u32 %v2582, 7
    %v2584 = vsub.s32 %v2581, %v2583
    %v2585 = vrot.slane %v2578, %v2584
    %v2586 = vcombine.low %v2458, %v2459
    %v2588 = vunpack.c.l.s4 1983009808
    %v2589 = vunpack.c.0.s8 %v2588
    %v2590 = vlaneseq
    %v2591 = vshrl.u32 %v2590, 7
    %v2592 = vsub.s32 %v2589, %v2591
    %v2593 = vrot.slane %v2586, %v2592
    %v2594 = vcombine.low %v2569, %v2577
    %v2595 = vcombine.high %v2569, %v2577
    %v2597 = vunpack.c.l.s4 1934713408
    %v2598 = vunpack.c.0.s8 %v2597
    %v2599 = vlaneseq
    %v2600 = vshrl.u32 %v2599, 7
    %v2601 = vsub.s32 %v2598, %v2600
    %v2602 = vrot.slane %v2594, %v2601
    %v2604 = vunpack.c.l.s4 1934713408
    %v2605 = vunpack.c.0.s8 %v2604
    %v2606 = vlaneseq
    %v2607 = vshrl.u32 %v2606, 7
    %v2608 = vsub.s32 %v2605, %v2607
    %v2609 = vrot.slane %v2595, %v2608
    %v2610 = vcombine.low %v2585, %v2593
    %v2611 = vcombine.high %v2585, %v2593
    %v2613 = vunpack.c.l.s4 1934713408
    %v2614 = vunpack.c.0.s8 %v2613
    %v2615 = vlaneseq
    %v2616 = vshrl.u32 %v2615, 7
    %v2617 = vsub.s32 %v2614, %v2616
    %v2618 = vrot.slane %v2610, %v2617
    %v2620 = vunpack.c.l.s4 1934713408
    %v2621 = vunpack.c.0.s8 %v2620
    %v2622 = vlaneseq
    %v2623 = vshrl.u32 %v2622, 7
    %v2624 = vsub.s32 %v2621, %v2623
    %v2625 = vrot.slane %v2611, %v2624
    %v2626 = vcombine.low %v2602, %v2618
    %v2627 = vcombine.high %v2602, %v2618
    %v2628 = vcombine.low %v2609, %v2625
    %v2629 = vcombine.high %v2609, %v2625
    %v2630 = vcombine.low %v2484, %v2491
    %v2632 = vunpack.c.l.s4 1983009808
    %v2633 = vunpack.c.0.s8 %v2632
    %v2634 = vlaneseq
    %v2635 = vshrl.u32 %v2634, 7
    %v2636 = vsub.s32 %v2633, %v2635
    %v2637 = vrot.slane %v2630, %v2636
    %v2638 = vcombine.low %v2492, %v2493
    %v2640 = vunpack.c.l.s4 1983009808
    %v2641 = vunpack.c.0.s8 %v2640
    %v2642 = vlaneseq
    %v2643 = vshrl.u32 %v2642, 7
    %v2644 = vsub.s32 %v2641, %v2643
    %v2645 = vrot.slane %v2638, %v2644
    %v2646 = vcombine.low %v2637, %v2645
    %v2647 = vcombine.high %v2637, %v2645
    %v2649 = vunpack.c.l.s4 1934713408
    %v2650 = vunpack.c.0.s8 %v2649
    %v2651 = vlaneseq
    %v2652 = vshrl.u32 %v2651, 7
    %v2653 = vsub.s32 %v2650, %v2652
    %v2654 = vrot.slane %v2646, %v2653
    %v2656 = vunpack.c.l.s4 1934713408
    %v2657 = vunpack.c.0.s8 %v2656
    %v2658 = vlaneseq
    %v2659 = vshrl.u32 %v2658, 7
    %v2660 = vsub.s32 %v2657, %v2659
    %v2661 = vrot.slane %v2647, %v2660
    %v2662 = vcombine.high %v2654, 0.0
    %v2663 = vcombine.high %v2661, 0.0
    %v2676 = vcombine.high %v2558, %v2558
    %v2677 = vcombine.high %v2626, %v2626
    %v2678 = vcombine.high %v2559, %v2559
    %v2679 = vcombine.high %v2627, %v2627
    %v2680 = vcombine.high %v2560, %v2560
    %v2681 = vcombine.high %v2628, %v2628
    %v2682 = vcombine.high %v2561, %v2561
    %v2683 = vcombine.high %v2629, %v2629
    %2684 = vrot.lane.b32.xlu0 %v1984, 96
    %v2685 = vpop.permute.xlu0 %2684
    %2686 = vrot.lane.b32.xlu0 %v1987, 96
    %v2687 = vpop.permute.xlu0 %2686
    %2688 = vrot.lane.b32.xlu0 %v1992, 96
    %v2689 = vpop.permute.xlu0 %2688
    %2690 = vrot.lane.b32.xlu0 %v2298, 96
    %v2691 = vpop.permute.xlu0 %2690
    %2692 = vrot.lane.b32.xlu0 %v2300, 96
    %v2693 = vpop.permute.xlu0 %2692
    %2694 = vrot.lane.b32.xlu0 %v2302, 96
    %v2695 = vpop.permute.xlu0 %2694
    %2696 = vrot.lane.b32.xlu0 %v2307, 96
    %v2697 = vpop.permute.xlu0 %2696
    %2698 = vrot.lane.b32.xlu0 %v2309, 96
    %v2699 = vpop.permute.xlu0 %2698
    %2700 = vrot.lane.b32.xlu0 %v2311, 96
    %v2701 = vpop.permute.xlu0 %2700
    %2702 = vrot.lane.b32.xlu0 %v2316, 96
    %v2703 = vpop.permute.xlu0 %2702
    %2704 = vrot.lane.b32.xlu0 %v2318, 96
    %v2705 = vpop.permute.xlu0 %2704
    %2706 = vrot.lane.b32.xlu0 %v2320, 96
    %v2707 = vpop.permute.xlu0 %2706
    %v2720 = vcombine.low %v2685, %v2697
    %v2721 = vcombine.high %v2685, %v2697
    %v2723 = vunpack.c.l.s4 1983009808
    %v2724 = vunpack.c.0.s8 %v2723
    %v2725 = vlaneseq
    %v2726 = vshrl.u32 %v2725, 7
    %v2727 = vsub.s32 %v2724, %v2726
    %v2728 = vrot.slane %v2720, %v2727
    %v2730 = vunpack.c.l.s4 1983009808
    %v2731 = vunpack.c.0.s8 %v2730
    %v2732 = vlaneseq
    %v2733 = vshrl.u32 %v2732, 7
    %v2734 = vsub.s32 %v2731, %v2733
    %v2735 = vrot.slane %v2721, %v2734
    %v2736 = vcombine.low %v2691, %v2703
    %v2737 = vcombine.high %v2691, %v2703
    %v2739 = vunpack.c.l.s4 1983009808
    %v2740 = vunpack.c.0.s8 %v2739
    %v2741 = vlaneseq
    %v2742 = vshrl.u32 %v2741, 7
    %v2743 = vsub.s32 %v2740, %v2742
    %v2744 = vrot.slane %v2736, %v2743
    %v2746 = vunpack.c.l.s4 1983009808
    %v2747 = vunpack.c.0.s8 %v2746
    %v2748 = vlaneseq
    %v2749 = vshrl.u32 %v2748, 7
    %v2750 = vsub.s32 %v2747, %v2749
    %v2751 = vrot.slane %v2737, %v2750
    %v2752 = vcombine.low %v2728, %v2744
    %v2753 = vcombine.high %v2728, %v2744
    %v2755 = vunpack.c.l.s4 1934713408
    %v2756 = vunpack.c.0.s8 %v2755
    %v2757 = vlaneseq
    %v2758 = vshrl.u32 %v2757, 7
    %v2759 = vsub.s32 %v2756, %v2758
    %v2760 = vrot.slane %v2752, %v2759
    %v2762 = vunpack.c.l.s4 1934713408
    %v2763 = vunpack.c.0.s8 %v2762
    %v2764 = vlaneseq
    %v2765 = vshrl.u32 %v2764, 7
    %v2766 = vsub.s32 %v2763, %v2765
    %v2767 = vrot.slane %v2753, %v2766
    %v2768 = vcombine.low %v2735, %v2751
    %v2769 = vcombine.high %v2735, %v2751
    %v2771 = vunpack.c.l.s4 1934713408
    %v2772 = vunpack.c.0.s8 %v2771
    %v2773 = vlaneseq
    %v2774 = vshrl.u32 %v2773, 7
    %v2775 = vsub.s32 %v2772, %v2774
    %v2776 = vrot.slane %v2768, %v2775
    %v2778 = vunpack.c.l.s4 1934713408
    %v2779 = vunpack.c.0.s8 %v2778
    %v2780 = vlaneseq
    %v2781 = vshrl.u32 %v2780, 7
    %v2782 = vsub.s32 %v2779, %v2781
    %v2783 = vrot.slane %v2769, %v2782
    %v2784 = vcombine.high %v2760, 0.0
    %v2785 = vcombine.high %v2767, 0.0
    %v2786 = vcombine.high %v2776, 0.0
    %v2787 = vcombine.high %v2783, 0.0
    %v2788 = vcombine.low %v2687, %v2699
    %v2789 = vcombine.high %v2687, %v2699
    %v2791 = vunpack.c.l.s4 1983009808
    %v2792 = vunpack.c.0.s8 %v2791
    %v2793 = vlaneseq
    %v2794 = vshrl.u32 %v2793, 7
    %v2795 = vsub.s32 %v2792, %v2794
    %v2796 = vrot.slane %v2788, %v2795
    %v2798 = vunpack.c.l.s4 1983009808
    %v2799 = vunpack.c.0.s8 %v2798
    %v2800 = vlaneseq
    %v2801 = vshrl.u32 %v2800, 7
    %v2802 = vsub.s32 %v2799, %v2801
    %v2803 = vrot.slane %v2789, %v2802
    %v2804 = vcombine.low %v2693, %v2705
    %v2805 = vcombine.high %v2693, %v2705
    %v2807 = vunpack.c.l.s4 1983009808
    %v2808 = vunpack.c.0.s8 %v2807
    %v2809 = vlaneseq
    %v2810 = vshrl.u32 %v2809, 7
    %v2811 = vsub.s32 %v2808, %v2810
    %v2812 = vrot.slane %v2804, %v2811
    %v2814 = vunpack.c.l.s4 1983009808
    %v2815 = vunpack.c.0.s8 %v2814
    %v2816 = vlaneseq
    %v2817 = vshrl.u32 %v2816, 7
    %v2818 = vsub.s32 %v2815, %v2817
    %v2819 = vrot.slane %v2805, %v2818
    %v2820 = vcombine.low %v2796, %v2812
    %v2821 = vcombine.high %v2796, %v2812
    %v2823 = vunpack.c.l.s4 1934713408
    %v2824 = vunpack.c.0.s8 %v2823
    %v2825 = vlaneseq
    %v2826 = vshrl.u32 %v2825, 7
    %v2827 = vsub.s32 %v2824, %v2826
    %v2828 = vrot.slane %v2820, %v2827
    %v2830 = vunpack.c.l.s4 1934713408
    %v2831 = vunpack.c.0.s8 %v2830
    %v2832 = vlaneseq
    %v2833 = vshrl.u32 %v2832, 7
    %v2834 = vsub.s32 %v2831, %v2833
    %v2835 = vrot.slane %v2821, %v2834
    %v2836 = vcombine.low %v2803, %v2819
    %v2837 = vcombine.high %v2803, %v2819
    %v2839 = vunpack.c.l.s4 1934713408
    %v2840 = vunpack.c.0.s8 %v2839
    %v2841 = vlaneseq
    %v2842 = vshrl.u32 %v2841, 7
    %v2843 = vsub.s32 %v2840, %v2842
    %v2844 = vrot.slane %v2836, %v2843
    %v2846 = vunpack.c.l.s4 1934713408
    %v2847 = vunpack.c.0.s8 %v2846
    %v2848 = vlaneseq
    %v2849 = vshrl.u32 %v2848, 7
    %v2850 = vsub.s32 %v2847, %v2849
    %v2851 = vrot.slane %v2837, %v2850
    %v2852 = vcombine.high %v2828, 0.0
    %v2853 = vcombine.high %v2835, 0.0
    %v2854 = vcombine.high %v2844, 0.0
    %v2855 = vcombine.high %v2851, 0.0
    %v2856 = vcombine.low %v2689, %v2701
    %v2858 = vunpack.c.l.s4 1983009808
    %v2859 = vunpack.c.0.s8 %v2858
    %v2860 = vlaneseq
    %v2861 = vshrl.u32 %v2860, 7
    %v2862 = vsub.s32 %v2859, %v2861
    %v2863 = vrot.slane %v2856, %v2862
    %v2864 = vcombine.low %v2695, %v2707
    %v2866 = vunpack.c.l.s4 1983009808
    %v2867 = vunpack.c.0.s8 %v2866
    %v2868 = vlaneseq
    %v2869 = vshrl.u32 %v2868, 7
    %v2870 = vsub.s32 %v2867, %v2869
    %v2871 = vrot.slane %v2864, %v2870
    %v2872 = vcombine.low %v2863, %v2871
    %v2873 = vcombine.high %v2863, %v2871
    %v2875 = vunpack.c.l.s4 1934713408
    %v2876 = vunpack.c.0.s8 %v2875
    %v2877 = vlaneseq
    %v2878 = vshrl.u32 %v2877, 7
    %v2879 = vsub.s32 %v2876, %v2878
    %v2880 = vrot.slane %v2872, %v2879
    %v2882 = vunpack.c.l.s4 1934713408
    %v2883 = vunpack.c.0.s8 %v2882
    %v2884 = vlaneseq
    %v2885 = vshrl.u32 %v2884, 7
    %v2886 = vsub.s32 %v2883, %v2885
    %v2887 = vrot.slane %v2873, %v2886
    %v2888 = vcombine.high %v2880, 0.0
    %v2889 = vcombine.high %v2887, 0.0
    %v2890 = vcombine.low %v2760, %v2767
    %v2892 = vunpack.c.l.s4 1983009808
    %v2893 = vunpack.c.0.s8 %v2892
    %v2894 = vlaneseq
    %v2895 = vshrl.u32 %v2894, 7
    %v2896 = vsub.s32 %v2893, %v2895
    %v2897 = vrot.slane %v2890, %v2896
    %v2898 = vcombine.low %v2784, %v2785
    %v2900 = vunpack.c.l.s4 1983009808
    %v2901 = vunpack.c.0.s8 %v2900
    %v2902 = vlaneseq
    %v2903 = vshrl.u32 %v2902, 7
    %v2904 = vsub.s32 %v2901, %v2903
    %v2905 = vrot.slane %v2898, %v2904
    %v2906 = vcombine.low %v2776, %v2783
    %v2908 = vunpack.c.l.s4 1983009808
    %v2909 = vunpack.c.0.s8 %v2908
    %v2910 = vlaneseq
    %v2911 = vshrl.u32 %v2910, 7
    %v2912 = vsub.s32 %v2909, %v2911
    %v2913 = vrot.slane %v2906, %v2912
    %v2914 = vcombine.low %v2786, %v2787
    %v2916 = vunpack.c.l.s4 1983009808
    %v2917 = vunpack.c.0.s8 %v2916
    %v2918 = vlaneseq
    %v2919 = vshrl.u32 %v2918, 7
    %v2920 = vsub.s32 %v2917, %v2919
    %v2921 = vrot.slane %v2914, %v2920
    %v2922 = vcombine.low %v2897, %v2905
    %v2923 = vcombine.high %v2897, %v2905
    %v2925 = vunpack.c.l.s4 1934713408
    %v2926 = vunpack.c.0.s8 %v2925
    %v2927 = vlaneseq
    %v2928 = vshrl.u32 %v2927, 7
    %v2929 = vsub.s32 %v2926, %v2928
    %v2930 = vrot.slane %v2922, %v2929
    %v2932 = vunpack.c.l.s4 1934713408
    %v2933 = vunpack.c.0.s8 %v2932
    %v2934 = vlaneseq
    %v2935 = vshrl.u32 %v2934, 7
    %v2936 = vsub.s32 %v2933, %v2935
    %v2937 = vrot.slane %v2923, %v2936
    %v2938 = vcombine.low %v2913, %v2921
    %v2939 = vcombine.high %v2913, %v2921
    %v2941 = vunpack.c.l.s4 1934713408
    %v2942 = vunpack.c.0.s8 %v2941
    %v2943 = vlaneseq
    %v2944 = vshrl.u32 %v2943, 7
    %v2945 = vsub.s32 %v2942, %v2944
    %v2946 = vrot.slane %v2938, %v2945
    %v2948 = vunpack.c.l.s4 1934713408
    %v2949 = vunpack.c.0.s8 %v2948
    %v2950 = vlaneseq
    %v2951 = vshrl.u32 %v2950, 7
    %v2952 = vsub.s32 %v2949, %v2951
    %v2953 = vrot.slane %v2939, %v2952
    %v2954 = vcombine.low %v2930, %v2946
    %v2955 = vcombine.high %v2930, %v2946
    %v2956 = vcombine.low %v2937, %v2953
    %v2957 = vcombine.high %v2937, %v2953
    %v2958 = vcombine.low %v2828, %v2835
    %v2960 = vunpack.c.l.s4 1983009808
    %v2961 = vunpack.c.0.s8 %v2960
    %v2962 = vlaneseq
    %v2963 = vshrl.u32 %v2962, 7
    %v2964 = vsub.s32 %v2961, %v2963
    %v2965 = vrot.slane %v2958, %v2964
    %v2966 = vcombine.low %v2852, %v2853
    %v2968 = vunpack.c.l.s4 1983009808
    %v2969 = vunpack.c.0.s8 %v2968
    %v2970 = vlaneseq
    %v2971 = vshrl.u32 %v2970, 7
    %v2972 = vsub.s32 %v2969, %v2971
    %v2973 = vrot.slane %v2966, %v2972
    %v2974 = vcombine.low %v2844, %v2851
    %v2976 = vunpack.c.l.s4 1983009808
    %v2977 = vunpack.c.0.s8 %v2976
    %v2978 = vlaneseq
    %v2979 = vshrl.u32 %v2978, 7
    %v2980 = vsub.s32 %v2977, %v2979
    %v2981 = vrot.slane %v2974, %v2980
    %v2982 = vcombine.low %v2854, %v2855
    %v2984 = vunpack.c.l.s4 1983009808
    %v2985 = vunpack.c.0.s8 %v2984
    %v2986 = vlaneseq
    %v2987 = vshrl.u32 %v2986, 7
    %v2988 = vsub.s32 %v2985, %v2987
    %v2989 = vrot.slane %v2982, %v2988
    %v2990 = vcombine.low %v2965, %v2973
    %v2991 = vcombine.high %v2965, %v2973
    %v2993 = vunpack.c.l.s4 1934713408
    %v2994 = vunpack.c.0.s8 %v2993
    %v2995 = vlaneseq
    %v2996 = vshrl.u32 %v2995, 7
    %v2997 = vsub.s32 %v2994, %v2996
    %v2998 = vrot.slane %v2990, %v2997
    %v3000 = vunpack.c.l.s4 1934713408
    %v3001 = vunpack.c.0.s8 %v3000
    %v3002 = vlaneseq
    %v3003 = vshrl.u32 %v3002, 7
    %v3004 = vsub.s32 %v3001, %v3003
    %v3005 = vrot.slane %v2991, %v3004
    %v3006 = vcombine.low %v2981, %v2989
    %v3007 = vcombine.high %v2981, %v2989
    %v3009 = vunpack.c.l.s4 1934713408
    %v3010 = vunpack.c.0.s8 %v3009
    %v3011 = vlaneseq
    %v3012 = vshrl.u32 %v3011, 7
    %v3013 = vsub.s32 %v3010, %v3012
    %v3014 = vrot.slane %v3006, %v3013
    %v3016 = vunpack.c.l.s4 1934713408
    %v3017 = vunpack.c.0.s8 %v3016
    %v3018 = vlaneseq
    %v3019 = vshrl.u32 %v3018, 7
    %v3020 = vsub.s32 %v3017, %v3019
    %v3021 = vrot.slane %v3007, %v3020
    %v3022 = vcombine.low %v2998, %v3014
    %v3023 = vcombine.high %v2998, %v3014
    %v3024 = vcombine.low %v3005, %v3021
    %v3025 = vcombine.high %v3005, %v3021
    %v3026 = vcombine.low %v2880, %v2887
    %v3028 = vunpack.c.l.s4 1983009808
    %v3029 = vunpack.c.0.s8 %v3028
    %v3030 = vlaneseq
    %v3031 = vshrl.u32 %v3030, 7
    %v3032 = vsub.s32 %v3029, %v3031
    %v3033 = vrot.slane %v3026, %v3032
    %v3034 = vcombine.low %v2888, %v2889
    %v3036 = vunpack.c.l.s4 1983009808
    %v3037 = vunpack.c.0.s8 %v3036
    %v3038 = vlaneseq
    %v3039 = vshrl.u32 %v3038, 7
    %v3040 = vsub.s32 %v3037, %v3039
    %v3041 = vrot.slane %v3034, %v3040
    %v3042 = vcombine.low %v3033, %v3041
    %v3043 = vcombine.high %v3033, %v3041
    %v3045 = vunpack.c.l.s4 1934713408
    %v3046 = vunpack.c.0.s8 %v3045
    %v3047 = vlaneseq
    %v3048 = vshrl.u32 %v3047, 7
    %v3049 = vsub.s32 %v3046, %v3048
    %v3050 = vrot.slane %v3042, %v3049
    %v3052 = vunpack.c.l.s4 1934713408
    %v3053 = vunpack.c.0.s8 %v3052
    %v3054 = vlaneseq
    %v3055 = vshrl.u32 %v3054, 7
    %v3056 = vsub.s32 %v3053, %v3055
    %v3057 = vrot.slane %v3043, %v3056
    %v3058 = vcombine.high %v3050, 0.0
    %v3059 = vcombine.high %v3057, 0.0
    %v3072 = vcombine.high %v2954, %v2954
    %v3073 = vcombine.high %v3022, %v3022
    %v3074 = vcombine.high %v2955, %v2955
    %v3075 = vcombine.high %v3023, %v3023
    %v3076 = vcombine.high %v2956, %v2956
    %v3077 = vcombine.high %v3024, %v3024
    %v3078 = vcombine.high %v2957, %v2957
    %v3079 = vcombine.high %v3025, %v3025
    %v3080 = vcombine.low %v2558, %v2676
    %v3081 = vcombine.low %v2626, %v2677
    %v3082 = vcombine.low %v2654, %v2559
    %v3083 = vcombine.low %v2678, %v2627
    %v3084 = vcombine.low %v2679, %v2662
    %v3085 = vcombine.low %v2560, %v2680
    %v3086 = vcombine.low %v2628, %v2681
    %v3087 = vcombine.low %v2661, %v2561
    %v3088 = vcombine.low %v2682, %v2629
    %v3089 = vcombine.low %v2683, %v2663
    %v3091 = vsel %vm1066, %v2222, 0
    %v3094 = vsel %vm1066, %v2290, 0
    %v3097 = vsel %vm1066, %v2223, 0
    %v3100 = vsel %vm1066, %v2291, 0
    %v3103 = vsel %vm1066, %v2224, 0
    %v3106 = vsel %vm1066, %v2292, 0
    %v3109 = vsel %vm1066, %v2225, 0
    %v3112 = vsel %vm1066, %v2293, 0
    %v3114 = vsel %vm1066, %v3080, 0
    %v3116 = vsel %vm1066, %v3081, 0
    %v3118 = vsel %vm1066, %v3082, 0
    %v3120 = vsel %vm1066, %v3083, 0
    %v3122 = vsel %vm1066, %v3084, 0
    %v3124 = vsel %vm1066, %v3085, 0
    %v3126 = vsel %vm1066, %v3086, 0
    %v3128 = vsel %vm1066, %v3087, 0
    %v3130 = vsel %vm1066, %v3088, 0
    %v3132 = vsel %vm1066, %v3089, 0
    %3134 = vmatprep.subr.mxu0 0.0
    %3135 = vmatpush1.xpose.msra.mxu0 %v3114
    %3136 = vmatprep.subr.mxu0 0.0
    %3137 = vmatpush1.xpose.msra.mxu0 %v3116
    %3138 = vmatprep.subr.mxu0 0.0
    %3139 = vmatpush1.xpose.msra.mxu0 %v3118
    %3140 = vmatprep.subr.mxu0 0.0
    %3141 = vmatpush1.xpose.msra.mxu0 %v3120
    %3142 = vmatprep.subr.mxu0 0.0
    %3143 = vmatpush1.xpose.msra.mxu0 %v3122
    %3144 = vmatprep.subr.mxu0 0.0
    %3145 = vmatpush1.xpose.msra.mxu0 %v3124
    %3146 = vmatprep.subr.mxu0 0.0
    %3147 = vmatpush1.xpose.msra.mxu0 %v3126
    %3148 = vmatprep.subr.mxu0 0.0
    %3149 = vmatpush1.xpose.msra.mxu0 %v3128
    %3150 = vmatprep.subr.mxu0 0.0
    %3151 = vmatpush1.xpose.msra.mxu0 %v3130
    %3152 = vmatprep.subr.mxu0 0.0
    %3153 = vmatpush1.xpose.msra.mxu0 %v3132
    %3154 = vmatprep.subr.mxu0 0.0
    %3155 = vmatpush1.xpose.msra.mxu0 0.0
    %3156 = vmatprep.subr.mxu0 0.0
    %3157 = vmatpush1.xpose.msra.mxu0 0.0
    %3158 = vmatprep.subr.mxu0 0.0
    %3159 = vmatpush1.xpose.msra.mxu0 0.0
    %3160 = vmatprep.subr.mxu0 0.0
    %3161 = vmatpush1.xpose.msra.mxu0 0.0
    %3162 = vmatprep.subr.mxu0 0.0
    %3163 = vmatpush1.xpose.msra.mxu0 0.0
    %3164 = vmatprep.subr.mxu0 0.0
    %3165 = vmatpush1.xpose.msra.mxu0 0.0
    %3166 = vmatprep.subr.mxu0 0.0
    %3167 = vmatpush1.xpose.msra.mxu0 0.0
    %3168 = vmatprep.subr.mxu0 0.0
    %3169 = vmatpush1.xpose.msra.mxu0 0.0
    %3170 = vmatprep.subr.mxu0 0.0
    %3171 = vmatpush1.xpose.msra.mxu0 0.0
    %3172 = vmatprep.subr.mxu0 0.0
    %3173 = vmatpush1.xpose.msra.mxu0 0.0
    %3174 = vmatprep.subr.mxu0 0.0
    %3175 = vmatpush1.xpose.msra.mxu0 0.0
    %3176 = vmatprep.subr.mxu0 0.0
    %3177 = vmatpush1.xpose.msra.mxu0 0.0
    %3178 = vmatprep.subr.mxu0 0.0
    %3179 = vmatpush1.xpose.msra.mxu0 0.0
    %3180 = vmatprep.subr.mxu0 0.0
    %3181 = vmatpush1.xpose.msra.mxu0 0.0
    %3182 = vmatprep.subr.mxu0 0.0
    %3183 = vmatpush1.xpose.msra.mxu0 0.0
    %3184 = vmatprep.subr.mxu0 0.0
    %3185 = vmatpush1.xpose.msra.mxu0 0.0
    %3186 = vmatprep.subr.mxu0 0.0
    %3187 = vmatpush1.xpose.msra.mxu0 0.0
    %3188 = vmatprep.subr.mxu0 0.0
    %3189 = vmatpush1.xpose.msra.mxu0 0.0
    %3190 = vmatprep.subr.mxu0 0.0
    %3191 = vmatpush1.xpose.msra.mxu0 0.0
    %3192 = vmatprep.subr.mxu0 0.0
    %3193 = vmatpush1.xpose.msra.mxu0 0.0
    %3194 = vmatprep.subr.mxu0 0.0
    %3195 = vmatpush1.xpose.msra.mxu0 0.0
    %3196 = vmatprep.subr.mxu0 0.0
    %3197 = vmatpush1.xpose.msra.mxu0 0.0
    %3198 = vmatprep.mubr.f32.mxu0 0.0
    %3199 = vmatmul.mubr.f32.gmra.mrb[0].mxu0 %v3091
    %v3200 = vpop.f32.mrb[0].mxu0
    %v3201 = vadd.f32 %v100, %v3200
    %v3202 = vpop.f32.mrb[0].mxu0
    %3203 = vmatprep.mubr.f32.mxu0 0.0
    %3204 = vmatmul.mubr.f32.gmra.mrb[0].mxu0 %v3094
    %v3205 = vpop.f32.mrb[0].mxu0
    %v3206 = vadd.f32 %v101, %v3205
    %v3207 = vpop.f32.mrb[0].mxu0
    %3208 = vmatprep.mubr.f32.mxu0 0.0
    %3209 = vmatmul.mubr.f32.gmra.mrb[0].mxu0 %v3097
    %v3210 = vpop.f32.mrb[0].mxu0
    %v3211 = vadd.f32 %v102, %v3210
    %v3212 = vpop.f32.mrb[0].mxu0
    %3213 = vmatprep.mubr.f32.mxu0 0.0
    %3214 = vmatmul.mubr.f32.gmra.mrb[0].mxu0 %v3100
    %v3215 = vpop.f32.mrb[0].mxu0
    %v3216 = vadd.f32 %v103, %v3215
    %v3217 = vpop.f32.mrb[0].mxu0
    %3218 = vmatprep.mubr.f32.mxu0 0.0
    %3219 = vmatmul.mubr.f32.gmra.mrb[0].mxu0 %v3103
    %v3220 = vpop.f32.mrb[0].mxu0
    %v3221 = vadd.f32 %v104, %v3220
    %v3222 = vpop.f32.mrb[0].mxu0
    %3223 = vmatprep.mubr.f32.mxu0 0.0
    %3224 = vmatmul.mubr.f32.gmra.mrb[0].mxu0 %v3106
    %v3225 = vpop.f32.mrb[0].mxu0
    %v3226 = vadd.f32 %v105, %v3225
    %v3227 = vpop.f32.mrb[0].mxu0
    %3228 = vmatprep.mubr.f32.mxu0 0.0
    %3229 = vmatmul.mubr.f32.gmra.mrb[0].mxu0 %v3109
    %v3230 = vpop.f32.mrb[0].mxu0
    %v3231 = vadd.f32 %v106, %v3230
    %v3232 = vpop.f32.mrb[0].mxu0
    %3233 = vmatprep.mubr.f32.mxu0 0.0
    %3234 = vmatmul.mubr.f32.gmra.mrb[0].mxu0 %v3112
    %v3235 = vpop.f32.mrb[0].mxu0
    %v3236 = vadd.f32 %v107, %v3235
    %v3237 = vpop.f32.mrb[0].mxu0
    %3238 = vdwg.mxu0
    %vm3239 = vcmask 654336
    %v3240 = vsel %vm3239, %v3201, -inf
    %3241 = vmax.xlane.f32.xlu0 %v3240
    %v3242 = vpop.xlane.xlu0 %3241
    %v3243 = vsel %vm3239, %v3206, -inf
    %3244 = vmax.xlane.f32.xlu0 %v3243
    %v3245 = vpop.xlane.xlu0 %3244
    %v3246 = vsel %vm3239, %v3211, -inf
    %3247 = vmax.xlane.f32.xlu0 %v3246
    %v3248 = vpop.xlane.xlu0 %3247
    %v3249 = vsel %vm3239, %v3216, -inf
    %3250 = vmax.xlane.f32.xlu0 %v3249
    %v3251 = vpop.xlane.xlu0 %3250
    %v3252 = vsel %vm3239, %v3221, -inf
    %3253 = vmax.xlane.f32.xlu0 %v3252
    %v3254 = vpop.xlane.xlu0 %3253
    %v3255 = vsel %vm3239, %v3226, -inf
    %3256 = vmax.xlane.f32.xlu0 %v3255
    %v3257 = vpop.xlane.xlu0 %3256
    %v3258 = vsel %vm3239, %v3231, -inf
    %3259 = vmax.xlane.f32.xlu0 %v3258
    %v3260 = vpop.xlane.xlu0 %3259
    %v3261 = vsel %vm3239, %v3236, -inf
    %3262 = vmax.xlane.f32.xlu0 %v3261
    %v3263 = vpop.xlane.xlu0 %3262
    %v3264 = vsub.f32 %v3201, %v3242
    %v3265 = vsub.f32 %v3206, %v3245
    %v3266 = vsub.f32 %v3211, %v3248
    %v3267 = vsub.f32 %v3216, %v3251
    %v3268 = vsub.f32 %v3221, %v3254
    %v3269 = vsub.f32 %v3226, %v3257
    %v3270 = vsub.f32 %v3231, %v3260
    %v3271 = vsub.f32 %v3236, %v3263
    %v3272 = vmul.f32 %v3264, 1.442695
    %v3273 = vpow.pop %v3272
    %v3274 = vmul.f32 %v3265, 1.442695
    %v3275 = vpow.pop %v3274
    %v3276 = vmul.f32 %v3266, 1.442695
    %v3277 = vpow.pop %v3276
    %v3278 = vmul.f32 %v3267, 1.442695
    %v3279 = vpow.pop %v3278
    %v3280 = vmul.f32 %v3268, 1.442695
    %v3281 = vpow.pop %v3280
    %v3282 = vmul.f32 %v3269, 1.442695
    %v3283 = vpow.pop %v3282
    %v3284 = vmul.f32 %v3270, 1.442695
    %v3285 = vpow.pop %v3284
    %v3286 = vmul.f32 %v3271, 1.442695
    %v3287 = vpow.pop %v3286
    %v3288 = vsel %vm3239, %v3273, 0.0
    %3289 = vadd.xlane.f32.xlu0 %v3288
    %v3290 = vpop.xlane.xlu0 %3289
    %v3291 = vsel %vm3239, %v3275, 0.0
    %3292 = vadd.xlane.f32.xlu0 %v3291
    %v3293 = vpop.xlane.xlu0 %3292
    %v3294 = vsel %vm3239, %v3277, 0.0
    %3295 = vadd.xlane.f32.xlu0 %v3294
    %v3296 = vpop.xlane.xlu0 %3295
    %v3297 = vsel %vm3239, %v3279, 0.0
    %3298 = vadd.xlane.f32.xlu0 %v3297
    %v3299 = vpop.xlane.xlu0 %3298
    %v3300 = vsel %vm3239, %v3281, 0.0
    %3301 = vadd.xlane.f32.xlu0 %v3300
    %v3302 = vpop.xlane.xlu0 %3301
    %v3303 = vsel %vm3239, %v3283, 0.0
    %3304 = vadd.xlane.f32.xlu0 %v3303
    %v3305 = vpop.xlane.xlu0 %3304
    %v3306 = vsel %vm3239, %v3285, 0.0
    %3307 = vadd.xlane.f32.xlu0 %v3306
    %v3308 = vpop.xlane.xlu0 %3307
    %v3309 = vsel %vm3239, %v3287, 0.0
    %3310 = vadd.xlane.f32.xlu0 %v3309
    %v3311 = vpop.xlane.xlu0 %3310
    %v3312 = vrcp.pop %v3290
    %v3313 = vrcp.pop %v3293
    %v3314 = vrcp.pop %v3296
    %v3315 = vrcp.pop %v3299
    %v3316 = vrcp.pop %v3302
    %v3317 = vrcp.pop %v3305
    %v3318 = vrcp.pop %v3308
    %v3319 = vrcp.pop %v3311
    %v3320 = vmul.f32 %v3273, %v3312
    %v3321 = vmul.f32 %v3275, %v3313
    %v3322 = vmul.f32 %v3277, %v3314
    %v3323 = vmul.f32 %v3279, %v3315
    %v3324 = vmul.f32 %v3281, %v3316
    %v3325 = vmul.f32 %v3283, %v3317
    %v3326 = vmul.f32 %v3285, %v3318
    %v3327 = vmul.f32 %v3287, %v3319
    %v3328 = vcombine.low %v2954, %v3072
    %v3329 = vcombine.low %v3022, %v3073
    %v3330 = vcombine.low %v3050, %v2955
    %v3331 = vcombine.low %v3074, %v3023
    %v3332 = vcombine.low %v3075, %v3058
    %v3333 = vcombine.low %v2956, %v3076
    %v3334 = vcombine.low %v3024, %v3077
    %v3335 = vcombine.low %v3057, %v2957
    %v3336 = vcombine.low %v3078, %v3025
    %v3337 = vcombine.low %v3079, %v3059
    %v3349 = vsel %vm3239, %v3320, 0
    %v3352 = vsel %vm3239, %v3321, 0
    %v3355 = vsel %vm3239, %v3322, 0
    %v3358 = vsel %vm3239, %v3323, 0
    %v3361 = vsel %vm3239, %v3324, 0
    %v3364 = vsel %vm3239, %v3325, 0
    %v3367 = vsel %vm3239, %v3326, 0
    %v3370 = vsel %vm3239, %v3327, 0
    %3372 = vmatprep.subr.mxu0 0.0
    %3373 = vmatpush1.msra.mxu0 %v3328
    %3374 = vmatprep.subr.mxu0 0.0
    %3375 = vmatpush1.msra.mxu0 %v3329
    %3376 = vmatprep.subr.mxu0 0.0
    %3377 = vmatpush1.msra.mxu0 %v3330
    %3378 = vmatprep.subr.mxu0 0.0
    %3379 = vmatpush1.msra.mxu0 %v3331
    %3380 = vmatprep.subr.mxu0 0.0
    %3381 = vmatpush1.msra.mxu0 %v3332
    %3382 = vmatprep.subr.mxu0 0.0
    %3383 = vmatpush1.msra.mxu0 %v3333
    %3384 = vmatprep.subr.mxu0 0.0
    %3385 = vmatpush1.msra.mxu0 %v3334
    %3386 = vmatprep.subr.mxu0 0.0
    %3387 = vmatpush1.msra.mxu0 %v3335
    %3388 = vmatprep.subr.mxu0 0.0
    %3389 = vmatpush1.msra.mxu0 %v3336
    %3390 = vmatprep.subr.mxu0 0.0
    %3391 = vmatpush1.msra.mxu0 %v3337
    %3392 = vmatprep.subr.mxu0 0.0
    %3393 = vmatpush1.msra.mxu0 0.0
    %3394 = vmatprep.subr.mxu0 0.0
    %3395 = vmatpush1.msra.mxu0 0.0
    %3396 = vmatprep.subr.mxu0 0.0
    %3397 = vmatpush1.msra.mxu0 0.0
    %3398 = vmatprep.subr.mxu0 0.0
    %3399 = vmatpush1.msra.mxu0 0.0
    %3400 = vmatprep.subr.mxu0 0.0
    %3401 = vmatpush1.msra.mxu0 0.0
    %3402 = vmatprep.subr.mxu0 0.0
    %3403 = vmatpush1.msra.mxu0 0.0
    %3404 = vmatprep.subr.mxu0 0.0
    %3405 = vmatpush1.msra.mxu0 0.0
    %3406 = vmatprep.subr.mxu0 0.0
    %3407 = vmatpush1.msra.mxu0 0.0
    %3408 = vmatprep.subr.mxu0 0.0
    %3409 = vmatpush1.msra.mxu0 0.0
    %3410 = vmatprep.subr.mxu0 0.0
    %3411 = vmatpush1.msra.mxu0 0.0
    %3412 = vmatprep.subr.mxu0 0.0
    %3413 = vmatpush1.msra.mxu0 0.0
    %3414 = vmatprep.subr.mxu0 0.0
    %3415 = vmatpush1.msra.mxu0 0.0
    %3416 = vmatprep.subr.mxu0 0.0
    %3417 = vmatpush1.msra.mxu0 0.0
    %3418 = vmatprep.subr.mxu0 0.0
    %3419 = vmatpush1.msra.mxu0 0.0
    %3420 = vmatprep.subr.mxu0 0.0
    %3421 = vmatpush1.msra.mxu0 0.0
    %3422 = vmatprep.subr.mxu0 0.0
    %3423 = vmatpush1.msra.mxu0 0.0
    %3424 = vmatprep.subr.mxu0 0.0
    %3425 = vmatpush1.msra.mxu0 0.0
    %3426 = vmatprep.subr.mxu0 0.0
    %3427 = vmatpush1.msra.mxu0 0.0
    %3428 = vmatprep.subr.mxu0 0.0
    %3429 = vmatpush1.msra.mxu0 0.0
    %3430 = vmatprep.subr.mxu0 0.0
    %3431 = vmatpush1.msra.mxu0 0.0
    %3432 = vmatprep.subr.mxu0 0.0
    %3433 = vmatpush1.msra.mxu0 0.0
    %3434 = vmatprep.subr.mxu0 0.0
    %3435 = vmatpush1.msra.mxu0 0.0
    %3436 = vmatprep.mubr.f32.mxu0 0.0
    %3437 = vmatmul.mubr.f32.gmra.mrb[0].mxu0 %v3349
    %v3438 = vpop.f32.mrb[0].mxu0
    %v3439 = vadd.f32 0.0, %v3438
    %v3440 = vpop.f32.mrb[0].mxu0
    %3441 = vmatprep.mubr.f32.mxu0 0.0
    %3442 = vmatmul.mubr.f32.gmra.mrb[0].mxu0 %v3352
    %v3443 = vpop.f32.mrb[0].mxu0
    %v3444 = vadd.f32 0.0, %v3443
    %v3445 = vpop.f32.mrb[0].mxu0
    %3446 = vmatprep.mubr.f32.mxu0 0.0
    %3447 = vmatmul.mubr.f32.gmra.mrb[0].mxu0 %v3355
    %v3448 = vpop.f32.mrb[0].mxu0
    %v3449 = vadd.f32 0.0, %v3448
    %v3450 = vpop.f32.mrb[0].mxu0
    %3451 = vmatprep.mubr.f32.mxu0 0.0
    %3452 = vmatmul.mubr.f32.gmra.mrb[0].mxu0 %v3358
    %v3453 = vpop.f32.mrb[0].mxu0
    %v3454 = vadd.f32 0.0, %v3453
    %v3455 = vpop.f32.mrb[0].mxu0
    %3456 = vmatprep.mubr.f32.mxu0 0.0
    %3457 = vmatmul.mubr.f32.gmra.mrb[0].mxu0 %v3361
    %v3458 = vpop.f32.mrb[0].mxu0
    %v3459 = vadd.f32 0.0, %v3458
    %v3460 = vpop.f32.mrb[0].mxu0
    %3461 = vmatprep.mubr.f32.mxu0 0.0
    %3462 = vmatmul.mubr.f32.gmra.mrb[0].mxu0 %v3364
    %v3463 = vpop.f32.mrb[0].mxu0
    %v3464 = vadd.f32 0.0, %v3463
    %v3465 = vpop.f32.mrb[0].mxu0
    %3466 = vmatprep.mubr.f32.mxu0 0.0
    %3467 = vmatmul.mubr.f32.gmra.mrb[0].mxu0 %v3367
    %v3468 = vpop.f32.mrb[0].mxu0
    %v3469 = vadd.f32 0.0, %v3468
    %v3470 = vpop.f32.mrb[0].mxu0
    %3471 = vmatprep.mubr.f32.mxu0 0.0
    %3472 = vmatmul.mubr.f32.gmra.mrb[0].mxu0 %v3370
    %v3473 = vpop.f32.mrb[0].mxu0
    %v3474 = vadd.f32 0.0, %v3473
    %v3475 = vpop.f32.mrb[0].mxu0
    %3476 = vdwg.mxu0
    %v3477 = vcombine.low %v3439, %v3459
    %v3478 = vcombine.high %v3439, %v3459
    %v3480 = vunpack.c.l.s4 1983009808
    %v3481 = vunpack.c.0.s8 %v3480
    %v3482 = vlaneseq
    %v3483 = vshrl.u32 %v3482, 7
    %v3484 = vsub.s32 %v3481, %v3483
    %v3485 = vrot.slane %v3477, %v3484
    %v3487 = vunpack.c.l.s4 1983009808
    %v3488 = vunpack.c.0.s8 %v3487
    %v3489 = vlaneseq
    %v3490 = vshrl.u32 %v3489, 7
    %v3491 = vsub.s32 %v3488, %v3490
    %v3492 = vrot.slane %v3478, %v3491
    %v3493 = vcombine.low %v3449, %v3469
    %v3494 = vcombine.high %v3449, %v3469
    %v3496 = vunpack.c.l.s4 1983009808
    %v3497 = vunpack.c.0.s8 %v3496
    %v3498 = vlaneseq
    %v3499 = vshrl.u32 %v3498, 7
    %v3500 = vsub.s32 %v3497, %v3499
    %v3501 = vrot.slane %v3493, %v3500
    %v3503 = vunpack.c.l.s4 1983009808
    %v3504 = vunpack.c.0.s8 %v3503
    %v3505 = vlaneseq
    %v3506 = vshrl.u32 %v3505, 7
    %v3507 = vsub.s32 %v3504, %v3506
    %v3508 = vrot.slane %v3494, %v3507
    %v3509 = vcombine.low %v3485, %v3501
    %v3510 = vcombine.high %v3485, %v3501
    %v3512 = vunpack.c.l.s4 1934713408
    %v3513 = vunpack.c.0.s8 %v3512
    %v3514 = vlaneseq
    %v3515 = vshrl.u32 %v3514, 7
    %v3516 = vsub.s32 %v3513, %v3515
    %v3517 = vrot.slane %v3509, %v3516
    %v3519 = vunpack.c.l.s4 1934713408
    %v3520 = vunpack.c.0.s8 %v3519
    %v3521 = vlaneseq
    %v3522 = vshrl.u32 %v3521, 7
    %v3523 = vsub.s32 %v3520, %v3522
    %v3524 = vrot.slane %v3510, %v3523
    %v3525 = vcombine.low %v3492, %v3508
    %v3526 = vcombine.high %v3492, %v3508
    %v3528 = vunpack.c.l.s4 1934713408
    %v3529 = vunpack.c.0.s8 %v3528
    %v3530 = vlaneseq
    %v3531 = vshrl.u32 %v3530, 7
    %v3532 = vsub.s32 %v3529, %v3531
    %v3533 = vrot.slane %v3525, %v3532
    %v3535 = vunpack.c.l.s4 1934713408
    %v3536 = vunpack.c.0.s8 %v3535
    %v3537 = vlaneseq
    %v3538 = vshrl.u32 %v3537, 7
    %v3539 = vsub.s32 %v3536, %v3538
    %v3540 = vrot.slane %v3526, %v3539
    %v3541 = vcombine.high %v3517, 0.0
    %v3542 = vcombine.high %v3524, 0.0
    %v3543 = vcombine.high %v3533, 0.0
    %v3544 = vcombine.high %v3540, 0.0
    %v3545 = vcombine.low %v3444, %v3464
    %v3546 = vcombine.high %v3444, %v3464
    %v3548 = vunpack.c.l.s4 1983009808
    %v3549 = vunpack.c.0.s8 %v3548
    %v3550 = vlaneseq
    %v3551 = vshrl.u32 %v3550, 7
    %v3552 = vsub.s32 %v3549, %v3551
    %v3553 = vrot.slane %v3545, %v3552
    %v3555 = vunpack.c.l.s4 1983009808
    %v3556 = vunpack.c.0.s8 %v3555
    %v3557 = vlaneseq
    %v3558 = vshrl.u32 %v3557, 7
    %v3559 = vsub.s32 %v3556, %v3558
    %v3560 = vrot.slane %v3546, %v3559
    %v3561 = vcombine.low %v3454, %v3474
    %v3562 = vcombine.high %v3454, %v3474
    %v3564 = vunpack.c.l.s4 1983009808
    %v3565 = vunpack.c.0.s8 %v3564
    %v3566 = vlaneseq
    %v3567 = vshrl.u32 %v3566, 7
    %v3568 = vsub.s32 %v3565, %v3567
    %v3569 = vrot.slane %v3561, %v3568
    %v3571 = vunpack.c.l.s4 1983009808
    %v3572 = vunpack.c.0.s8 %v3571
    %v3573 = vlaneseq
    %v3574 = vshrl.u32 %v3573, 7
    %v3575 = vsub.s32 %v3572, %v3574
    %v3576 = vrot.slane %v3562, %v3575
    %v3577 = vcombine.low %v3553, %v3569
    %v3578 = vcombine.high %v3553, %v3569
    %v3580 = vunpack.c.l.s4 1934713408
    %v3581 = vunpack.c.0.s8 %v3580
    %v3582 = vlaneseq
    %v3583 = vshrl.u32 %v3582, 7
    %v3584 = vsub.s32 %v3581, %v3583
    %v3585 = vrot.slane %v3577, %v3584
    %v3587 = vunpack.c.l.s4 1934713408
    %v3588 = vunpack.c.0.s8 %v3587
    %v3589 = vlaneseq
    %v3590 = vshrl.u32 %v3589, 7
    %v3591 = vsub.s32 %v3588, %v3590
    %v3592 = vrot.slane %v3578, %v3591
    %v3593 = vcombine.low %v3560, %v3576
    %v3594 = vcombine.high %v3560, %v3576
    %v3596 = vunpack.c.l.s4 1934713408
    %v3597 = vunpack.c.0.s8 %v3596
    %v3598 = vlaneseq
    %v3599 = vshrl.u32 %v3598, 7
    %v3600 = vsub.s32 %v3597, %v3599
    %v3601 = vrot.slane %v3593, %v3600
    %v3603 = vunpack.c.l.s4 1934713408
    %v3604 = vunpack.c.0.s8 %v3603
    %v3605 = vlaneseq
    %v3606 = vshrl.u32 %v3605, 7
    %v3607 = vsub.s32 %v3604, %v3606
    %v3608 = vrot.slane %v3594, %v3607
    %v3609 = vcombine.high %v3585, 0.0
    %v3610 = vcombine.high %v3592, 0.0
    %v3611 = vcombine.high %v3601, 0.0
    %v3612 = vcombine.high %v3608, 0.0
    %v3613 = vcombine.low %v3517, %v3524
    %v3615 = vunpack.c.l.s4 1983009808
    %v3616 = vunpack.c.0.s8 %v3615
    %v3617 = vlaneseq
    %v3618 = vshrl.u32 %v3617, 7
    %v3619 = vsub.s32 %v3616, %v3618
    %v3620 = vrot.slane %v3613, %v3619
    %v3621 = vcombine.low %v3541, %v3542
    %v3623 = vunpack.c.l.s4 1983009808
    %v3624 = vunpack.c.0.s8 %v3623
    %v3625 = vlaneseq
    %v3626 = vshrl.u32 %v3625, 7
    %v3627 = vsub.s32 %v3624, %v3626
    %v3628 = vrot.slane %v3621, %v3627
    %v3629 = vcombine.low %v3533, %v3540
    %v3631 = vunpack.c.l.s4 1983009808
    %v3632 = vunpack.c.0.s8 %v3631
    %v3633 = vlaneseq
    %v3634 = vshrl.u32 %v3633, 7
    %v3635 = vsub.s32 %v3632, %v3634
    %v3636 = vrot.slane %v3629, %v3635
    %v3637 = vcombine.low %v3543, %v3544
    %v3639 = vunpack.c.l.s4 1983009808
    %v3640 = vunpack.c.0.s8 %v3639
    %v3641 = vlaneseq
    %v3642 = vshrl.u32 %v3641, 7
    %v3643 = vsub.s32 %v3640, %v3642
    %v3644 = vrot.slane %v3637, %v3643
    %v3645 = vcombine.low %v3620, %v3628
    %v3646 = vcombine.high %v3620, %v3628
    %v3648 = vunpack.c.l.s4 1934713408
    %v3649 = vunpack.c.0.s8 %v3648
    %v3650 = vlaneseq
    %v3651 = vshrl.u32 %v3650, 7
    %v3652 = vsub.s32 %v3649, %v3651
    %v3653 = vrot.slane %v3645, %v3652
    %v3655 = vunpack.c.l.s4 1934713408
    %v3656 = vunpack.c.0.s8 %v3655
    %v3657 = vlaneseq
    %v3658 = vshrl.u32 %v3657, 7
    %v3659 = vsub.s32 %v3656, %v3658
    %v3660 = vrot.slane %v3646, %v3659
    %v3661 = vcombine.low %v3636, %v3644
    %v3662 = vcombine.high %v3636, %v3644
    %v3664 = vunpack.c.l.s4 1934713408
    %v3665 = vunpack.c.0.s8 %v3664
    %v3666 = vlaneseq
    %v3667 = vshrl.u32 %v3666, 7
    %v3668 = vsub.s32 %v3665, %v3667
    %v3669 = vrot.slane %v3661, %v3668
    %v3671 = vunpack.c.l.s4 1934713408
    %v3672 = vunpack.c.0.s8 %v3671
    %v3673 = vlaneseq
    %v3674 = vshrl.u32 %v3673, 7
    %v3675 = vsub.s32 %v3672, %v3674
    %v3676 = vrot.slane %v3662, %v3675
    %v3677 = vcombine.low %v3653, %v3669
    %v3678 = vcombine.high %v3653, %v3669
    %v3679 = vcombine.low %v3660, %v3676
    %v3680 = vcombine.high %v3660, %v3676
    %v3681 = vcombine.low %v3585, %v3592
    %v3683 = vunpack.c.l.s4 1983009808
    %v3684 = vunpack.c.0.s8 %v3683
    %v3685 = vlaneseq
    %v3686 = vshrl.u32 %v3685, 7
    %v3687 = vsub.s32 %v3684, %v3686
    %v3688 = vrot.slane %v3681, %v3687
    %v3689 = vcombine.low %v3609, %v3610
    %v3691 = vunpack.c.l.s4 1983009808
    %v3692 = vunpack.c.0.s8 %v3691
    %v3693 = vlaneseq
    %v3694 = vshrl.u32 %v3693, 7
    %v3695 = vsub.s32 %v3692, %v3694
    %v3696 = vrot.slane %v3689, %v3695
    %v3697 = vcombine.low %v3601, %v3608
    %v3699 = vunpack.c.l.s4 1983009808
    %v3700 = vunpack.c.0.s8 %v3699
    %v3701 = vlaneseq
    %v3702 = vshrl.u32 %v3701, 7
    %v3703 = vsub.s32 %v3700, %v3702
    %v3704 = vrot.slane %v3697, %v3703
    %v3705 = vcombine.low %v3611, %v3612
    %v3707 = vunpack.c.l.s4 1983009808
    %v3708 = vunpack.c.0.s8 %v3707
    %v3709 = vlaneseq
    %v3710 = vshrl.u32 %v3709, 7
    %v3711 = vsub.s32 %v3708, %v3710
    %v3712 = vrot.slane %v3705, %v3711
    %v3713 = vcombine.low %v3688, %v3696
    %v3714 = vcombine.high %v3688, %v3696
    %v3716 = vunpack.c.l.s4 1934713408
    %v3717 = vunpack.c.0.s8 %v3716
    %v3718 = vlaneseq
    %v3719 = vshrl.u32 %v3718, 7
    %v3720 = vsub.s32 %v3717, %v3719
    %v3721 = vrot.slane %v3713, %v3720
    %v3723 = vunpack.c.l.s4 1934713408
    %v3724 = vunpack.c.0.s8 %v3723
    %v3725 = vlaneseq
    %v3726 = vshrl.u32 %v3725, 7
    %v3727 = vsub.s32 %v3724, %v3726
    %v3728 = vrot.slane %v3714, %v3727
    %v3729 = vcombine.low %v3704, %v3712
    %v3730 = vcombine.high %v3704, %v3712
    %v3732 = vunpack.c.l.s4 1934713408
    %v3733 = vunpack.c.0.s8 %v3732
    %v3734 = vlaneseq
    %v3735 = vshrl.u32 %v3734, 7
    %v3736 = vsub.s32 %v3733, %v3735
    %v3737 = vrot.slane %v3729, %v3736
    %v3739 = vunpack.c.l.s4 1934713408
    %v3740 = vunpack.c.0.s8 %v3739
    %v3741 = vlaneseq
    %v3742 = vshrl.u32 %v3741, 7
    %v3743 = vsub.s32 %v3740, %v3742
    %v3744 = vrot.slane %v3730, %v3743
    %v3745 = vcombine.low %v3721, %v3737
    %v3746 = vcombine.high %v3721, %v3737
    %v3747 = vcombine.low %v3728, %v3744
    %v3748 = vcombine.high %v3728, %v3744
    %3751 = vrot.lane.b32.xlu0 %v3678, 8
    %v3752 = vpop.permute.xlu0 %3751
    %3753 = vrot.lane.b32.xlu0 %v3746, 8
    %v3754 = vpop.permute.xlu0 %3753
    %3759 = vrot.lane.b32.xlu0 %v3679, 16
    %v3760 = vpop.permute.xlu0 %3759
    %3761 = vrot.lane.b32.xlu0 %v3747, 16
    %v3762 = vpop.permute.xlu0 %3761
    %3767 = vrot.lane.b32.xlu0 %v3680, 24
    %v3768 = vpop.permute.xlu0 %3767
    %3769 = vrot.lane.b32.xlu0 %v3748, 24
    %v3770 = vpop.permute.xlu0 %3769
    %v3773 = vsel %vm1066, %v3677, %v3752
    %v3774 = vsel %vm1066, %v3745, %v3754
    %v3775 = vsel %vm1736, %v3773, %v3760
    %v3776 = vsel %vm1736, %v3774, %v3762
    %v3777 = vsel %vm1739, %v3775, %v3768
    %v3778 = vsel %vm1739, %v3776, %v3770
    %v3779 = vpack.c.bf16 %v3778, %v3777
    %v3781 = vlaneseq
    %v3782 = vshrl.u32 %v3781, 7
    %v3783 = vsub.s32 0, %v3782
    %v3784 = vrot.slane %v2001, %v3783
    %v3790 = vunpack.c.l.b16 %v1997
    %v3791 = vunpack.c.l.b16 %v1998
    %v3792 = vunpack.c.l.b16 %v1999
    %v3793 = vunpack.c.l.b16 %v2000
    %v3794 = vpack.c.b16 %v3791, %v3790
    %v3795 = vpack.c.b16 %v3793, %v3792
    %v3799 = vsel %vm132, %v3779, 0
    %3801 = vmatprep.subr.bf16.mxu0 0
    %3802 = vmatpush1.bf16.msra.mxu0 %v3794
    %3803 = vmatprep.subr.bf16.mxu0 0
    %3804 = vmatpush1.bf16.msra.mxu0 %v3795
    %3805 = vmatprep.subr.bf16.mxu0 0
    %3806 = vmatpush1.bf16.msra.mxu0 0
    %3807 = vmatprep.subr.bf16.mxu0 0
    %3808 = vmatpush1.bf16.msra.mxu0 0
    %3809 = vmatprep.subr.bf16.mxu0 0
    %3810 = vmatpush1.bf16.msra.mxu0 0
    %3811 = vmatprep.subr.bf16.mxu0 0
    %3812 = vmatpush1.bf16.msra.mxu0 0
    %3813 = vmatprep.subr.bf16.mxu0 0
    %3814 = vmatpush1.bf16.msra.mxu0 0
    %3815 = vmatprep.subr.bf16.mxu0 0
    %3816 = vmatpush1.bf16.msra.mxu0 0
    %3817 = vmatprep.subr.bf16.mxu0 0
    %3818 = vmatpush1.bf16.msra.mxu0 0
    %3819 = vmatprep.subr.bf16.mxu0 0
    %3820 = vmatpush1.bf16.msra.mxu0 0
    %3821 = vmatprep.subr.bf16.mxu0 0
    %3822 = vmatpush1.bf16.msra.mxu0 0
    %3823 = vmatprep.subr.bf16.mxu0 0
    %3824 = vmatpush1.bf16.msra.mxu0 0
    %3825 = vmatprep.subr.bf16.mxu0 0
    %3826 = vmatpush1.bf16.msra.mxu0 0
    %3827 = vmatprep.subr.bf16.mxu0 0
    %3828 = vmatpush1.bf16.msra.mxu0 0
    %3829 = vmatprep.subr.bf16.mxu0 0
    %3830 = vmatpush1.bf16.msra.mxu0 0
    %3831 = vmatprep.subr.bf16.mxu0 0
    %3832 = vmatpush1.bf16.msra.mxu0 0
    %3833 = vmatprep.mubr.bf16.mxu0 0
    %3834 = vmatmul.mubr.bf16.gmra.mrb[0].mxu0 %v3799
    %v3835 = vpop.f32.mrb[0].mxu0
    %v3836 = vadd.f32 %v3784, %v3835
    %v3837 = vpop.f32.mrb[0].mxu0
    %v3838 = vpop.f32.mrb[0].mxu0
    %v3839 = vadd.f32 %v3784, %v3838
    %v3840 = vpop.f32.mrb[0].mxu0
    %3841 = vdwg.mxu0
    %v3842 = vadd.f32 %v1850, %v3836
    %v3843 = vadd.f32 %v1851, %v3839
    %v3844 = vld [vmem:[%s16] sm:$0x1]
    %v3845 = vld [vmem:[%s17] sm:$0x1]
    %v3846 = vsel %vm132, %v3842, 0.0
    %3847 = vadd.xlane.f32.xlu0 %v3846
    %v3848 = vpop.xlane.xlu0 %3847
    %v3849 = vsel %vm132, %v3843, 0.0
    %3850 = vadd.xlane.f32.xlu0 %v3849
    %v3851 = vpop.xlane.xlu0 %3850
    %v3852 = vmul.f32 %v3848, %v1815
    %v3853 = vmul.f32 %v3851, %v1815
    %v3854 = vsub.f32 %v3842, %v3852
    %v3855 = vsub.f32 %v3843, %v3853
    %v3856 = vmul.f32 %v3854, %v3854
    %v3857 = vmul.f32 %v3855, %v3855
    %v3858 = vsel %vm132, %v3856, 0.0
    %3859 = vadd.xlane.f32.xlu0 %v3858
    %v3860 = vpop.xlane.xlu0 %3859
    %v3861 = vsel %vm132, %v3857, 0.0
    %3862 = vadd.xlane.f32.xlu0 %v3861
    %v3863 = vpop.xlane.xlu0 %3862
    %v3864 = vmul.f32 %v3860, %v1815
    %v3865 = vmul.f32 %v3863, %v1815
    %v3866 = vadd.f32 %v3864, 1e-05
    %v3867 = vadd.f32 %v3865, 1e-05
    %v3868 = vrsqrt.pop %v3866
    %v3869 = vrsqrt.pop %v3867
    %v3870 = vmul.f32 %v3854, %v3868
    %v3871 = vmul.f32 %v3855, %v3869
    %v3873 = vlaneseq
    %v3874 = vshrl.u32 %v3873, 7
    %v3875 = vsub.s32 0, %v3874
    %v3876 = vrot.slane %v3844, %v3875
    %v3878 = vmul.f32 %v3870, %v3876
    %v3879 = vmul.f32 %v3871, %v3876
    %v3881 = vlaneseq
    %v3882 = vshrl.u32 %v3881, 7
    %v3883 = vsub.s32 0, %v3882
    %v3884 = vrot.slane %v3845, %v3883
    %v3886 = vadd.f32 %v3878, %v3884
    %v3887 = vadd.f32 %v3879, %v3884
    %v3888 = vpack.c.bf16 %v3887, %v3886
    %v3889 = vld [vmem:[%s18] sm:$0xf]
    %v3890 = vld [vmem:[%s18 + $0x4] sm:$0xf]
    %v3891 = vld [vmem:[%s18 + $0x8] sm:$0xf]
    %v3892 = vld [vmem:[%s18 + $0xc] sm:$0xf]
    %v3893 = vld [vmem:[%s19] sm:$0x1]
    %v3895 = vlaneseq
    %v3896 = vshrl.u32 %v3895, 7
    %v3897 = vsub.s32 0, %v3896
    %v3898 = vrot.slane %v3893, %v3897
    %v3904 = vunpack.c.l.b16 %v3889
    %v3905 = vunpack.c.l.b16 %v3890
    %v3906 = vunpack.c.l.b16 %v3891
    %v3907 = vunpack.c.l.b16 %v3892
    %v3908 = vpack.c.b16 %v3905, %v3904
    %v3909 = vpack.c.b16 %v3907, %v3906
    %v3913 = vsel %vm132, %v3888, 0
    %3915 = vmatprep.subr.bf16.mxu0 0
    %3916 = vmatpush1.bf16.msra.mxu0 %v3908
    %3917 = vmatprep.subr.bf16.mxu0 0
    %3918 = vmatpush1.bf16.msra.mxu0 %v3909
    %3919 = vmatprep.subr.bf16.mxu0 0
    %3920 = vmatpush1.bf16.msra.mxu0 0
    %3921 = vmatprep.subr.bf16.mxu0 0
    %3922 = vmatpush1.bf16.msra.mxu0 0
    %3923 = vmatprep.subr.bf16.mxu0 0
    %3924 = vmatpush1.bf16.msra.mxu0 0
    %3925 = vmatprep.subr.bf16.mxu0 0
    %3926 = vmatpush1.bf16.msra.mxu0 0
    %3927 = vmatprep.subr.bf16.mxu0 0
    %3928 = vmatpush1.bf16.msra.mxu0 0
    %3929 = vmatprep.subr.bf16.mxu0 0
    %3930 = vmatpush1.bf16.msra.mxu0 0
    %3931 = vmatprep.subr.bf16.mxu0 0
    %3932 = vmatpush1.bf16.msra.mxu0 0
    %3933 = vmatprep.subr.bf16.mxu0 0
    %3934 = vmatpush1.bf16.msra.mxu0 0
    %3935 = vmatprep.subr.bf16.mxu0 0
    %3936 = vmatpush1.bf16.msra.mxu0 0
    %3937 = vmatprep.subr.bf16.mxu0 0
    %3938 = vmatpush1.bf16.msra.mxu0 0
    %3939 = vmatprep.subr.bf16.mxu0 0
    %3940 = vmatpush1.bf16.msra.mxu0 0
    %3941 = vmatprep.subr.bf16.mxu0 0
    %3942 = vmatpush1.bf16.msra.mxu0 0
    %3943 = vmatprep.subr.bf16.mxu0 0
    %3944 = vmatpush1.bf16.msra.mxu0 0
    %3945 = vmatprep.subr.bf16.mxu0 0
    %3946 = vmatpush1.bf16.msra.mxu0 0
    %3947 = vmatprep.mubr.bf16.mxu0 0
    %3948 = vmatmul.mubr.bf16.gmra.mrb[0].mxu0 %v3913
    %v3949 = vpop.f32.mrb[0].mxu0
    %v3950 = vadd.f32 %v3898, %v3949
    %v3951 = vpop.f32.mrb[0].mxu0
    %v3952 = vpop.f32.mrb[0].mxu0
    %v3953 = vadd.f32 %v3898, %v3952
    %v3954 = vpop.f32.mrb[0].mxu0
    %3955 = vdwg.mxu0
    %v3956 = vmax.f32 %v3950, 0.0
    %v3957 = vmax.f32 %v3953, 0.0
    %v3958 = vpack.c.bf16 %v3957, %v3956
    %v3959 = vld [vmem:[%s20] sm:$0xf]
    %v3960 = vld [vmem:[%s20 + $0x4] sm:$0xf]
    %v3961 = vld [vmem:[%s20 + $0x8] sm:$0xf]
    %v3962 = vld [vmem:[%s20 + $0xc] sm:$0xf]
    %v3963 = vld [vmem:[%s20 + $0x10] sm:$0xf]
    %v3964 = vld [vmem:[%s20 + $0x14] sm:$0xf]
    %v3965 = vld [vmem:[%s20 + $0x18] sm:$0xf]
    %v3966 = vld [vmem:[%s20 + $0x1c] sm:$0xf]
    %v3967 = vld [vmem:[%s21] sm:$0x1]
    %v3969 = vlaneseq
    %v3970 = vshrl.u32 %v3969, 7
    %v3971 = vsub.s32 0, %v3970
    %v3972 = vrot.slane %v3967, %v3971
    %v3982 = vunpack.c.l.b16 %v3959
    %v3983 = vunpack.c.l.b16 %v3960
    %v3984 = vunpack.c.l.b16 %v3961
    %v3985 = vunpack.c.l.b16 %v3962
    %v3986 = vunpack.c.l.b16 %v3963
    %v3987 = vunpack.c.l.b16 %v3964
    %v3988 = vunpack.c.l.b16 %v3965
    %v3989 = vunpack.c.l.b16 %v3966
    %v3990 = vpack.c.b16 %v3983, %v3982
    %v3991 = vpack.c.b16 %v3985, %v3984
    %v3992 = vpack.c.b16 %v3987, %v3986
    %v3993 = vpack.c.b16 %v3989, %v3988
    %v3999 = vsel %vm1220, %v3958, 0
    %4001 = vmatprep.subr.bf16.mxu0 0
    %4002 = vmatpush1.bf16.msra.mxu0 %v3990
    %4003 = vmatprep.subr.bf16.mxu0 0
    %4004 = vmatpush1.bf16.msra.mxu0 %v3991
    %4005 = vmatprep.subr.bf16.mxu0 0
    %4006 = vmatpush1.bf16.msra.mxu0 %v3992
    %4007 = vmatprep.subr.bf16.mxu0 0
    %4008 = vmatpush1.bf16.msra.mxu0 %v3993
    %4009 = vmatprep.subr.bf16.mxu0 0
    %4010 = vmatpush1.bf16.msra.mxu0 0
    %4011 = vmatprep.subr.bf16.mxu0 0
    %4012 = vmatpush1.bf16.msra.mxu0 0
    %4013 = vmatprep.subr.bf16.mxu0 0
    %4014 = vmatpush1.bf16.msra.mxu0 0
    %4015 = vmatprep.subr.bf16.mxu0 0
    %4016 = vmatpush1.bf16.msra.mxu0 0
    %4017 = vmatprep.subr.bf16.mxu0 0
    %4018 = vmatpush1.bf16.msra.mxu0 0
    %4019 = vmatprep.subr.bf16.mxu0 0
    %4020 = vmatpush1.bf16.msra.mxu0 0
    %4021 = vmatprep.subr.bf16.mxu0 0
    %4022 = vmatpush1.bf16.msra.mxu0 0
    %4023 = vmatprep.subr.bf16.mxu0 0
    %4024 = vmatpush1.bf16.msra.mxu0 0
    %4025 = vmatprep.subr.bf16.mxu0 0
    %4026 = vmatpush1.bf16.msra.mxu0 0
    %4027 = vmatprep.subr.bf16.mxu0 0
    %4028 = vmatpush1.bf16.msra.mxu0 0
    %4029 = vmatprep.subr.bf16.mxu0 0
    %4030 = vmatpush1.bf16.msra.mxu0 0
    %4031 = vmatprep.subr.bf16.mxu0 0
    %4032 = vmatpush1.bf16.msra.mxu0 0
    %4033 = vmatprep.mubr.bf16.mxu0 0
    %4034 = vmatmul.mubr.bf16.gmra.mrb[0].mxu0 %v3999
    %v4035 = vpop.f32.mrb[0].mxu0
    %v4036 = vadd.f32 %v3972, %v4035
    %v4037 = vpop.f32.mrb[0].mxu0
    %v4038 = vpop.f32.mrb[0].mxu0
    %v4039 = vadd.f32 %v3972, %v4038
    %v4040 = vpop.f32.mrb[0].mxu0
    %4041 = vdwg.mxu0
    %v4042 = vadd.f32 %v3886, %v4036
    %v4043 = vadd.f32 %v3887, %v4039
    %v4044 = vld [vmem:[%s22] sm:$0x1]
    %v4045 = vld [vmem:[%s23] sm:$0x1]
    %v4046 = vsel %vm132, %v4042, 0.0
    %4047 = vadd.xlane.f32.xlu0 %v4046
    %v4048 = vpop.xlane.xlu0 %4047
    %v4049 = vsel %vm132, %v4043, 0.0
    %4050 = vadd.xlane.f32.xlu0 %v4049
    %v4051 = vpop.xlane.xlu0 %4050
    %v4052 = vmul.f32 %v4048, %v1815
    %v4053 = vmul.f32 %v4051, %v1815
    %v4054 = vsub.f32 %v4042, %v4052
    %v4055 = vsub.f32 %v4043, %v4053
    %v4056 = vmul.f32 %v4054, %v4054
    %v4057 = vmul.f32 %v4055, %v4055
    %v4058 = vsel %vm132, %v4056, 0.0
    %4059 = vadd.xlane.f32.xlu0 %v4058
    %v4060 = vpop.xlane.xlu0 %4059
    %v4061 = vsel %vm132, %v4057, 0.0
    %4062 = vadd.xlane.f32.xlu0 %v4061
    %v4063 = vpop.xlane.xlu0 %4062
    %v4064 = vmul.f32 %v4060, %v1815
    %v4065 = vmul.f32 %v4063, %v1815
    %v4066 = vadd.f32 %v4064, 1e-05
    %v4067 = vadd.f32 %v4065, 1e-05
    %v4068 = vrsqrt.pop %v4066
    %v4069 = vrsqrt.pop %v4067
    %v4070 = vmul.f32 %v4054, %v4068
    %v4071 = vmul.f32 %v4055, %v4069
    %v4073 = vlaneseq
    %v4074 = vshrl.u32 %v4073, 7
    %v4075 = vsub.s32 0, %v4074
    %v4076 = vrot.slane %v4044, %v4075
    %v4078 = vmul.f32 %v4070, %v4076
    %v4079 = vmul.f32 %v4071, %v4076
    %v4081 = vlaneseq
    %v4082 = vshrl.u32 %v4081, 7
    %v4083 = vsub.s32 0, %v4082
    %v4084 = vrot.slane %v4045, %v4083
    %v4086 = vadd.f32 %v4078, %v4084
    %v4087 = vadd.f32 %v4079, %v4084
    %v4088 = vpack.c.bf16 %v4087, %v4086
    %s4089 = scalar_lea.vmem %s4, 16
    %v4090 = vld [vmem:[%s4089] sm:$0xf]
    %v4091 = vld [vmem:[%s4089 + $0x4] sm:$0xf]
    %v4092 = vld [vmem:[%s4089 + $0x8] sm:$0xf]
    %v4093 = vld [vmem:[%s4089 + $0xc] sm:$0xf]
    %s4094 = scalar_lea.vmem %s5, 1
    %v4095 = vld [vmem:[%s4094] sm:$0x1]
    %v4097 = vlaneseq
    %v4098 = vshrl.u32 %v4097, 7
    %v4099 = vsub.s32 0, %v4098
    %v4100 = vrot.slane %v4095, %v4099
    %v4106 = vunpack.c.l.b16 %v4090
    %v4107 = vunpack.c.l.b16 %v4091
    %v4108 = vunpack.c.l.b16 %v4092
    %v4109 = vunpack.c.l.b16 %v4093
    %v4110 = vpack.c.b16 %v4107, %v4106
    %v4111 = vpack.c.b16 %v4109, %v4108
    %v4115 = vsel %vm132, %v4088, 0
    %4117 = vmatprep.subr.bf16.mxu0 0
    %4118 = vmatpush1.bf16.msra.mxu0 %v4110
    %4119 = vmatprep.subr.bf16.mxu0 0
    %4120 = vmatpush1.bf16.msra.mxu0 %v4111
    %4121 = vmatprep.subr.bf16.mxu0 0
    %4122 = vmatpush1.bf16.msra.mxu0 0
    %4123 = vmatprep.subr.bf16.mxu0 0
    %4124 = vmatpush1.bf16.msra.mxu0 0
    %4125 = vmatprep.subr.bf16.mxu0 0
    %4126 = vmatpush1.bf16.msra.mxu0 0
    %4127 = vmatprep.subr.bf16.mxu0 0
    %4128 = vmatpush1.bf16.msra.mxu0 0
    %4129 = vmatprep.subr.bf16.mxu0 0
    %4130 = vmatpush1.bf16.msra.mxu0 0
    %4131 = vmatprep.subr.bf16.mxu0 0
    %4132 = vmatpush1.bf16.msra.mxu0 0
    %4133 = vmatprep.subr.bf16.mxu0 0
    %4134 = vmatpush1.bf16.msra.mxu0 0
    %4135 = vmatprep.subr.bf16.mxu0 0
    %4136 = vmatpush1.bf16.msra.mxu0 0
    %4137 = vmatprep.subr.bf16.mxu0 0
    %4138 = vmatpush1.bf16.msra.mxu0 0
    %4139 = vmatprep.subr.bf16.mxu0 0
    %4140 = vmatpush1.bf16.msra.mxu0 0
    %4141 = vmatprep.subr.bf16.mxu0 0
    %4142 = vmatpush1.bf16.msra.mxu0 0
    %4143 = vmatprep.subr.bf16.mxu0 0
    %4144 = vmatpush1.bf16.msra.mxu0 0
    %4145 = vmatprep.subr.bf16.mxu0 0
    %4146 = vmatpush1.bf16.msra.mxu0 0
    %4147 = vmatprep.subr.bf16.mxu0 0
    %4148 = vmatpush1.bf16.msra.mxu0 0
    %4149 = vmatprep.mubr.bf16.mxu0 0
    %4150 = vmatmul.mubr.bf16.gmra.mrb[0].mxu0 %v4115
    %v4151 = vpop.f32.mrb[0].mxu0
    %v4152 = vadd.f32 %v4100, %v4151
    %v4153 = vpop.f32.mrb[0].mxu0
    %v4154 = vpop.f32.mrb[0].mxu0
    %v4155 = vadd.f32 %v4100, %v4154
    %v4156 = vpop.f32.mrb[0].mxu0
    %4157 = vdwg.mxu0
    %s4158 = scalar_lea.vmem %s6, 16
    %v4159 = vld [vmem:[%s4158] sm:$0xf]
    %v4160 = vld [vmem:[%s4158 + $0x4] sm:$0xf]
    %v4161 = vld [vmem:[%s4158 + $0x8] sm:$0xf]
    %v4162 = vld [vmem:[%s4158 + $0xc] sm:$0xf]
    %s4163 = scalar_lea.vmem %s7, 1
    %v4164 = vld [vmem:[%s4163] sm:$0x1]
    %4167 = vrot.lane.b32.xlu0 %v4152, 120
    %v4168 = vpop.permute.xlu0 %4167
    %4169 = vrot.lane.b32.xlu0 %v4155, 120
    %v4170 = vpop.permute.xlu0 %4169
    %4173 = vrot.lane.b32.xlu0 %v4152, 112
    %v4174 = vpop.permute.xlu0 %4173
    %4175 = vrot.lane.b32.xlu0 %v4155, 112
    %v4176 = vpop.permute.xlu0 %4175
    %4179 = vrot.lane.b32.xlu0 %v4152, 104
    %v4180 = vpop.permute.xlu0 %4179
    %4181 = vrot.lane.b32.xlu0 %v4155, 104
    %v4182 = vpop.permute.xlu0 %4181
    %v4185 = vcombine.low %v4152, %v4174
    %v4186 = vcombine.high %v4152, %v4174
    %v4188 = vunpack.c.l.s4 1983009808
    %v4189 = vunpack.c.0.s8 %v4188
    %v4190 = vlaneseq
    %v4191 = vshrl.u32 %v4190, 7
    %v4192 = vsub.s32 %v4189, %v4191
    %v4193 = vrot.slane %v4185, %v4192
    %v4195 = vunpack.c.l.s4 1983009808
    %v4196 = vunpack.c.0.s8 %v4195
    %v4197 = vlaneseq
    %v4198 = vshrl.u32 %v4197, 7
    %v4199 = vsub.s32 %v4196, %v4198
    %v4200 = vrot.slane %v4186, %v4199
    %v4201 = vcombine.low %v4168, %v4180
    %v4202 = vcombine.high %v4168, %v4180
    %v4204 = vunpack.c.l.s4 1983009808
    %v4205 = vunpack.c.0.s8 %v4204
    %v4206 = vlaneseq
    %v4207 = vshrl.u32 %v4206, 7
    %v4208 = vsub.s32 %v4205, %v4207
    %v4209 = vrot.slane %v4201, %v4208
    %v4211 = vunpack.c.l.s4 1983009808
    %v4212 = vunpack.c.0.s8 %v4211
    %v4213 = vlaneseq
    %v4214 = vshrl.u32 %v4213, 7
    %v4215 = vsub.s32 %v4212, %v4214
    %v4216 = vrot.slane %v4202, %v4215
    %v4217 = vcombine.low %v4193, %v4209
    %v4218 = vcombine.high %v4193, %v4209
    %v4220 = vunpack.c.l.s4 1934713408
    %v4221 = vunpack.c.0.s8 %v4220
    %v4222 = vlaneseq
    %v4223 = vshrl.u32 %v4222, 7
    %v4224 = vsub.s32 %v4221, %v4223
    %v4225 = vrot.slane %v4217, %v4224
    %v4227 = vunpack.c.l.s4 1934713408
    %v4228 = vunpack.c.0.s8 %v4227
    %v4229 = vlaneseq
    %v4230 = vshrl.u32 %v4229, 7
    %v4231 = vsub.s32 %v4228, %v4230
    %v4232 = vrot.slane %v4218, %v4231
    %v4233 = vcombine.low %v4200, %v4216
    %v4234 = vcombine.high %v4200, %v4216
    %v4236 = vunpack.c.l.s4 1934713408
    %v4237 = vunpack.c.0.s8 %v4236
    %v4238 = vlaneseq
    %v4239 = vshrl.u32 %v4238, 7
    %v4240 = vsub.s32 %v4237, %v4239
    %v4241 = vrot.slane %v4233, %v4240
    %v4243 = vunpack.c.l.s4 1934713408
    %v4244 = vunpack.c.0.s8 %v4243
    %v4245 = vlaneseq
    %v4246 = vshrl.u32 %v4245, 7
    %v4247 = vsub.s32 %v4244, %v4246
    %v4248 = vrot.slane %v4234, %v4247
    %v4249 = vcombine.high %v4225, 0.0
    %v4250 = vcombine.high %v4232, 0.0
    %v4251 = vcombine.high %v4241, 0.0
    %v4252 = vcombine.high %v4248, 0.0
    %v4253 = vcombine.low %v4155, %v4176
    %v4254 = vcombine.high %v4155, %v4176
    %v4256 = vunpack.c.l.s4 1983009808
    %v4257 = vunpack.c.0.s8 %v4256
    %v4258 = vlaneseq
    %v4259 = vshrl.u32 %v4258, 7
    %v4260 = vsub.s32 %v4257, %v4259
    %v4261 = vrot.slane %v4253, %v4260
    %v4263 = vunpack.c.l.s4 1983009808
    %v4264 = vunpack.c.0.s8 %v4263
    %v4265 = vlaneseq
    %v4266 = vshrl.u32 %v4265, 7
    %v4267 = vsub.s32 %v4264, %v4266
    %v4268 = vrot.slane %v4254, %v4267
    %v4269 = vcombine.low %v4170, %v4182
    %v4270 = vcombine.high %v4170, %v4182
    %v4272 = vunpack.c.l.s4 1983009808
    %v4273 = vunpack.c.0.s8 %v4272
    %v4274 = vlaneseq
    %v4275 = vshrl.u32 %v4274, 7
    %v4276 = vsub.s32 %v4273, %v4275
    %v4277 = vrot.slane %v4269, %v4276
    %v4279 = vunpack.c.l.s4 1983009808
    %v4280 = vunpack.c.0.s8 %v4279
    %v4281 = vlaneseq
    %v4282 = vshrl.u32 %v4281, 7
    %v4283 = vsub.s32 %v4280, %v4282
    %v4284 = vrot.slane %v4270, %v4283
    %v4285 = vcombine.low %v4261, %v4277
    %v4286 = vcombine.high %v4261, %v4277
    %v4288 = vunpack.c.l.s4 1934713408
    %v4289 = vunpack.c.0.s8 %v4288
    %v4290 = vlaneseq
    %v4291 = vshrl.u32 %v4290, 7
    %v4292 = vsub.s32 %v4289, %v4291
    %v4293 = vrot.slane %v4285, %v4292
    %v4295 = vunpack.c.l.s4 1934713408
    %v4296 = vunpack.c.0.s8 %v4295
    %v4297 = vlaneseq
    %v4298 = vshrl.u32 %v4297, 7
    %v4299 = vsub.s32 %v4296, %v4298
    %v4300 = vrot.slane %v4286, %v4299
    %v4301 = vcombine.low %v4268, %v4284
    %v4302 = vcombine.high %v4268, %v4284
    %v4304 = vunpack.c.l.s4 1934713408
    %v4305 = vunpack.c.0.s8 %v4304
    %v4306 = vlaneseq
    %v4307 = vshrl.u32 %v4306, 7
    %v4308 = vsub.s32 %v4305, %v4307
    %v4309 = vrot.slane %v4301, %v4308
    %v4311 = vunpack.c.l.s4 1934713408
    %v4312 = vunpack.c.0.s8 %v4311
    %v4313 = vlaneseq
    %v4314 = vshrl.u32 %v4313, 7
    %v4315 = vsub.s32 %v4312, %v4314
    %v4316 = vrot.slane %v4302, %v4315
    %v4317 = vcombine.high %v4293, 0.0
    %v4318 = vcombine.high %v4300, 0.0
    %v4319 = vcombine.high %v4309, 0.0
    %v4320 = vcombine.high %v4316, 0.0
    %v4321 = vcombine.low %v4225, %v4232
    %v4323 = vunpack.c.l.s4 1983009808
    %v4324 = vunpack.c.0.s8 %v4323
    %v4325 = vlaneseq
    %v4326 = vshrl.u32 %v4325, 7
    %v4327 = vsub.s32 %v4324, %v4326
    %v4328 = vrot.slane %v4321, %v4327
    %v4329 = vcombine.low %v4249, %v4250
    %v4331 = vunpack.c.l.s4 1983009808
    %v4332 = vunpack.c.0.s8 %v4331
    %v4333 = vlaneseq
    %v4334 = vshrl.u32 %v4333, 7
    %v4335 = vsub.s32 %v4332, %v4334
    %v4336 = vrot.slane %v4329, %v4335
    %v4337 = vcombine.low %v4241, %v4248
    %v4339 = vunpack.c.l.s4 1983009808
    %v4340 = vunpack.c.0.s8 %v4339
    %v4341 = vlaneseq
    %v4342 = vshrl.u32 %v4341, 7
    %v4343 = vsub.s32 %v4340, %v4342
    %v4344 = vrot.slane %v4337, %v4343
    %v4345 = vcombine.low %v4251, %v4252
    %v4347 = vunpack.c.l.s4 1983009808
    %v4348 = vunpack.c.0.s8 %v4347
    %v4349 = vlaneseq
    %v4350 = vshrl.u32 %v4349, 7
    %v4351 = vsub.s32 %v4348, %v4350
    %v4352 = vrot.slane %v4345, %v4351
    %v4353 = vcombine.low %v4328, %v4336
    %v4354 = vcombine.high %v4328, %v4336
    %v4356 = vunpack.c.l.s4 1934713408
    %v4357 = vunpack.c.0.s8 %v4356
    %v4358 = vlaneseq
    %v4359 = vshrl.u32 %v4358, 7
    %v4360 = vsub.s32 %v4357, %v4359
    %v4361 = vrot.slane %v4353, %v4360
    %v4363 = vunpack.c.l.s4 1934713408
    %v4364 = vunpack.c.0.s8 %v4363
    %v4365 = vlaneseq
    %v4366 = vshrl.u32 %v4365, 7
    %v4367 = vsub.s32 %v4364, %v4366
    %v4368 = vrot.slane %v4354, %v4367
    %v4369 = vcombine.low %v4344, %v4352
    %v4370 = vcombine.high %v4344, %v4352
    %v4372 = vunpack.c.l.s4 1934713408
    %v4373 = vunpack.c.0.s8 %v4372
    %v4374 = vlaneseq
    %v4375 = vshrl.u32 %v4374, 7
    %v4376 = vsub.s32 %v4373, %v4375
    %v4377 = vrot.slane %v4369, %v4376
    %v4379 = vunpack.c.l.s4 1934713408
    %v4380 = vunpack.c.0.s8 %v4379
    %v4381 = vlaneseq
    %v4382 = vshrl.u32 %v4381, 7
    %v4383 = vsub.s32 %v4380, %v4382
    %v4384 = vrot.slane %v4370, %v4383
    %v4385 = vcombine.low %v4361, %v4377
    %v4386 = vcombine.high %v4361, %v4377
    %v4387 = vcombine.low %v4368, %v4384
    %v4388 = vcombine.high %v4368, %v4384
    %v4389 = vcombine.low %v4293, %v4300
    %v4391 = vunpack.c.l.s4 1983009808
    %v4392 = vunpack.c.0.s8 %v4391
    %v4393 = vlaneseq
    %v4394 = vshrl.u32 %v4393, 7
    %v4395 = vsub.s32 %v4392, %v4394
    %v4396 = vrot.slane %v4389, %v4395
    %v4397 = vcombine.low %v4317, %v4318
    %v4399 = vunpack.c.l.s4 1983009808
    %v4400 = vunpack.c.0.s8 %v4399
    %v4401 = vlaneseq
    %v4402 = vshrl.u32 %v4401, 7
    %v4403 = vsub.s32 %v4400, %v4402
    %v4404 = vrot.slane %v4397, %v4403
    %v4405 = vcombine.low %v4309, %v4316
    %v4407 = vunpack.c.l.s4 1983009808
    %v4408 = vunpack.c.0.s8 %v4407
    %v4409 = vlaneseq
    %v4410 = vshrl.u32 %v4409, 7
    %v4411 = vsub.s32 %v4408, %v4410
    %v4412 = vrot.slane %v4405, %v4411
    %v4413 = vcombine.low %v4319, %v4320
    %v4415 = vunpack.c.l.s4 1983009808
    %v4416 = vunpack.c.0.s8 %v4415
    %v4417 = vlaneseq
    %v4418 = vshrl.u32 %v4417, 7
    %v4419 = vsub.s32 %v4416, %v4418
    %v4420 = vrot.slane %v4413, %v4419
    %v4421 = vcombine.low %v4396, %v4404
    %v4422 = vcombine.high %v4396, %v4404
    %v4424 = vunpack.c.l.s4 1934713408
    %v4425 = vunpack.c.0.s8 %v4424
    %v4426 = vlaneseq
    %v4427 = vshrl.u32 %v4426, 7
    %v4428 = vsub.s32 %v4425, %v4427
    %v4429 = vrot.slane %v4421, %v4428
    %v4431 = vunpack.c.l.s4 1934713408
    %v4432 = vunpack.c.0.s8 %v4431
    %v4433 = vlaneseq
    %v4434 = vshrl.u32 %v4433, 7
    %v4435 = vsub.s32 %v4432, %v4434
    %v4436 = vrot.slane %v4422, %v4435
    %v4437 = vcombine.low %v4412, %v4420
    %v4438 = vcombine.high %v4412, %v4420
    %v4440 = vunpack.c.l.s4 1934713408
    %v4441 = vunpack.c.0.s8 %v4440
    %v4442 = vlaneseq
    %v4443 = vshrl.u32 %v4442, 7
    %v4444 = vsub.s32 %v4441, %v4443
    %v4445 = vrot.slane %v4437, %v4444
    %v4447 = vunpack.c.l.s4 1934713408
    %v4448 = vunpack.c.0.s8 %v4447
    %v4449 = vlaneseq
    %v4450 = vshrl.u32 %v4449, 7
    %v4451 = vsub.s32 %v4448, %v4450
    %v4452 = vrot.slane %v4438, %v4451
    %v4453 = vcombine.low %v4429, %v4445
    %v4454 = vcombine.high %v4429, %v4445
    %v4455 = vcombine.low %v4436, %v4452
    %v4456 = vcombine.high %v4436, %v4452
    %4457 = vrot.lane.b32.xlu0 %v4152, 96
    %v4458 = vpop.permute.xlu0 %4457
    %4459 = vrot.lane.b32.xlu0 %v4155, 96
    %v4460 = vpop.permute.xlu0 %4459
    %4461 = vrot.lane.b32.xlu0 %v4168, 96
    %v4462 = vpop.permute.xlu0 %4461
    %4463 = vrot.lane.b32.xlu0 %v4170, 96
    %v4464 = vpop.permute.xlu0 %4463
    %4465 = vrot.lane.b32.xlu0 %v4174, 96
    %v4466 = vpop.permute.xlu0 %4465
    %4467 = vrot.lane.b32.xlu0 %v4176, 96
    %v4468 = vpop.permute.xlu0 %4467
    %4469 = vrot.lane.b32.xlu0 %v4180, 96
    %v4470 = vpop.permute.xlu0 %4469
    %4471 = vrot.lane.b32.xlu0 %v4182, 96
    %v4472 = vpop.permute.xlu0 %4471
    %v4481 = vcombine.low %v4458, %v4466
    %v4482 = vcombine.high %v4458, %v4466
    %v4484 = vunpack.c.l.s4 1983009808
    %v4485 = vunpack.c.0.s8 %v4484
    %v4486 = vlaneseq
    %v4487 = vshrl.u32 %v4486, 7
    %v4488 = vsub.s32 %v4485, %v4487
    %v4489 = vrot.slane %v4481, %v4488
    %v4491 = vunpack.c.l.s4 1983009808
    %v4492 = vunpack.c.0.s8 %v4491
    %v4493 = vlaneseq
    %v4494 = vshrl.u32 %v4493, 7
    %v4495 = vsub.s32 %v4492, %v4494
    %v4496 = vrot.slane %v4482, %v4495
    %v4497 = vcombine.low %v4462, %v4470
    %v4498 = vcombine.high %v4462, %v4470
    %v4500 = vunpack.c.l.s4 1983009808
    %v4501 = vunpack.c.0.s8 %v4500
    %v4502 = vlaneseq
    %v4503 = vshrl.u32 %v4502, 7
    %v4504 = vsub.s32 %v4501, %v4503
    %v4505 = vrot.slane %v4497, %v4504
    %v4507 = vunpack.c.l.s4 1983009808
    %v4508 = vunpack.c.0.s8 %v4507
    %v4509 = vlaneseq
    %v4510 = vshrl.u32 %v4509, 7
    %v4511 = vsub.s32 %v4508, %v4510
    %v4512 = vrot.slane %v4498, %v4511
    %v4513 = vcombine.low %v4489, %v4505
    %v4514 = vcombine.high %v4489, %v4505
    %v4516 = vunpack.c.l.s4 1934713408
    %v4517 = vunpack.c.0.s8 %v4516
    %v4518 = vlaneseq
    %v4519 = vshrl.u32 %v4518, 7
    %v4520 = vsub.s32 %v4517, %v4519
    %v4521 = vrot.slane %v4513, %v4520
    %v4523 = vunpack.c.l.s4 1934713408
    %v4524 = vunpack.c.0.s8 %v4523
    %v4525 = vlaneseq
    %v4526 = vshrl.u32 %v4525, 7
    %v4527 = vsub.s32 %v4524, %v4526
    %v4528 = vrot.slane %v4514, %v4527
    %v4529 = vcombine.low %v4496, %v4512
    %v4530 = vcombine.high %v4496, %v4512
    %v4532 = vunpack.c.l.s4 1934713408
    %v4533 = vunpack.c.0.s8 %v4532
    %v4534 = vlaneseq
    %v4535 = vshrl.u32 %v4534, 7
    %v4536 = vsub.s32 %v4533, %v4535
    %v4537 = vrot.slane %v4529, %v4536
    %v4539 = vunpack.c.l.s4 1934713408
    %v4540 = vunpack.c.0.s8 %v4539
    %v4541 = vlaneseq
    %v4542 = vshrl.u32 %v4541, 7
    %v4543 = vsub.s32 %v4540, %v4542
    %v4544 = vrot.slane %v4530, %v4543
    %v4545 = vcombine.high %v4521, 0.0
    %v4546 = vcombine.high %v4528, 0.0
    %v4547 = vcombine.high %v4537, 0.0
    %v4548 = vcombine.high %v4544, 0.0
    %v4549 = vcombine.low %v4460, %v4468
    %v4550 = vcombine.high %v4460, %v4468
    %v4552 = vunpack.c.l.s4 1983009808
    %v4553 = vunpack.c.0.s8 %v4552
    %v4554 = vlaneseq
    %v4555 = vshrl.u32 %v4554, 7
    %v4556 = vsub.s32 %v4553, %v4555
    %v4557 = vrot.slane %v4549, %v4556
    %v4559 = vunpack.c.l.s4 1983009808
    %v4560 = vunpack.c.0.s8 %v4559
    %v4561 = vlaneseq
    %v4562 = vshrl.u32 %v4561, 7
    %v4563 = vsub.s32 %v4560, %v4562
    %v4564 = vrot.slane %v4550, %v4563
    %v4565 = vcombine.low %v4464, %v4472
    %v4566 = vcombine.high %v4464, %v4472
    %v4568 = vunpack.c.l.s4 1983009808
    %v4569 = vunpack.c.0.s8 %v4568
    %v4570 = vlaneseq
    %v4571 = vshrl.u32 %v4570, 7
    %v4572 = vsub.s32 %v4569, %v4571
    %v4573 = vrot.slane %v4565, %v4572
    %v4575 = vunpack.c.l.s4 1983009808
    %v4576 = vunpack.c.0.s8 %v4575
    %v4577 = vlaneseq
    %v4578 = vshrl.u32 %v4577, 7
    %v4579 = vsub.s32 %v4576, %v4578
    %v4580 = vrot.slane %v4566, %v4579
    %v4581 = vcombine.low %v4557, %v4573
    %v4582 = vcombine.high %v4557, %v4573
    %v4584 = vunpack.c.l.s4 1934713408
    %v4585 = vunpack.c.0.s8 %v4584
    %v4586 = vlaneseq
    %v4587 = vshrl.u32 %v4586, 7
    %v4588 = vsub.s32 %v4585, %v4587
    %v4589 = vrot.slane %v4581, %v4588
    %v4591 = vunpack.c.l.s4 1934713408
    %v4592 = vunpack.c.0.s8 %v4591
    %v4593 = vlaneseq
    %v4594 = vshrl.u32 %v4593, 7
    %v4595 = vsub.s32 %v4592, %v4594
    %v4596 = vrot.slane %v4582, %v4595
    %v4597 = vcombine.low %v4564, %v4580
    %v4598 = vcombine.high %v4564, %v4580
    %v4600 = vunpack.c.l.s4 1934713408
    %v4601 = vunpack.c.0.s8 %v4600
    %v4602 = vlaneseq
    %v4603 = vshrl.u32 %v4602, 7
    %v4604 = vsub.s32 %v4601, %v4603
    %v4605 = vrot.slane %v4597, %v4604
    %v4607 = vunpack.c.l.s4 1934713408
    %v4608 = vunpack.c.0.s8 %v4607
    %v4609 = vlaneseq
    %v4610 = vshrl.u32 %v4609, 7
    %v4611 = vsub.s32 %v4608, %v4610
    %v4612 = vrot.slane %v4598, %v4611
    %v4613 = vcombine.high %v4589, 0.0
    %v4614 = vcombine.high %v4596, 0.0
    %v4615 = vcombine.high %v4605, 0.0
    %v4616 = vcombine.high %v4612, 0.0
    %v4617 = vcombine.low %v4521, %v4528
    %v4619 = vunpack.c.l.s4 1983009808
    %v4620 = vunpack.c.0.s8 %v4619
    %v4621 = vlaneseq
    %v4622 = vshrl.u32 %v4621, 7
    %v4623 = vsub.s32 %v4620, %v4622
    %v4624 = vrot.slane %v4617, %v4623
    %v4625 = vcombine.low %v4545, %v4546
    %v4627 = vunpack.c.l.s4 1983009808
    %v4628 = vunpack.c.0.s8 %v4627
    %v4629 = vlaneseq
    %v4630 = vshrl.u32 %v4629, 7
    %v4631 = vsub.s32 %v4628, %v4630
    %v4632 = vrot.slane %v4625, %v4631
    %v4633 = vcombine.low %v4537, %v4544
    %v4635 = vunpack.c.l.s4 1983009808
    %v4636 = vunpack.c.0.s8 %v4635
    %v4637 = vlaneseq
    %v4638 = vshrl.u32 %v4637, 7
    %v4639 = vsub.s32 %v4636, %v4638
    %v4640 = vrot.slane %v4633, %v4639
    %v4641 = vcombine.low %v4547, %v4548
    %v4643 = vunpack.c.l.s4 1983009808
    %v4644 = vunpack.c.0.s8 %v4643
    %v4645 = vlaneseq
    %v4646 = vshrl.u32 %v4645, 7
    %v4647 = vsub.s32 %v4644, %v4646
    %v4648 = vrot.slane %v4641, %v4647
    %v4649 = vcombine.low %v4624, %v4632
    %v4650 = vcombine.high %v4624, %v4632
    %v4652 = vunpack.c.l.s4 1934713408
    %v4653 = vunpack.c.0.s8 %v4652
    %v4654 = vlaneseq
    %v4655 = vshrl.u32 %v4654, 7
    %v4656 = vsub.s32 %v4653, %v4655
    %v4657 = vrot.slane %v4649, %v4656
    %v4659 = vunpack.c.l.s4 1934713408
    %v4660 = vunpack.c.0.s8 %v4659
    %v4661 = vlaneseq
    %v4662 = vshrl.u32 %v4661, 7
    %v4663 = vsub.s32 %v4660, %v4662
    %v4664 = vrot.slane %v4650, %v4663
    %v4665 = vcombine.low %v4640, %v4648
    %v4666 = vcombine.high %v4640, %v4648
    %v4668 = vunpack.c.l.s4 1934713408
    %v4669 = vunpack.c.0.s8 %v4668
    %v4670 = vlaneseq
    %v4671 = vshrl.u32 %v4670, 7
    %v4672 = vsub.s32 %v4669, %v4671
    %v4673 = vrot.slane %v4665, %v4672
    %v4675 = vunpack.c.l.s4 1934713408
    %v4676 = vunpack.c.0.s8 %v4675
    %v4677 = vlaneseq
    %v4678 = vshrl.u32 %v4677, 7
    %v4679 = vsub.s32 %v4676, %v4678
    %v4680 = vrot.slane %v4666, %v4679
    %v4681 = vcombine.low %v4657, %v4673
    %v4682 = vcombine.high %v4657, %v4673
    %v4683 = vcombine.low %v4664, %v4680
    %v4684 = vcombine.high %v4664, %v4680
    %v4685 = vcombine.low %v4589, %v4596
    %v4687 = vunpack.c.l.s4 1983009808
    %v4688 = vunpack.c.0.s8 %v4687
    %v4689 = vlaneseq
    %v4690 = vshrl.u32 %v4689, 7
    %v4691 = vsub.s32 %v4688, %v4690
    %v4692 = vrot.slane %v4685, %v4691
    %v4693 = vcombine.low %v4613, %v4614
    %v4695 = vunpack.c.l.s4 1983009808
    %v4696 = vunpack.c.0.s8 %v4695
    %v4697 = vlaneseq
    %v4698 = vshrl.u32 %v4697, 7
    %v4699 = vsub.s32 %v4696, %v4698
    %v4700 = vrot.slane %v4693, %v4699
    %v4701 = vcombine.low %v4605, %v4612
    %v4703 = vunpack.c.l.s4 1983009808
    %v4704 = vunpack.c.0.s8 %v4703
    %v4705 = vlaneseq
    %v4706 = vshrl.u32 %v4705, 7
    %v4707 = vsub.s32 %v4704, %v4706
    %v4708 = vrot.slane %v4701, %v4707
    %v4709 = vcombine.low %v4615, %v4616
    %v4711 = vunpack.c.l.s4 1983009808
    %v4712 = vunpack.c.0.s8 %v4711
    %v4713 = vlaneseq
    %v4714 = vshrl.u32 %v4713, 7
    %v4715 = vsub.s32 %v4712, %v4714
    %v4716 = vrot.slane %v4709, %v4715
    %v4717 = vcombine.low %v4692, %v4700
    %v4718 = vcombine.high %v4692, %v4700
    %v4720 = vunpack.c.l.s4 1934713408
    %v4721 = vunpack.c.0.s8 %v4720
    %v4722 = vlaneseq
    %v4723 = vshrl.u32 %v4722, 7
    %v4724 = vsub.s32 %v4721, %v4723
    %v4725 = vrot.slane %v4717, %v4724
    %v4727 = vunpack.c.l.s4 1934713408
    %v4728 = vunpack.c.0.s8 %v4727
    %v4729 = vlaneseq
    %v4730 = vshrl.u32 %v4729, 7
    %v4731 = vsub.s32 %v4728, %v4730
    %v4732 = vrot.slane %v4718, %v4731
    %v4733 = vcombine.low %v4708, %v4716
    %v4734 = vcombine.high %v4708, %v4716
    %v4736 = vunpack.c.l.s4 1934713408
    %v4737 = vunpack.c.0.s8 %v4736
    %v4738 = vlaneseq
    %v4739 = vshrl.u32 %v4738, 7
    %v4740 = vsub.s32 %v4737, %v4739
    %v4741 = vrot.slane %v4733, %v4740
    %v4743 = vunpack.c.l.s4 1934713408
    %v4744 = vunpack.c.0.s8 %v4743
    %v4745 = vlaneseq
    %v4746 = vshrl.u32 %v4745, 7
    %v4747 = vsub.s32 %v4744, %v4746
    %v4748 = vrot.slane %v4734, %v4747
    %v4749 = vcombine.low %v4725, %v4741
    %v4750 = vcombine.high %v4725, %v4741
    %v4751 = vcombine.low %v4732, %v4748
    %v4752 = vcombine.high %v4732, %v4748
    %4753 = vrot.lane.b32.xlu0 %v4152, 64
    %v4754 = vpop.permute.xlu0 %4753
    %4755 = vrot.lane.b32.xlu0 %v4155, 64
    %v4756 = vpop.permute.xlu0 %4755
    %4757 = vrot.lane.b32.xlu0 %v4168, 64
    %v4758 = vpop.permute.xlu0 %4757
    %4759 = vrot.lane.b32.xlu0 %v4170, 64
    %v4760 = vpop.permute.xlu0 %4759
    %4761 = vrot.lane.b32.xlu0 %v4174, 64
    %v4762 = vpop.permute.xlu0 %4761
    %4763 = vrot.lane.b32.xlu0 %v4176, 64
    %v4764 = vpop.permute.xlu0 %4763
    %4765 = vrot.lane.b32.xlu0 %v4180, 64
    %v4766 = vpop.permute.xlu0 %4765
    %4767 = vrot.lane.b32.xlu0 %v4182, 64
    %v4768 = vpop.permute.xlu0 %4767
    %v4777 = vcombine.low %v4754, %v4762
    %v4778 = vcombine.high %v4754, %v4762
    %v4780 = vunpack.c.l.s4 1983009808
    %v4781 = vunpack.c.0.s8 %v4780
    %v4782 = vlaneseq
    %v4783 = vshrl.u32 %v4782, 7
    %v4784 = vsub.s32 %v4781, %v4783
    %v4785 = vrot.slane %v4777, %v4784
    %v4787 = vunpack.c.l.s4 1983009808
    %v4788 = vunpack.c.0.s8 %v4787
    %v4789 = vlaneseq
    %v4790 = vshrl.u32 %v4789, 7
    %v4791 = vsub.s32 %v4788, %v4790
    %v4792 = vrot.slane %v4778, %v4791
    %v4793 = vcombine.low %v4758, %v4766
    %v4794 = vcombine.high %v4758, %v4766
    %v4796 = vunpack.c.l.s4 1983009808
    %v4797 = vunpack.c.0.s8 %v4796
    %v4798 = vlaneseq
    %v4799 = vshrl.u32 %v4798, 7
    %v4800 = vsub.s32 %v4797, %v4799
    %v4801 = vrot.slane %v4793, %v4800
    %v4803 = vunpack.c.l.s4 1983009808
    %v4804 = vunpack.c.0.s8 %v4803
    %v4805 = vlaneseq
    %v4806 = vshrl.u32 %v4805, 7
    %v4807 = vsub.s32 %v4804, %v4806
    %v4808 = vrot.slane %v4794, %v4807
    %v4809 = vcombine.low %v4785, %v4801
    %v4810 = vcombine.high %v4785, %v4801
    %v4812 = vunpack.c.l.s4 1934713408
    %v4813 = vunpack.c.0.s8 %v4812
    %v4814 = vlaneseq
    %v4815 = vshrl.u32 %v4814, 7
    %v4816 = vsub.s32 %v4813, %v4815
    %v4817 = vrot.slane %v4809, %v4816
    %v4819 = vunpack.c.l.s4 1934713408
    %v4820 = vunpack.c.0.s8 %v4819
    %v4821 = vlaneseq
    %v4822 = vshrl.u32 %v4821, 7
    %v4823 = vsub.s32 %v4820, %v4822
    %v4824 = vrot.slane %v4810, %v4823
    %v4825 = vcombine.low %v4792, %v4808
    %v4826 = vcombine.high %v4792, %v4808
    %v4828 = vunpack.c.l.s4 1934713408
    %v4829 = vunpack.c.0.s8 %v4828
    %v4830 = vlaneseq
    %v4831 = vshrl.u32 %v4830, 7
    %v4832 = vsub.s32 %v4829, %v4831
    %v4833 = vrot.slane %v4825, %v4832
    %v4835 = vunpack.c.l.s4 1934713408
    %v4836 = vunpack.c.0.s8 %v4835
    %v4837 = vlaneseq
    %v4838 = vshrl.u32 %v4837, 7
    %v4839 = vsub.s32 %v4836, %v4838
    %v4840 = vrot.slane %v4826, %v4839
    %v4841 = vcombine.high %v4817, 0.0
    %v4842 = vcombine.high %v4824, 0.0
    %v4843 = vcombine.high %v4833, 0.0
    %v4844 = vcombine.high %v4840, 0.0
    %v4845 = vcombine.low %v4756, %v4764
    %v4846 = vcombine.high %v4756, %v4764
    %v4848 = vunpack.c.l.s4 1983009808
    %v4849 = vunpack.c.0.s8 %v4848
    %v4850 = vlaneseq
    %v4851 = vshrl.u32 %v4850, 7
    %v4852 = vsub.s32 %v4849, %v4851
    %v4853 = vrot.slane %v4845, %v4852
    %v4855 = vunpack.c.l.s4 1983009808
    %v4856 = vunpack.c.0.s8 %v4855
    %v4857 = vlaneseq
    %v4858 = vshrl.u32 %v4857, 7
    %v4859 = vsub.s32 %v4856, %v4858
    %v4860 = vrot.slane %v4846, %v4859
    %v4861 = vcombine.low %v4760, %v4768
    %v4862 = vcombine.high %v4760, %v4768
    %v4864 = vunpack.c.l.s4 1983009808
    %v4865 = vunpack.c.0.s8 %v4864
    %v4866 = vlaneseq
    %v4867 = vshrl.u32 %v4866, 7
    %v4868 = vsub.s32 %v4865, %v4867
    %v4869 = vrot.slane %v4861, %v4868
    %v4871 = vunpack.c.l.s4 1983009808
    %v4872 = vunpack.c.0.s8 %v4871
    %v4873 = vlaneseq
    %v4874 = vshrl.u32 %v4873, 7
    %v4875 = vsub.s32 %v4872, %v4874
    %v4876 = vrot.slane %v4862, %v4875
    %v4877 = vcombine.low %v4853, %v4869
    %v4878 = vcombine.high %v4853, %v4869
    %v4880 = vunpack.c.l.s4 1934713408
    %v4881 = vunpack.c.0.s8 %v4880
    %v4882 = vlaneseq
    %v4883 = vshrl.u32 %v4882, 7
    %v4884 = vsub.s32 %v4881, %v4883
    %v4885 = vrot.slane %v4877, %v4884
    %v4887 = vunpack.c.l.s4 1934713408
    %v4888 = vunpack.c.0.s8 %v4887
    %v4889 = vlaneseq
    %v4890 = vshrl.u32 %v4889, 7
    %v4891 = vsub.s32 %v4888, %v4890
    %v4892 = vrot.slane %v4878, %v4891
    %v4893 = vcombine.low %v4860, %v4876
    %v4894 = vcombine.high %v4860, %v4876
    %v4896 = vunpack.c.l.s4 1934713408
    %v4897 = vunpack.c.0.s8 %v4896
    %v4898 = vlaneseq
    %v4899 = vshrl.u32 %v4898, 7
    %v4900 = vsub.s32 %v4897, %v4899
    %v4901 = vrot.slane %v4893, %v4900
    %v4903 = vunpack.c.l.s4 1934713408
    %v4904 = vunpack.c.0.s8 %v4903
    %v4905 = vlaneseq
    %v4906 = vshrl.u32 %v4905, 7
    %v4907 = vsub.s32 %v4904, %v4906
    %v4908 = vrot.slane %v4894, %v4907
    %v4909 = vcombine.high %v4885, 0.0
    %v4910 = vcombine.high %v4892, 0.0
    %v4911 = vcombine.high %v4901, 0.0
    %v4912 = vcombine.high %v4908, 0.0
    %v4913 = vcombine.low %v4817, %v4824
    %v4915 = vunpack.c.l.s4 1983009808
    %v4916 = vunpack.c.0.s8 %v4915
    %v4917 = vlaneseq
    %v4918 = vshrl.u32 %v4917, 7
    %v4919 = vsub.s32 %v4916, %v4918
    %v4920 = vrot.slane %v4913, %v4919
    %v4921 = vcombine.low %v4841, %v4842
    %v4923 = vunpack.c.l.s4 1983009808
    %v4924 = vunpack.c.0.s8 %v4923
    %v4925 = vlaneseq
    %v4926 = vshrl.u32 %v4925, 7
    %v4927 = vsub.s32 %v4924, %v4926
    %v4928 = vrot.slane %v4921, %v4927
    %v4929 = vcombine.low %v4833, %v4840
    %v4931 = vunpack.c.l.s4 1983009808
    %v4932 = vunpack.c.0.s8 %v4931
    %v4933 = vlaneseq
    %v4934 = vshrl.u32 %v4933, 7
    %v4935 = vsub.s32 %v4932, %v4934
    %v4936 = vrot.slane %v4929, %v4935
    %v4937 = vcombine.low %v4843, %v4844
    %v4939 = vunpack.c.l.s4 1983009808
    %v4940 = vunpack.c.0.s8 %v4939
    %v4941 = vlaneseq
    %v4942 = vshrl.u32 %v4941, 7
    %v4943 = vsub.s32 %v4940, %v4942
    %v4944 = vrot.slane %v4937, %v4943
    %v4945 = vcombine.low %v4920, %v4928
    %v4946 = vcombine.high %v4920, %v4928
    %v4948 = vunpack.c.l.s4 1934713408
    %v4949 = vunpack.c.0.s8 %v4948
    %v4950 = vlaneseq
    %v4951 = vshrl.u32 %v4950, 7
    %v4952 = vsub.s32 %v4949, %v4951
    %v4953 = vrot.slane %v4945, %v4952
    %v4955 = vunpack.c.l.s4 1934713408
    %v4956 = vunpack.c.0.s8 %v4955
    %v4957 = vlaneseq
    %v4958 = vshrl.u32 %v4957, 7
    %v4959 = vsub.s32 %v4956, %v4958
    %v4960 = vrot.slane %v4946, %v4959
    %v4961 = vcombine.low %v4936, %v4944
    %v4962 = vcombine.high %v4936, %v4944
    %v4964 = vunpack.c.l.s4 1934713408
    %v4965 = vunpack.c.0.s8 %v4964
    %v4966 = vlaneseq
    %v4967 = vshrl.u32 %v4966, 7
    %v4968 = vsub.s32 %v4965, %v4967
    %v4969 = vrot.slane %v4961, %v4968
    %v4971 = vunpack.c.l.s4 1934713408
    %v4972 = vunpack.c.0.s8 %v4971
    %v4973 = vlaneseq
    %v4974 = vshrl.u32 %v4973, 7
    %v4975 = vsub.s32 %v4972, %v4974
    %v4976 = vrot.slane %v4962, %v4975
    %v4977 = vcombine.low %v4953, %v4969
    %v4978 = vcombine.high %v4953, %v4969
    %v4979 = vcombine.low %v4960, %v4976
    %v4980 = vcombine.high %v4960, %v4976
    %v4981 = vcombine.low %v4885, %v4892
    %v4983 = vunpack.c.l.s4 1983009808
    %v4984 = vunpack.c.0.s8 %v4983
    %v4985 = vlaneseq
    %v4986 = vshrl.u32 %v4985, 7
    %v4987 = vsub.s32 %v4984, %v4986
    %v4988 = vrot.slane %v4981, %v4987
    %v4989 = vcombine.low %v4909, %v4910
    %v4991 = vunpack.c.l.s4 1983009808
    %v4992 = vunpack.c.0.s8 %v4991
    %v4993 = vlaneseq
    %v4994 = vshrl.u32 %v4993, 7
    %v4995 = vsub.s32 %v4992, %v4994
    %v4996 = vrot.slane %v4989, %v4995
    %v4997 = vcombine.low %v4901, %v4908
    %v4999 = vunpack.c.l.s4 1983009808
    %v5000 = vunpack.c.0.s8 %v4999
    %v5001 = vlaneseq
    %v5002 = vshrl.u32 %v5001, 7
    %v5003 = vsub.s32 %v5000, %v5002
    %v5004 = vrot.slane %v4997, %v5003
    %v5005 = vcombine.low %v4911, %v4912
    %v5007 = vunpack.c.l.s4 1983009808
    %v5008 = vunpack.c.0.s8 %v5007
    %v5009 = vlaneseq
    %v5010 = vshrl.u32 %v5009, 7
    %v5011 = vsub.s32 %v5008, %v5010
    %v5012 = vrot.slane %v5005, %v5011
    %v5013 = vcombine.low %v4988, %v4996
    %v5014 = vcombine.high %v4988, %v4996
    %v5016 = vunpack.c.l.s4 1934713408
    %v5017 = vunpack.c.0.s8 %v5016
    %v5018 = vlaneseq
    %v5019 = vshrl.u32 %v5018, 7
    %v5020 = vsub.s32 %v5017, %v5019
    %v5021 = vrot.slane %v5013, %v5020
    %v5023 = vunpack.c.l.s4 1934713408
    %v5024 = vunpack.c.0.s8 %v5023
    %v5025 = vlaneseq
    %v5026 = vshrl.u32 %v5025, 7
    %v5027 = vsub.s32 %v5024, %v5026
    %v5028 = vrot.slane %v5014, %v5027
    %v5029 = vcombine.low %v5004, %v5012
    %v5030 = vcombine.high %v5004, %v5012
    %v5032 = vunpack.c.l.s4 1934713408
    %v5033 = vunpack.c.0.s8 %v5032
    %v5034 = vlaneseq
    %v5035 = vshrl.u32 %v5034, 7
    %v5036 = vsub.s32 %v5033, %v5035
    %v5037 = vrot.slane %v5029, %v5036
    %v5039 = vunpack.c.l.s4 1934713408
    %v5040 = vunpack.c.0.s8 %v5039
    %v5041 = vlaneseq
    %v5042 = vshrl.u32 %v5041, 7
    %v5043 = vsub.s32 %v5040, %v5042
    %v5044 = vrot.slane %v5030, %v5043
    %v5045 = vcombine.low %v5021, %v5037
    %v5046 = vcombine.high %v5021, %v5037
    %v5047 = vcombine.low %v5028, %v5044
    %v5048 = vcombine.high %v5028, %v5044
    %v5050 = vsel %vm1066, %v4385, 0
    %v5053 = vsel %vm1066, %v4453, 0
    %v5056 = vsel %vm1066, %v4386, 0
    %v5059 = vsel %vm1066, %v4454, 0
    %v5062 = vsel %vm1066, %v4387, 0
    %v5065 = vsel %vm1066, %v4455, 0
    %v5068 = vsel %vm1066, %v4388, 0
    %v5071 = vsel %vm1066, %v4456, 0
    %v5074 = vsel %vm1066, %v4681, 0
    %v5077 = vsel %vm1066, %v4749, 0
    %v5080 = vsel %vm1066, %v4682, 0
    %v5083 = vsel %vm1066, %v4750, 0
    %v5086 = vsel %vm1066, %v4683, 0
    %v5089 = vsel %vm1066, %v4751, 0
    %v5092 = vsel %vm1066, %v4684, 0
    %v5095 = vsel %vm1066, %v4752, 0
    %5097 = vmatprep.subr.mxu0 0.0
    %5098 = vmatpush1.xpose.msra.mxu0 %v5074
    %5099 = vmatprep.subr.mxu0 0.0
    %5100 = vmatpush1.xpose.msra.mxu0 %v5077
    %5101 = vmatprep.subr.mxu0 0.0
    %5102 = vmatpush1.xpose.msra.mxu0 %v5080
    %5103 = vmatprep.subr.mxu0 0.0
    %5104 = vmatpush1.xpose.msra.mxu0 %v5083
    %5105 = vmatprep.subr.mxu0 0.0
    %5106 = vmatpush1.xpose.msra.mxu0 %v5086
    %5107 = vmatprep.subr.mxu0 0.0
    %5108 = vmatpush1.xpose.msra.mxu0 %v5089
    %5109 = vmatprep.subr.mxu0 0.0
    %5110 = vmatpush1.xpose.msra.mxu0 %v5092
    %5111 = vmatprep.subr.mxu0 0.0
    %5112 = vmatpush1.xpose.msra.mxu0 %v5095
    %5113 = vmatprep.subr.mxu0 0.0
    %5114 = vmatpush1.xpose.msra.mxu0 0.0
    %5115 = vmatprep.subr.mxu0 0.0
    %5116 = vmatpush1.xpose.msra.mxu0 0.0
    %5117 = vmatprep.subr.mxu0 0.0
    %5118 = vmatpush1.xpose.msra.mxu0 0.0
    %5119 = vmatprep.subr.mxu0 0.0
    %5120 = vmatpush1.xpose.msra.mxu0 0.0
    %5121 = vmatprep.subr.mxu0 0.0
    %5122 = vmatpush1.xpose.msra.mxu0 0.0
    %5123 = vmatprep.subr.mxu0 0.0
    %5124 = vmatpush1.xpose.msra.mxu0 0.0
    %5125 = vmatprep.subr.mxu0 0.0
    %5126 = vmatpush1.xpose.msra.mxu0 0.0
    %5127 = vmatprep.subr.mxu0 0.0
    %5128 = vmatpush1.xpose.msra.mxu0 0.0
    %5129 = vmatprep.subr.mxu0 0.0
    %5130 = vmatpush1.xpose.msra.mxu0 0.0
    %5131 = vmatprep.subr.mxu0 0.0
    %5132 = vmatpush1.xpose.msra.mxu0 0.0
    %5133 = vmatprep.subr.mxu0 0.0
    %5134 = vmatpush1.xpose.msra.mxu0 0.0
    %5135 = vmatprep.subr.mxu0 0.0
    %5136 = vmatpush1.xpose.msra.mxu0 0.0
    %5137 = vmatprep.subr.mxu0 0.0
    %5138 = vmatpush1.xpose.msra.mxu0 0.0
    %5139 = vmatprep.subr.mxu0 0.0
    %5140 = vmatpush1.xpose.msra.mxu0 0.0
    %5141 = vmatprep.subr.mxu0 0.0
    %5142 = vmatpush1.xpose.msra.mxu0 0.0
    %5143 = vmatprep.subr.mxu0 0.0
    %5144 = vmatpush1.xpose.msra.mxu0 0.0
    %5145 = vmatprep.subr.mxu0 0.0
    %5146 = vmatpush1.xpose.msra.mxu0 0.0
    %5147 = vmatprep.subr.mxu0 0.0
    %5148 = vmatpush1.xpose.msra.mxu0 0.0
    %5149 = vmatprep.subr.mxu0 0.0
    %5150 = vmatpush1.xpose.msra.mxu0 0.0
    %5151 = vmatprep.subr.mxu0 0.0
    %5152 = vmatpush1.xpose.msra.mxu0 0.0
    %5153 = vmatprep.subr.mxu0 0.0
    %5154 = vmatpush1.xpose.msra.mxu0 0.0
    %5155 = vmatprep.subr.mxu0 0.0
    %5156 = vmatpush1.xpose.msra.mxu0 0.0
    %5157 = vmatprep.subr.mxu0 0.0
    %5158 = vmatpush1.xpose.msra.mxu0 0.0
    %5159 = vmatprep.subr.mxu0 0.0
    %5160 = vmatpush1.xpose.msra.mxu0 0.0
    %5161 = vmatprep.mubr.f32.mxu0 0.0
    %5162 = vmatmul.mubr.f32.gmra.mrb[0].mxu0 %v5050
    %v5163 = vpop.f32.mrb[0].mxu0
    %v5164 = vadd.f32 %v92, %v5163
    %v5165 = vpop.f32.mrb[0].mxu0
    %5166 = vmatprep.mubr.f32.mxu0 0.0
    %5167 = vmatmul.mubr.f32.gmra.mrb[0].mxu0 %v5053
    %v5168 = vpop.f32.mrb[0].mxu0
    %v5169 = vadd.f32 %v93, %v5168
    %v5170 = vpop.f32.mrb[0].mxu0
    %5171 = vmatprep.mubr.f32.mxu0 0.0
    %5172 = vmatmul.mubr.f32.gmra.mrb[0].mxu0 %v5056
    %v5173 = vpop.f32.mrb[0].mxu0
    %v5174 = vadd.f32 %v94, %v5173
    %v5175 = vpop.f32.mrb[0].mxu0
    %5176 = vmatprep.mubr.f32.mxu0 0.0
    %5177 = vmatmul.mubr.f32.gmra.mrb[0].mxu0 %v5059
    %v5178 = vpop.f32.mrb[0].mxu0
    %v5179 = vadd.f32 %v95, %v5178
    %v5180 = vpop.f32.mrb[0].mxu0
    %5181 = vmatprep.mubr.f32.mxu0 0.0
    %5182 = vmatmul.mubr.f32.gmra.mrb[0].mxu0 %v5062
    %v5183 = vpop.f32.mrb[0].mxu0
    %v5184 = vadd.f32 %v96, %v5183
    %v5185 = vpop.f32.mrb[0].mxu0
    %5186 = vmatprep.mubr.f32.mxu0 0.0
    %5187 = vmatmul.mubr.f32.gmra.mrb[0].mxu0 %v5065
    %v5188 = vpop.f32.mrb[0].mxu0
    %v5189 = vadd.f32 %v97, %v5188
    %v5190 = vpop.f32.mrb[0].mxu0
    %5191 = vmatprep.mubr.f32.mxu0 0.0
    %5192 = vmatmul.mubr.f32.gmra.mrb[0].mxu0 %v5068
    %v5193 = vpop.f32.mrb[0].mxu0
    %v5194 = vadd.f32 %v98, %v5193
    %v5195 = vpop.f32.mrb[0].mxu0
    %5196 = vmatprep.mubr.f32.mxu0 0.0
    %5197 = vmatmul.mubr.f32.gmra.mrb[0].mxu0 %v5071
    %v5198 = vpop.f32.mrb[0].mxu0
    %v5199 = vadd.f32 %v99, %v5198
    %v5200 = vpop.f32.mrb[0].mxu0
    %5201 = vdwg.mxu0
    %v5202 = vsel %vm1220, %v5164, -inf
    %5203 = vmax.xlane.f32.xlu0 %v5202
    %v5204 = vpop.xlane.xlu0 %5203
    %v5205 = vsel %vm1220, %v5169, -inf
    %5206 = vmax.xlane.f32.xlu0 %v5205
    %v5207 = vpop.xlane.xlu0 %5206
    %v5208 = vsel %vm1220, %v5174, -inf
    %5209 = vmax.xlane.f32.xlu0 %v5208
    %v5210 = vpop.xlane.xlu0 %5209
    %v5211 = vsel %vm1220, %v5179, -inf
    %5212 = vmax.xlane.f32.xlu0 %v5211
    %v5213 = vpop.xlane.xlu0 %5212
    %v5214 = vsel %vm1220, %v5184, -inf
    %5215 = vmax.xlane.f32.xlu0 %v5214
    %v5216 = vpop.xlane.xlu0 %5215
    %v5217 = vsel %vm1220, %v5189, -inf
    %5218 = vmax.xlane.f32.xlu0 %v5217
    %v5219 = vpop.xlane.xlu0 %5218
    %v5220 = vsel %vm1220, %v5194, -inf
    %5221 = vmax.xlane.f32.xlu0 %v5220
    %v5222 = vpop.xlane.xlu0 %5221
    %v5223 = vsel %vm1220, %v5199, -inf
    %5224 = vmax.xlane.f32.xlu0 %v5223
    %v5225 = vpop.xlane.xlu0 %5224
    %v5226 = vsub.f32 %v5164, %v5204
    %v5227 = vsub.f32 %v5169, %v5207
    %v5228 = vsub.f32 %v5174, %v5210
    %v5229 = vsub.f32 %v5179, %v5213
    %v5230 = vsub.f32 %v5184, %v5216
    %v5231 = vsub.f32 %v5189, %v5219
    %v5232 = vsub.f32 %v5194, %v5222
    %v5233 = vsub.f32 %v5199, %v5225
    %v5234 = vmul.f32 %v5226, 1.442695
    %v5235 = vpow.pop %v5234
    %v5236 = vmul.f32 %v5227, 1.442695
    %v5237 = vpow.pop %v5236
    %v5238 = vmul.f32 %v5228, 1.442695
    %v5239 = vpow.pop %v5238
    %v5240 = vmul.f32 %v5229, 1.442695
    %v5241 = vpow.pop %v5240
    %v5242 = vmul.f32 %v5230, 1.442695
    %v5243 = vpow.pop %v5242
    %v5244 = vmul.f32 %v5231, 1.442695
    %v5245 = vpow.pop %v5244
    %v5246 = vmul.f32 %v5232, 1.442695
    %v5247 = vpow.pop %v5246
    %v5248 = vmul.f32 %v5233, 1.442695
    %v5249 = vpow.pop %v5248
    %v5250 = vsel %vm1220, %v5235, 0.0
    %5251 = vadd.xlane.f32.xlu0 %v5250
    %v5252 = vpop.xlane.xlu0 %5251
    %v5253 = vsel %vm1220, %v5237, 0.0
    %5254 = vadd.xlane.f32.xlu0 %v5253
    %v5255 = vpop.xlane.xlu0 %5254
    %v5256 = vsel %vm1220, %v5239, 0.0
    %5257 = vadd.xlane.f32.xlu0 %v5256
    %v5258 = vpop.xlane.xlu0 %5257
    %v5259 = vsel %vm1220, %v5241, 0.0
    %5260 = vadd.xlane.f32.xlu0 %v5259
    %v5261 = vpop.xlane.xlu0 %5260
    %v5262 = vsel %vm1220, %v5243, 0.0
    %5263 = vadd.xlane.f32.xlu0 %v5262
    %v5264 = vpop.xlane.xlu0 %5263
    %v5265 = vsel %vm1220, %v5245, 0.0
    %5266 = vadd.xlane.f32.xlu0 %v5265
    %v5267 = vpop.xlane.xlu0 %5266
    %v5268 = vsel %vm1220, %v5247, 0.0
    %5269 = vadd.xlane.f32.xlu0 %v5268
    %v5270 = vpop.xlane.xlu0 %5269
    %v5271 = vsel %vm1220, %v5249, 0.0
    %5272 = vadd.xlane.f32.xlu0 %v5271
    %v5273 = vpop.xlane.xlu0 %5272
    %v5274 = vrcp.pop %v5252
    %v5275 = vrcp.pop %v5255
    %v5276 = vrcp.pop %v5258
    %v5277 = vrcp.pop %v5261
    %v5278 = vrcp.pop %v5264
    %v5279 = vrcp.pop %v5267
    %v5280 = vrcp.pop %v5270
    %v5281 = vrcp.pop %v5273
    %v5282 = vmul.f32 %v5235, %v5274
    %v5283 = vmul.f32 %v5237, %v5275
    %v5284 = vmul.f32 %v5239, %v5276
    %v5285 = vmul.f32 %v5241, %v5277
    %v5286 = vmul.f32 %v5243, %v5278
    %v5287 = vmul.f32 %v5245, %v5279
    %v5288 = vmul.f32 %v5247, %v5280
    %v5289 = vmul.f32 %v5249, %v5281
    %v5291 = vsel %vm1220, %v5282, 0
    %v5294 = vsel %vm1220, %v5283, 0
    %v5297 = vsel %vm1220, %v5284, 0
    %v5300 = vsel %vm1220, %v5285, 0
    %v5303 = vsel %vm1220, %v5286, 0
    %v5306 = vsel %vm1220, %v5287, 0
    %v5309 = vsel %vm1220, %v5288, 0
    %v5312 = vsel %vm1220, %v5289, 0
    %5314 = vmatprep.subr.mxu0 0.0
    %5315 = vmatpush1.msra.mxu0 %v4977
    %5316 = vmatprep.subr.mxu0 0.0
    %5317 = vmatpush1.msra.mxu0 %v5045
    %5318 = vmatprep.subr.mxu0 0.0
    %5319 = vmatpush1.msra.mxu0 %v4978
    %5320 = vmatprep.subr.mxu0 0.0
    %5321 = vmatpush1.msra.mxu0 %v5046
    %5322 = vmatprep.subr.mxu0 0.0
    %5323 = vmatpush1.msra.mxu0 %v4979
    %5324 = vmatprep.subr.mxu0 0.0
    %5325 = vmatpush1.msra.mxu0 %v5047
    %5326 = vmatprep.subr.mxu0 0.0
    %5327 = vmatpush1.msra.mxu0 %v4980
    %5328 = vmatprep.subr.mxu0 0.0
    %5329 = vmatpush1.msra.mxu0 %v5048
    %5330 = vmatprep.subr.mxu0 0.0
    %5331 = vmatpush1.msra.mxu0 0.0
    %5332 = vmatprep.subr.mxu0 0.0
    %5333 = vmatpush1.msra.mxu0 0.0
    %5334 = vmatprep.subr.mxu0 0.0
    %5335 = vmatpush1.msra.mxu0 0.0
    %5336 = vmatprep.subr.mxu0 0.0
    %5337 = vmatpush1.msra.mxu0 0.0
    %5338 = vmatprep.subr.mxu0 0.0
    %5339 = vmatpush1.msra.mxu0 0.0
    %5340 = vmatprep.subr.mxu0 0.0
    %5341 = vmatpush1.msra.mxu0 0.0
    %5342 = vmatprep.subr.mxu0 0.0
    %5343 = vmatpush1.msra.mxu0 0.0
    %5344 = vmatprep.subr.mxu0 0.0
    %5345 = vmatpush1.msra.mxu0 0.0
    %5346 = vmatprep.subr.mxu0 0.0
    %5347 = vmatpush1.msra.mxu0 0.0
    %5348 = vmatprep.subr.mxu0 0.0
    %5349 = vmatpush1.msra.mxu0 0.0
    %5350 = vmatprep.subr.mxu0 0.0
    %5351 = vmatpush1.msra.mxu0 0.0
    %5352 = vmatprep.subr.mxu0 0.0
    %5353 = vmatpush1.msra.mxu0 0.0
    %5354 = vmatprep.subr.mxu0 0.0
    %5355 = vmatpush1.msra.mxu0 0.0
    %5356 = vmatprep.subr.mxu0 0.0
    %5357 = vmatpush1.msra.mxu0 0.0
    %5358 = vmatprep.subr.mxu0 0.0
    %5359 = vmatpush1.msra.mxu0 0.0
    %5360 = vmatprep.subr.mxu0 0.0
    %5361 = vmatpush1.msra.mxu0 0.0
    %5362 = vmatprep.subr.mxu0 0.0
    %5363 = vmatpush1.msra.mxu0 0.0
    %5364 = vmatprep.subr.mxu0 0.0
    %5365 = vmatpush1.msra.mxu0 0.0
    %5366 = vmatprep.subr.mxu0 0.0
    %5367 = vmatpush1.msra.mxu0 0.0
    %5368 = vmatprep.subr.mxu0 0.0
    %5369 = vmatpush1.msra.mxu0 0.0
    %5370 = vmatprep.subr.mxu0 0.0
    %5371 = vmatpush1.msra.mxu0 0.0
    %5372 = vmatprep.subr.mxu0 0.0
    %5373 = vmatpush1.msra.mxu0 0.0
    %5374 = vmatprep.subr.mxu0 0.0
    %5375 = vmatpush1.msra.mxu0 0.0
    %5376 = vmatprep.subr.mxu0 0.0
    %5377 = vmatpush1.msra.mxu0 0.0
    %5378 = vmatprep.mubr.f32.mxu0 0.0
    %5379 = vmatmul.mubr.f32.gmra.mrb[0].mxu0 %v5291
    %v5380 = vpop.f32.mrb[0].mxu0
    %v5381 = vadd.f32 0.0, %v5380
    %v5382 = vpop.f32.mrb[0].mxu0
    %5383 = vmatprep.mubr.f32.mxu0 0.0
    %5384 = vmatmul.mubr.f32.gmra.mrb[0].mxu0 %v5294
    %v5385 = vpop.f32.mrb[0].mxu0
    %v5386 = vadd.f32 0.0, %v5385
    %v5387 = vpop.f32.mrb[0].mxu0
    %5388 = vmatprep.mubr.f32.mxu0 0.0
    %5389 = vmatmul.mubr.f32.gmra.mrb[0].mxu0 %v5297
    %v5390 = vpop.f32.mrb[0].mxu0
    %v5391 = vadd.f32 0.0, %v5390
    %v5392 = vpop.f32.mrb[0].mxu0
    %5393 = vmatprep.mubr.f32.mxu0 0.0
    %5394 = vmatmul.mubr.f32.gmra.mrb[0].mxu0 %v5300
    %v5395 = vpop.f32.mrb[0].mxu0
    %v5396 = vadd.f32 0.0, %v5395
    %v5397 = vpop.f32.mrb[0].mxu0
    %5398 = vmatprep.mubr.f32.mxu0 0.0
    %5399 = vmatmul.mubr.f32.gmra.mrb[0].mxu0 %v5303
    %v5400 = vpop.f32.mrb[0].mxu0
    %v5401 = vadd.f32 0.0, %v5400
    %v5402 = vpop.f32.mrb[0].mxu0
    %5403 = vmatprep.mubr.f32.mxu0 0.0
    %5404 = vmatmul.mubr.f32.gmra.mrb[0].mxu0 %v5306
    %v5405 = vpop.f32.mrb[0].mxu0
    %v5406 = vadd.f32 0.0, %v5405
    %v5407 = vpop.f32.mrb[0].mxu0
    %5408 = vmatprep.mubr.f32.mxu0 0.0
    %5409 = vmatmul.mubr.f32.gmra.mrb[0].mxu0 %v5309
    %v5410 = vpop.f32.mrb[0].mxu0
    %v5411 = vadd.f32 0.0, %v5410
    %v5412 = vpop.f32.mrb[0].mxu0
    %5413 = vmatprep.mubr.f32.mxu0 0.0
    %5414 = vmatmul.mubr.f32.gmra.mrb[0].mxu0 %v5312
    %v5415 = vpop.f32.mrb[0].mxu0
    %v5416 = vadd.f32 0.0, %v5415
    %v5417 = vpop.f32.mrb[0].mxu0
    %5418 = vdwg.mxu0
    %v5419 = vcombine.low %v5381, %v5401
    %v5420 = vcombine.high %v5381, %v5401
    %v5422 = vunpack.c.l.s4 1983009808
    %v5423 = vunpack.c.0.s8 %v5422
    %v5424 = vlaneseq
    %v5425 = vshrl.u32 %v5424, 7
    %v5426 = vsub.s32 %v5423, %v5425
    %v5427 = vrot.slane %v5419, %v5426
    %v5429 = vunpack.c.l.s4 1983009808
    %v5430 = vunpack.c.0.s8 %v5429
    %v5431 = vlaneseq
    %v5432 = vshrl.u32 %v5431, 7
    %v5433 = vsub.s32 %v5430, %v5432
    %v5434 = vrot.slane %v5420, %v5433
    %v5435 = vcombine.low %v5391, %v5411
    %v5436 = vcombine.high %v5391, %v5411
    %v5438 = vunpack.c.l.s4 1983009808
    %v5439 = vunpack.c.0.s8 %v5438
    %v5440 = vlaneseq
    %v5441 = vshrl.u32 %v5440, 7
    %v5442 = vsub.s32 %v5439, %v5441
    %v5443 = vrot.slane %v5435, %v5442
    %v5445 = vunpack.c.l.s4 1983009808
    %v5446 = vunpack.c.0.s8 %v5445
    %v5447 = vlaneseq
    %v5448 = vshrl.u32 %v5447, 7
    %v5449 = vsub.s32 %v5446, %v5448
    %v5450 = vrot.slane %v5436, %v5449
    %v5451 = vcombine.low %v5427, %v5443
    %v5452 = vcombine.high %v5427, %v5443
    %v5454 = vunpack.c.l.s4 1934713408
    %v5455 = vunpack.c.0.s8 %v5454
    %v5456 = vlaneseq
    %v5457 = vshrl.u32 %v5456, 7
    %v5458 = vsub.s32 %v5455, %v5457
    %v5459 = vrot.slane %v5451, %v5458
    %v5461 = vunpack.c.l.s4 1934713408
    %v5462 = vunpack.c.0.s8 %v5461
    %v5463 = vlaneseq
    %v5464 = vshrl.u32 %v5463, 7
    %v5465 = vsub.s32 %v5462, %v5464
    %v5466 = vrot.slane %v5452, %v5465
    %v5467 = vcombine.low %v5434, %v5450
    %v5468 = vcombine.high %v5434, %v5450
    %v5470 = vunpack.c.l.s4 1934713408
    %v5471 = vunpack.c.0.s8 %v5470
    %v5472 = vlaneseq
    %v5473 = vshrl.u32 %v5472, 7
    %v5474 = vsub.s32 %v5471, %v5473
    %v5475 = vrot.slane %v5467, %v5474
    %v5477 = vunpack.c.l.s4 1934713408
    %v5478 = vunpack.c.0.s8 %v5477
    %v5479 = vlaneseq
    %v5480 = vshrl.u32 %v5479, 7
    %v5481 = vsub.s32 %v5478, %v5480
    %v5482 = vrot.slane %v5468, %v5481
    %v5483 = vcombine.high %v5459, 0.0
    %v5484 = vcombine.high %v5466, 0.0
    %v5485 = vcombine.high %v5475, 0.0
    %v5486 = vcombine.high %v5482, 0.0
    %v5487 = vcombine.low %v5386, %v5406
    %v5488 = vcombine.high %v5386, %v5406
    %v5490 = vunpack.c.l.s4 1983009808
    %v5491 = vunpack.c.0.s8 %v5490
    %v5492 = vlaneseq
    %v5493 = vshrl.u32 %v5492, 7
    %v5494 = vsub.s32 %v5491, %v5493
    %v5495 = vrot.slane %v5487, %v5494
    %v5497 = vunpack.c.l.s4 1983009808
    %v5498 = vunpack.c.0.s8 %v5497
    %v5499 = vlaneseq
    %v5500 = vshrl.u32 %v5499, 7
    %v5501 = vsub.s32 %v5498, %v5500
    %v5502 = vrot.slane %v5488, %v5501
    %v5503 = vcombine.low %v5396, %v5416
    %v5504 = vcombine.high %v5396, %v5416
    %v5506 = vunpack.c.l.s4 1983009808
    %v5507 = vunpack.c.0.s8 %v5506
    %v5508 = vlaneseq
    %v5509 = vshrl.u32 %v5508, 7
    %v5510 = vsub.s32 %v5507, %v5509
    %v5511 = vrot.slane %v5503, %v5510
    %v5513 = vunpack.c.l.s4 1983009808
    %v5514 = vunpack.c.0.s8 %v5513
    %v5515 = vlaneseq
    %v5516 = vshrl.u32 %v5515, 7
    %v5517 = vsub.s32 %v5514, %v5516
    %v5518 = vrot.slane %v5504, %v5517
    %v5519 = vcombine.low %v5495, %v5511
    %v5520 = vcombine.high %v5495, %v5511
    %v5522 = vunpack.c.l.s4 1934713408
    %v5523 = vunpack.c.0.s8 %v5522
    %v5524 = vlaneseq
    %v5525 = vshrl.u32 %v5524, 7
    %v5526 = vsub.s32 %v5523, %v5525
    %v5527 = vrot.slane %v5519, %v5526
    %v5529 = vunpack.c.l.s4 1934713408
    %v5530 = vunpack.c.0.s8 %v5529
    %v5531 = vlaneseq
    %v5532 = vshrl.u32 %v5531, 7
    %v5533 = vsub.s32 %v5530, %v5532
    %v5534 = vrot.slane %v5520, %v5533
    %v5535 = vcombine.low %v5502, %v5518
    %v5536 = vcombine.high %v5502, %v5518
    %v5538 = vunpack.c.l.s4 1934713408
    %v5539 = vunpack.c.0.s8 %v5538
    %v5540 = vlaneseq
    %v5541 = vshrl.u32 %v5540, 7
    %v5542 = vsub.s32 %v5539, %v5541
    %v5543 = vrot.slane %v5535, %v5542
    %v5545 = vunpack.c.l.s4 1934713408
    %v5546 = vunpack.c.0.s8 %v5545
    %v5547 = vlaneseq
    %v5548 = vshrl.u32 %v5547, 7
    %v5549 = vsub.s32 %v5546, %v5548
    %v5550 = vrot.slane %v5536, %v5549
    %v5551 = vcombine.high %v5527, 0.0
    %v5552 = vcombine.high %v5534, 0.0
    %v5553 = vcombine.high %v5543, 0.0
    %v5554 = vcombine.high %v5550, 0.0
    %v5555 = vcombine.low %v5459, %v5466
    %v5557 = vunpack.c.l.s4 1983009808
    %v5558 = vunpack.c.0.s8 %v5557
    %v5559 = vlaneseq
    %v5560 = vshrl.u32 %v5559, 7
    %v5561 = vsub.s32 %v5558, %v5560
    %v5562 = vrot.slane %v5555, %v5561
    %v5563 = vcombine.low %v5483, %v5484
    %v5565 = vunpack.c.l.s4 1983009808
    %v5566 = vunpack.c.0.s8 %v5565
    %v5567 = vlaneseq
    %v5568 = vshrl.u32 %v5567, 7
    %v5569 = vsub.s32 %v5566, %v5568
    %v5570 = vrot.slane %v5563, %v5569
    %v5571 = vcombine.low %v5475, %v5482
    %v5573 = vunpack.c.l.s4 1983009808
    %v5574 = vunpack.c.0.s8 %v5573
    %v5575 = vlaneseq
    %v5576 = vshrl.u32 %v5575, 7
    %v5577 = vsub.s32 %v5574, %v5576
    %v5578 = vrot.slane %v5571, %v5577
    %v5579 = vcombine.low %v5485, %v5486
    %v5581 = vunpack.c.l.s4 1983009808
    %v5582 = vunpack.c.0.s8 %v5581
    %v5583 = vlaneseq
    %v5584 = vshrl.u32 %v5583, 7
    %v5585 = vsub.s32 %v5582, %v5584
    %v5586 = vrot.slane %v5579, %v5585
    %v5587 = vcombine.low %v5562, %v5570
    %v5588 = vcombine.high %v5562, %v5570
    %v5590 = vunpack.c.l.s4 1934713408
    %v5591 = vunpack.c.0.s8 %v5590
    %v5592 = vlaneseq
    %v5593 = vshrl.u32 %v5592, 7
    %v5594 = vsub.s32 %v5591, %v5593
    %v5595 = vrot.slane %v5587, %v5594
    %v5597 = vunpack.c.l.s4 1934713408
    %v5598 = vunpack.c.0.s8 %v5597
    %v5599 = vlaneseq
    %v5600 = vshrl.u32 %v5599, 7
    %v5601 = vsub.s32 %v5598, %v5600
    %v5602 = vrot.slane %v5588, %v5601
    %v5603 = vcombine.low %v5578, %v5586
    %v5604 = vcombine.high %v5578, %v5586
    %v5606 = vunpack.c.l.s4 1934713408
    %v5607 = vunpack.c.0.s8 %v5606
    %v5608 = vlaneseq
    %v5609 = vshrl.u32 %v5608, 7
    %v5610 = vsub.s32 %v5607, %v5609
    %v5611 = vrot.slane %v5603, %v5610
    %v5613 = vunpack.c.l.s4 1934713408
    %v5614 = vunpack.c.0.s8 %v5613
    %v5615 = vlaneseq
    %v5616 = vshrl.u32 %v5615, 7
    %v5617 = vsub.s32 %v5614, %v5616
    %v5618 = vrot.slane %v5604, %v5617
    %v5619 = vcombine.low %v5595, %v5611
    %v5620 = vcombine.high %v5595, %v5611
    %v5621 = vcombine.low %v5602, %v5618
    %v5622 = vcombine.high %v5602, %v5618
    %v5623 = vcombine.low %v5527, %v5534
    %v5625 = vunpack.c.l.s4 1983009808
    %v5626 = vunpack.c.0.s8 %v5625
    %v5627 = vlaneseq
    %v5628 = vshrl.u32 %v5627, 7
    %v5629 = vsub.s32 %v5626, %v5628
    %v5630 = vrot.slane %v5623, %v5629
    %v5631 = vcombine.low %v5551, %v5552
    %v5633 = vunpack.c.l.s4 1983009808
    %v5634 = vunpack.c.0.s8 %v5633
    %v5635 = vlaneseq
    %v5636 = vshrl.u32 %v5635, 7
    %v5637 = vsub.s32 %v5634, %v5636
    %v5638 = vrot.slane %v5631, %v5637
    %v5639 = vcombine.low %v5543, %v5550
    %v5641 = vunpack.c.l.s4 1983009808
    %v5642 = vunpack.c.0.s8 %v5641
    %v5643 = vlaneseq
    %v5644 = vshrl.u32 %v5643, 7
    %v5645 = vsub.s32 %v5642, %v5644
    %v5646 = vrot.slane %v5639, %v5645
    %v5647 = vcombine.low %v5553, %v5554
    %v5649 = vunpack.c.l.s4 1983009808
    %v5650 = vunpack.c.0.s8 %v5649
    %v5651 = vlaneseq
    %v5652 = vshrl.u32 %v5651, 7
    %v5653 = vsub.s32 %v5650, %v5652
    %v5654 = vrot.slane %v5647, %v5653
    %v5655 = vcombine.low %v5630, %v5638
    %v5656 = vcombine.high %v5630, %v5638
    %v5658 = vunpack.c.l.s4 1934713408
    %v5659 = vunpack.c.0.s8 %v5658
    %v5660 = vlaneseq
    %v5661 = vshrl.u32 %v5660, 7
    %v5662 = vsub.s32 %v5659, %v5661
    %v5663 = vrot.slane %v5655, %v5662
    %v5665 = vunpack.c.l.s4 1934713408
    %v5666 = vunpack.c.0.s8 %v5665
    %v5667 = vlaneseq
    %v5668 = vshrl.u32 %v5667, 7
    %v5669 = vsub.s32 %v5666, %v5668
    %v5670 = vrot.slane %v5656, %v5669
    %v5671 = vcombine.low %v5646, %v5654
    %v5672 = vcombine.high %v5646, %v5654
    %v5674 = vunpack.c.l.s4 1934713408
    %v5675 = vunpack.c.0.s8 %v5674
    %v5676 = vlaneseq
    %v5677 = vshrl.u32 %v5676, 7
    %v5678 = vsub.s32 %v5675, %v5677
    %v5679 = vrot.slane %v5671, %v5678
    %v5681 = vunpack.c.l.s4 1934713408
    %v5682 = vunpack.c.0.s8 %v5681
    %v5683 = vlaneseq
    %v5684 = vshrl.u32 %v5683, 7
    %v5685 = vsub.s32 %v5682, %v5684
    %v5686 = vrot.slane %v5672, %v5685
    %v5687 = vcombine.low %v5663, %v5679
    %v5688 = vcombine.high %v5663, %v5679
    %v5689 = vcombine.low %v5670, %v5686
    %v5690 = vcombine.high %v5670, %v5686
    %5693 = vrot.lane.b32.xlu0 %v5620, 8
    %v5694 = vpop.permute.xlu0 %5693
    %5695 = vrot.lane.b32.xlu0 %v5688, 8
    %v5696 = vpop.permute.xlu0 %5695
    %5701 = vrot.lane.b32.xlu0 %v5621, 16
    %v5702 = vpop.permute.xlu0 %5701
    %5703 = vrot.lane.b32.xlu0 %v5689, 16
    %v5704 = vpop.permute.xlu0 %5703
    %5709 = vrot.lane.b32.xlu0 %v5622, 24
    %v5710 = vpop.permute.xlu0 %5709
    %5711 = vrot.lane.b32.xlu0 %v5690, 24
    %v5712 = vpop.permute.xlu0 %5711
    %v5715 = vsel %vm1066, %v5619, %v5694
    %v5716 = vsel %vm1066, %v5687, %v5696
    %v5717 = vsel %vm1736, %v5715, %v5702
    %v5718 = vsel %vm1736, %v5716, %v5704
    %v5719 = vsel %vm1739, %v5717, %v5710
    %v5720 = vsel %vm1739, %v5718, %v5712
    %v5721 = vpack.c.bf16 %v5720, %v5719
    %v5723 = vlaneseq
    %v5724 = vshrl.u32 %v5723, 7
    %v5725 = vsub.s32 0, %v5724
    %v5726 = vrot.slane %v4164, %v5725
    %v5732 = vunpack.c.l.b16 %v4159
    %v5733 = vunpack.c.l.b16 %v4160
    %v5734 = vunpack.c.l.b16 %v4161
    %v5735 = vunpack.c.l.b16 %v4162
    %v5736 = vpack.c.b16 %v5733, %v5732
    %v5737 = vpack.c.b16 %v5735, %v5734
    %v5741 = vsel %vm132, %v5721, 0
    %5743 = vmatprep.subr.bf16.mxu0 0
    %5744 = vmatpush1.bf16.msra.mxu0 %v5736
    %5745 = vmatprep.subr.bf16.mxu0 0
    %5746 = vmatpush1.bf16.msra.mxu0 %v5737
    %5747 = vmatprep.subr.bf16.mxu0 0
    %5748 = vmatpush1.bf16.msra.mxu0 0
    %5749 = vmatprep.subr.bf16.mxu0 0
    %5750 = vmatpush1.bf16.msra.mxu0 0
    %5751 = vmatprep.subr.bf16.mxu0 0
    %5752 = vmatpush1.bf16.msra.mxu0 0
    %5753 = vmatprep.subr.bf16.mxu0 0
    %5754 = vmatpush1.bf16.msra.mxu0 0
    %5755 = vmatprep.subr.bf16.mxu0 0
    %5756 = vmatpush1.bf16.msra.mxu0 0
    %5757 = vmatprep.subr.bf16.mxu0 0
    %5758 = vmatpush1.bf16.msra.mxu0 0
    %5759 = vmatprep.subr.bf16.mxu0 0
    %5760 = vmatpush1.bf16.msra.mxu0 0
    %5761 = vmatprep.subr.bf16.mxu0 0
    %5762 = vmatpush1.bf16.msra.mxu0 0
    %5763 = vmatprep.subr.bf16.mxu0 0
    %5764 = vmatpush1.bf16.msra.mxu0 0
    %5765 = vmatprep.subr.bf16.mxu0 0
    %5766 = vmatpush1.bf16.msra.mxu0 0
    %5767 = vmatprep.subr.bf16.mxu0 0
    %5768 = vmatpush1.bf16.msra.mxu0 0
    %5769 = vmatprep.subr.bf16.mxu0 0
    %5770 = vmatpush1.bf16.msra.mxu0 0
    %5771 = vmatprep.subr.bf16.mxu0 0
    %5772 = vmatpush1.bf16.msra.mxu0 0
    %5773 = vmatprep.subr.bf16.mxu0 0
    %5774 = vmatpush1.bf16.msra.mxu0 0
    %5775 = vmatprep.mubr.bf16.mxu0 0
    %5776 = vmatmul.mubr.bf16.gmra.mrb[0].mxu0 %v5741
    %v5777 = vpop.f32.mrb[0].mxu0
    %v5778 = vadd.f32 %v5726, %v5777
    %v5779 = vpop.f32.mrb[0].mxu0
    %v5780 = vpop.f32.mrb[0].mxu0
    %v5781 = vadd.f32 %v5726, %v5780
    %v5782 = vpop.f32.mrb[0].mxu0
    %5783 = vdwg.mxu0
    %v5784 = vadd.f32 %v4086, %v5778
    %v5785 = vadd.f32 %v4087, %v5781
    %s5786 = scalar_lea.vmem %s8, 1
    %v5787 = vld [vmem:[%s5786] sm:$0x1]
    %s5788 = scalar_lea.vmem %s9, 1
    %v5789 = vld [vmem:[%s5788] sm:$0x1]
    %v5790 = vsel %vm132, %v5784, 0.0
    %5791 = vadd.xlane.f32.xlu0 %v5790
    %v5792 = vpop.xlane.xlu0 %5791
    %v5793 = vsel %vm132, %v5785, 0.0
    %5794 = vadd.xlane.f32.xlu0 %v5793
    %v5795 = vpop.xlane.xlu0 %5794
    %v5796 = vmul.f32 %v5792, %v1815
    %v5797 = vmul.f32 %v5795, %v1815
    %v5798 = vsub.f32 %v5784, %v5796
    %v5799 = vsub.f32 %v5785, %v5797
    %v5800 = vmul.f32 %v5798, %v5798
    %v5801 = vmul.f32 %v5799, %v5799
    %v5802 = vsel %vm132, %v5800, 0.0
    %5803 = vadd.xlane.f32.xlu0 %v5802
    %v5804 = vpop.xlane.xlu0 %5803
    %v5805 = vsel %vm132, %v5801, 0.0
    %5806 = vadd.xlane.f32.xlu0 %v5805
    %v5807 = vpop.xlane.xlu0 %5806
    %v5808 = vmul.f32 %v5804, %v1815
    %v5809 = vmul.f32 %v5807, %v1815
    %v5810 = vadd.f32 %v5808, 1e-05
    %v5811 = vadd.f32 %v5809, 1e-05
    %v5812 = vrsqrt.pop %v5810
    %v5813 = vrsqrt.pop %v5811
    %v5814 = vmul.f32 %v5798, %v5812
    %v5815 = vmul.f32 %v5799, %v5813
    %v5817 = vlaneseq
    %v5818 = vshrl.u32 %v5817, 7
    %v5819 = vsub.s32 0, %v5818
    %v5820 = vrot.slane %v5787, %v5819
    %v5822 = vmul.f32 %v5814, %v5820
    %v5823 = vmul.f32 %v5815, %v5820
    %v5825 = vlaneseq
    %v5826 = vshrl.u32 %v5825, 7
    %v5827 = vsub.s32 0, %v5826
    %v5828 = vrot.slane %v5789, %v5827
    %v5830 = vadd.f32 %v5822, %v5828
    %v5831 = vadd.f32 %v5823, %v5828
    %v5832 = vpack.c.bf16 %v5831, %v5830
    %s5833 = scalar_lea.vmem %s10, 16
    %v5834 = vld [vmem:[%s5833] sm:$0xf]
    %v5835 = vld [vmem:[%s5833 + $0x4] sm:$0xf]
    %v5836 = vld [vmem:[%s5833 + $0x8] sm:$0xf]
    %v5837 = vld [vmem:[%s5833 + $0xc] sm:$0xf]
    %s5838 = scalar_lea.vmem %s11, 1
    %v5839 = vld [vmem:[%s5838] sm:$0x1]
    %v5841 = vlaneseq
    %v5842 = vshrl.u32 %v5841, 7
    %v5843 = vsub.s32 0, %v5842
    %v5844 = vrot.slane %v5839, %v5843
    %v5850 = vunpack.c.l.b16 %v5834
    %v5851 = vunpack.c.l.b16 %v5835
    %v5852 = vunpack.c.l.b16 %v5836
    %v5853 = vunpack.c.l.b16 %v5837
    %v5854 = vpack.c.b16 %v5851, %v5850
    %v5855 = vpack.c.b16 %v5853, %v5852
    %v5859 = vsel %vm132, %v5832, 0
    %5861 = vmatprep.subr.bf16.mxu0 0
    %5862 = vmatpush1.bf16.msra.mxu0 %v5854
    %5863 = vmatprep.subr.bf16.mxu0 0
    %5864 = vmatpush1.bf16.msra.mxu0 %v5855
    %5865 = vmatprep.subr.bf16.mxu0 0
    %5866 = vmatpush1.bf16.msra.mxu0 0
    %5867 = vmatprep.subr.bf16.mxu0 0
    %5868 = vmatpush1.bf16.msra.mxu0 0
    %5869 = vmatprep.subr.bf16.mxu0 0
    %5870 = vmatpush1.bf16.msra.mxu0 0
    %5871 = vmatprep.subr.bf16.mxu0 0
    %5872 = vmatpush1.bf16.msra.mxu0 0
    %5873 = vmatprep.subr.bf16.mxu0 0
    %5874 = vmatpush1.bf16.msra.mxu0 0
    %5875 = vmatprep.subr.bf16.mxu0 0
    %5876 = vmatpush1.bf16.msra.mxu0 0
    %5877 = vmatprep.subr.bf16.mxu0 0
    %5878 = vmatpush1.bf16.msra.mxu0 0
    %5879 = vmatprep.subr.bf16.mxu0 0
    %5880 = vmatpush1.bf16.msra.mxu0 0
    %5881 = vmatprep.subr.bf16.mxu0 0
    %5882 = vmatpush1.bf16.msra.mxu0 0
    %5883 = vmatprep.subr.bf16.mxu0 0
    %5884 = vmatpush1.bf16.msra.mxu0 0
    %5885 = vmatprep.subr.bf16.mxu0 0
    %5886 = vmatpush1.bf16.msra.mxu0 0
    %5887 = vmatprep.subr.bf16.mxu0 0
    %5888 = vmatpush1.bf16.msra.mxu0 0
    %5889 = vmatprep.subr.bf16.mxu0 0
    %5890 = vmatpush1.bf16.msra.mxu0 0
    %5891 = vmatprep.subr.bf16.mxu0 0
    %5892 = vmatpush1.bf16.msra.mxu0 0
    %5893 = vmatprep.mubr.bf16.mxu0 0
    %5894 = vmatmul.mubr.bf16.gmra.mrb[0].mxu0 %v5859
    %v5895 = vpop.f32.mrb[0].mxu0
    %v5896 = vadd.f32 %v5844, %v5895
    %v5897 = vpop.f32.mrb[0].mxu0
    %v5898 = vpop.f32.mrb[0].mxu0
    %v5899 = vadd.f32 %v5844, %v5898
    %v5900 = vpop.f32.mrb[0].mxu0
    %5901 = vdwg.mxu0
    %s5902 = scalar_lea.vmem %s12, 16
    %v5903 = vld [vmem:[%s5902] sm:$0xf]
    %v5904 = vld [vmem:[%s5902 + $0x4] sm:$0xf]
    %v5905 = vld [vmem:[%s5902 + $0x8] sm:$0xf]
    %v5906 = vld [vmem:[%s5902 + $0xc] sm:$0xf]
    %s5907 = scalar_lea.vmem %s13, 1
    %v5908 = vld [vmem:[%s5907] sm:$0x1]
    %v5910 = vlaneseq
    %v5911 = vshrl.u32 %v5910, 7
    %v5912 = vsub.s32 0, %v5911
    %v5913 = vrot.slane %v5908, %v5912
    %v5919 = vunpack.c.l.b16 %v5903
    %v5920 = vunpack.c.l.b16 %v5904
    %v5921 = vunpack.c.l.b16 %v5905
    %v5922 = vunpack.c.l.b16 %v5906
    %v5923 = vpack.c.b16 %v5920, %v5919
    %v5924 = vpack.c.b16 %v5922, %v5921
    %5927 = vmatprep.subr.bf16.mxu0 0
    %5928 = vmatpush1.bf16.msra.mxu0 %v5923
    %5929 = vmatprep.subr.bf16.mxu0 0
    %5930 = vmatpush1.bf16.msra.mxu0 %v5924
    %5931 = vmatprep.subr.bf16.mxu0 0
    %5932 = vmatpush1.bf16.msra.mxu0 0
    %5933 = vmatprep.subr.bf16.mxu0 0
    %5934 = vmatpush1.bf16.msra.mxu0 0
    %5935 = vmatprep.subr.bf16.mxu0 0
    %5936 = vmatpush1.bf16.msra.mxu0 0
    %5937 = vmatprep.subr.bf16.mxu0 0
    %5938 = vmatpush1.bf16.msra.mxu0 0
    %5939 = vmatprep.subr.bf16.mxu0 0
    %5940 = vmatpush1.bf16.msra.mxu0 0
    %5941 = vmatprep.subr.bf16.mxu0 0
    %5942 = vmatpush1.bf16.msra.mxu0 0
    %5943 = vmatprep.subr.bf16.mxu0 0
    %5944 = vmatpush1.bf16.msra.mxu0 0
    %5945 = vmatprep.subr.bf16.mxu0 0
    %5946 = vmatpush1.bf16.msra.mxu0 0
    %5947 = vmatprep.subr.bf16.mxu0 0
    %5948 = vmatpush1.bf16.msra.mxu0 0
    %5949 = vmatprep.subr.bf16.mxu0 0
    %5950 = vmatpush1.bf16.msra.mxu0 0
    %5951 = vmatprep.subr.bf16.mxu0 0
    %5952 = vmatpush1.bf16.msra.mxu0 0
    %5953 = vmatprep.subr.bf16.mxu0 0
    %5954 = vmatpush1.bf16.msra.mxu0 0
    %5955 = vmatprep.subr.bf16.mxu0 0
    %5956 = vmatpush1.bf16.msra.mxu0 0
    %5957 = vmatprep.subr.bf16.mxu0 0
    %5958 = vmatpush1.bf16.msra.mxu0 0
    %5959 = vmatprep.mubr.bf16.mxu0 0
    %5960 = vmatmul.mubr.bf16.gmra.mrb[0].mxu0 %v1944
    %v5961 = vpop.f32.mrb[0].mxu0
    %v5962 = vadd.f32 %v5913, %v5961
    %v5963 = vpop.f32.mrb[0].mxu0
    %v5964 = vpop.f32.mrb[0].mxu0
    %v5965 = vadd.f32 %v5913, %v5964
    %v5966 = vpop.f32.mrb[0].mxu0
    %5967 = vmatprep.mubr.bf16.mxu0 0
    %5968 = vmatmul.mubr.bf16.gmra.mrb[0].mxu0 %v1947
    %v5969 = vpop.f32.mrb[0].mxu0
    %v5970 = vadd.f32 %v5913, %v5969
    %v5971 = vpop.f32.mrb[0].mxu0
    %v5972 = vpop.f32.mrb[0].mxu0
    %v5973 = vpop.f32.mrb[0].mxu0
    %5974 = vdwg.mxu0
    %s5975 = scalar_lea.vmem %s14, 16
    %v5976 = vld [vmem:[%s5975] sm:$0xf]
    %v5977 = vld [vmem:[%s5975 + $0x4] sm:$0xf]
    %v5978 = vld [vmem:[%s5975 + $0x8] sm:$0xf]
    %v5979 = vld [vmem:[%s5975 + $0xc] sm:$0xf]
    %s5980 = scalar_lea.vmem %s15, 1
    %v5981 = vld [vmem:[%s5980] sm:$0x1]
    %5984 = vrot.lane.b32.xlu0 %v5896, 120
    %v5985 = vpop.permute.xlu0 %5984
    %5986 = vrot.lane.b32.xlu0 %v5899, 120
    %v5987 = vpop.permute.xlu0 %5986
    %5990 = vrot.lane.b32.xlu0 %v5896, 112
    %v5991 = vpop.permute.xlu0 %5990
    %5992 = vrot.lane.b32.xlu0 %v5899, 112
    %v5993 = vpop.permute.xlu0 %5992
    %5996 = vrot.lane.b32.xlu0 %v5896, 104
    %v5997 = vpop.permute.xlu0 %5996
    %5998 = vrot.lane.b32.xlu0 %v5899, 104
    %v5999 = vpop.permute.xlu0 %5998
    %v6002 = vcombine.low %v5896, %v5991
    %v6003 = vcombine.high %v5896, %v5991
    %v6005 = vunpack.c.l.s4 1983009808
    %v6006 = vunpack.c.0.s8 %v6005
    %v6007 = vlaneseq
    %v6008 = vshrl.u32 %v6007, 7
    %v6009 = vsub.s32 %v6006, %v6008
    %v6010 = vrot.slane %v6002, %v6009
    %v6012 = vunpack.c.l.s4 1983009808
    %v6013 = vunpack.c.0.s8 %v6012
    %v6014 = vlaneseq
    %v6015 = vshrl.u32 %v6014, 7
    %v6016 = vsub.s32 %v6013, %v6015
    %v6017 = vrot.slane %v6003, %v6016
    %v6018 = vcombine.low %v5985, %v5997
    %v6019 = vcombine.high %v5985, %v5997
    %v6021 = vunpack.c.l.s4 1983009808
    %v6022 = vunpack.c.0.s8 %v6021
    %v6023 = vlaneseq
    %v6024 = vshrl.u32 %v6023, 7
    %v6025 = vsub.s32 %v6022, %v6024
    %v6026 = vrot.slane %v6018, %v6025
    %v6028 = vunpack.c.l.s4 1983009808
    %v6029 = vunpack.c.0.s8 %v6028
    %v6030 = vlaneseq
    %v6031 = vshrl.u32 %v6030, 7
    %v6032 = vsub.s32 %v6029, %v6031
    %v6033 = vrot.slane %v6019, %v6032
    %v6034 = vcombine.low %v6010, %v6026
    %v6035 = vcombine.high %v6010, %v6026
    %v6037 = vunpack.c.l.s4 1934713408
    %v6038 = vunpack.c.0.s8 %v6037
    %v6039 = vlaneseq
    %v6040 = vshrl.u32 %v6039, 7
    %v6041 = vsub.s32 %v6038, %v6040
    %v6042 = vrot.slane %v6034, %v6041
    %v6044 = vunpack.c.l.s4 1934713408
    %v6045 = vunpack.c.0.s8 %v6044
    %v6046 = vlaneseq
    %v6047 = vshrl.u32 %v6046, 7
    %v6048 = vsub.s32 %v6045, %v6047
    %v6049 = vrot.slane %v6035, %v6048
    %v6050 = vcombine.low %v6017, %v6033
    %v6051 = vcombine.high %v6017, %v6033
    %v6053 = vunpack.c.l.s4 1934713408
    %v6054 = vunpack.c.0.s8 %v6053
    %v6055 = vlaneseq
    %v6056 = vshrl.u32 %v6055, 7
    %v6057 = vsub.s32 %v6054, %v6056
    %v6058 = vrot.slane %v6050, %v6057
    %v6060 = vunpack.c.l.s4 1934713408
    %v6061 = vunpack.c.0.s8 %v6060
    %v6062 = vlaneseq
    %v6063 = vshrl.u32 %v6062, 7
    %v6064 = vsub.s32 %v6061, %v6063
    %v6065 = vrot.slane %v6051, %v6064
    %v6066 = vcombine.high %v6042, 0.0
    %v6067 = vcombine.high %v6049, 0.0
    %v6068 = vcombine.high %v6058, 0.0
    %v6069 = vcombine.high %v6065, 0.0
    %v6070 = vcombine.low %v5899, %v5993
    %v6071 = vcombine.high %v5899, %v5993
    %v6073 = vunpack.c.l.s4 1983009808
    %v6074 = vunpack.c.0.s8 %v6073
    %v6075 = vlaneseq
    %v6076 = vshrl.u32 %v6075, 7
    %v6077 = vsub.s32 %v6074, %v6076
    %v6078 = vrot.slane %v6070, %v6077
    %v6080 = vunpack.c.l.s4 1983009808
    %v6081 = vunpack.c.0.s8 %v6080
    %v6082 = vlaneseq
    %v6083 = vshrl.u32 %v6082, 7
    %v6084 = vsub.s32 %v6081, %v6083
    %v6085 = vrot.slane %v6071, %v6084
    %v6086 = vcombine.low %v5987, %v5999
    %v6087 = vcombine.high %v5987, %v5999
    %v6089 = vunpack.c.l.s4 1983009808
    %v6090 = vunpack.c.0.s8 %v6089
    %v6091 = vlaneseq
    %v6092 = vshrl.u32 %v6091, 7
    %v6093 = vsub.s32 %v6090, %v6092
    %v6094 = vrot.slane %v6086, %v6093
    %v6096 = vunpack.c.l.s4 1983009808
    %v6097 = vunpack.c.0.s8 %v6096
    %v6098 = vlaneseq
    %v6099 = vshrl.u32 %v6098, 7
    %v6100 = vsub.s32 %v6097, %v6099
    %v6101 = vrot.slane %v6087, %v6100
    %v6102 = vcombine.low %v6078, %v6094
    %v6103 = vcombine.high %v6078, %v6094
    %v6105 = vunpack.c.l.s4 1934713408
    %v6106 = vunpack.c.0.s8 %v6105
    %v6107 = vlaneseq
    %v6108 = vshrl.u32 %v6107, 7
    %v6109 = vsub.s32 %v6106, %v6108
    %v6110 = vrot.slane %v6102, %v6109
    %v6112 = vunpack.c.l.s4 1934713408
    %v6113 = vunpack.c.0.s8 %v6112
    %v6114 = vlaneseq
    %v6115 = vshrl.u32 %v6114, 7
    %v6116 = vsub.s32 %v6113, %v6115
    %v6117 = vrot.slane %v6103, %v6116
    %v6118 = vcombine.low %v6085, %v6101
    %v6119 = vcombine.high %v6085, %v6101
    %v6121 = vunpack.c.l.s4 1934713408
    %v6122 = vunpack.c.0.s8 %v6121
    %v6123 = vlaneseq
    %v6124 = vshrl.u32 %v6123, 7
    %v6125 = vsub.s32 %v6122, %v6124
    %v6126 = vrot.slane %v6118, %v6125
    %v6128 = vunpack.c.l.s4 1934713408
    %v6129 = vunpack.c.0.s8 %v6128
    %v6130 = vlaneseq
    %v6131 = vshrl.u32 %v6130, 7
    %v6132 = vsub.s32 %v6129, %v6131
    %v6133 = vrot.slane %v6119, %v6132
    %v6134 = vcombine.high %v6110, 0.0
    %v6135 = vcombine.high %v6117, 0.0
    %v6136 = vcombine.high %v6126, 0.0
    %v6137 = vcombine.high %v6133, 0.0
    %v6138 = vcombine.low %v6042, %v6049
    %v6140 = vunpack.c.l.s4 1983009808
    %v6141 = vunpack.c.0.s8 %v6140
    %v6142 = vlaneseq
    %v6143 = vshrl.u32 %v6142, 7
    %v6144 = vsub.s32 %v6141, %v6143
    %v6145 = vrot.slane %v6138, %v6144
    %v6146 = vcombine.low %v6066, %v6067
    %v6148 = vunpack.c.l.s4 1983009808
    %v6149 = vunpack.c.0.s8 %v6148
    %v6150 = vlaneseq
    %v6151 = vshrl.u32 %v6150, 7
    %v6152 = vsub.s32 %v6149, %v6151
    %v6153 = vrot.slane %v6146, %v6152
    %v6154 = vcombine.low %v6058, %v6065
    %v6156 = vunpack.c.l.s4 1983009808
    %v6157 = vunpack.c.0.s8 %v6156
    %v6158 = vlaneseq
    %v6159 = vshrl.u32 %v6158, 7
    %v6160 = vsub.s32 %v6157, %v6159
    %v6161 = vrot.slane %v6154, %v6160
    %v6162 = vcombine.low %v6068, %v6069
    %v6164 = vunpack.c.l.s4 1983009808
    %v6165 = vunpack.c.0.s8 %v6164
    %v6166 = vlaneseq
    %v6167 = vshrl.u32 %v6166, 7
    %v6168 = vsub.s32 %v6165, %v6167
    %v6169 = vrot.slane %v6162, %v6168
    %v6170 = vcombine.low %v6145, %v6153
    %v6171 = vcombine.high %v6145, %v6153
    %v6173 = vunpack.c.l.s4 1934713408
    %v6174 = vunpack.c.0.s8 %v6173
    %v6175 = vlaneseq
    %v6176 = vshrl.u32 %v6175, 7
    %v6177 = vsub.s32 %v6174, %v6176
    %v6178 = vrot.slane %v6170, %v6177
    %v6180 = vunpack.c.l.s4 1934713408
    %v6181 = vunpack.c.0.s8 %v6180
    %v6182 = vlaneseq
    %v6183 = vshrl.u32 %v6182, 7
    %v6184 = vsub.s32 %v6181, %v6183
    %v6185 = vrot.slane %v6171, %v6184
    %v6186 = vcombine.low %v6161, %v6169
    %v6187 = vcombine.high %v6161, %v6169
    %v6189 = vunpack.c.l.s4 1934713408
    %v6190 = vunpack.c.0.s8 %v6189
    %v6191 = vlaneseq
    %v6192 = vshrl.u32 %v6191, 7
    %v6193 = vsub.s32 %v6190, %v6192
    %v6194 = vrot.slane %v6186, %v6193
    %v6196 = vunpack.c.l.s4 1934713408
    %v6197 = vunpack.c.0.s8 %v6196
    %v6198 = vlaneseq
    %v6199 = vshrl.u32 %v6198, 7
    %v6200 = vsub.s32 %v6197, %v6199
    %v6201 = vrot.slane %v6187, %v6200
    %v6202 = vcombine.low %v6178, %v6194
    %v6203 = vcombine.high %v6178, %v6194
    %v6204 = vcombine.low %v6185, %v6201
    %v6205 = vcombine.high %v6185, %v6201
    %v6206 = vcombine.low %v6110, %v6117
    %v6208 = vunpack.c.l.s4 1983009808
    %v6209 = vunpack.c.0.s8 %v6208
    %v6210 = vlaneseq
    %v6211 = vshrl.u32 %v6210, 7
    %v6212 = vsub.s32 %v6209, %v6211
    %v6213 = vrot.slane %v6206, %v6212
    %v6214 = vcombine.low %v6134, %v6135
    %v6216 = vunpack.c.l.s4 1983009808
    %v6217 = vunpack.c.0.s8 %v6216
    %v6218 = vlaneseq
    %v6219 = vshrl.u32 %v6218, 7
    %v6220 = vsub.s32 %v6217, %v6219
    %v6221 = vrot.slane %v6214, %v6220
    %v6222 = vcombine.low %v6126, %v6133
    %v6224 = vunpack.c.l.s4 1983009808
    %v6225 = vunpack.c.0.s8 %v6224
    %v6226 = vlaneseq
    %v6227 = vshrl.u32 %v6226, 7
    %v6228 = vsub.s32 %v6225, %v6227
    %v6229 = vrot.slane %v6222, %v6228
    %v6230 = vcombine.low %v6136, %v6137
    %v6232 = vunpack.c.l.s4 1983009808
    %v6233 = vunpack.c.0.s8 %v6232
    %v6234 = vlaneseq
    %v6235 = vshrl.u32 %v6234, 7
    %v6236 = vsub.s32 %v6233, %v6235
    %v6237 = vrot.slane %v6230, %v6236
    %v6238 = vcombine.low %v6213, %v6221
    %v6239 = vcombine.high %v6213, %v6221
    %v6241 = vunpack.c.l.s4 1934713408
    %v6242 = vunpack.c.0.s8 %v6241
    %v6243 = vlaneseq
    %v6244 = vshrl.u32 %v6243, 7
    %v6245 = vsub.s32 %v6242, %v6244
    %v6246 = vrot.slane %v6238, %v6245
    %v6248 = vunpack.c.l.s4 1934713408
    %v6249 = vunpack.c.0.s8 %v6248
    %v6250 = vlaneseq
    %v6251 = vshrl.u32 %v6250, 7
    %v6252 = vsub.s32 %v6249, %v6251
    %v6253 = vrot.slane %v6239, %v6252
    %v6254 = vcombine.low %v6229, %v6237
    %v6255 = vcombine.high %v6229, %v6237
    %v6257 = vunpack.c.l.s4 1934713408
    %v6258 = vunpack.c.0.s8 %v6257
    %v6259 = vlaneseq
    %v6260 = vshrl.u32 %v6259, 7
    %v6261 = vsub.s32 %v6258, %v6260
    %v6262 = vrot.slane %v6254, %v6261
    %v6264 = vunpack.c.l.s4 1934713408
    %v6265 = vunpack.c.0.s8 %v6264
    %v6266 = vlaneseq
    %v6267 = vshrl.u32 %v6266, 7
    %v6268 = vsub.s32 %v6265, %v6267
    %v6269 = vrot.slane %v6255, %v6268
    %v6270 = vcombine.low %v6246, %v6262
    %v6271 = vcombine.high %v6246, %v6262
    %v6272 = vcombine.low %v6253, %v6269
    %v6273 = vcombine.high %v6253, %v6269
    %6277 = vrot.lane.b32.xlu0 %v5962, 120
    %v6278 = vpop.permute.xlu0 %6277
    %6279 = vrot.lane.b32.xlu0 %v5965, 120
    %v6280 = vpop.permute.xlu0 %6279
    %6281 = vrot.lane.b32.xlu0 %v5970, 120
    %v6282 = vpop.permute.xlu0 %6281
    %6286 = vrot.lane.b32.xlu0 %v5962, 112
    %v6287 = vpop.permute.xlu0 %6286
    %6288 = vrot.lane.b32.xlu0 %v5965, 112
    %v6289 = vpop.permute.xlu0 %6288
    %6290 = vrot.lane.b32.xlu0 %v5970, 112
    %v6291 = vpop.permute.xlu0 %6290
    %6295 = vrot.lane.b32.xlu0 %v5962, 104
    %v6296 = vpop.permute.xlu0 %6295
    %6297 = vrot.lane.b32.xlu0 %v5965, 104
    %v6298 = vpop.permute.xlu0 %6297
    %6299 = vrot.lane.b32.xlu0 %v5970, 104
    %v6300 = vpop.permute.xlu0 %6299
    %v6304 = vcombine.low %v5962, %v6287
    %v6305 = vcombine.high %v5962, %v6287
    %v6307 = vunpack.c.l.s4 1983009808
    %v6308 = vunpack.c.0.s8 %v6307
    %v6309 = vlaneseq
    %v6310 = vshrl.u32 %v6309, 7
    %v6311 = vsub.s32 %v6308, %v6310
    %v6312 = vrot.slane %v6304, %v6311
    %v6314 = vunpack.c.l.s4 1983009808
    %v6315 = vunpack.c.0.s8 %v6314
    %v6316 = vlaneseq
    %v6317 = vshrl.u32 %v6316, 7
    %v6318 = vsub.s32 %v6315, %v6317
    %v6319 = vrot.slane %v6305, %v6318
    %v6320 = vcombine.low %v6278, %v6296
    %v6321 = vcombine.high %v6278, %v6296
    %v6323 = vunpack.c.l.s4 1983009808
    %v6324 = vunpack.c.0.s8 %v6323
    %v6325 = vlaneseq
    %v6326 = vshrl.u32 %v6325, 7
    %v6327 = vsub.s32 %v6324, %v6326
    %v6328 = vrot.slane %v6320, %v6327
    %v6330 = vunpack.c.l.s4 1983009808
    %v6331 = vunpack.c.0.s8 %v6330
    %v6332 = vlaneseq
    %v6333 = vshrl.u32 %v6332, 7
    %v6334 = vsub.s32 %v6331, %v6333
    %v6335 = vrot.slane %v6321, %v6334
    %v6336 = vcombine.low %v6312, %v6328
    %v6337 = vcombine.high %v6312, %v6328
    %v6339 = vunpack.c.l.s4 1934713408
    %v6340 = vunpack.c.0.s8 %v6339
    %v6341 = vlaneseq
    %v6342 = vshrl.u32 %v6341, 7
    %v6343 = vsub.s32 %v6340, %v6342
    %v6344 = vrot.slane %v6336, %v6343
    %v6346 = vunpack.c.l.s4 1934713408
    %v6347 = vunpack.c.0.s8 %v6346
    %v6348 = vlaneseq
    %v6349 = vshrl.u32 %v6348, 7
    %v6350 = vsub.s32 %v6347, %v6349
    %v6351 = vrot.slane %v6337, %v6350
    %v6352 = vcombine.low %v6319, %v6335
    %v6353 = vcombine.high %v6319, %v6335
    %v6355 = vunpack.c.l.s4 1934713408
    %v6356 = vunpack.c.0.s8 %v6355
    %v6357 = vlaneseq
    %v6358 = vshrl.u32 %v6357, 7
    %v6359 = vsub.s32 %v6356, %v6358
    %v6360 = vrot.slane %v6352, %v6359
    %v6362 = vunpack.c.l.s4 1934713408
    %v6363 = vunpack.c.0.s8 %v6362
    %v6364 = vlaneseq
    %v6365 = vshrl.u32 %v6364, 7
    %v6366 = vsub.s32 %v6363, %v6365
    %v6367 = vrot.slane %v6353, %v6366
    %v6368 = vcombine.high %v6344, 0.0
    %v6369 = vcombine.high %v6351, 0.0
    %v6370 = vcombine.high %v6360, 0.0
    %v6371 = vcombine.high %v6367, 0.0
    %v6372 = vcombine.low %v5965, %v6289
    %v6373 = vcombine.high %v5965, %v6289
    %v6375 = vunpack.c.l.s4 1983009808
    %v6376 = vunpack.c.0.s8 %v6375
    %v6377 = vlaneseq
    %v6378 = vshrl.u32 %v6377, 7
    %v6379 = vsub.s32 %v6376, %v6378
    %v6380 = vrot.slane %v6372, %v6379
    %v6382 = vunpack.c.l.s4 1983009808
    %v6383 = vunpack.c.0.s8 %v6382
    %v6384 = vlaneseq
    %v6385 = vshrl.u32 %v6384, 7
    %v6386 = vsub.s32 %v6383, %v6385
    %v6387 = vrot.slane %v6373, %v6386
    %v6388 = vcombine.low %v6280, %v6298
    %v6389 = vcombine.high %v6280, %v6298
    %v6391 = vunpack.c.l.s4 1983009808
    %v6392 = vunpack.c.0.s8 %v6391
    %v6393 = vlaneseq
    %v6394 = vshrl.u32 %v6393, 7
    %v6395 = vsub.s32 %v6392, %v6394
    %v6396 = vrot.slane %v6388, %v6395
    %v6398 = vunpack.c.l.s4 1983009808
    %v6399 = vunpack.c.0.s8 %v6398
    %v6400 = vlaneseq
    %v6401 = vshrl.u32 %v6400, 7
    %v6402 = vsub.s32 %v6399, %v6401
    %v6403 = vrot.slane %v6389, %v6402
    %v6404 = vcombine.low %v6380, %v6396
    %v6405 = vcombine.high %v6380, %v6396
    %v6407 = vunpack.c.l.s4 1934713408
    %v6408 = vunpack.c.0.s8 %v6407
    %v6409 = vlaneseq
    %v6410 = vshrl.u32 %v6409, 7
    %v6411 = vsub.s32 %v6408, %v6410
    %v6412 = vrot.slane %v6404, %v6411
    %v6414 = vunpack.c.l.s4 1934713408
    %v6415 = vunpack.c.0.s8 %v6414
    %v6416 = vlaneseq
    %v6417 = vshrl.u32 %v6416, 7
    %v6418 = vsub.s32 %v6415, %v6417
    %v6419 = vrot.slane %v6405, %v6418
    %v6420 = vcombine.low %v6387, %v6403
    %v6421 = vcombine.high %v6387, %v6403
    %v6423 = vunpack.c.l.s4 1934713408
    %v6424 = vunpack.c.0.s8 %v6423
    %v6425 = vlaneseq
    %v6426 = vshrl.u32 %v6425, 7
    %v6427 = vsub.s32 %v6424, %v6426
    %v6428 = vrot.slane %v6420, %v6427
    %v6430 = vunpack.c.l.s4 1934713408
    %v6431 = vunpack.c.0.s8 %v6430
    %v6432 = vlaneseq
    %v6433 = vshrl.u32 %v6432, 7
    %v6434 = vsub.s32 %v6431, %v6433
    %v6435 = vrot.slane %v6421, %v6434
    %v6436 = vcombine.high %v6412, 0.0
    %v6437 = vcombine.high %v6419, 0.0
    %v6438 = vcombine.high %v6428, 0.0
    %v6439 = vcombine.high %v6435, 0.0
    %v6440 = vcombine.low %v5970, %v6291
    %v6442 = vunpack.c.l.s4 1983009808
    %v6443 = vunpack.c.0.s8 %v6442
    %v6444 = vlaneseq
    %v6445 = vshrl.u32 %v6444, 7
    %v6446 = vsub.s32 %v6443, %v6445
    %v6447 = vrot.slane %v6440, %v6446
    %v6448 = vcombine.low %v6282, %v6300
    %v6450 = vunpack.c.l.s4 1983009808
    %v6451 = vunpack.c.0.s8 %v6450
    %v6452 = vlaneseq
    %v6453 = vshrl.u32 %v6452, 7
    %v6454 = vsub.s32 %v6451, %v6453
    %v6455 = vrot.slane %v6448, %v6454
    %v6456 = vcombine.low %v6447, %v6455
    %v6457 = vcombine.high %v6447, %v6455
    %v6459 = vunpack.c.l.s4 1934713408
    %v6460 = vunpack.c.0.s8 %v6459
    %v6461 = vlaneseq
    %v6462 = vshrl.u32 %v6461, 7
    %v6463 = vsub.s32 %v6460, %v6462
    %v6464 = vrot.slane %v6456, %v6463
    %v6466 = vunpack.c.l.s4 1934713408
    %v6467 = vunpack.c.0.s8 %v6466
    %v6468 = vlaneseq
    %v6469 = vshrl.u32 %v6468, 7
    %v6470 = vsub.s32 %v6467, %v6469
    %v6471 = vrot.slane %v6457, %v6470
    %v6472 = vcombine.high %v6464, 0.0
    %v6473 = vcombine.high %v6471, 0.0
    %v6474 = vcombine.low %v6344, %v6351
    %v6476 = vunpack.c.l.s4 1983009808
    %v6477 = vunpack.c.0.s8 %v6476
    %v6478 = vlaneseq
    %v6479 = vshrl.u32 %v6478, 7
    %v6480 = vsub.s32 %v6477, %v6479
    %v6481 = vrot.slane %v6474, %v6480
    %v6482 = vcombine.low %v6368, %v6369
    %v6484 = vunpack.c.l.s4 1983009808
    %v6485 = vunpack.c.0.s8 %v6484
    %v6486 = vlaneseq
    %v6487 = vshrl.u32 %v6486, 7
    %v6488 = vsub.s32 %v6485, %v6487
    %v6489 = vrot.slane %v6482, %v6488
    %v6490 = vcombine.low %v6360, %v6367
    %v6492 = vunpack.c.l.s4 1983009808
    %v6493 = vunpack.c.0.s8 %v6492
    %v6494 = vlaneseq
    %v6495 = vshrl.u32 %v6494, 7
    %v6496 = vsub.s32 %v6493, %v6495
    %v6497 = vrot.slane %v6490, %v6496
    %v6498 = vcombine.low %v6370, %v6371
    %v6500 = vunpack.c.l.s4 1983009808
    %v6501 = vunpack.c.0.s8 %v6500
    %v6502 = vlaneseq
    %v6503 = vshrl.u32 %v6502, 7
    %v6504 = vsub.s32 %v6501, %v6503
    %v6505 = vrot.slane %v6498, %v6504
    %v6506 = vcombine.low %v6481, %v6489
    %v6507 = vcombine.high %v6481, %v6489
    %v6509 = vunpack.c.l.s4 1934713408
    %v6510 = vunpack.c.0.s8 %v6509
    %v6511 = vlaneseq
    %v6512 = vshrl.u32 %v6511, 7
    %v6513 = vsub.s32 %v6510, %v6512
    %v6514 = vrot.slane %v6506, %v6513
    %v6516 = vunpack.c.l.s4 1934713408
    %v6517 = vunpack.c.0.s8 %v6516
    %v6518 = vlaneseq
    %v6519 = vshrl.u32 %v6518, 7
    %v6520 = vsub.s32 %v6517, %v6519
    %v6521 = vrot.slane %v6507, %v6520
    %v6522 = vcombine.low %v6497, %v6505
    %v6523 = vcombine.high %v6497, %v6505
    %v6525 = vunpack.c.l.s4 1934713408
    %v6526 = vunpack.c.0.s8 %v6525
    %v6527 = vlaneseq
    %v6528 = vshrl.u32 %v6527, 7
    %v6529 = vsub.s32 %v6526, %v6528
    %v6530 = vrot.slane %v6522, %v6529
    %v6532 = vunpack.c.l.s4 1934713408
    %v6533 = vunpack.c.0.s8 %v6532
    %v6534 = vlaneseq
    %v6535 = vshrl.u32 %v6534, 7
    %v6536 = vsub.s32 %v6533, %v6535
    %v6537 = vrot.slane %v6523, %v6536
    %v6538 = vcombine.low %v6514, %v6530
    %v6539 = vcombine.high %v6514, %v6530
    %v6540 = vcombine.low %v6521, %v6537
    %v6541 = vcombine.high %v6521, %v6537
    %v6542 = vcombine.low %v6412, %v6419
    %v6544 = vunpack.c.l.s4 1983009808
    %v6545 = vunpack.c.0.s8 %v6544
    %v6546 = vlaneseq
    %v6547 = vshrl.u32 %v6546, 7
    %v6548 = vsub.s32 %v6545, %v6547
    %v6549 = vrot.slane %v6542, %v6548
    %v6550 = vcombine.low %v6436, %v6437
    %v6552 = vunpack.c.l.s4 1983009808
    %v6553 = vunpack.c.0.s8 %v6552
    %v6554 = vlaneseq
    %v6555 = vshrl.u32 %v6554, 7
    %v6556 = vsub.s32 %v6553, %v6555
    %v6557 = vrot.slane %v6550, %v6556
    %v6558 = vcombine.low %v6428, %v6435
    %v6560 = vunpack.c.l.s4 1983009808
    %v6561 = vunpack.c.0.s8 %v6560
    %v6562 = vlaneseq
    %v6563 = vshrl.u32 %v6562, 7
    %v6564 = vsub.s32 %v6561, %v6563
    %v6565 = vrot.slane %v6558, %v6564
    %v6566 = vcombine.low %v6438, %v6439
    %v6568 = vunpack.c.l.s4 1983009808
    %v6569 = vunpack.c.0.s8 %v6568
    %v6570 = vlaneseq
    %v6571 = vshrl.u32 %v6570, 7
    %v6572 = vsub.s32 %v6569, %v6571
    %v6573 = vrot.slane %v6566, %v6572
    %v6574 = vcombine.low %v6549, %v6557
    %v6575 = vcombine.high %v6549, %v6557
    %v6577 = vunpack.c.l.s4 1934713408
    %v6578 = vunpack.c.0.s8 %v6577
    %v6579 = vlaneseq
    %v6580 = vshrl.u32 %v6579, 7
    %v6581 = vsub.s32 %v6578, %v6580
    %v6582 = vrot.slane %v6574, %v6581
    %v6584 = vunpack.c.l.s4 1934713408
    %v6585 = vunpack.c.0.s8 %v6584
    %v6586 = vlaneseq
    %v6587 = vshrl.u32 %v6586, 7
    %v6588 = vsub.s32 %v6585, %v6587
    %v6589 = vrot.slane %v6575, %v6588
    %v6590 = vcombine.low %v6565, %v6573
    %v6591 = vcombine.high %v6565, %v6573
    %v6593 = vunpack.c.l.s4 1934713408
    %v6594 = vunpack.c.0.s8 %v6593
    %v6595 = vlaneseq
    %v6596 = vshrl.u32 %v6595, 7
    %v6597 = vsub.s32 %v6594, %v6596
    %v6598 = vrot.slane %v6590, %v6597
    %v6600 = vunpack.c.l.s4 1934713408
    %v6601 = vunpack.c.0.s8 %v6600
    %v6602 = vlaneseq
    %v6603 = vshrl.u32 %v6602, 7
    %v6604 = vsub.s32 %v6601, %v6603
    %v6605 = vrot.slane %v6591, %v6604
    %v6606 = vcombine.low %v6582, %v6598
    %v6607 = vcombine.high %v6582, %v6598
    %v6608 = vcombine.low %v6589, %v6605
    %v6609 = vcombine.high %v6589, %v6605
    %v6610 = vcombine.low %v6464, %v6471
    %v6612 = vunpack.c.l.s4 1983009808
    %v6613 = vunpack.c.0.s8 %v6612
    %v6614 = vlaneseq
    %v6615 = vshrl.u32 %v6614, 7
    %v6616 = vsub.s32 %v6613, %v6615
    %v6617 = vrot.slane %v6610, %v6616
    %v6618 = vcombine.low %v6472, %v6473
    %v6620 = vunpack.c.l.s4 1983009808
    %v6621 = vunpack.c.0.s8 %v6620
    %v6622 = vlaneseq
    %v6623 = vshrl.u32 %v6622, 7
    %v6624 = vsub.s32 %v6621, %v6623
    %v6625 = vrot.slane %v6618, %v6624
    %v6626 = vcombine.low %v6617, %v6625
    %v6627 = vcombine.high %v6617, %v6625
    %v6629 = vunpack.c.l.s4 1934713408
    %v6630 = vunpack.c.0.s8 %v6629
    %v6631 = vlaneseq
    %v6632 = vshrl.u32 %v6631, 7
    %v6633 = vsub.s32 %v6630, %v6632
    %v6634 = vrot.slane %v6626, %v6633
    %v6636 = vunpack.c.l.s4 1934713408
    %v6637 = vunpack.c.0.s8 %v6636
    %v6638 = vlaneseq
    %v6639 = vshrl.u32 %v6638, 7
    %v6640 = vsub.s32 %v6637, %v6639
    %v6641 = vrot.slane %v6627, %v6640
    %v6642 = vcombine.high %v6634, 0.0
    %v6643 = vcombine.high %v6641, 0.0
    %v6656 = vcombine.high %v6538, %v6538
    %v6657 = vcombine.high %v6606, %v6606
    %v6658 = vcombine.high %v6539, %v6539
    %v6659 = vcombine.high %v6607, %v6607
    %v6660 = vcombine.high %v6540, %v6540
    %v6661 = vcombine.high %v6608, %v6608
    %v6662 = vcombine.high %v6541, %v6541
    %v6663 = vcombine.high %v6609, %v6609
    %6664 = vrot.lane.b32.xlu0 %v5962, 96
    %v6665 = vpop.permute.xlu0 %6664
    %6666 = vrot.lane.b32.xlu0 %v5965, 96
    %v6667 = vpop.permute.xlu0 %6666
    %6668 = vrot.lane.b32.xlu0 %v5970, 96
    %v6669 = vpop.permute.xlu0 %6668
    %6670 = vrot.lane.b32.xlu0 %v6278, 96
    %v6671 = vpop.permute.xlu0 %6670
    %6672 = vrot.lane.b32.xlu0 %v6280, 96
    %v6673 = vpop.permute.xlu0 %6672
    %6674 = vrot.lane.b32.xlu0 %v6282, 96
    %v6675 = vpop.permute.xlu0 %6674
    %6676 = vrot.lane.b32.xlu0 %v6287, 96
    %v6677 = vpop.permute.xlu0 %6676
    %6678 = vrot.lane.b32.xlu0 %v6289, 96
    %v6679 = vpop.permute.xlu0 %6678
    %6680 = vrot.lane.b32.xlu0 %v6291, 96
    %v6681 = vpop.permute.xlu0 %6680
    %6682 = vrot.lane.b32.xlu0 %v6296, 96
    %v6683 = vpop.permute.xlu0 %6682
    %6684 = vrot.lane.b32.xlu0 %v6298, 96
    %v6685 = vpop.permute.xlu0 %6684
    %6686 = vrot.lane.b32.xlu0 %v6300, 96
    %v6687 = vpop.permute.xlu0 %6686
    %v6700 = vcombine.low %v6665, %v6677
    %v6701 = vcombine.high %v6665, %v6677
    %v6703 = vunpack.c.l.s4 1983009808
    %v6704 = vunpack.c.0.s8 %v6703
    %v6705 = vlaneseq
    %v6706 = vshrl.u32 %v6705, 7
    %v6707 = vsub.s32 %v6704, %v6706
    %v6708 = vrot.slane %v6700, %v6707
    %v6710 = vunpack.c.l.s4 1983009808
    %v6711 = vunpack.c.0.s8 %v6710
    %v6712 = vlaneseq
    %v6713 = vshrl.u32 %v6712, 7
    %v6714 = vsub.s32 %v6711, %v6713
    %v6715 = vrot.slane %v6701, %v6714
    %v6716 = vcombine.low %v6671, %v6683
    %v6717 = vcombine.high %v6671, %v6683
    %v6719 = vunpack.c.l.s4 1983009808
    %v6720 = vunpack.c.0.s8 %v6719
    %v6721 = vlaneseq
    %v6722 = vshrl.u32 %v6721, 7
    %v6723 = vsub.s32 %v6720, %v6722
    %v6724 = vrot.slane %v6716, %v6723
    %v6726 = vunpack.c.l.s4 1983009808
    %v6727 = vunpack.c.0.s8 %v6726
    %v6728 = vlaneseq
    %v6729 = vshrl.u32 %v6728, 7
    %v6730 = vsub.s32 %v6727, %v6729
    %v6731 = vrot.slane %v6717, %v6730
    %v6732 = vcombine.low %v6708, %v6724
    %v6733 = vcombine.high %v6708, %v6724
    %v6735 = vunpack.c.l.s4 1934713408
    %v6736 = vunpack.c.0.s8 %v6735
    %v6737 = vlaneseq
    %v6738 = vshrl.u32 %v6737, 7
    %v6739 = vsub.s32 %v6736, %v6738
    %v6740 = vrot.slane %v6732, %v6739
    %v6742 = vunpack.c.l.s4 1934713408
    %v6743 = vunpack.c.0.s8 %v6742
    %v6744 = vlaneseq
    %v6745 = vshrl.u32 %v6744, 7
    %v6746 = vsub.s32 %v6743, %v6745
    %v6747 = vrot.slane %v6733, %v6746
    %v6748 = vcombine.low %v6715, %v6731
    %v6749 = vcombine.high %v6715, %v6731
    %v6751 = vunpack.c.l.s4 1934713408
    %v6752 = vunpack.c.0.s8 %v6751
    %v6753 = vlaneseq
    %v6754 = vshrl.u32 %v6753, 7
    %v6755 = vsub.s32 %v6752, %v6754
    %v6756 = vrot.slane %v6748, %v6755
    %v6758 = vunpack.c.l.s4 1934713408
    %v6759 = vunpack.c.0.s8 %v6758
    %v6760 = vlaneseq
    %v6761 = vshrl.u32 %v6760, 7
    %v6762 = vsub.s32 %v6759, %v6761
    %v6763 = vrot.slane %v6749, %v6762
    %v6764 = vcombine.high %v6740, 0.0
    %v6765 = vcombine.high %v6747, 0.0
    %v6766 = vcombine.high %v6756, 0.0
    %v6767 = vcombine.high %v6763, 0.0
    %v6768 = vcombine.low %v6667, %v6679
    %v6769 = vcombine.high %v6667, %v6679
    %v6771 = vunpack.c.l.s4 1983009808
    %v6772 = vunpack.c.0.s8 %v6771
    %v6773 = vlaneseq
    %v6774 = vshrl.u32 %v6773, 7
    %v6775 = vsub.s32 %v6772, %v6774
    %v6776 = vrot.slane %v6768, %v6775
    %v6778 = vunpack.c.l.s4 1983009808
    %v6779 = vunpack.c.0.s8 %v6778
    %v6780 = vlaneseq
    %v6781 = vshrl.u32 %v6780, 7
    %v6782 = vsub.s32 %v6779, %v6781
    %v6783 = vrot.slane %v6769, %v6782
    %v6784 = vcombine.low %v6673, %v6685
    %v6785 = vcombine.high %v6673, %v6685
    %v6787 = vunpack.c.l.s4 1983009808
    %v6788 = vunpack.c.0.s8 %v6787
    %v6789 = vlaneseq
    %v6790 = vshrl.u32 %v6789, 7
    %v6791 = vsub.s32 %v6788, %v6790
    %v6792 = vrot.slane %v6784, %v6791
    %v6794 = vunpack.c.l.s4 1983009808
    %v6795 = vunpack.c.0.s8 %v6794
    %v6796 = vlaneseq
    %v6797 = vshrl.u32 %v6796, 7
    %v6798 = vsub.s32 %v6795, %v6797
    %v6799 = vrot.slane %v6785, %v6798
    %v6800 = vcombine.low %v6776, %v6792
    %v6801 = vcombine.high %v6776, %v6792
    %v6803 = vunpack.c.l.s4 1934713408
    %v6804 = vunpack.c.0.s8 %v6803
    %v6805 = vlaneseq
    %v6806 = vshrl.u32 %v6805, 7
    %v6807 = vsub.s32 %v6804, %v6806
    %v6808 = vrot.slane %v6800, %v6807
    %v6810 = vunpack.c.l.s4 1934713408
    %v6811 = vunpack.c.0.s8 %v6810
    %v6812 = vlaneseq
    %v6813 = vshrl.u32 %v6812, 7
    %v6814 = vsub.s32 %v6811, %v6813
    %v6815 = vrot.slane %v6801, %v6814
    %v6816 = vcombine.low %v6783, %v6799
    %v6817 = vcombine.high %v6783, %v6799
    %v6819 = vunpack.c.l.s4 1934713408
    %v6820 = vunpack.c.0.s8 %v6819
    %v6821 = vlaneseq
    %v6822 = vshrl.u32 %v6821, 7
    %v6823 = vsub.s32 %v6820, %v6822
    %v6824 = vrot.slane %v6816, %v6823
    %v6826 = vunpack.c.l.s4 1934713408
    %v6827 = vunpack.c.0.s8 %v6826
    %v6828 = vlaneseq
    %v6829 = vshrl.u32 %v6828, 7
    %v6830 = vsub.s32 %v6827, %v6829
    %v6831 = vrot.slane %v6817, %v6830
    %v6832 = vcombine.high %v6808, 0.0
    %v6833 = vcombine.high %v6815, 0.0
    %v6834 = vcombine.high %v6824, 0.0
    %v6835 = vcombine.high %v6831, 0.0
    %v6836 = vcombine.low %v6669, %v6681
    %v6838 = vunpack.c.l.s4 1983009808
    %v6839 = vunpack.c.0.s8 %v6838
    %v6840 = vlaneseq
    %v6841 = vshrl.u32 %v6840, 7
    %v6842 = vsub.s32 %v6839, %v6841
    %v6843 = vrot.slane %v6836, %v6842
    %v6844 = vcombine.low %v6675, %v6687
    %v6846 = vunpack.c.l.s4 1983009808
    %v6847 = vunpack.c.0.s8 %v6846
    %v6848 = vlaneseq
    %v6849 = vshrl.u32 %v6848, 7
    %v6850 = vsub.s32 %v6847, %v6849
    %v6851 = vrot.slane %v6844, %v6850
    %v6852 = vcombine.low %v6843, %v6851
    %v6853 = vcombine.high %v6843, %v6851
    %v6855 = vunpack.c.l.s4 1934713408
    %v6856 = vunpack.c.0.s8 %v6855
    %v6857 = vlaneseq
    %v6858 = vshrl.u32 %v6857, 7
    %v6859 = vsub.s32 %v6856, %v6858
    %v6860 = vrot.slane %v6852, %v6859
    %v6862 = vunpack.c.l.s4 1934713408
    %v6863 = vunpack.c.0.s8 %v6862
    %v6864 = vlaneseq
    %v6865 = vshrl.u32 %v6864, 7
    %v6866 = vsub.s32 %v6863, %v6865
    %v6867 = vrot.slane %v6853, %v6866
    %v6868 = vcombine.high %v6860, 0.0
    %v6869 = vcombine.high %v6867, 0.0
    %v6870 = vcombine.low %v6740, %v6747
    %v6872 = vunpack.c.l.s4 1983009808
    %v6873 = vunpack.c.0.s8 %v6872
    %v6874 = vlaneseq
    %v6875 = vshrl.u32 %v6874, 7
    %v6876 = vsub.s32 %v6873, %v6875
    %v6877 = vrot.slane %v6870, %v6876
    %v6878 = vcombine.low %v6764, %v6765
    %v6880 = vunpack.c.l.s4 1983009808
    %v6881 = vunpack.c.0.s8 %v6880
    %v6882 = vlaneseq
    %v6883 = vshrl.u32 %v6882, 7
    %v6884 = vsub.s32 %v6881, %v6883
    %v6885 = vrot.slane %v6878, %v6884
    %v6886 = vcombine.low %v6756, %v6763
    %v6888 = vunpack.c.l.s4 1983009808
    %v6889 = vunpack.c.0.s8 %v6888
    %v6890 = vlaneseq
    %v6891 = vshrl.u32 %v6890, 7
    %v6892 = vsub.s32 %v6889, %v6891
    %v6893 = vrot.slane %v6886, %v6892
    %v6894 = vcombine.low %v6766, %v6767
    %v6896 = vunpack.c.l.s4 1983009808
    %v6897 = vunpack.c.0.s8 %v6896
    %v6898 = vlaneseq
    %v6899 = vshrl.u32 %v6898, 7
    %v6900 = vsub.s32 %v6897, %v6899
    %v6901 = vrot.slane %v6894, %v6900
    %v6902 = vcombine.low %v6877, %v6885
    %v6903 = vcombine.high %v6877, %v6885
    %v6905 = vunpack.c.l.s4 1934713408
    %v6906 = vunpack.c.0.s8 %v6905
    %v6907 = vlaneseq
    %v6908 = vshrl.u32 %v6907, 7
    %v6909 = vsub.s32 %v6906, %v6908
    %v6910 = vrot.slane %v6902, %v6909
    %v6912 = vunpack.c.l.s4 1934713408
    %v6913 = vunpack.c.0.s8 %v6912
    %v6914 = vlaneseq
    %v6915 = vshrl.u32 %v6914, 7
    %v6916 = vsub.s32 %v6913, %v6915
    %v6917 = vrot.slane %v6903, %v6916
    %v6918 = vcombine.low %v6893, %v6901
    %v6919 = vcombine.high %v6893, %v6901
    %v6921 = vunpack.c.l.s4 1934713408
    %v6922 = vunpack.c.0.s8 %v6921
    %v6923 = vlaneseq
    %v6924 = vshrl.u32 %v6923, 7
    %v6925 = vsub.s32 %v6922, %v6924
    %v6926 = vrot.slane %v6918, %v6925
    %v6928 = vunpack.c.l.s4 1934713408
    %v6929 = vunpack.c.0.s8 %v6928
    %v6930 = vlaneseq
    %v6931 = vshrl.u32 %v6930, 7
    %v6932 = vsub.s32 %v6929, %v6931
    %v6933 = vrot.slane %v6919, %v6932
    %v6934 = vcombine.low %v6910, %v6926
    %v6935 = vcombine.high %v6910, %v6926
    %v6936 = vcombine.low %v6917, %v6933
    %v6937 = vcombine.high %v6917, %v6933
    %v6938 = vcombine.low %v6808, %v6815
    %v6940 = vunpack.c.l.s4 1983009808
    %v6941 = vunpack.c.0.s8 %v6940
    %v6942 = vlaneseq
    %v6943 = vshrl.u32 %v6942, 7
    %v6944 = vsub.s32 %v6941, %v6943
    %v6945 = vrot.slane %v6938, %v6944
    %v6946 = vcombine.low %v6832, %v6833
    %v6948 = vunpack.c.l.s4 1983009808
    %v6949 = vunpack.c.0.s8 %v6948
    %v6950 = vlaneseq
    %v6951 = vshrl.u32 %v6950, 7
    %v6952 = vsub.s32 %v6949, %v6951
    %v6953 = vrot.slane %v6946, %v6952
    %v6954 = vcombine.low %v6824, %v6831
    %v6956 = vunpack.c.l.s4 1983009808
    %v6957 = vunpack.c.0.s8 %v6956
    %v6958 = vlaneseq
    %v6959 = vshrl.u32 %v6958, 7
    %v6960 = vsub.s32 %v6957, %v6959
    %v6961 = vrot.slane %v6954, %v6960
    %v6962 = vcombine.low %v6834, %v6835
    %v6964 = vunpack.c.l.s4 1983009808
    %v6965 = vunpack.c.0.s8 %v6964
    %v6966 = vlaneseq
    %v6967 = vshrl.u32 %v6966, 7
    %v6968 = vsub.s32 %v6965, %v6967
    %v6969 = vrot.slane %v6962, %v6968
    %v6970 = vcombine.low %v6945, %v6953
    %v6971 = vcombine.high %v6945, %v6953
    %v6973 = vunpack.c.l.s4 1934713408
    %v6974 = vunpack.c.0.s8 %v6973
    %v6975 = vlaneseq
    %v6976 = vshrl.u32 %v6975, 7
    %v6977 = vsub.s32 %v6974, %v6976
    %v6978 = vrot.slane %v6970, %v6977
    %v6980 = vunpack.c.l.s4 1934713408
    %v6981 = vunpack.c.0.s8 %v6980
    %v6982 = vlaneseq
    %v6983 = vshrl.u32 %v6982, 7
    %v6984 = vsub.s32 %v6981, %v6983
    %v6985 = vrot.slane %v6971, %v6984
    %v6986 = vcombine.low %v6961, %v6969
    %v6987 = vcombine.high %v6961, %v6969
    %v6989 = vunpack.c.l.s4 1934713408
    %v6990 = vunpack.c.0.s8 %v6989
    %v6991 = vlaneseq
    %v6992 = vshrl.u32 %v6991, 7
    %v6993 = vsub.s32 %v6990, %v6992
    %v6994 = vrot.slane %v6986, %v6993
    %v6996 = vunpack.c.l.s4 1934713408
    %v6997 = vunpack.c.0.s8 %v6996
    %v6998 = vlaneseq
    %v6999 = vshrl.u32 %v6998, 7
    %v7000 = vsub.s32 %v6997, %v6999
    %v7001 = vrot.slane %v6987, %v7000
    %v7002 = vcombine.low %v6978, %v6994
    %v7003 = vcombine.high %v6978, %v6994
    %v7004 = vcombine.low %v6985, %v7001
    %v7005 = vcombine.high %v6985, %v7001
    %v7006 = vcombine.low %v6860, %v6867
    %v7008 = vunpack.c.l.s4 1983009808
    %v7009 = vunpack.c.0.s8 %v7008
    %v7010 = vlaneseq
    %v7011 = vshrl.u32 %v7010, 7
    %v7012 = vsub.s32 %v7009, %v7011
    %v7013 = vrot.slane %v7006, %v7012
    %v7014 = vcombine.low %v6868, %v6869
    %v7016 = vunpack.c.l.s4 1983009808
    %v7017 = vunpack.c.0.s8 %v7016
    %v7018 = vlaneseq
    %v7019 = vshrl.u32 %v7018, 7
    %v7020 = vsub.s32 %v7017, %v7019
    %v7021 = vrot.slane %v7014, %v7020
    %v7022 = vcombine.low %v7013, %v7021
    %v7023 = vcombine.high %v7013, %v7021
    %v7025 = vunpack.c.l.s4 1934713408
    %v7026 = vunpack.c.0.s8 %v7025
    %v7027 = vlaneseq
    %v7028 = vshrl.u32 %v7027, 7
    %v7029 = vsub.s32 %v7026, %v7028
    %v7030 = vrot.slane %v7022, %v7029
    %v7032 = vunpack.c.l.s4 1934713408
    %v7033 = vunpack.c.0.s8 %v7032
    %v7034 = vlaneseq
    %v7035 = vshrl.u32 %v7034, 7
    %v7036 = vsub.s32 %v7033, %v7035
    %v7037 = vrot.slane %v7023, %v7036
    %v7038 = vcombine.high %v7030, 0.0
    %v7039 = vcombine.high %v7037, 0.0
    %v7052 = vcombine.high %v6934, %v6934
    %v7053 = vcombine.high %v7002, %v7002
    %v7054 = vcombine.high %v6935, %v6935
    %v7055 = vcombine.high %v7003, %v7003
    %v7056 = vcombine.high %v6936, %v6936
    %v7057 = vcombine.high %v7004, %v7004
    %v7058 = vcombine.high %v6937, %v6937
    %v7059 = vcombine.high %v7005, %v7005
    %v7060 = vcombine.low %v6538, %v6656
    %v7061 = vcombine.low %v6606, %v6657
    %v7062 = vcombine.low %v6634, %v6539
    %v7063 = vcombine.low %v6658, %v6607
    %v7064 = vcombine.low %v6659, %v6642
    %v7065 = vcombine.low %v6540, %v6660
    %v7066 = vcombine.low %v6608, %v6661
    %v7067 = vcombine.low %v6641, %v6541
    %v7068 = vcombine.low %v6662, %v6609
    %v7069 = vcombine.low %v6663, %v6643
    %v7071 = vsel %vm1066, %v6202, 0
    %v7074 = vsel %vm1066, %v6270, 0
    %v7077 = vsel %vm1066, %v6203, 0
    %v7080 = vsel %vm1066, %v6271, 0
    %v7083 = vsel %vm1066, %v6204, 0
    %v7086 = vsel %vm1066, %v6272, 0
    %v7089 = vsel %vm1066, %v6205, 0
    %v7092 = vsel %vm1066, %v6273, 0
    %v7094 = vsel %vm1066, %v7060, 0
    %v7096 = vsel %vm1066, %v7061, 0
    %v7098 = vsel %vm1066, %v7062, 0
    %v7100 = vsel %vm1066, %v7063, 0
    %v7102 = vsel %vm1066, %v7064, 0
    %v7104 = vsel %vm1066, %v7065, 0
    %v7106 = vsel %vm1066, %v7066, 0
    %v7108 = vsel %vm1066, %v7067, 0
    %v7110 = vsel %vm1066, %v7068, 0
    %v7112 = vsel %vm1066, %v7069, 0
    %7114 = vmatprep.subr.mxu0 0.0
    %7115 = vmatpush1.xpose.msra.mxu0 %v7094
    %7116 = vmatprep.subr.mxu0 0.0
    %7117 = vmatpush1.xpose.msra.mxu0 %v7096
    %7118 = vmatprep.subr.mxu0 0.0
    %7119 = vmatpush1.xpose.msra.mxu0 %v7098
    %7120 = vmatprep.subr.mxu0 0.0
    %7121 = vmatpush1.xpose.msra.mxu0 %v7100
    %7122 = vmatprep.subr.mxu0 0.0
    %7123 = vmatpush1.xpose.msra.mxu0 %v7102
    %7124 = vmatprep.subr.mxu0 0.0
    %7125 = vmatpush1.xpose.msra.mxu0 %v7104
    %7126 = vmatprep.subr.mxu0 0.0
    %7127 = vmatpush1.xpose.msra.mxu0 %v7106
    %7128 = vmatprep.subr.mxu0 0.0
    %7129 = vmatpush1.xpose.msra.mxu0 %v7108
    %7130 = vmatprep.subr.mxu0 0.0
    %7131 = vmatpush1.xpose.msra.mxu0 %v7110
    %7132 = vmatprep.subr.mxu0 0.0
    %7133 = vmatpush1.xpose.msra.mxu0 %v7112
    %7134 = vmatprep.subr.mxu0 0.0
    %7135 = vmatpush1.xpose.msra.mxu0 0.0
    %7136 = vmatprep.subr.mxu0 0.0
    %7137 = vmatpush1.xpose.msra.mxu0 0.0
    %7138 = vmatprep.subr.mxu0 0.0
    %7139 = vmatpush1.xpose.msra.mxu0 0.0
    %7140 = vmatprep.subr.mxu0 0.0
    %7141 = vmatpush1.xpose.msra.mxu0 0.0
    %7142 = vmatprep.subr.mxu0 0.0
    %7143 = vmatpush1.xpose.msra.mxu0 0.0
    %7144 = vmatprep.subr.mxu0 0.0
    %7145 = vmatpush1.xpose.msra.mxu0 0.0
    %7146 = vmatprep.subr.mxu0 0.0
    %7147 = vmatpush1.xpose.msra.mxu0 0.0
    %7148 = vmatprep.subr.mxu0 0.0
    %7149 = vmatpush1.xpose.msra.mxu0 0.0
    %7150 = vmatprep.subr.mxu0 0.0
    %7151 = vmatpush1.xpose.msra.mxu0 0.0
    %7152 = vmatprep.subr.mxu0 0.0
    %7153 = vmatpush1.xpose.msra.mxu0 0.0
    %7154 = vmatprep.subr.mxu0 0.0
    %7155 = vmatpush1.xpose.msra.mxu0 0.0
    %7156 = vmatprep.subr.mxu0 0.0
    %7157 = vmatpush1.xpose.msra.mxu0 0.0
    %7158 = vmatprep.subr.mxu0 0.0
    %7159 = vmatpush1.xpose.msra.mxu0 0.0
    %7160 = vmatprep.subr.mxu0 0.0
    %7161 = vmatpush1.xpose.msra.mxu0 0.0
    %7162 = vmatprep.subr.mxu0 0.0
    %7163 = vmatpush1.xpose.msra.mxu0 0.0
    %7164 = vmatprep.subr.mxu0 0.0
    %7165 = vmatpush1.xpose.msra.mxu0 0.0
    %7166 = vmatprep.subr.mxu0 0.0
    %7167 = vmatpush1.xpose.msra.mxu0 0.0
    %7168 = vmatprep.subr.mxu0 0.0
    %7169 = vmatpush1.xpose.msra.mxu0 0.0
    %7170 = vmatprep.subr.mxu0 0.0
    %7171 = vmatpush1.xpose.msra.mxu0 0.0
    %7172 = vmatprep.subr.mxu0 0.0
    %7173 = vmatpush1.xpose.msra.mxu0 0.0
    %7174 = vmatprep.subr.mxu0 0.0
    %7175 = vmatpush1.xpose.msra.mxu0 0.0
    %7176 = vmatprep.subr.mxu0 0.0
    %7177 = vmatpush1.xpose.msra.mxu0 0.0
    %7178 = vmatprep.mubr.f32.mxu0 0.0
    %7179 = vmatmul.mubr.f32.gmra.mrb[0].mxu0 %v7071
    %v7180 = vpop.f32.mrb[0].mxu0
    %v7181 = vadd.f32 %v100, %v7180
    %v7182 = vpop.f32.mrb[0].mxu0
    %7183 = vmatprep.mubr.f32.mxu0 0.0
    %7184 = vmatmul.mubr.f32.gmra.mrb[0].mxu0 %v7074
    %v7185 = vpop.f32.mrb[0].mxu0
    %v7186 = vadd.f32 %v101, %v7185
    %v7187 = vpop.f32.mrb[0].mxu0
    %7188 = vmatprep.mubr.f32.mxu0 0.0
    %7189 = vmatmul.mubr.f32.gmra.mrb[0].mxu0 %v7077
    %v7190 = vpop.f32.mrb[0].mxu0
    %v7191 = vadd.f32 %v102, %v7190
    %v7192 = vpop.f32.mrb[0].mxu0
    %7193 = vmatprep.mubr.f32.mxu0 0.0
    %7194 = vmatmul.mubr.f32.gmra.mrb[0].mxu0 %v7080
    %v7195 = vpop.f32.mrb[0].mxu0
    %v7196 = vadd.f32 %v103, %v7195
    %v7197 = vpop.f32.mrb[0].mxu0
    %7198 = vmatprep.mubr.f32.mxu0 0.0
    %7199 = vmatmul.mubr.f32.gmra.mrb[0].mxu0 %v7083
    %v7200 = vpop.f32.mrb[0].mxu0
    %v7201 = vadd.f32 %v104, %v7200
    %v7202 = vpop.f32.mrb[0].mxu0
    %7203 = vmatprep.mubr.f32.mxu0 0.0
    %7204 = vmatmul.mubr.f32.gmra.mrb[0].mxu0 %v7086
    %v7205 = vpop.f32.mrb[0].mxu0
    %v7206 = vadd.f32 %v105, %v7205
    %v7207 = vpop.f32.mrb[0].mxu0
    %7208 = vmatprep.mubr.f32.mxu0 0.0
    %7209 = vmatmul.mubr.f32.gmra.mrb[0].mxu0 %v7089
    %v7210 = vpop.f32.mrb[0].mxu0
    %v7211 = vadd.f32 %v106, %v7210
    %v7212 = vpop.f32.mrb[0].mxu0
    %7213 = vmatprep.mubr.f32.mxu0 0.0
    %7214 = vmatmul.mubr.f32.gmra.mrb[0].mxu0 %v7092
    %v7215 = vpop.f32.mrb[0].mxu0
    %v7216 = vadd.f32 %v107, %v7215
    %v7217 = vpop.f32.mrb[0].mxu0
    %7218 = vdwg.mxu0
    %v7219 = vsel %vm3239, %v7181, -inf
    %7220 = vmax.xlane.f32.xlu0 %v7219
    %v7221 = vpop.xlane.xlu0 %7220
    %v7222 = vsel %vm3239, %v7186, -inf
    %7223 = vmax.xlane.f32.xlu0 %v7222
    %v7224 = vpop.xlane.xlu0 %7223
    %v7225 = vsel %vm3239, %v7191, -inf
    %7226 = vmax.xlane.f32.xlu0 %v7225
    %v7227 = vpop.xlane.xlu0 %7226
    %v7228 = vsel %vm3239, %v7196, -inf
    %7229 = vmax.xlane.f32.xlu0 %v7228
    %v7230 = vpop.xlane.xlu0 %7229
    %v7231 = vsel %vm3239, %v7201, -inf
    %7232 = vmax.xlane.f32.xlu0 %v7231
    %v7233 = vpop.xlane.xlu0 %7232
    %v7234 = vsel %vm3239, %v7206, -inf
    %7235 = vmax.xlane.f32.xlu0 %v7234
    %v7236 = vpop.xlane.xlu0 %7235
    %v7237 = vsel %vm3239, %v7211, -inf
    %7238 = vmax.xlane.f32.xlu0 %v7237
    %v7239 = vpop.xlane.xlu0 %7238
    %v7240 = vsel %vm3239, %v7216, -inf
    %7241 = vmax.xlane.f32.xlu0 %v7240
    %v7242 = vpop.xlane.xlu0 %7241
    %v7243 = vsub.f32 %v7181, %v7221
    %v7244 = vsub.f32 %v7186, %v7224
    %v7245 = vsub.f32 %v7191, %v7227
    %v7246 = vsub.f32 %v7196, %v7230
    %v7247 = vsub.f32 %v7201, %v7233
    %v7248 = vsub.f32 %v7206, %v7236
    %v7249 = vsub.f32 %v7211, %v7239
    %v7250 = vsub.f32 %v7216, %v7242
    %v7251 = vmul.f32 %v7243, 1.442695
    %v7252 = vpow.pop %v7251
    %v7253 = vmul.f32 %v7244, 1.442695
    %v7254 = vpow.pop %v7253
    %v7255 = vmul.f32 %v7245, 1.442695
    %v7256 = vpow.pop %v7255
    %v7257 = vmul.f32 %v7246, 1.442695
    %v7258 = vpow.pop %v7257
    %v7259 = vmul.f32 %v7247, 1.442695
    %v7260 = vpow.pop %v7259
    %v7261 = vmul.f32 %v7248, 1.442695
    %v7262 = vpow.pop %v7261
    %v7263 = vmul.f32 %v7249, 1.442695
    %v7264 = vpow.pop %v7263
    %v7265 = vmul.f32 %v7250, 1.442695
    %v7266 = vpow.pop %v7265
    %v7267 = vsel %vm3239, %v7252, 0.0
    %7268 = vadd.xlane.f32.xlu0 %v7267
    %v7269 = vpop.xlane.xlu0 %7268
    %v7270 = vsel %vm3239, %v7254, 0.0
    %7271 = vadd.xlane.f32.xlu0 %v7270
    %v7272 = vpop.xlane.xlu0 %7271
    %v7273 = vsel %vm3239, %v7256, 0.0
    %7274 = vadd.xlane.f32.xlu0 %v7273
    %v7275 = vpop.xlane.xlu0 %7274
    %v7276 = vsel %vm3239, %v7258, 0.0
    %7277 = vadd.xlane.f32.xlu0 %v7276
    %v7278 = vpop.xlane.xlu0 %7277
    %v7279 = vsel %vm3239, %v7260, 0.0
    %7280 = vadd.xlane.f32.xlu0 %v7279
    %v7281 = vpop.xlane.xlu0 %7280
    %v7282 = vsel %vm3239, %v7262, 0.0
    %7283 = vadd.xlane.f32.xlu0 %v7282
    %v7284 = vpop.xlane.xlu0 %7283
    %v7285 = vsel %vm3239, %v7264, 0.0
    %7286 = vadd.xlane.f32.xlu0 %v7285
    %v7287 = vpop.xlane.xlu0 %7286
    %v7288 = vsel %vm3239, %v7266, 0.0
    %7289 = vadd.xlane.f32.xlu0 %v7288
    %v7290 = vpop.xlane.xlu0 %7289
    %v7291 = vrcp.pop %v7269
    %v7292 = vrcp.pop %v7272
    %v7293 = vrcp.pop %v7275
    %v7294 = vrcp.pop %v7278
    %v7295 = vrcp.pop %v7281
    %v7296 = vrcp.pop %v7284
    %v7297 = vrcp.pop %v7287
    %v7298 = vrcp.pop %v7290
    %v7299 = vmul.f32 %v7252, %v7291
    %v7300 = vmul.f32 %v7254, %v7292
    %v7301 = vmul.f32 %v7256, %v7293
    %v7302 = vmul.f32 %v7258, %v7294
    %v7303 = vmul.f32 %v7260, %v7295
    %v7304 = vmul.f32 %v7262, %v7296
    %v7305 = vmul.f32 %v7264, %v7297
    %v7306 = vmul.f32 %v7266, %v7298
    %v7307 = vcombine.low %v6934, %v7052
    %v7308 = vcombine.low %v7002, %v7053
    %v7309 = vcombine.low %v7030, %v6935
    %v7310 = vcombine.low %v7054, %v7003
    %v7311 = vcombine.low %v7055, %v7038
    %v7312 = vcombine.low %v6936, %v7056
    %v7313 = vcombine.low %v7004, %v7057
    %v7314 = vcombine.low %v7037, %v6937
    %v7315 = vcombine.low %v7058, %v7005
    %v7316 = vcombine.low %v7059, %v7039
    %v7328 = vsel %vm3239, %v7299, 0
    %v7331 = vsel %vm3239, %v7300, 0
    %v7334 = vsel %vm3239, %v7301, 0
    %v7337 = vsel %vm3239, %v7302, 0
    %v7340 = vsel %vm3239, %v7303, 0
    %v7343 = vsel %vm3239, %v7304, 0
    %v7346 = vsel %vm3239, %v7305, 0
    %v7349 = vsel %vm3239, %v7306, 0
    %7351 = vmatprep.subr.mxu0 0.0
    %7352 = vmatpush1.msra.mxu0 %v7307
    %7353 = vmatprep.subr.mxu0 0.0
    %7354 = vmatpush1.msra.mxu0 %v7308
    %7355 = vmatprep.subr.mxu0 0.0
    %7356 = vmatpush1.msra.mxu0 %v7309
    %7357 = vmatprep.subr.mxu0 0.0
    %7358 = vmatpush1.msra.mxu0 %v7310
    %7359 = vmatprep.subr.mxu0 0.0
    %7360 = vmatpush1.msra.mxu0 %v7311
    %7361 = vmatprep.subr.mxu0 0.0
    %7362 = vmatpush1.msra.mxu0 %v7312
    %7363 = vmatprep.subr.mxu0 0.0
    %7364 = vmatpush1.msra.mxu0 %v7313
    %7365 = vmatprep.subr.mxu0 0.0
    %7366 = vmatpush1.msra.mxu0 %v7314
    %7367 = vmatprep.subr.mxu0 0.0
    %7368 = vmatpush1.msra.mxu0 %v7315
    %7369 = vmatprep.subr.mxu0 0.0
    %7370 = vmatpush1.msra.mxu0 %v7316
    %7371 = vmatprep.subr.mxu0 0.0
    %7372 = vmatpush1.msra.mxu0 0.0
    %7373 = vmatprep.subr.mxu0 0.0
    %7374 = vmatpush1.msra.mxu0 0.0
    %7375 = vmatprep.subr.mxu0 0.0
    %7376 = vmatpush1.msra.mxu0 0.0
    %7377 = vmatprep.subr.mxu0 0.0
    %7378 = vmatpush1.msra.mxu0 0.0
    %7379 = vmatprep.subr.mxu0 0.0
    %7380 = vmatpush1.msra.mxu0 0.0
    %7381 = vmatprep.subr.mxu0 0.0
    %7382 = vmatpush1.msra.mxu0 0.0
    %7383 = vmatprep.subr.mxu0 0.0
    %7384 = vmatpush1.msra.mxu0 0.0
    %7385 = vmatprep.subr.mxu0 0.0
    %7386 = vmatpush1.msra.mxu0 0.0
    %7387 = vmatprep.subr.mxu0 0.0
    %7388 = vmatpush1.msra.mxu0 0.0
    %7389 = vmatprep.subr.mxu0 0.0
    %7390 = vmatpush1.msra.mxu0 0.0
    %7391 = vmatprep.subr.mxu0 0.0
    %7392 = vmatpush1.msra.mxu0 0.0
    %7393 = vmatprep.subr.mxu0 0.0
    %7394 = vmatpush1.msra.mxu0 0.0
    %7395 = vmatprep.subr.mxu0 0.0
    %7396 = vmatpush1.msra.mxu0 0.0
    %7397 = vmatprep.subr.mxu0 0.0
    %7398 = vmatpush1.msra.mxu0 0.0
    %7399 = vmatprep.subr.mxu0 0.0
    %7400 = vmatpush1.msra.mxu0 0.0
    %7401 = vmatprep.subr.mxu0 0.0
    %7402 = vmatpush1.msra.mxu0 0.0
    %7403 = vmatprep.subr.mxu0 0.0
    %7404 = vmatpush1.msra.mxu0 0.0
    %7405 = vmatprep.subr.mxu0 0.0
    %7406 = vmatpush1.msra.mxu0 0.0
    %7407 = vmatprep.subr.mxu0 0.0
    %7408 = vmatpush1.msra.mxu0 0.0
    %7409 = vmatprep.subr.mxu0 0.0
    %7410 = vmatpush1.msra.mxu0 0.0
    %7411 = vmatprep.subr.mxu0 0.0
    %7412 = vmatpush1.msra.mxu0 0.0
    %7413 = vmatprep.subr.mxu0 0.0
    %7414 = vmatpush1.msra.mxu0 0.0
    %7415 = vmatprep.mubr.f32.mxu0 0.0
    %7416 = vmatmul.mubr.f32.gmra.mrb[0].mxu0 %v7328
    %v7417 = vpop.f32.mrb[0].mxu0
    %v7418 = vadd.f32 0.0, %v7417
    %v7419 = vpop.f32.mrb[0].mxu0
    %7420 = vmatprep.mubr.f32.mxu0 0.0
    %7421 = vmatmul.mubr.f32.gmra.mrb[0].mxu0 %v7331
    %v7422 = vpop.f32.mrb[0].mxu0
    %v7423 = vadd.f32 0.0, %v7422
    %v7424 = vpop.f32.mrb[0].mxu0
    %7425 = vmatprep.mubr.f32.mxu0 0.0
    %7426 = vmatmul.mubr.f32.gmra.mrb[0].mxu0 %v7334
    %v7427 = vpop.f32.mrb[0].mxu0
    %v7428 = vadd.f32 0.0, %v7427
    %v7429 = vpop.f32.mrb[0].mxu0
    %7430 = vmatprep.mubr.f32.mxu0 0.0
    %7431 = vmatmul.mubr.f32.gmra.mrb[0].mxu0 %v7337
    %v7432 = vpop.f32.mrb[0].mxu0
    %v7433 = vadd.f32 0.0, %v7432
    %v7434 = vpop.f32.mrb[0].mxu0
    %7435 = vmatprep.mubr.f32.mxu0 0.0
    %7436 = vmatmul.mubr.f32.gmra.mrb[0].mxu0 %v7340
    %v7437 = vpop.f32.mrb[0].mxu0
    %v7438 = vadd.f32 0.0, %v7437
    %v7439 = vpop.f32.mrb[0].mxu0
    %7440 = vmatprep.mubr.f32.mxu0 0.0
    %7441 = vmatmul.mubr.f32.gmra.mrb[0].mxu0 %v7343
    %v7442 = vpop.f32.mrb[0].mxu0
    %v7443 = vadd.f32 0.0, %v7442
    %v7444 = vpop.f32.mrb[0].mxu0
    %7445 = vmatprep.mubr.f32.mxu0 0.0
    %7446 = vmatmul.mubr.f32.gmra.mrb[0].mxu0 %v7346
    %v7447 = vpop.f32.mrb[0].mxu0
    %v7448 = vadd.f32 0.0, %v7447
    %v7449 = vpop.f32.mrb[0].mxu0
    %7450 = vmatprep.mubr.f32.mxu0 0.0
    %7451 = vmatmul.mubr.f32.gmra.mrb[0].mxu0 %v7349
    %v7452 = vpop.f32.mrb[0].mxu0
    %v7453 = vadd.f32 0.0, %v7452
    %v7454 = vpop.f32.mrb[0].mxu0
    %7455 = vdwg.mxu0
    %v7456 = vcombine.low %v7418, %v7438
    %v7457 = vcombine.high %v7418, %v7438
    %v7459 = vunpack.c.l.s4 1983009808
    %v7460 = vunpack.c.0.s8 %v7459
    %v7461 = vlaneseq
    %v7462 = vshrl.u32 %v7461, 7
    %v7463 = vsub.s32 %v7460, %v7462
    %v7464 = vrot.slane %v7456, %v7463
    %v7466 = vunpack.c.l.s4 1983009808
    %v7467 = vunpack.c.0.s8 %v7466
    %v7468 = vlaneseq
    %v7469 = vshrl.u32 %v7468, 7
    %v7470 = vsub.s32 %v7467, %v7469
    %v7471 = vrot.slane %v7457, %v7470
    %v7472 = vcombine.low %v7428, %v7448
    %v7473 = vcombine.high %v7428, %v7448
    %v7475 = vunpack.c.l.s4 1983009808
    %v7476 = vunpack.c.0.s8 %v7475
    %v7477 = vlaneseq
    %v7478 = vshrl.u32 %v7477, 7
    %v7479 = vsub.s32 %v7476, %v7478
    %v7480 = vrot.slane %v7472, %v7479
    %v7482 = vunpack.c.l.s4 1983009808
    %v7483 = vunpack.c.0.s8 %v7482
    %v7484 = vlaneseq
    %v7485 = vshrl.u32 %v7484, 7
    %v7486 = vsub.s32 %v7483, %v7485
    %v7487 = vrot.slane %v7473, %v7486
    %v7488 = vcombine.low %v7464, %v7480
    %v7489 = vcombine.high %v7464, %v7480
    %v7491 = vunpack.c.l.s4 1934713408
    %v7492 = vunpack.c.0.s8 %v7491
    %v7493 = vlaneseq
    %v7494 = vshrl.u32 %v7493, 7
    %v7495 = vsub.s32 %v7492, %v7494
    %v7496 = vrot.slane %v7488, %v7495
    %v7498 = vunpack.c.l.s4 1934713408
    %v7499 = vunpack.c.0.s8 %v7498
    %v7500 = vlaneseq
    %v7501 = vshrl.u32 %v7500, 7
    %v7502 = vsub.s32 %v7499, %v7501
    %v7503 = vrot.slane %v7489, %v7502
    %v7504 = vcombine.low %v7471, %v7487
    %v7505 = vcombine.high %v7471, %v7487
    %v7507 = vunpack.c.l.s4 1934713408
    %v7508 = vunpack.c.0.s8 %v7507
    %v7509 = vlaneseq
    %v7510 = vshrl.u32 %v7509, 7
    %v7511 = vsub.s32 %v7508, %v7510
    %v7512 = vrot.slane %v7504, %v7511
    %v7514 = vunpack.c.l.s4 1934713408
    %v7515 = vunpack.c.0.s8 %v7514
    %v7516 = vlaneseq
    %v7517 = vshrl.u32 %v7516, 7
    %v7518 = vsub.s32 %v7515, %v7517
    %v7519 = vrot.slane %v7505, %v7518
    %v7520 = vcombine.high %v7496, 0.0
    %v7521 = vcombine.high %v7503, 0.0
    %v7522 = vcombine.high %v7512, 0.0
    %v7523 = vcombine.high %v7519, 0.0
    %v7524 = vcombine.low %v7423, %v7443
    %v7525 = vcombine.high %v7423, %v7443
    %v7527 = vunpack.c.l.s4 1983009808
    %v7528 = vunpack.c.0.s8 %v7527
    %v7529 = vlaneseq
    %v7530 = vshrl.u32 %v7529, 7
    %v7531 = vsub.s32 %v7528, %v7530
    %v7532 = vrot.slane %v7524, %v7531
    %v7534 = vunpack.c.l.s4 1983009808
    %v7535 = vunpack.c.0.s8 %v7534
    %v7536 = vlaneseq
    %v7537 = vshrl.u32 %v7536, 7
    %v7538 = vsub.s32 %v7535, %v7537
    %v7539 = vrot.slane %v7525, %v7538
    %v7540 = vcombine.low %v7433, %v7453
    %v7541 = vcombine.high %v7433, %v7453
    %v7543 = vunpack.c.l.s4 1983009808
    %v7544 = vunpack.c.0.s8 %v7543
    %v7545 = vlaneseq
    %v7546 = vshrl.u32 %v7545, 7
    %v7547 = vsub.s32 %v7544, %v7546
    %v7548 = vrot.slane %v7540, %v7547
    %v7550 = vunpack.c.l.s4 1983009808
    %v7551 = vunpack.c.0.s8 %v7550
    %v7552 = vlaneseq
    %v7553 = vshrl.u32 %v7552, 7
    %v7554 = vsub.s32 %v7551, %v7553
    %v7555 = vrot.slane %v7541, %v7554
    %v7556 = vcombine.low %v7532, %v7548
    %v7557 = vcombine.high %v7532, %v7548
    %v7559 = vunpack.c.l.s4 1934713408
    %v7560 = vunpack.c.0.s8 %v7559
    %v7561 = vlaneseq
    %v7562 = vshrl.u32 %v7561, 7
    %v7563 = vsub.s32 %v7560, %v7562
    %v7564 = vrot.slane %v7556, %v7563
    %v7566 = vunpack.c.l.s4 1934713408
    %v7567 = vunpack.c.0.s8 %v7566
    %v7568 = vlaneseq
    %v7569 = vshrl.u32 %v7568, 7
    %v7570 = vsub.s32 %v7567, %v7569
    %v7571 = vrot.slane %v7557, %v7570
    %v7572 = vcombine.low %v7539, %v7555
    %v7573 = vcombine.high %v7539, %v7555
    %v7575 = vunpack.c.l.s4 1934713408
    %v7576 = vunpack.c.0.s8 %v7575
    %v7577 = vlaneseq
    %v7578 = vshrl.u32 %v7577, 7
    %v7579 = vsub.s32 %v7576, %v7578
    %v7580 = vrot.slane %v7572, %v7579
    %v7582 = vunpack.c.l.s4 1934713408
    %v7583 = vunpack.c.0.s8 %v7582
    %v7584 = vlaneseq
    %v7585 = vshrl.u32 %v7584, 7
    %v7586 = vsub.s32 %v7583, %v7585
    %v7587 = vrot.slane %v7573, %v7586
    %v7588 = vcombine.high %v7564, 0.0
    %v7589 = vcombine.high %v7571, 0.0
    %v7590 = vcombine.high %v7580, 0.0
    %v7591 = vcombine.high %v7587, 0.0
    %v7592 = vcombine.low %v7496, %v7503
    %v7594 = vunpack.c.l.s4 1983009808
    %v7595 = vunpack.c.0.s8 %v7594
    %v7596 = vlaneseq
    %v7597 = vshrl.u32 %v7596, 7
    %v7598 = vsub.s32 %v7595, %v7597
    %v7599 = vrot.slane %v7592, %v7598
    %v7600 = vcombine.low %v7520, %v7521
    %v7602 = vunpack.c.l.s4 1983009808
    %v7603 = vunpack.c.0.s8 %v7602
    %v7604 = vlaneseq
    %v7605 = vshrl.u32 %v7604, 7
    %v7606 = vsub.s32 %v7603, %v7605
    %v7607 = vrot.slane %v7600, %v7606
    %v7608 = vcombine.low %v7512, %v7519
    %v7610 = vunpack.c.l.s4 1983009808
    %v7611 = vunpack.c.0.s8 %v7610
    %v7612 = vlaneseq
    %v7613 = vshrl.u32 %v7612, 7
    %v7614 = vsub.s32 %v7611, %v7613
    %v7615 = vrot.slane %v7608, %v7614
    %v7616 = vcombine.low %v7522, %v7523
    %v7618 = vunpack.c.l.s4 1983009808
    %v7619 = vunpack.c.0.s8 %v7618
    %v7620 = vlaneseq
    %v7621 = vshrl.u32 %v7620, 7
    %v7622 = vsub.s32 %v7619, %v7621
    %v7623 = vrot.slane %v7616, %v7622
    %v7624 = vcombine.low %v7599, %v7607
    %v7625 = vcombine.high %v7599, %v7607
    %v7627 = vunpack.c.l.s4 1934713408
    %v7628 = vunpack.c.0.s8 %v7627
    %v7629 = vlaneseq
    %v7630 = vshrl.u32 %v7629, 7
    %v7631 = vsub.s32 %v7628, %v7630
    %v7632 = vrot.slane %v7624, %v7631
    %v7634 = vunpack.c.l.s4 1934713408
    %v7635 = vunpack.c.0.s8 %v7634
    %v7636 = vlaneseq
    %v7637 = vshrl.u32 %v7636, 7
    %v7638 = vsub.s32 %v7635, %v7637
    %v7639 = vrot.slane %v7625, %v7638
    %v7640 = vcombine.low %v7615, %v7623
    %v7641 = vcombine.high %v7615, %v7623
    %v7643 = vunpack.c.l.s4 1934713408
    %v7644 = vunpack.c.0.s8 %v7643
    %v7645 = vlaneseq
    %v7646 = vshrl.u32 %v7645, 7
    %v7647 = vsub.s32 %v7644, %v7646
    %v7648 = vrot.slane %v7640, %v7647
    %v7650 = vunpack.c.l.s4 1934713408
    %v7651 = vunpack.c.0.s8 %v7650
    %v7652 = vlaneseq
    %v7653 = vshrl.u32 %v7652, 7
    %v7654 = vsub.s32 %v7651, %v7653
    %v7655 = vrot.slane %v7641, %v7654
    %v7656 = vcombine.low %v7632, %v7648
    %v7657 = vcombine.high %v7632, %v7648
    %v7658 = vcombine.low %v7639, %v7655
    %v7659 = vcombine.high %v7639, %v7655
    %v7660 = vcombine.low %v7564, %v7571
    %v7662 = vunpack.c.l.s4 1983009808
    %v7663 = vunpack.c.0.s8 %v7662
    %v7664 = vlaneseq
    %v7665 = vshrl.u32 %v7664, 7
    %v7666 = vsub.s32 %v7663, %v7665
    %v7667 = vrot.slane %v7660, %v7666
    %v7668 = vcombine.low %v7588, %v7589
    %v7670 = vunpack.c.l.s4 1983009808
    %v7671 = vunpack.c.0.s8 %v7670
    %v7672 = vlaneseq
    %v7673 = vshrl.u32 %v7672, 7
    %v7674 = vsub.s32 %v7671, %v7673
    %v7675 = vrot.slane %v7668, %v7674
    %v7676 = vcombine.low %v7580, %v7587
    %v7678 = vunpack.c.l.s4 1983009808
    %v7679 = vunpack.c.0.s8 %v7678
    %v7680 = vlaneseq
    %v7681 = vshrl.u32 %v7680, 7
    %v7682 = vsub.s32 %v7679, %v7681
    %v7683 = vrot.slane %v7676, %v7682
    %v7684 = vcombine.low %v7590, %v7591
    %v7686 = vunpack.c.l.s4 1983009808
    %v7687 = vunpack.c.0.s8 %v7686
    %v7688 = vlaneseq
    %v7689 = vshrl.u32 %v7688, 7
    %v7690 = vsub.s32 %v7687, %v7689
    %v7691 = vrot.slane %v7684, %v7690
    %v7692 = vcombine.low %v7667, %v7675
    %v7693 = vcombine.high %v7667, %v7675
    %v7695 = vunpack.c.l.s4 1934713408
    %v7696 = vunpack.c.0.s8 %v7695
    %v7697 = vlaneseq
    %v7698 = vshrl.u32 %v7697, 7
    %v7699 = vsub.s32 %v7696, %v7698
    %v7700 = vrot.slane %v7692, %v7699
    %v7702 = vunpack.c.l.s4 1934713408
    %v7703 = vunpack.c.0.s8 %v7702
    %v7704 = vlaneseq
    %v7705 = vshrl.u32 %v7704, 7
    %v7706 = vsub.s32 %v7703, %v7705
    %v7707 = vrot.slane %v7693, %v7706
    %v7708 = vcombine.low %v7683, %v7691
    %v7709 = vcombine.high %v7683, %v7691
    %v7711 = vunpack.c.l.s4 1934713408
    %v7712 = vunpack.c.0.s8 %v7711
    %v7713 = vlaneseq
    %v7714 = vshrl.u32 %v7713, 7
    %v7715 = vsub.s32 %v7712, %v7714
    %v7716 = vrot.slane %v7708, %v7715
    %v7718 = vunpack.c.l.s4 1934713408
    %v7719 = vunpack.c.0.s8 %v7718
    %v7720 = vlaneseq
    %v7721 = vshrl.u32 %v7720, 7
    %v7722 = vsub.s32 %v7719, %v7721
    %v7723 = vrot.slane %v7709, %v7722
    %v7724 = vcombine.low %v7700, %v7716
    %v7725 = vcombine.high %v7700, %v7716
    %v7726 = vcombine.low %v7707, %v7723
    %v7727 = vcombine.high %v7707, %v7723
    %7730 = vrot.lane.b32.xlu0 %v7657, 8
    %v7731 = vpop.permute.xlu0 %7730
    %7732 = vrot.lane.b32.xlu0 %v7725, 8
    %v7733 = vpop.permute.xlu0 %7732
    %7738 = vrot.lane.b32.xlu0 %v7658, 16
    %v7739 = vpop.permute.xlu0 %7738
    %7740 = vrot.lane.b32.xlu0 %v7726, 16
    %v7741 = vpop.permute.xlu0 %7740
    %7746 = vrot.lane.b32.xlu0 %v7659, 24
    %v7747 = vpop.permute.xlu0 %7746
    %7748 = vrot.lane.b32.xlu0 %v7727, 24
    %v7749 = vpop.permute.xlu0 %7748
    %v7752 = vsel %vm1066, %v7656, %v7731
    %v7753 = vsel %vm1066, %v7724, %v7733
    %v7754 = vsel %vm1736, %v7752, %v7739
    %v7755 = vsel %vm1736, %v7753, %v7741
    %v7756 = vsel %vm1739, %v7754, %v7747
    %v7757 = vsel %vm1739, %v7755, %v7749
    %v7758 = vpack.c.bf16 %v7757, %v7756
    %v7760 = vlaneseq
    %v7761 = vshrl.u32 %v7760, 7
    %v7762 = vsub.s32 0, %v7761
    %v7763 = vrot.slane %v5981, %v7762
    %v7769 = vunpack.c.l.b16 %v5976
    %v7770 = vunpack.c.l.b16 %v5977
    %v7771 = vunpack.c.l.b16 %v5978
    %v7772 = vunpack.c.l.b16 %v5979
    %v7773 = vpack.c.b16 %v7770, %v7769
    %v7774 = vpack.c.b16 %v7772, %v7771
    %v7778 = vsel %vm132, %v7758, 0
    %7780 = vmatprep.subr.bf16.mxu0 0
    %7781 = vmatpush1.bf16.msra.mxu0 %v7773
    %7782 = vmatprep.subr.bf16.mxu0 0
    %7783 = vmatpush1.bf16.msra.mxu0 %v7774
    %7784 = vmatprep.subr.bf16.mxu0 0
    %7785 = vmatpush1.bf16.msra.mxu0 0
    %7786 = vmatprep.subr.bf16.mxu0 0
    %7787 = vmatpush1.bf16.msra.mxu0 0
    %7788 = vmatprep.subr.bf16.mxu0 0
    %7789 = vmatpush1.bf16.msra.mxu0 0
    %7790 = vmatprep.subr.bf16.mxu0 0
    %7791 = vmatpush1.bf16.msra.mxu0 0
    %7792 = vmatprep.subr.bf16.mxu0 0
    %7793 = vmatpush1.bf16.msra.mxu0 0
    %7794 = vmatprep.subr.bf16.mxu0 0
    %7795 = vmatpush1.bf16.msra.mxu0 0
    %7796 = vmatprep.subr.bf16.mxu0 0
    %7797 = vmatpush1.bf16.msra.mxu0 0
    %7798 = vmatprep.subr.bf16.mxu0 0
    %7799 = vmatpush1.bf16.msra.mxu0 0
    %7800 = vmatprep.subr.bf16.mxu0 0
    %7801 = vmatpush1.bf16.msra.mxu0 0
    %7802 = vmatprep.subr.bf16.mxu0 0
    %7803 = vmatpush1.bf16.msra.mxu0 0
    %7804 = vmatprep.subr.bf16.mxu0 0
    %7805 = vmatpush1.bf16.msra.mxu0 0
    %7806 = vmatprep.subr.bf16.mxu0 0
    %7807 = vmatpush1.bf16.msra.mxu0 0
    %7808 = vmatprep.subr.bf16.mxu0 0
    %7809 = vmatpush1.bf16.msra.mxu0 0
    %7810 = vmatprep.subr.bf16.mxu0 0
    %7811 = vmatpush1.bf16.msra.mxu0 0
    %7812 = vmatprep.mubr.bf16.mxu0 0
    %7813 = vmatmul.mubr.bf16.gmra.mrb[0].mxu0 %v7778
    %v7814 = vpop.f32.mrb[0].mxu0
    %v7815 = vadd.f32 %v7763, %v7814
    %v7816 = vpop.f32.mrb[0].mxu0
    %v7817 = vpop.f32.mrb[0].mxu0
    %v7818 = vadd.f32 %v7763, %v7817
    %v7819 = vpop.f32.mrb[0].mxu0
    %7820 = vdwg.mxu0
    %v7821 = vadd.f32 %v5830, %v7815
    %v7822 = vadd.f32 %v5831, %v7818
    %s7823 = scalar_lea.vmem %s16, 1
    %v7824 = vld [vmem:[%s7823] sm:$0x1]
    %s7825 = scalar_lea.vmem %s17, 1
    %v7826 = vld [vmem:[%s7825] sm:$0x1]
    %v7827 = vsel %vm132, %v7821, 0.0
    %7828 = vadd.xlane.f32.xlu0 %v7827
    %v7829 = vpop.xlane.xlu0 %7828
    %v7830 = vsel %vm132, %v7822, 0.0
    %7831 = vadd.xlane.f32.xlu0 %v7830
    %v7832 = vpop.xlane.xlu0 %7831
    %v7833 = vmul.f32 %v7829, %v1815
    %v7834 = vmul.f32 %v7832, %v1815
    %v7835 = vsub.f32 %v7821, %v7833
    %v7836 = vsub.f32 %v7822, %v7834
    %v7837 = vmul.f32 %v7835, %v7835
    %v7838 = vmul.f32 %v7836, %v7836
    %v7839 = vsel %vm132, %v7837, 0.0
    %7840 = vadd.xlane.f32.xlu0 %v7839
    %v7841 = vpop.xlane.xlu0 %7840
    %v7842 = vsel %vm132, %v7838, 0.0
    %7843 = vadd.xlane.f32.xlu0 %v7842
    %v7844 = vpop.xlane.xlu0 %7843
    %v7845 = vmul.f32 %v7841, %v1815
    %v7846 = vmul.f32 %v7844, %v1815
    %v7847 = vadd.f32 %v7845, 1e-05
    %v7848 = vadd.f32 %v7846, 1e-05
    %v7849 = vrsqrt.pop %v7847
    %v7850 = vrsqrt.pop %v7848
    %v7851 = vmul.f32 %v7835, %v7849
    %v7852 = vmul.f32 %v7836, %v7850
    %v7854 = vlaneseq
    %v7855 = vshrl.u32 %v7854, 7
    %v7856 = vsub.s32 0, %v7855
    %v7857 = vrot.slane %v7824, %v7856
    %v7859 = vmul.f32 %v7851, %v7857
    %v7860 = vmul.f32 %v7852, %v7857
    %v7862 = vlaneseq
    %v7863 = vshrl.u32 %v7862, 7
    %v7864 = vsub.s32 0, %v7863
    %v7865 = vrot.slane %v7826, %v7864
    %v7867 = vadd.f32 %v7859, %v7865
    %v7868 = vadd.f32 %v7860, %v7865
    %v7869 = vpack.c.bf16 %v7868, %v7867
    %s7870 = scalar_lea.vmem %s18, 16
    %v7871 = vld [vmem:[%s7870] sm:$0xf]
    %v7872 = vld [vmem:[%s7870 + $0x4] sm:$0xf]
    %v7873 = vld [vmem:[%s7870 + $0x8] sm:$0xf]
    %v7874 = vld [vmem:[%s7870 + $0xc] sm:$0xf]
    %s7875 = scalar_lea.vmem %s19, 1
    %v7876 = vld [vmem:[%s7875] sm:$0x1]
    %v7878 = vlaneseq
    %v7879 = vshrl.u32 %v7878, 7
    %v7880 = vsub.s32 0, %v7879
    %v7881 = vrot.slane %v7876, %v7880
    %v7887 = vunpack.c.l.b16 %v7871
    %v7888 = vunpack.c.l.b16 %v7872
    %v7889 = vunpack.c.l.b16 %v7873
    %v7890 = vunpack.c.l.b16 %v7874
    %v7891 = vpack.c.b16 %v7888, %v7887
    %v7892 = vpack.c.b16 %v7890, %v7889
    %v7896 = vsel %vm132, %v7869, 0
    %7898 = vmatprep.subr.bf16.mxu0 0
    %7899 = vmatpush1.bf16.msra.mxu0 %v7891
    %7900 = vmatprep.subr.bf16.mxu0 0
    %7901 = vmatpush1.bf16.msra.mxu0 %v7892
    %7902 = vmatprep.subr.bf16.mxu0 0
    %7903 = vmatpush1.bf16.msra.mxu0 0
    %7904 = vmatprep.subr.bf16.mxu0 0
    %7905 = vmatpush1.bf16.msra.mxu0 0
    %7906 = vmatprep.subr.bf16.mxu0 0
    %7907 = vmatpush1.bf16.msra.mxu0 0
    %7908 = vmatprep.subr.bf16.mxu0 0
    %7909 = vmatpush1.bf16.msra.mxu0 0
    %7910 = vmatprep.subr.bf16.mxu0 0
    %7911 = vmatpush1.bf16.msra.mxu0 0
    %7912 = vmatprep.subr.bf16.mxu0 0
    %7913 = vmatpush1.bf16.msra.mxu0 0
    %7914 = vmatprep.subr.bf16.mxu0 0
    %7915 = vmatpush1.bf16.msra.mxu0 0
    %7916 = vmatprep.subr.bf16.mxu0 0
    %7917 = vmatpush1.bf16.msra.mxu0 0
    %7918 = vmatprep.subr.bf16.mxu0 0
    %7919 = vmatpush1.bf16.msra.mxu0 0
    %7920 = vmatprep.subr.bf16.mxu0 0
    %7921 = vmatpush1.bf16.msra.mxu0 0
    %7922 = vmatprep.subr.bf16.mxu0 0
    %7923 = vmatpush1.bf16.msra.mxu0 0
    %7924 = vmatprep.subr.bf16.mxu0 0
    %7925 = vmatpush1.bf16.msra.mxu0 0
    %7926 = vmatprep.subr.bf16.mxu0 0
    %7927 = vmatpush1.bf16.msra.mxu0 0
    %7928 = vmatprep.subr.bf16.mxu0 0
    %7929 = vmatpush1.bf16.msra.mxu0 0
    %7930 = vmatprep.mubr.bf16.mxu0 0
    %7931 = vmatmul.mubr.bf16.gmra.mrb[0].mxu0 %v7896
    %v7932 = vpop.f32.mrb[0].mxu0
    %v7933 = vadd.f32 %v7881, %v7932
    %v7934 = vpop.f32.mrb[0].mxu0
    %v7935 = vpop.f32.mrb[0].mxu0
    %v7936 = vadd.f32 %v7881, %v7935
    %v7937 = vpop.f32.mrb[0].mxu0
    %7938 = vdwg.mxu0
    %v7939 = vmax.f32 %v7933, 0.0
    %v7940 = vmax.f32 %v7936, 0.0
    %v7941 = vpack.c.bf16 %v7940, %v7939
    %s7942 = scalar_lea.vmem %s20, 32
    %v7943 = vld [vmem:[%s7942] sm:$0xf]
    %v7944 = vld [vmem:[%s7942 + $0x4] sm:$0xf]
    %v7945 = vld [vmem:[%s7942 + $0x8] sm:$0xf]
    %v7946 = vld [vmem:[%s7942 + $0xc] sm:$0xf]
    %v7947 = vld [vmem:[%s7942 + $0x10] sm:$0xf]
    %v7948 = vld [vmem:[%s7942 + $0x14] sm:$0xf]
    %v7949 = vld [vmem:[%s7942 + $0x18] sm:$0xf]
    %v7950 = vld [vmem:[%s7942 + $0x1c] sm:$0xf]
    %s7951 = scalar_lea.vmem %s21, 1
    %v7952 = vld [vmem:[%s7951] sm:$0x1]
    %v7954 = vlaneseq
    %v7955 = vshrl.u32 %v7954, 7
    %v7956 = vsub.s32 0, %v7955
    %v7957 = vrot.slane %v7952, %v7956
    %v7967 = vunpack.c.l.b16 %v7943
    %v7968 = vunpack.c.l.b16 %v7944
    %v7969 = vunpack.c.l.b16 %v7945
    %v7970 = vunpack.c.l.b16 %v7946
    %v7971 = vunpack.c.l.b16 %v7947
    %v7972 = vunpack.c.l.b16 %v7948
    %v7973 = vunpack.c.l.b16 %v7949
    %v7974 = vunpack.c.l.b16 %v7950
    %v7975 = vpack.c.b16 %v7968, %v7967
    %v7976 = vpack.c.b16 %v7970, %v7969
    %v7977 = vpack.c.b16 %v7972, %v7971
    %v7978 = vpack.c.b16 %v7974, %v7973
    %v7984 = vsel %vm1220, %v7941, 0
    %7986 = vmatprep.subr.bf16.mxu0 0
    %7987 = vmatpush1.bf16.msra.mxu0 %v7975
    %7988 = vmatprep.subr.bf16.mxu0 0
    %7989 = vmatpush1.bf16.msra.mxu0 %v7976
    %7990 = vmatprep.subr.bf16.mxu0 0
    %7991 = vmatpush1.bf16.msra.mxu0 %v7977
    %7992 = vmatprep.subr.bf16.mxu0 0
    %7993 = vmatpush1.bf16.msra.mxu0 %v7978
    %7994 = vmatprep.subr.bf16.mxu0 0
    %7995 = vmatpush1.bf16.msra.mxu0 0
    %7996 = vmatprep.subr.bf16.mxu0 0
    %7997 = vmatpush1.bf16.msra.mxu0 0
    %7998 = vmatprep.subr.bf16.mxu0 0
    %7999 = vmatpush1.bf16.msra.mxu0 0
    %8000 = vmatprep.subr.bf16.mxu0 0
    %8001 = vmatpush1.bf16.msra.mxu0 0
    %8002 = vmatprep.subr.bf16.mxu0 0
    %8003 = vmatpush1.bf16.msra.mxu0 0
    %8004 = vmatprep.subr.bf16.mxu0 0
    %8005 = vmatpush1.bf16.msra.mxu0 0
    %8006 = vmatprep.subr.bf16.mxu0 0
    %8007 = vmatpush1.bf16.msra.mxu0 0
    %8008 = vmatprep.subr.bf16.mxu0 0
    %8009 = vmatpush1.bf16.msra.mxu0 0
    %8010 = vmatprep.subr.bf16.mxu0 0
    %8011 = vmatpush1.bf16.msra.mxu0 0
    %8012 = vmatprep.subr.bf16.mxu0 0
    %8013 = vmatpush1.bf16.msra.mxu0 0
    %8014 = vmatprep.subr.bf16.mxu0 0
    %8015 = vmatpush1.bf16.msra.mxu0 0
    %8016 = vmatprep.subr.bf16.mxu0 0
    %8017 = vmatpush1.bf16.msra.mxu0 0
    %8018 = vmatprep.mubr.bf16.mxu0 0
    %8019 = vmatmul.mubr.bf16.gmra.mrb[0].mxu0 %v7984
    %v8020 = vpop.f32.mrb[0].mxu0
    %v8021 = vadd.f32 %v7957, %v8020
    %v8022 = vpop.f32.mrb[0].mxu0
    %v8023 = vpop.f32.mrb[0].mxu0
    %v8024 = vadd.f32 %v7957, %v8023
    %v8025 = vpop.f32.mrb[0].mxu0
    %8026 = vdwg.mxu0
    %v8027 = vadd.f32 %v7867, %v8021
    %v8028 = vadd.f32 %v7868, %v8024
    %s8029 = scalar_lea.vmem %s22, 1
    %v8030 = vld [vmem:[%s8029] sm:$0x1]
    %s8031 = scalar_lea.vmem %s23, 1
    %v8032 = vld [vmem:[%s8031] sm:$0x1]
    %v8033 = vsel %vm132, %v8027, 0.0
    %8034 = vadd.xlane.f32.xlu0 %v8033
    %v8035 = vpop.xlane.xlu0 %8034
    %v8036 = vsel %vm132, %v8028, 0.0
    %8037 = vadd.xlane.f32.xlu0 %v8036
    %v8038 = vpop.xlane.xlu0 %8037
    %v8039 = vmul.f32 %v8035, %v1815
    %v8040 = vmul.f32 %v8038, %v1815
    %v8041 = vsub.f32 %v8027, %v8039
    %v8042 = vsub.f32 %v8028, %v8040
    %v8043 = vmul.f32 %v8041, %v8041
    %v8044 = vmul.f32 %v8042, %v8042
    %v8045 = vsel %vm132, %v8043, 0.0
    %8046 = vadd.xlane.f32.xlu0 %v8045
    %v8047 = vpop.xlane.xlu0 %8046
    %v8048 = vsel %vm132, %v8044, 0.0
    %8049 = vadd.xlane.f32.xlu0 %v8048
    %v8050 = vpop.xlane.xlu0 %8049
    %v8051 = vmul.f32 %v8047, %v1815
    %v8052 = vmul.f32 %v8050, %v1815
    %v8053 = vadd.f32 %v8051, 1e-05
    %v8054 = vadd.f32 %v8052, 1e-05
    %v8055 = vrsqrt.pop %v8053
    %v8056 = vrsqrt.pop %v8054
    %v8057 = vmul.f32 %v8041, %v8055
    %v8058 = vmul.f32 %v8042, %v8056
    %v8060 = vlaneseq
    %v8061 = vshrl.u32 %v8060, 7
    %v8062 = vsub.s32 0, %v8061
    %v8063 = vrot.slane %v8030, %v8062
    %v8065 = vmul.f32 %v8057, %v8063
    %v8066 = vmul.f32 %v8058, %v8063
    %v8068 = vlaneseq
    %v8069 = vshrl.u32 %v8068, 7
    %v8070 = vsub.s32 0, %v8069
    %v8071 = vrot.slane %v8032, %v8070
    %v8073 = vadd.f32 %v8065, %v8071
    %v8074 = vadd.f32 %v8066, %v8071
    %v8075 = vpack.c.bf16 %v8074, %v8073
    %v8076 = vld [vmem:[%s24] sm:$0xf]
    %v8077 = vld [vmem:[%s24 + $0x4] sm:$0xf]
    %v8078 = vld [vmem:[%s24 + $0x8] sm:$0xf]
    %v8079 = vld [vmem:[%s24 + $0xc] sm:$0xf]
    %v8080 = vld [vmem:[%s25] sm:$0x1]
    %v8082 = vlaneseq
    %v8083 = vshrl.u32 %v8082, 7
    %v8084 = vsub.s32 0, %v8083
    %v8085 = vrot.slane %v8080, %v8084
    %v8091 = vunpack.c.l.b16 %v8076
    %v8092 = vunpack.c.l.b16 %v8077
    %v8093 = vunpack.c.l.b16 %v8078
    %v8094 = vunpack.c.l.b16 %v8079
    %v8095 = vpack.c.b16 %v8092, %v8091
    %v8096 = vpack.c.b16 %v8094, %v8093
    %v8100 = vsel %vm132, %v8075, 0
    %8102 = vmatprep.subr.bf16.mxu0 0
    %8103 = vmatpush1.bf16.msra.mxu0 %v8095
    %8104 = vmatprep.subr.bf16.mxu0 0
    %8105 = vmatpush1.bf16.msra.mxu0 %v8096
    %8106 = vmatprep.subr.bf16.mxu0 0
    %8107 = vmatpush1.bf16.msra.mxu0 0
    %8108 = vmatprep.subr.bf16.mxu0 0
    %8109 = vmatpush1.bf16.msra.mxu0 0
    %8110 = vmatprep.subr.bf16.mxu0 0
    %8111 = vmatpush1.bf16.msra.mxu0 0
    %8112 = vmatprep.subr.bf16.mxu0 0
    %8113 = vmatpush1.bf16.msra.mxu0 0
    %8114 = vmatprep.subr.bf16.mxu0 0
    %8115 = vmatpush1.bf16.msra.mxu0 0
    %8116 = vmatprep.subr.bf16.mxu0 0
    %8117 = vmatpush1.bf16.msra.mxu0 0
    %8118 = vmatprep.subr.bf16.mxu0 0
    %8119 = vmatpush1.bf16.msra.mxu0 0
    %8120 = vmatprep.subr.bf16.mxu0 0
    %8121 = vmatpush1.bf16.msra.mxu0 0
    %8122 = vmatprep.subr.bf16.mxu0 0
    %8123 = vmatpush1.bf16.msra.mxu0 0
    %8124 = vmatprep.subr.bf16.mxu0 0
    %8125 = vmatpush1.bf16.msra.mxu0 0
    %8126 = vmatprep.subr.bf16.mxu0 0
    %8127 = vmatpush1.bf16.msra.mxu0 0
    %8128 = vmatprep.subr.bf16.mxu0 0
    %8129 = vmatpush1.bf16.msra.mxu0 0
    %8130 = vmatprep.subr.bf16.mxu0 0
    %8131 = vmatpush1.bf16.msra.mxu0 0
    %8132 = vmatprep.subr.bf16.mxu0 0
    %8133 = vmatpush1.bf16.msra.mxu0 0
    %8134 = vmatprep.mubr.bf16.mxu0 0
    %8135 = vmatmul.mubr.bf16.gmra.mrb[0].mxu0 %v8100
    %v8136 = vpop.f32.mrb[0].mxu0
    %v8137 = vadd.f32 %v8085, %v8136
    %v8138 = vpop.f32.mrb[0].mxu0
    %v8139 = vpop.f32.mrb[0].mxu0
    %v8140 = vadd.f32 %v8085, %v8139
    %v8141 = vpop.f32.mrb[0].mxu0
    %8142 = vdwg.mxu0
    %8143 = vst [vmem:[#allocation2] sm:$0xff] %v8137
    %8144 = vst [vmem:[#allocation2 + $0x8] sm:$0xff] %v8140
    // Predicated region
    $region106: #{decoder_forward.1} parent=1 // pred_check
      _
    $region107: #{decoder_forward.1} parent=1 // pred_check_branch
      %8146 = sbr.rel (0) target = $region109
    $region108: #{decoder_forward.1} parent=1 // pred_region
      %s8148 = ssub.s32 256, 256
      %8149 = vsyncadd [#allocation3], %s8148
      %s8150 = sshll.u32 [#allocation2], 4
      %s8151 = int_to_ptr.vmem [resolvable:$true] %s8150
      %8156 = dma.vmem_to_hbm [thread:$0]  %s8151, 256, %s26, [#allocation3], 128, 128, 8
    $region109: #{decoder_forward.1} parent=1 // pred_fallthru
      _
    // Predicated region
    $region110: #{decoder_forward.1} parent=1 // pred_check
      _
    $region111: #{decoder_forward.1} parent=1 // pred_check_branch
      %8158 = sbr.rel (0) target = $region113
    $region112: #{decoder_forward.1} parent=1 // pred_region
      %8159 = dma.done [#allocation3], 256
    $region113: #{decoder_forward.1} parent=1 // pred_fallthru
      _
    %8160 = vsyncpa [#allocation3], 1

</llo_original>
